<compile_context>
chip_gen: v5e
topology: v5e:2x2
jax: 0.10.0
libtpu: 0.0.40
codegen_flags: <defaults>
</compile_context>

<pallas_src>
import jax
import jax.numpy as jnp
from jax.experimental import pallas as pl
from jax.experimental.pallas import tpu as pltpu

EPS = 1e-5

# float32 keeps torch.round tie behaviour identical to the f32 PyTorch
# reference; set to jnp.bfloat16 for ~2x MXU rate at production channel
# counts once the round()-tie sensitivity has been validated.
MATMUL_DTYPE = jnp.float32


def _round_up(x, m):
    return -(-x // m) * m


# ----------------------------------------------------------------------------
# Fully fused ASPP: 1x1 branch + 3 dilated 3x3 branches + (hoisted) pooled
# branch + channel concat + 1x1 projection, one Pallas pass over x.
# ----------------------------------------------------------------------------
def aspp_forward(x_nchw, params, rates):
    N, Cin, H, W = x_nchw.shape
    Cout = params["w0"].shape[-1]
    rates = tuple(int(r) for r in rates)
    dmax = max(rates)

    WP = W + 2 * dmax                      # padded width
    TOP = 2 * dmax                         # conv pad (dmax) + halo guard (dmax)
    rows = H * WP                          # flat output rows per image (junk cols incl.)
    # TODO(synk): sweep TM (256/512/1024) per TPU generation (review #6).
    TM = min(512, _round_up(rows, 8))      # row tile, multiple of 8
    RPB = _round_up(rows, TM)              # rows computed per image (cdiv grid)
    TPB = RPB // TM
    halo = dmax * WP + dmax                # max |flat tap offset|
    HP = TOP + _round_up(RPB + halo, WP) // WP   # padded height: all tap reads in-slab
    pad_bottom = HP - TOP - H

    # --- glue: NCHW -> padded, flattened NHWC rows (feeds the MXU) ----------
    x_nhwc = jnp.transpose(x_nchw, (0, 2, 3, 1))                    # (N,H,W,Cin)
    xp = jnp.pad(x_nhwc, ((0, 0), (TOP, pad_bottom), (dmax, dmax), (0, 0)))
    xflat = xp.reshape(N, HP * WP, Cin).astype(MATMUL_DTYPE)

    # --- ASPPPooling head, hoisted out of the kernel (review #2/#10) --------
    # AdaptiveAvgPool2d(1) -> 1x1 ConvBlock; bilinear upsample from a 1x1 map
    # is a spatial broadcast, so the branch's contribution to the projection
    # collapses to a per-image (1, Cout) bias computed once here.
    mean = jnp.mean(x_nhwc, axis=(1, 2))                            # (N, Cin)
    p4 = jnp.round(jnp.maximum(
        mean @ params["w4"] * params["scale4"] + params["shift4"], 0.0))
    pool_contrib = (p4 @ params["wp"][4 * Cout:]).astype(jnp.float32)   # (N, Cout)

    # --- weights / BN constants ----------------------------------------------
    w0 = params["w0"].astype(MATMUL_DTYPE)                          # (Cin, Cout)
    w3x3 = jnp.stack(
        [params["w1"].reshape(9 * Cin, Cout),
         params["w2"].reshape(9 * Cin, Cout),
         params["w3"].reshape(9 * Cin, Cout)], axis=0
    ).astype(MATMUL_DTYPE)                                          # (3, 9*Cin, Cout)
    wp4 = params["wp"][:4 * Cout].astype(MATMUL_DTYPE)              # (4*Cout, Cout)
    scales = jnp.concatenate(
        [params["scale0"], params["scale1"], params["scale2"],
         params["scale3"], params["scalep"]], axis=0)               # (5, Cout)
    shifts = jnp.concatenate(
        [params["shift0"], params["shift1"], params["shift2"],
         params["shift3"], params["shiftp"]], axis=0)               # (5, Cout)

    def kernel(x_ref, pc_ref, w0_ref, w3_ref, wp_ref, sc_ref, sh_ref, o_ref,
               im2col_ref, cat_ref):
        n = pl.program_id(0)
        t = pl.program_id(1)
        base = TOP * WP + t * TM           # first centre row of this tile
        sc = sc_ref[...]
        sh = sh_ref[...]

        def bn_relu_round(y, b):           # BatchNorm(eval) -> ReLU -> round
            y = y * sc[b:b + 1, :] + sh[b:b + 1, :]
            return jnp.round(jnp.maximum(y, 0.0))

        # branch 0: 1x1 ConvBlock straight off the VMEM-resident slab
        y0 = bn_relu_round(
            jnp.dot(x_ref[pl.ds(base, TM), :], w0_ref[...],
                    preferred_element_type=jnp.float32), 0)
        cat_ref[:, pl.ds(0, Cout)] = y0.astype(cat_ref.dtype)

        # branches 1..3: dilated 3x3 ConvBlocks.  Gather the 9 taps into an
        # im2col scratch with lane-slice stores, then ONE K = 9*Cin matmul.
        for b, d in enumerate(rates, start=1):
            for ky in range(3):
                for kx in range(3):
                    i = ky * 3 + kx
                    off = ((ky - 1) * WP + (kx - 1)) * d
                    im2col_ref[:, pl.ds(i * Cin, Cin)] = \
                        x_ref[pl.ds(base + off, TM), :]
            yb = bn_relu_round(
                jnp.dot(im2col_ref[...], w3_ref[b - 1],
                        preferred_element_type=jnp.float32), b)
            cat_ref[:, pl.ds(b * Cout, Cout)] = yb.astype(cat_ref.dtype)

        # final 1x1 projection over branches 0..3 (one K = 4*Cout matmul),
        # plus the hoisted pooled-branch bias (constant per image).
        accp = jnp.dot(cat_ref[...], wp_ref[...],
                       preferred_element_type=jnp.float32)
        accp = accp + pc_ref[pl.ds(n, 1), :]           # (1, Cout) broadcast
        o_ref[...] = bn_relu_round(accp, 4).astype(o_ref.dtype)

    out = pl.pallas_call(
        kernel,
        out_shape=jax.ShapeDtypeStruct((N, RPB, Cout), jnp.float32),
        grid=(N, TPB),
        in_specs=[
            # padded image slab, VMEM-resident across all row tiles of image n.
            # TODO(synk): at production shapes (Cin>=128, rates 6/12/18)
            # single-buffer the invariant slab/weight blocks
            # (pipeline_mode=pl.Buffered(1)) or halo-tile the slab and raise
            # vmem_limit_bytes so the kernel fits v7x's 64 MiB (review #3).
            pl.BlockSpec((None, HP * WP, Cin), lambda n, t: (n, 0, 0)),
            pl.BlockSpec((N, Cout), lambda n, t: (0, 0)),
            pl.BlockSpec((Cin, Cout), lambda n, t: (0, 0)),
            pl.BlockSpec((3, 9 * Cin, Cout), lambda n, t: (0, 0, 0)),
            pl.BlockSpec((4 * Cout, Cout), lambda n, t: (0, 0)),
            pl.BlockSpec((5, Cout), lambda n, t: (0, 0)),
            pl.BlockSpec((5, Cout), lambda n, t: (0, 0)),
        ],
        # TODO(synk): for small Cout this output block is lane-sparse (masked
        # vst); pad Cout to 128 or pack pixels into lanes for small-channel
        # production configs, and fold the pad-column crop into the output
        # write (reviews #8/#9).
        out_specs=pl.BlockSpec((None, TM, Cout), lambda n, t: (n, t, 0)),
        scratch_shapes=[
            pltpu.VMEM((TM, 9 * Cin), MATMUL_DTYPE),    # im2col gather
            pltpu.VMEM((TM, 4 * Cout), MATMUL_DTYPE),   # branch concat
        ],
        compiler_params=pltpu.CompilerParams(
            dimension_semantics=("parallel", "parallel")),
    )(xflat, pool_contrib, w0, w3x3, wp4, scales, shifts)

    # drop junk (pad) columns and tail-tile rows, back to NCHW
    out = out[:, :H * WP, :].reshape(N, H, WP, Cout)[:, :, dmax:dmax + W, :]
    return jnp.transpose(out, (0, 3, 1, 2))


# ----------------------------------------------------------------------------
# Deterministic synthetic parameters (Conv weights + BN running stats).
# ----------------------------------------------------------------------------
def init_params(key, in_channels, out_channels):
    ks = jax.random.split(key, 12)

    def bn(k):
        km, kv = jax.random.split(k)
        mean = 0.1 * jax.random.normal(km, (1, out_channels), jnp.float32)
        var = 0.5 + jax.random.uniform(kv, (1, out_channels), jnp.float32)
        scale = 1.0 / jnp.sqrt(var + EPS)
        return scale, -mean * scale

    p = {}
    p["w0"] = 0.3 * jax.random.normal(ks[0], (in_channels, out_channels), jnp.float32)
    p["scale0"], p["shift0"] = bn(ks[1])
    for bi in (1, 2, 3):
        p[f"w{bi}"] = 0.2 * jax.random.normal(
            ks[2 * bi], (9, in_channels, out_channels), jnp.float32)
        p[f"scale{bi}"], p[f"shift{bi}"] = bn(ks[2 * bi + 1])
    p["w4"] = 0.3 * jax.random.normal(ks[8], (in_channels, out_channels), jnp.float32)
    p["scale4"], p["shift4"] = bn(ks[9])
    p["wp"] = 0.2 * jax.random.normal(
        ks[10], (5 * out_channels, out_channels), jnp.float32)
    p["scalep"], p["shiftp"] = bn(ks[11])
    return p


if __name__ == "__main__":
    key = jax.random.PRNGKey(0)
    kx, kp = jax.random.split(key)

    N, Cin, H, W = 2, 4, 16, 16
    Cout = 8
    rates = (1, 2, 3)

    x = jax.random.normal(kx, (N, Cin, H, W), jnp.float32)   # NCHW like PyTorch
    params = init_params(kp, Cin, Cout)

    y = aspp_forward(x, params, rates)
    y = jax.block_until_ready(y)
    assert y.shape == (N, Cout, H, W), y.shape
    assert y.dtype == jnp.float32

    print("KERNEL_OK")
</pallas_src>

<mosaic_0001>
module attributes {stable_mosaic.version = 11 : i64} {
  func.func @kernel(%arg0: i32, %arg1: i32, %arg2: memref<1x572x4xf32, #tpu.memory_space<vmem>>, %arg3: memref<2x8xf32, #tpu.memory_space<vmem>>, %arg4: memref<4x8xf32, #tpu.memory_space<vmem>>, %arg5: memref<3x36x8xf32, #tpu.memory_space<vmem>>, %arg6: memref<32x8xf32, #tpu.memory_space<vmem>>, %arg7: memref<5x8xf32, #tpu.memory_space<vmem>>, %arg8: memref<5x8xf32, #tpu.memory_space<vmem>>, %arg9: memref<1x352x8xf32, #tpu.memory_space<vmem>>, %arg10: memref<352x36xf32, #tpu.memory_space<vmem>>, %arg11: memref<352x32xf32, #tpu.memory_space<vmem>>) attributes {dimension_semantics = [#tpu.dimension_semantics<parallel>, #tpu.dimension_semantics<parallel>], iteration_bounds = array<i64: 2, 1>, scalar_prefetch = 0 : i64, scratch_operands = 2 : i64, tpu.core_type = #tpu.core_type<tc>, window_params = [{transform_indices = @transform_0, window_bounds = array<i64: 1, 572, 4>}, {pipeline_mode = #tpu.pipeline_mode<synchronous>, transform_indices = @transform_1, window_bounds = array<i64: 2, 8>}, {pipeline_mode = #tpu.pipeline_mode<synchronous>, transform_indices = @transform_2, window_bounds = array<i64: 4, 8>}, {pipeline_mode = #tpu.pipeline_mode<synchronous>, transform_indices = @transform_3, window_bounds = array<i64: 3, 36, 8>}, {pipeline_mode = #tpu.pipeline_mode<synchronous>, transform_indices = @transform_4, window_bounds = array<i64: 32, 8>}, {pipeline_mode = #tpu.pipeline_mode<synchronous>, transform_indices = @transform_5, window_bounds = array<i64: 5, 8>}, {pipeline_mode = #tpu.pipeline_mode<synchronous>, transform_indices = @transform_6, window_bounds = array<i64: 5, 8>}, {transform_indices = @transform_7, window_bounds = array<i64: 1, 352, 8>}]} {
    %c352_i32 = arith.constant 352 : i32
    %0 = arith.muli %arg1, %c352_i32 : i32
    %c132_i32 = arith.constant 132 : i32
    %1 = arith.addi %c132_i32, %0 : i32
    %c0 = arith.constant 0 : index
    %c0_0 = arith.constant 0 : index
    %2 = vector.load %arg7[%c0, %c0_0] : memref<5x8xf32, #tpu.memory_space<vmem>>, vector<5x8xf32>
    %c0_1 = arith.constant 0 : index
    %c0_2 = arith.constant 0 : index
    %3 = vector.load %arg8[%c0_1, %c0_2] : memref<5x8xf32, #tpu.memory_space<vmem>>, vector<5x8xf32>
    %c0_3 = arith.constant 0 : index
    %4 = arith.index_cast %1 : i32 to index
    %c0_4 = arith.constant 0 : index
    %5 = vector.load %arg2[%c0_3, %4, %c0_4] : memref<1x572x4xf32, #tpu.memory_space<vmem>>, vector<1x352x4xf32>
    %6 = vector.shape_cast %5 : vector<1x352x4xf32> to vector<352x4xf32>
    %c0_5 = arith.constant 0 : index
    %c0_6 = arith.constant 0 : index
    %7 = vector.load %arg4[%c0_5, %c0_6] : memref<4x8xf32, #tpu.memory_space<vmem>>, vector<4x8xf32>
    %cst = arith.constant dense<0.000000e+00> : vector<352x8xf32>
    %8 = tpu.matmul %6, %7, %cst {dimension_numbers = #tpu.dot_dimension_numbers<[1], [0], [0], [1], [0, 0, 1, 1], [], []>} : vector<352x4xf32>, vector<4x8xf32>, vector<352x8xf32> -> vector<352x8xf32>
    %9 = vector.extract_strided_slice %2 {offsets = [0, 0], sizes = [1, 8], strides = [1, 1]} : vector<5x8xf32> to vector<1x8xf32>
    %10 = vector.broadcast %9 : vector<1x8xf32> to vector<352x8xf32>
    %11 = arith.mulf %8, %10 : vector<352x8xf32>
    %12 = vector.extract_strided_slice %3 {offsets = [0, 0], sizes = [1, 8], strides = [1, 1]} : vector<5x8xf32> to vector<1x8xf32>
    %13 = vector.broadcast %12 : vector<1x8xf32> to vector<352x8xf32>
    %14 = arith.addf %11, %13 : vector<352x8xf32>
    %cst_7 = arith.constant 0.000000e+00 : f32
    %15 = vector.broadcast %cst_7 : f32 to vector<352x8xf32>
    %16 = arith.maximumf %14, %15 : vector<352x8xf32>
    %17 = math.roundeven %16 : vector<352x8xf32>
    %c0_8 = arith.constant 0 : index
    %c0_9 = arith.constant 0 : index
    %18 = vector.load %arg11[%c0_8, %c0_9] : memref<352x32xf32, #tpu.memory_space<vmem>>, vector<352x8xf32>
    tpu.vector_store %arg11[%c0_8, %c0_9], %17 {strides = array<i32>} : memref<352x32xf32, #tpu.memory_space<vmem>>, vector<352x8xf32>,
    %c-23_i32 = arith.constant -23 : i32
    %19 = arith.addi %1, %c-23_i32 : i32
    %c0_10 = arith.constant 0 : index
    %20 = arith.index_cast %19 : i32 to index
    %c0_11 = arith.constant 0 : index
    %21 = vector.load %arg2[%c0_10, %20, %c0_11] : memref<1x572x4xf32, #tpu.memory_space<vmem>>, vector<1x352x4xf32>
    %22 = vector.shape_cast %21 : vector<1x352x4xf32> to vector<352x4xf32>
    %c0_12 = arith.constant 0 : index
    %c0_13 = arith.constant 0 : index
    %23 = vector.load %arg10[%c0_12, %c0_13] : memref<352x36xf32, #tpu.memory_space<vmem>>, vector<352x4xf32>
    tpu.vector_store %arg10[%c0_12, %c0_13], %22 {strides = array<i32>} : memref<352x36xf32, #tpu.memory_space<vmem>>, vector<352x4xf32>,
    %c-22_i32 = arith.constant -22 : i32
    %24 = arith.addi %1, %c-22_i32 : i32
    %c0_14 = arith.constant 0 : index
    %25 = arith.index_cast %24 : i32 to index
    %c0_15 = arith.constant 0 : index
    %26 = vector.load %arg2[%c0_14, %25, %c0_15] : memref<1x572x4xf32, #tpu.memory_space<vmem>>, vector<1x352x4xf32>
    %27 = vector.shape_cast %26 : vector<1x352x4xf32> to vector<352x4xf32>
    %c0_16 = arith.constant 0 : index
    %c4 = arith.constant 4 : index
    %28 = vector.load %arg10[%c0_16, %c4] : memref<352x36xf32, #tpu.memory_space<vmem>>, vector<352x4xf32>
    tpu.vector_store %arg10[%c0_16, %c4], %27 {strides = array<i32>} : memref<352x36xf32, #tpu.memory_space<vmem>>, vector<352x4xf32>,
    %c-21_i32 = arith.constant -21 : i32
    %29 = arith.addi %1, %c-21_i32 : i32
    %c0_17 = arith.constant 0 : index
    %30 = arith.index_cast %29 : i32 to index
    %c0_18 = arith.constant 0 : index
    %31 = vector.load %arg2[%c0_17, %30, %c0_18] : memref<1x572x4xf32, #tpu.memory_space<vmem>>, vector<1x352x4xf32>
    %32 = vector.shape_cast %31 : vector<1x352x4xf32> to vector<352x4xf32>
    %c0_19 = arith.constant 0 : index
    %c8 = arith.constant 8 : index
    %33 = vector.load %arg10[%c0_19, %c8] : memref<352x36xf32, #tpu.memory_space<vmem>>, vector<352x4xf32>
    tpu.vector_store %arg10[%c0_19, %c8], %32 {strides = array<i32>} : memref<352x36xf32, #tpu.memory_space<vmem>>, vector<352x4xf32>,
    %c-1_i32 = arith.constant -1 : i32
    %34 = arith.addi %1, %c-1_i32 : i32
    %c0_20 = arith.constant 0 : index
    %35 = arith.index_cast %34 : i32 to index
    %c0_21 = arith.constant 0 : index
    %36 = vector.load %arg2[%c0_20, %35, %c0_21] : memref<1x572x4xf32, #tpu.memory_space<vmem>>, vector<1x352x4xf32>
    %37 = vector.shape_cast %36 : vector<1x352x4xf32> to vector<352x4xf32>
    %c0_22 = arith.constant 0 : index
    %c12 = arith.constant 12 : index
    %38 = vector.load %arg10[%c0_22, %c12] : memref<352x36xf32, #tpu.memory_space<vmem>>, vector<352x4xf32>
    tpu.vector_store %arg10[%c0_22, %c12], %37 {strides = array<i32>} : memref<352x36xf32, #tpu.memory_space<vmem>>, vector<352x4xf32>,
    %c0_i32 = arith.constant 0 : i32
    %39 = arith.addi %1, %c0_i32 : i32
    %c0_23 = arith.constant 0 : index
    %40 = arith.index_cast %39 : i32 to index
    %c0_24 = arith.constant 0 : index
    %41 = vector.load %arg2[%c0_23, %40, %c0_24] : memref<1x572x4xf32, #tpu.memory_space<vmem>>, vector<1x352x4xf32>
    %42 = vector.shape_cast %41 : vector<1x352x4xf32> to vector<352x4xf32>
    %c0_25 = arith.constant 0 : index
    %c16 = arith.constant 16 : index
    %43 = vector.load %arg10[%c0_25, %c16] : memref<352x36xf32, #tpu.memory_space<vmem>>, vector<352x4xf32>
    tpu.vector_store %arg10[%c0_25, %c16], %42 {strides = array<i32>} : memref<352x36xf32, #tpu.memory_space<vmem>>, vector<352x4xf32>,
    %c1_i32 = arith.constant 1 : i32
    %44 = arith.addi %1, %c1_i32 : i32
    %c0_26 = arith.constant 0 : index
    %45 = arith.index_cast %44 : i32 to index
    %c0_27 = arith.constant 0 : index
    %46 = vector.load %arg2[%c0_26, %45, %c0_27] : memref<1x572x4xf32, #tpu.memory_space<vmem>>, vector<1x352x4xf32>
    %47 = vector.shape_cast %46 : vector<1x352x4xf32> to vector<352x4xf32>
    %c0_28 = arith.constant 0 : index
    %c20 = arith.constant 20 : index
    %48 = vector.load %arg10[%c0_28, %c20] : memref<352x36xf32, #tpu.memory_space<vmem>>, vector<352x4xf32>
    tpu.vector_store %arg10[%c0_28, %c20], %47 {strides = array<i32>} : memref<352x36xf32, #tpu.memory_space<vmem>>, vector<352x4xf32>,
    %c21_i32 = arith.constant 21 : i32
    %49 = arith.addi %1, %c21_i32 : i32
    %c0_29 = arith.constant 0 : index
    %50 = arith.index_cast %49 : i32 to index
    %c0_30 = arith.constant 0 : index
    %51 = vector.load %arg2[%c0_29, %50, %c0_30] : memref<1x572x4xf32, #tpu.memory_space<vmem>>, vector<1x352x4xf32>
    %52 = vector.shape_cast %51 : vector<1x352x4xf32> to vector<352x4xf32>
    %c0_31 = arith.constant 0 : index
    %c24 = arith.constant 24 : index
    %53 = vector.load %arg10[%c0_31, %c24] : memref<352x36xf32, #tpu.memory_space<vmem>>, vector<352x4xf32>
    tpu.vector_store %arg10[%c0_31, %c24], %52 {strides = array<i32>} : memref<352x36xf32, #tpu.memory_space<vmem>>, vector<352x4xf32>,
    %c22_i32 = arith.constant 22 : i32
    %54 = arith.addi %1, %c22_i32 : i32
    %c0_32 = arith.constant 0 : index
    %55 = arith.index_cast %54 : i32 to index
    %c0_33 = arith.constant 0 : index
    %56 = vector.load %arg2[%c0_32, %55, %c0_33] : memref<1x572x4xf32, #tpu.memory_space<vmem>>, vector<1x352x4xf32>
    %57 = vector.shape_cast %56 : vector<1x352x4xf32> to vector<352x4xf32>
    %c0_34 = arith.constant 0 : index
    %c28 = arith.constant 28 : index
    %58 = vector.load %arg10[%c0_34, %c28] : memref<352x36xf32, #tpu.memory_space<vmem>>, vector<352x4xf32>
    tpu.vector_store %arg10[%c0_34, %c28], %57 {strides = array<i32>} : memref<352x36xf32, #tpu.memory_space<vmem>>, vector<352x4xf32>,
    %c23_i32 = arith.constant 23 : i32
    %59 = arith.addi %1, %c23_i32 : i32
    %c0_35 = arith.constant 0 : index
    %60 = arith.index_cast %59 : i32 to index
    %c0_36 = arith.constant 0 : index
    %61 = vector.load %arg2[%c0_35, %60, %c0_36] : memref<1x572x4xf32, #tpu.memory_space<vmem>>, vector<1x352x4xf32>
    %62 = vector.shape_cast %61 : vector<1x352x4xf32> to vector<352x4xf32>
    %c0_37 = arith.constant 0 : index
    %c32 = arith.constant 32 : index
    %63 = vector.load %arg10[%c0_37, %c32] : memref<352x36xf32, #tpu.memory_space<vmem>>, vector<352x4xf32>
    tpu.vector_store %arg10[%c0_37, %c32], %62 {strides = array<i32>} : memref<352x36xf32, #tpu.memory_space<vmem>>, vector<352x4xf32>,
    %c0_38 = arith.constant 0 : index
    %c0_39 = arith.constant 0 : index
    %64 = vector.load %arg10[%c0_38, %c0_39] : memref<352x36xf32, #tpu.memory_space<vmem>>, vector<352x36xf32>
    %c0_40 = arith.constant 0 : index
    %c0_41 = arith.constant 0 : index
    %c0_42 = arith.constant 0 : index
    %65 = vector.load %arg5[%c0_40, %c0_41, %c0_42] : memref<3x36x8xf32, #tpu.memory_space<vmem>>, vector<1x36x8xf32>
    %66 = vector.shape_cast %65 : vector<1x36x8xf32> to vector<36x8xf32>
    %cst_43 = arith.constant dense<0.000000e+00> : vector<352x8xf32>
    %67 = tpu.matmul %64, %66, %cst_43 {dimension_numbers = #tpu.dot_dimension_numbers<[1], [0], [0], [1], [0, 0, 1, 1], [], []>} : vector<352x36xf32>, vector<36x8xf32>, vector<352x8xf32> -> vector<352x8xf32>
    %68 = vector.extract_strided_slice %2 {offsets = [1, 0], sizes = [1, 8], strides = [1, 1]} : vector<5x8xf32> to vector<1x8xf32>
    %69 = vector.broadcast %68 : vector<1x8xf32> to vector<352x8xf32>
    %70 = arith.mulf %67, %69 : vector<352x8xf32>
    %71 = vector.extract_strided_slice %3 {offsets = [1, 0], sizes = [1, 8], strides = [1, 1]} : vector<5x8xf32> to vector<1x8xf32>
    %72 = vector.broadcast %71 : vector<1x8xf32> to vector<352x8xf32>
    %73 = arith.addf %70, %72 : vector<352x8xf32>
    %cst_44 = arith.constant 0.000000e+00 : f32
    %74 = vector.broadcast %cst_44 : f32 to vector<352x8xf32>
    %75 = arith.maximumf %73, %74 : vector<352x8xf32>
    %76 = math.roundeven %75 : vector<352x8xf32>
    %c0_45 = arith.constant 0 : index
    %c8_46 = arith.constant 8 : index
    %77 = vector.load %arg11[%c0_45, %c8_46] : memref<352x32xf32, #tpu.memory_space<vmem>>, vector<352x8xf32>
    tpu.vector_store %arg11[%c0_45, %c8_46], %76 {strides = array<i32>} : memref<352x32xf32, #tpu.memory_space<vmem>>, vector<352x8xf32>,
    %c-46_i32 = arith.constant -46 : i32
    %78 = arith.addi %1, %c-46_i32 : i32
    %c0_47 = arith.constant 0 : index
    %79 = arith.index_cast %78 : i32 to index
    %c0_48 = arith.constant 0 : index
    %80 = vector.load %arg2[%c0_47, %79, %c0_48] : memref<1x572x4xf32, #tpu.memory_space<vmem>>, vector<1x352x4xf32>
    %81 = vector.shape_cast %80 : vector<1x352x4xf32> to vector<352x4xf32>
    %c0_49 = arith.constant 0 : index
    %c0_50 = arith.constant 0 : index
    %82 = vector.load %arg10[%c0_49, %c0_50] : memref<352x36xf32, #tpu.memory_space<vmem>>, vector<352x4xf32>
    tpu.vector_store %arg10[%c0_49, %c0_50], %81 {strides = array<i32>} : memref<352x36xf32, #tpu.memory_space<vmem>>, vector<352x4xf32>,
    %c-44_i32 = arith.constant -44 : i32
    %83 = arith.addi %1, %c-44_i32 : i32
    %c0_51 = arith.constant 0 : index
    %84 = arith.index_cast %83 : i32 to index
    %c0_52 = arith.constant 0 : index
    %85 = vector.load %arg2[%c0_51, %84, %c0_52] : memref<1x572x4xf32, #tpu.memory_space<vmem>>, vector<1x352x4xf32>
    %86 = vector.shape_cast %85 : vector<1x352x4xf32> to vector<352x4xf32>
    %c0_53 = arith.constant 0 : index
    %c4_54 = arith.constant 4 : index
    %87 = vector.load %arg10[%c0_53, %c4_54] : memref<352x36xf32, #tpu.memory_space<vmem>>, vector<352x4xf32>
    tpu.vector_store %arg10[%c0_53, %c4_54], %86 {strides = array<i32>} : memref<352x36xf32, #tpu.memory_space<vmem>>, vector<352x4xf32>,
    %c-42_i32 = arith.constant -42 : i32
    %88 = arith.addi %1, %c-42_i32 : i32
    %c0_55 = arith.constant 0 : index
    %89 = arith.index_cast %88 : i32 to index
    %c0_56 = arith.constant 0 : index
    %90 = vector.load %arg2[%c0_55, %89, %c0_56] : memref<1x572x4xf32, #tpu.memory_space<vmem>>, vector<1x352x4xf32>
    %91 = vector.shape_cast %90 : vector<1x352x4xf32> to vector<352x4xf32>
    %c0_57 = arith.constant 0 : index
    %c8_58 = arith.constant 8 : index
    %92 = vector.load %arg10[%c0_57, %c8_58] : memref<352x36xf32, #tpu.memory_space<vmem>>, vector<352x4xf32>
    tpu.vector_store %arg10[%c0_57, %c8_58], %91 {strides = array<i32>} : memref<352x36xf32, #tpu.memory_space<vmem>>, vector<352x4xf32>,
    %c-2_i32 = arith.constant -2 : i32
    %93 = arith.addi %1, %c-2_i32 : i32
    %c0_59 = arith.constant 0 : index
    %94 = arith.index_cast %93 : i32 to index
    %c0_60 = arith.constant 0 : index
    %95 = vector.load %arg2[%c0_59, %94, %c0_60] : memref<1x572x4xf32, #tpu.memory_space<vmem>>, vector<1x352x4xf32>
    %96 = vector.shape_cast %95 : vector<1x352x4xf32> to vector<352x4xf32>
    %c0_61 = arith.constant 0 : index
    %c12_62 = arith.constant 12 : index
    %97 = vector.load %arg10[%c0_61, %c12_62] : memref<352x36xf32, #tpu.memory_space<vmem>>, vector<352x4xf32>
    tpu.vector_store %arg10[%c0_61, %c12_62], %96 {strides = array<i32>} : memref<352x36xf32, #tpu.memory_space<vmem>>, vector<352x4xf32>,
    %c0_i32_63 = arith.constant 0 : i32
    %98 = arith.addi %1, %c0_i32_63 : i32
    %c0_64 = arith.constant 0 : index
    %99 = arith.index_cast %98 : i32 to index
    %c0_65 = arith.constant 0 : index
    %100 = vector.load %arg2[%c0_64, %99, %c0_65] : memref<1x572x4xf32, #tpu.memory_space<vmem>>, vector<1x352x4xf32>
    %101 = vector.shape_cast %100 : vector<1x352x4xf32> to vector<352x4xf32>
    %c0_66 = arith.constant 0 : index
    %c16_67 = arith.constant 16 : index
    %102 = vector.load %arg10[%c0_66, %c16_67] : memref<352x36xf32, #tpu.memory_space<vmem>>, vector<352x4xf32>
    tpu.vector_store %arg10[%c0_66, %c16_67], %101 {strides = array<i32>} : memref<352x36xf32, #tpu.memory_space<vmem>>, vector<352x4xf32>,
    %c2_i32 = arith.constant 2 : i32
    %103 = arith.addi %1, %c2_i32 : i32
    %c0_68 = arith.constant 0 : index
    %104 = arith.index_cast %103 : i32 to index
    %c0_69 = arith.constant 0 : index
    %105 = vector.load %arg2[%c0_68, %104, %c0_69] : memref<1x572x4xf32, #tpu.memory_space<vmem>>, vector<1x352x4xf32>
    %106 = vector.shape_cast %105 : vector<1x352x4xf32> to vector<352x4xf32>
    %c0_70 = arith.constant 0 : index
    %c20_71 = arith.constant 20 : index
    %107 = vector.load %arg10[%c0_70, %c20_71] : memref<352x36xf32, #tpu.memory_space<vmem>>, vector<352x4xf32>
    tpu.vector_store %arg10[%c0_70, %c20_71], %106 {strides = array<i32>} : memref<352x36xf32, #tpu.memory_space<vmem>>, vector<352x4xf32>,
    %c42_i32 = arith.constant 42 : i32
    %108 = arith.addi %1, %c42_i32 : i32
    %c0_72 = arith.constant 0 : index
    %109 = arith.index_cast %108 : i32 to index
    %c0_73 = arith.constant 0 : index
    %110 = vector.load %arg2[%c0_72, %109, %c0_73] : memref<1x572x4xf32, #tpu.memory_space<vmem>>, vector<1x352x4xf32>
    %111 = vector.shape_cast %110 : vector<1x352x4xf32> to vector<352x4xf32>
    %c0_74 = arith.constant 0 : index
    %c24_75 = arith.constant 24 : index
    %112 = vector.load %arg10[%c0_74, %c24_75] : memref<352x36xf32, #tpu.memory_space<vmem>>, vector<352x4xf32>
    tpu.vector_store %arg10[%c0_74, %c24_75], %111 {strides = array<i32>} : memref<352x36xf32, #tpu.memory_space<vmem>>, vector<352x4xf32>,
    %c44_i32 = arith.constant 44 : i32
    %113 = arith.addi %1, %c44_i32 : i32
    %c0_76 = arith.constant 0 : index
    %114 = arith.index_cast %113 : i32 to index
    %c0_77 = arith.constant 0 : index
    %115 = vector.load %arg2[%c0_76, %114, %c0_77] : memref<1x572x4xf32, #tpu.memory_space<vmem>>, vector<1x352x4xf32>
    %116 = vector.shape_cast %115 : vector<1x352x4xf32> to vector<352x4xf32>
    %c0_78 = arith.constant 0 : index
    %c28_79 = arith.constant 28 : index
    %117 = vector.load %arg10[%c0_78, %c28_79] : memref<352x36xf32, #tpu.memory_space<vmem>>, vector<352x4xf32>
    tpu.vector_store %arg10[%c0_78, %c28_79], %116 {strides = array<i32>} : memref<352x36xf32, #tpu.memory_space<vmem>>, vector<352x4xf32>,
    %c46_i32 = arith.constant 46 : i32
    %118 = arith.addi %1, %c46_i32 : i32
    %c0_80 = arith.constant 0 : index
    %119 = arith.index_cast %118 : i32 to index
    %c0_81 = arith.constant 0 : index
    %120 = vector.load %arg2[%c0_80, %119, %c0_81] : memref<1x572x4xf32, #tpu.memory_space<vmem>>, vector<1x352x4xf32>
    %121 = vector.shape_cast %120 : vector<1x352x4xf32> to vector<352x4xf32>
    %c0_82 = arith.constant 0 : index
    %c32_83 = arith.constant 32 : index
    %122 = vector.load %arg10[%c0_82, %c32_83] : memref<352x36xf32, #tpu.memory_space<vmem>>, vector<352x4xf32>
    tpu.vector_store %arg10[%c0_82, %c32_83], %121 {strides = array<i32>} : memref<352x36xf32, #tpu.memory_space<vmem>>, vector<352x4xf32>,
    %c0_84 = arith.constant 0 : index
    %c0_85 = arith.constant 0 : index
    %123 = vector.load %arg10[%c0_84, %c0_85] : memref<352x36xf32, #tpu.memory_space<vmem>>, vector<352x36xf32>
    %c1 = arith.constant 1 : index
    %c0_86 = arith.constant 0 : index
    %c0_87 = arith.constant 0 : index
    %124 = vector.load %arg5[%c1, %c0_86, %c0_87] : memref<3x36x8xf32, #tpu.memory_space<vmem>>, vector<1x36x8xf32>
    %125 = vector.shape_cast %124 : vector<1x36x8xf32> to vector<36x8xf32>
    %cst_88 = arith.constant dense<0.000000e+00> : vector<352x8xf32>
    %126 = tpu.matmul %123, %125, %cst_88 {dimension_numbers = #tpu.dot_dimension_numbers<[1], [0], [0], [1], [0, 0, 1, 1], [], []>} : vector<352x36xf32>, vector<36x8xf32>, vector<352x8xf32> -> vector<352x8xf32>
    %127 = vector.extract_strided_slice %2 {offsets = [2, 0], sizes = [1, 8], strides = [1, 1]} : vector<5x8xf32> to vector<1x8xf32>
    %128 = vector.broadcast %127 : vector<1x8xf32> to vector<352x8xf32>
    %129 = arith.mulf %126, %128 : vector<352x8xf32>
    %130 = vector.extract_strided_slice %3 {offsets = [2, 0], sizes = [1, 8], strides = [1, 1]} : vector<5x8xf32> to vector<1x8xf32>
    %131 = vector.broadcast %130 : vector<1x8xf32> to vector<352x8xf32>
    %132 = arith.addf %129, %131 : vector<352x8xf32>
    %cst_89 = arith.constant 0.000000e+00 : f32
    %133 = vector.broadcast %cst_89 : f32 to vector<352x8xf32>
    %134 = arith.maximumf %132, %133 : vector<352x8xf32>
    %135 = math.roundeven %134 : vector<352x8xf32>
    %c0_90 = arith.constant 0 : index
    %c16_91 = arith.constant 16 : index
    %136 = vector.load %arg11[%c0_90, %c16_91] : memref<352x32xf32, #tpu.memory_space<vmem>>, vector<352x8xf32>
    tpu.vector_store %arg11[%c0_90, %c16_91], %135 {strides = array<i32>} : memref<352x32xf32, #tpu.memory_space<vmem>>, vector<352x8xf32>,
    %c-69_i32 = arith.constant -69 : i32
    %137 = arith.addi %1, %c-69_i32 : i32
    %c0_92 = arith.constant 0 : index
    %138 = arith.index_cast %137 : i32 to index
    %c0_93 = arith.constant 0 : index
    %139 = vector.load %arg2[%c0_92, %138, %c0_93] : memref<1x572x4xf32, #tpu.memory_space<vmem>>, vector<1x352x4xf32>
    %140 = vector.shape_cast %139 : vector<1x352x4xf32> to vector<352x4xf32>
    %c0_94 = arith.constant 0 : index
    %c0_95 = arith.constant 0 : index
    %141 = vector.load %arg10[%c0_94, %c0_95] : memref<352x36xf32, #tpu.memory_space<vmem>>, vector<352x4xf32>
    tpu.vector_store %arg10[%c0_94, %c0_95], %140 {strides = array<i32>} : memref<352x36xf32, #tpu.memory_space<vmem>>, vector<352x4xf32>,
    %c-66_i32 = arith.constant -66 : i32
    %142 = arith.addi %1, %c-66_i32 : i32
    %c0_96 = arith.constant 0 : index
    %143 = arith.index_cast %142 : i32 to index
    %c0_97 = arith.constant 0 : index
    %144 = vector.load %arg2[%c0_96, %143, %c0_97] : memref<1x572x4xf32, #tpu.memory_space<vmem>>, vector<1x352x4xf32>
    %145 = vector.shape_cast %144 : vector<1x352x4xf32> to vector<352x4xf32>
    %c0_98 = arith.constant 0 : index
    %c4_99 = arith.constant 4 : index
    %146 = vector.load %arg10[%c0_98, %c4_99] : memref<352x36xf32, #tpu.memory_space<vmem>>, vector<352x4xf32>
    tpu.vector_store %arg10[%c0_98, %c4_99], %145 {strides = array<i32>} : memref<352x36xf32, #tpu.memory_space<vmem>>, vector<352x4xf32>,
    %c-63_i32 = arith.constant -63 : i32
    %147 = arith.addi %1, %c-63_i32 : i32
    %c0_100 = arith.constant 0 : index
    %148 = arith.index_cast %147 : i32 to index
    %c0_101 = arith.constant 0 : index
    %149 = vector.load %arg2[%c0_100, %148, %c0_101] : memref<1x572x4xf32, #tpu.memory_space<vmem>>, vector<1x352x4xf32>
    %150 = vector.shape_cast %149 : vector<1x352x4xf32> to vector<352x4xf32>
    %c0_102 = arith.constant 0 : index
    %c8_103 = arith.constant 8 : index
    %151 = vector.load %arg10[%c0_102, %c8_103] : memref<352x36xf32, #tpu.memory_space<vmem>>, vector<352x4xf32>
    tpu.vector_store %arg10[%c0_102, %c8_103], %150 {strides = array<i32>} : memref<352x36xf32, #tpu.memory_space<vmem>>, vector<352x4xf32>,
    %c-3_i32 = arith.constant -3 : i32
    %152 = arith.addi %1, %c-3_i32 : i32
    %c0_104 = arith.constant 0 : index
    %153 = arith.index_cast %152 : i32 to index
    %c0_105 = arith.constant 0 : index
    %154 = vector.load %arg2[%c0_104, %153, %c0_105] : memref<1x572x4xf32, #tpu.memory_space<vmem>>, vector<1x352x4xf32>
    %155 = vector.shape_cast %154 : vector<1x352x4xf32> to vector<352x4xf32>
    %c0_106 = arith.constant 0 : index
    %c12_107 = arith.constant 12 : index
    %156 = vector.load %arg10[%c0_106, %c12_107] : memref<352x36xf32, #tpu.memory_space<vmem>>, vector<352x4xf32>
    tpu.vector_store %arg10[%c0_106, %c12_107], %155 {strides = array<i32>} : memref<352x36xf32, #tpu.memory_space<vmem>>, vector<352x4xf32>,
    %c0_i32_108 = arith.constant 0 : i32
    %157 = arith.addi %1, %c0_i32_108 : i32
    %c0_109 = arith.constant 0 : index
    %158 = arith.index_cast %157 : i32 to index
    %c0_110 = arith.constant 0 : index
    %159 = vector.load %arg2[%c0_109, %158, %c0_110] : memref<1x572x4xf32, #tpu.memory_space<vmem>>, vector<1x352x4xf32>
    %160 = vector.shape_cast %159 : vector<1x352x4xf32> to vector<352x4xf32>
    %c0_111 = arith.constant 0 : index
    %c16_112 = arith.constant 16 : index
    %161 = vector.load %arg10[%c0_111, %c16_112] : memref<352x36xf32, #tpu.memory_space<vmem>>, vector<352x4xf32>
    tpu.vector_store %arg10[%c0_111, %c16_112], %160 {strides = array<i32>} : memref<352x36xf32, #tpu.memory_space<vmem>>, vector<352x4xf32>,
    %c3_i32 = arith.constant 3 : i32
    %162 = arith.addi %1, %c3_i32 : i32
    %c0_113 = arith.constant 0 : index
    %163 = arith.index_cast %162 : i32 to index
    %c0_114 = arith.constant 0 : index
    %164 = vector.load %arg2[%c0_113, %163, %c0_114] : memref<1x572x4xf32, #tpu.memory_space<vmem>>, vector<1x352x4xf32>
    %165 = vector.shape_cast %164 : vector<1x352x4xf32> to vector<352x4xf32>
    %c0_115 = arith.constant 0 : index
    %c20_116 = arith.constant 20 : index
    %166 = vector.load %arg10[%c0_115, %c20_116] : memref<352x36xf32, #tpu.memory_space<vmem>>, vector<352x4xf32>
    tpu.vector_store %arg10[%c0_115, %c20_116], %165 {strides = array<i32>} : memref<352x36xf32, #tpu.memory_space<vmem>>, vector<352x4xf32>,
    %c63_i32 = arith.constant 63 : i32
    %167 = arith.addi %1, %c63_i32 : i32
    %c0_117 = arith.constant 0 : index
    %168 = arith.index_cast %167 : i32 to index
    %c0_118 = arith.constant 0 : index
    %169 = vector.load %arg2[%c0_117, %168, %c0_118] : memref<1x572x4xf32, #tpu.memory_space<vmem>>, vector<1x352x4xf32>
    %170 = vector.shape_cast %169 : vector<1x352x4xf32> to vector<352x4xf32>
    %c0_119 = arith.constant 0 : index
    %c24_120 = arith.constant 24 : index
    %171 = vector.load %arg10[%c0_119, %c24_120] : memref<352x36xf32, #tpu.memory_space<vmem>>, vector<352x4xf32>
    tpu.vector_store %arg10[%c0_119, %c24_120], %170 {strides = array<i32>} : memref<352x36xf32, #tpu.memory_space<vmem>>, vector<352x4xf32>,
    %c66_i32 = arith.constant 66 : i32
    %172 = arith.addi %1, %c66_i32 : i32
    %c0_121 = arith.constant 0 : index
    %173 = arith.index_cast %172 : i32 to index
    %c0_122 = arith.constant 0 : index
    %174 = vector.load %arg2[%c0_121, %173, %c0_122] : memref<1x572x4xf32, #tpu.memory_space<vmem>>, vector<1x352x4xf32>
    %175 = vector.shape_cast %174 : vector<1x352x4xf32> to vector<352x4xf32>
    %c0_123 = arith.constant 0 : index
    %c28_124 = arith.constant 28 : index
    %176 = vector.load %arg10[%c0_123, %c28_124] : memref<352x36xf32, #tpu.memory_space<vmem>>, vector<352x4xf32>
    tpu.vector_store %arg10[%c0_123, %c28_124], %175 {strides = array<i32>} : memref<352x36xf32, #tpu.memory_space<vmem>>, vector<352x4xf32>,
    %c69_i32 = arith.constant 69 : i32
    %177 = arith.addi %1, %c69_i32 : i32
    %c0_125 = arith.constant 0 : index
    %178 = arith.index_cast %177 : i32 to index
    %c0_126 = arith.constant 0 : index
    %179 = vector.load %arg2[%c0_125, %178, %c0_126] : memref<1x572x4xf32, #tpu.memory_space<vmem>>, vector<1x352x4xf32>
    %180 = vector.shape_cast %179 : vector<1x352x4xf32> to vector<352x4xf32>
    %c0_127 = arith.constant 0 : index
    %c32_128 = arith.constant 32 : index
    %181 = vector.load %arg10[%c0_127, %c32_128] : memref<352x36xf32, #tpu.memory_space<vmem>>, vector<352x4xf32>
    tpu.vector_store %arg10[%c0_127, %c32_128], %180 {strides = array<i32>} : memref<352x36xf32, #tpu.memory_space<vmem>>, vector<352x4xf32>,
    %c0_129 = arith.constant 0 : index
    %c0_130 = arith.constant 0 : index
    %182 = vector.load %arg10[%c0_129, %c0_130] : memref<352x36xf32, #tpu.memory_space<vmem>>, vector<352x36xf32>
    %c2 = arith.constant 2 : index
    %c0_131 = arith.constant 0 : index
    %c0_132 = arith.constant 0 : index
    %183 = vector.load %arg5[%c2, %c0_131, %c0_132] : memref<3x36x8xf32, #tpu.memory_space<vmem>>, vector<1x36x8xf32>
    %184 = vector.shape_cast %183 : vector<1x36x8xf32> to vector<36x8xf32>
    %cst_133 = arith.constant dense<0.000000e+00> : vector<352x8xf32>
    %185 = tpu.matmul %182, %184, %cst_133 {dimension_numbers = #tpu.dot_dimension_numbers<[1], [0], [0], [1], [0, 0, 1, 1], [], []>} : vector<352x36xf32>, vector<36x8xf32>, vector<352x8xf32> -> vector<352x8xf32>
    %186 = vector.extract_strided_slice %2 {offsets = [3, 0], sizes = [1, 8], strides = [1, 1]} : vector<5x8xf32> to vector<1x8xf32>
    %187 = vector.broadcast %186 : vector<1x8xf32> to vector<352x8xf32>
    %188 = arith.mulf %185, %187 : vector<352x8xf32>
    %189 = vector.extract_strided_slice %3 {offsets = [3, 0], sizes = [1, 8], strides = [1, 1]} : vector<5x8xf32> to vector<1x8xf32>
    %190 = vector.broadcast %189 : vector<1x8xf32> to vector<352x8xf32>
    %191 = arith.addf %188, %190 : vector<352x8xf32>
    %cst_134 = arith.constant 0.000000e+00 : f32
    %192 = vector.broadcast %cst_134 : f32 to vector<352x8xf32>
    %193 = arith.maximumf %191, %192 : vector<352x8xf32>
    %194 = math.roundeven %193 : vector<352x8xf32>
    %c0_135 = arith.constant 0 : index
    %c24_136 = arith.constant 24 : index
    %195 = vector.load %arg11[%c0_135, %c24_136] : memref<352x32xf32, #tpu.memory_space<vmem>>, vector<352x8xf32>
    tpu.vector_store %arg11[%c0_135, %c24_136], %194 {strides = array<i32>} : memref<352x32xf32, #tpu.memory_space<vmem>>, vector<352x8xf32>,
    %c0_137 = arith.constant 0 : index
    %c0_138 = arith.constant 0 : index
    %196 = vector.load %arg11[%c0_137, %c0_138] : memref<352x32xf32, #tpu.memory_space<vmem>>, vector<352x32xf32>
    %c0_139 = arith.constant 0 : index
    %c0_140 = arith.constant 0 : index
    %197 = vector.load %arg6[%c0_139, %c0_140] : memref<32x8xf32, #tpu.memory_space<vmem>>, vector<32x8xf32>
    %cst_141 = arith.constant dense<0.000000e+00> : vector<352x8xf32>
    %198 = tpu.matmul %196, %197, %cst_141 {dimension_numbers = #tpu.dot_dimension_numbers<[1], [0], [0], [1], [0, 0, 1, 1], [], []>} : vector<352x32xf32>, vector<32x8xf32>, vector<352x8xf32> -> vector<352x8xf32>
    %199 = arith.index_cast %arg0 : i32 to index
    %c0_142 = arith.constant 0 : index
    %200 = vector.load %arg3[%199, %c0_142] : memref<2x8xf32, #tpu.memory_space<vmem>>, vector<1x8xf32>
    %201 = vector.broadcast %200 : vector<1x8xf32> to vector<352x8xf32>
    %202 = arith.addf %198, %201 : vector<352x8xf32>
    %203 = vector.extract_strided_slice %2 {offsets = [4, 0], sizes = [1, 8], strides = [1, 1]} : vector<5x8xf32> to vector<1x8xf32>
    %204 = vector.broadcast %203 : vector<1x8xf32> to vector<352x8xf32>
    %205 = arith.mulf %202, %204 : vector<352x8xf32>
    %206 = vector.extract_strided_slice %3 {offsets = [4, 0], sizes = [1, 8], strides = [1, 1]} : vector<5x8xf32> to vector<1x8xf32>
    %207 = vector.broadcast %206 : vector<1x8xf32> to vector<352x8xf32>
    %208 = arith.addf %205, %207 : vector<352x8xf32>
    %cst_143 = arith.constant 0.000000e+00 : f32
    %209 = vector.broadcast %cst_143 : f32 to vector<352x8xf32>
    %210 = arith.maximumf %208, %209 : vector<352x8xf32>
    %211 = math.roundeven %210 : vector<352x8xf32>
    %c0_144 = arith.constant 0 : index
    %c0_145 = arith.constant 0 : index
    %c0_146 = arith.constant 0 : index
    %212 = vector.load %arg9[%c0_144, %c0_145, %c0_146] : memref<1x352x8xf32, #tpu.memory_space<vmem>>, vector<1x352x8xf32>
    %213 = vector.shape_cast %212 : vector<1x352x8xf32> to vector<352x8xf32>
    %214 = vector.shape_cast %211 : vector<352x8xf32> to vector<1x352x8xf32>
    tpu.vector_store %arg9[%c0_144, %c0_145, %c0_146], %214 {strides = array<i32>} : memref<1x352x8xf32, #tpu.memory_space<vmem>>, vector<1x352x8xf32>,
    return
  }
  func.func @transform_0(%arg0: i32, %arg1: i32) -> (i32, i32, i32) {
    %c0_i32 = arith.constant 0 : i32
    %c0_i32_0 = arith.constant 0 : i32
    %c0_i32_1 = arith.constant 0 : i32
    return %arg0, %c0_i32, %c0_i32_0 : i32, i32, i32
  }
  func.func @transform_1(%arg0: i32, %arg1: i32) -> (i32, i32) {
    %c0_i32 = arith.constant 0 : i32
    %c0_i32_0 = arith.constant 0 : i32
    %c0_i32_1 = arith.constant 0 : i32
    return %c0_i32, %c0_i32_0 : i32, i32
  }
  func.func @transform_2(%arg0: i32, %arg1: i32) -> (i32, i32) {
    %c0_i32 = arith.constant 0 : i32
    %c0_i32_0 = arith.constant 0 : i32
    %c0_i32_1 = arith.constant 0 : i32
    return %c0_i32, %c0_i32_0 : i32, i32
  }
  func.func @transform_3(%arg0: i32, %arg1: i32) -> (i32, i32, i32) {
    %c0_i32 = arith.constant 0 : i32
    %c0_i32_0 = arith.constant 0 : i32
    %c0_i32_1 = arith.constant 0 : i32
    %c0_i32_2 = arith.constant 0 : i32
    return %c0_i32, %c0_i32_0, %c0_i32_1 : i32, i32, i32
  }
  func.func @transform_4(%arg0: i32, %arg1: i32) -> (i32, i32) {
    %c0_i32 = arith.constant 0 : i32
    %c0_i32_0 = arith.constant 0 : i32
    %c0_i32_1 = arith.constant 0 : i32
    return %c0_i32, %c0_i32_0 : i32, i32
  }
  func.func @transform_5(%arg0: i32, %arg1: i32) -> (i32, i32) {
    %c0_i32 = arith.constant 0 : i32
    %c0_i32_0 = arith.constant 0 : i32
    %c0_i32_1 = arith.constant 0 : i32
    return %c0_i32, %c0_i32_0 : i32, i32
  }
  func.func @transform_6(%arg0: i32, %arg1: i32) -> (i32, i32) {
    %c0_i32 = arith.constant 0 : i32
    %c0_i32_0 = arith.constant 0 : i32
    %c0_i32_1 = arith.constant 0 : i32
    return %c0_i32, %c0_i32_0 : i32, i32
  }
  func.func @transform_7(%arg0: i32, %arg1: i32) -> (i32, i32, i32) {
    %c0_i32 = arith.constant 0 : i32
    %c0_i32_0 = arith.constant 0 : i32
    return %arg0, %arg1, %c0_i32 : i32, i32, i32
  }
}

</mosaic_0001>

<llo_original>
// kernel: tpu_custom_call.1
$region0: #{tpu_custom_call.1}
  #allocation0 [shape = 'u32[]', space=smem, size = 0x4, offset = 0x4, fixed_abs, tag = 'smem constant byte address 0x4 - core index']
  #allocation1 [shape = 'u32[72,128]{1,0:T(1,128)}', space=vmem, size = 0x9000, scoped, tag = 'internal scratch']
  #allocation2 [shape = 'f32[352,36]{1,0:T(8,128)}', space=vmem, size = 0x2c000, scoped, tag = 'scratch operand']
  #allocation3 [shape = 'f32[352,32]{1,0:T(8,128)}', space=vmem, size = 0x2c000, scoped, tag = 'scratch operand']
  %s0 = inlined_call_operand.vmem [shape: f32[2,572,4], index: 0, kind: input, shape index: {}]
  %s1 = inlined_call_operand.vmem [shape: f32[2,8], index: 1, kind: input, shape index: {}]
  %s2 = inlined_call_operand.vmem [shape: f32[4,8], index: 2, kind: input, shape index: {}]
  %s3 = inlined_call_operand.vmem [shape: f32[3,36,8], index: 3, kind: input, shape index: {}]
  %s4 = inlined_call_operand.vmem [shape: f32[32,8], index: 4, kind: input, shape index: {}]
  %s5 = inlined_call_operand.vmem [shape: f32[5,8], index: 5, kind: input, shape index: {}]
  %s6 = inlined_call_operand.vmem [shape: f32[5,8], index: 6, kind: input, shape index: {}]
  %s7 = inlined_call_operand.vmem [shape: f32[2,352,8], index: 7, kind: output, shape index: {}]
  %s8 = sld [smem:[#allocation0]]
  $region61: #{tpu_custom_call.1} parent=0
    _
  %s10 = ssub.s32 1, %s8
  %s11 = scalar_select 0, %s10, %s8
  loop: start=0, step=1, limit=4
  $region2: #{tpu_custom_call.1} parent=0 // loop_pre_header
    _
  $region3: #{tpu_custom_call.1} parent=0 // loop_header
    %s13 = sphi 0, %s17
    %p14 = scmp.ge.s32.totalorder %s13, 4
    %s20 = sphi 0, %s32
    %s21 = sphi 0, %s28
    %s22 = sphi 0, %s20
    %s23 = sphi 0, %s21
    %s24 = sphi 0, %s22
    %s25 = sphi 0, %s23
    %s35 = sphi 0, %s37
    %s38 = sphi 0, %s35
    %s39 = sphi 0, %s38
    %s55 = sphi 0, %s39
    %s59 = sphi 0, %s59
    %s61 = sphi 0, %s59
    %s62 = sphi 0, %s61
    %s76 = sphi 0, %s62
    %s80 = sphi 0, %s80
    %s82 = sphi 0, %s80
    %s83 = sphi 0, %s82
    %s97 = sphi 0, %s83
    %s101 = sphi 0, %s101
    %s103 = sphi 0, %s101
    %s104 = sphi 0, %s103
    %s118 = sphi 0, %s104
    %s122 = sphi 0, %s122
    %s124 = sphi 0, %s122
    %s125 = sphi 0, %s124
    %s139 = sphi 0, %s125
    %s143 = sphi 0, %s143
    %s145 = sphi 0, %s143
    %s146 = sphi 0, %s145
    %s160 = sphi 0, %s146
    %s164 = sphi 0, %s164
    %s166 = sphi 0, %s164
    %s167 = sphi 0, %s166
    %s181 = sphi 0, %s167
    %s189 = sphi 0, %s191
    %s192 = sphi 0, %s189
    %s193 = sphi 0, %s192
    %s209 = sphi 0, %s193
  $region4: #{tpu_custom_call.1} parent=0 // loop_header_branch
    %16 = sbr.rel (%p14) target = $region8
  $region5: #{tpu_custom_call.1} parent=0 // loop_body
    %s18 = ssub.s32 %s13, 1
    %s19 = ssub.s32 %s13, 2
    %s26 = sadd.s32 1, %s21
    %p27 = scmp.ge.s32.totalorder %s26, 1
    %s28 = scalar_select %p27, 0, %s26
    %s29 = sadd.s32 1, %s20
    %s30 = scalar_select %p27, %s29, %s20
    %p31 = scmp.ge.s32.totalorder %s30, 2
    %s32 = scalar_select %p31, 0, %s30
    %s33 = ssub.s32 %s20, %s32
    %p34 = scmp.eq.s32.totalorder %s33, 0
    %s36 = sadd.s32 %s35, 1
    %s37 = scalar_select %p34, %s35, %s36
    %p40 = pneg %p34
    %p41 = scmp.eq.s32.totalorder %s13, 1
    %p42 = por %p40, %p41
    %p43 = scmp.ne.s32.totalorder %s35, %s38
    %p44 = scmp.eq.s32.totalorder %s13, 0
    %p45 = por %p43, %p44
    %p46 = scmp.ne.s32.totalorder %s35, %s38
    %p47 = scmp.eq.s32.totalorder %s18, 1
    %p48 = por %p46, %p47
    %p49 = scmp.ne.s32.totalorder %s38, %s39
    %p50 = scmp.eq.s32.totalorder %s18, 0
    %p51 = por %p49, %p50
    %p52 = scmp.ne.s32.totalorder %s38, %s39
    %p53 = scmp.eq.s32.totalorder %s19, 1
    %p54 = por %p52, %p53
    %p56 = scmp.ne.s32.totalorder %s39, %s55
    %p57 = scmp.eq.s32.totalorder %s19, 0
    %p58 = por %p56, %p57
    %s60 = sadd.s32 %s59, 1
    %p63 = scmp.eq.s32.totalorder %s13, 1
    %p64 = scmp.ne.s32.totalorder %s59, %s61
    %p65 = scmp.eq.s32.totalorder %s13, 0
    %p66 = por %p64, %p65
    %p67 = scmp.ne.s32.totalorder %s59, %s61
    %p68 = scmp.eq.s32.totalorder %s18, 1
    %p69 = por %p67, %p68
    %p70 = scmp.ne.s32.totalorder %s61, %s62
    %p71 = scmp.eq.s32.totalorder %s18, 0
    %p72 = por %p70, %p71
    %p73 = scmp.ne.s32.totalorder %s61, %s62
    %p74 = scmp.eq.s32.totalorder %s19, 1
    %p75 = por %p73, %p74
    %p77 = scmp.ne.s32.totalorder %s62, %s76
    %p78 = scmp.eq.s32.totalorder %s19, 0
    %p79 = por %p77, %p78
    %s81 = sadd.s32 %s80, 1
    %p84 = scmp.eq.s32.totalorder %s13, 1
    %p85 = scmp.ne.s32.totalorder %s80, %s82
    %p86 = scmp.eq.s32.totalorder %s13, 0
    %p87 = por %p85, %p86
    %p88 = scmp.ne.s32.totalorder %s80, %s82
    %p89 = scmp.eq.s32.totalorder %s18, 1
    %p90 = por %p88, %p89
    %p91 = scmp.ne.s32.totalorder %s82, %s83
    %p92 = scmp.eq.s32.totalorder %s18, 0
    %p93 = por %p91, %p92
    %p94 = scmp.ne.s32.totalorder %s82, %s83
    %p95 = scmp.eq.s32.totalorder %s19, 1
    %p96 = por %p94, %p95
    %p98 = scmp.ne.s32.totalorder %s83, %s97
    %p99 = scmp.eq.s32.totalorder %s19, 0
    %p100 = por %p98, %p99
    %s102 = sadd.s32 %s101, 1
    %p105 = scmp.eq.s32.totalorder %s13, 1
    %p106 = scmp.ne.s32.totalorder %s101, %s103
    %p107 = scmp.eq.s32.totalorder %s13, 0
    %p108 = por %p106, %p107
    %p109 = scmp.ne.s32.totalorder %s101, %s103
    %p110 = scmp.eq.s32.totalorder %s18, 1
    %p111 = por %p109, %p110
    %p112 = scmp.ne.s32.totalorder %s103, %s104
    %p113 = scmp.eq.s32.totalorder %s18, 0
    %p114 = por %p112, %p113
    %p115 = scmp.ne.s32.totalorder %s103, %s104
    %p116 = scmp.eq.s32.totalorder %s19, 1
    %p117 = por %p115, %p116
    %p119 = scmp.ne.s32.totalorder %s104, %s118
    %p120 = scmp.eq.s32.totalorder %s19, 0
    %p121 = por %p119, %p120
    %s123 = sadd.s32 %s122, 1
    %p126 = scmp.eq.s32.totalorder %s13, 1
    %p127 = scmp.ne.s32.totalorder %s122, %s124
    %p128 = scmp.eq.s32.totalorder %s13, 0
    %p129 = por %p127, %p128
    %p130 = scmp.ne.s32.totalorder %s122, %s124
    %p131 = scmp.eq.s32.totalorder %s18, 1
    %p132 = por %p130, %p131
    %p133 = scmp.ne.s32.totalorder %s124, %s125
    %p134 = scmp.eq.s32.totalorder %s18, 0
    %p135 = por %p133, %p134
    %p136 = scmp.ne.s32.totalorder %s124, %s125
    %p137 = scmp.eq.s32.totalorder %s19, 1
    %p138 = por %p136, %p137
    %p140 = scmp.ne.s32.totalorder %s125, %s139
    %p141 = scmp.eq.s32.totalorder %s19, 0
    %p142 = por %p140, %p141
    %s144 = sadd.s32 %s143, 1
    %p147 = scmp.eq.s32.totalorder %s13, 1
    %p148 = scmp.ne.s32.totalorder %s143, %s145
    %p149 = scmp.eq.s32.totalorder %s13, 0
    %p150 = por %p148, %p149
    %p151 = scmp.ne.s32.totalorder %s143, %s145
    %p152 = scmp.eq.s32.totalorder %s18, 1
    %p153 = por %p151, %p152
    %p154 = scmp.ne.s32.totalorder %s145, %s146
    %p155 = scmp.eq.s32.totalorder %s18, 0
    %p156 = por %p154, %p155
    %p157 = scmp.ne.s32.totalorder %s145, %s146
    %p158 = scmp.eq.s32.totalorder %s19, 1
    %p159 = por %p157, %p158
    %p161 = scmp.ne.s32.totalorder %s146, %s160
    %p162 = scmp.eq.s32.totalorder %s19, 0
    %p163 = por %p161, %p162
    %s165 = sadd.s32 %s164, 1
    %p168 = scmp.eq.s32.totalorder %s13, 1
    %p169 = scmp.ne.s32.totalorder %s164, %s166
    %p170 = scmp.eq.s32.totalorder %s13, 0
    %p171 = por %p169, %p170
    %p172 = scmp.ne.s32.totalorder %s164, %s166
    %p173 = scmp.eq.s32.totalorder %s18, 1
    %p174 = por %p172, %p173
    %p175 = scmp.ne.s32.totalorder %s166, %s167
    %p176 = scmp.eq.s32.totalorder %s18, 0
    %p177 = por %p175, %p176
    %p178 = scmp.ne.s32.totalorder %s166, %s167
    %p179 = scmp.eq.s32.totalorder %s19, 1
    %p180 = por %p178, %p179
    %p182 = scmp.ne.s32.totalorder %s167, %s181
    %p183 = scmp.eq.s32.totalorder %s19, 0
    %p184 = por %p182, %p183
    %s185 = ssub.s32 %s20, %s32
    %s186 = ssub.s32 %s21, %s28
    %s187 = sor.u32 %s185, %s186
    %p188 = scmp.eq.s32.totalorder %s187, 0
    %s190 = sadd.s32 %s189, 1
    %s191 = scalar_select %p188, %s189, %s190
    %p194 = pneg %p188
    %p195 = scmp.eq.s32.totalorder %s13, 1
    %p196 = por %p194, %p195
    %p197 = scmp.ne.s32.totalorder %s189, %s192
    %p198 = scmp.eq.s32.totalorder %s13, 0
    %p199 = por %p197, %p198
    %p200 = scmp.ne.s32.totalorder %s189, %s192
    %p201 = scmp.eq.s32.totalorder %s18, 1
    %p202 = por %p200, %p201
    %p203 = scmp.ne.s32.totalorder %s192, %s193
    %p204 = scmp.eq.s32.totalorder %s18, 0
    %p205 = por %p203, %p204
    %p206 = scmp.ne.s32.totalorder %s192, %s193
    %p207 = scmp.eq.s32.totalorder %s19, 1
    %p208 = por %p206, %p207
    %p210 = scmp.ne.s32.totalorder %s193, %s209
    %p211 = scmp.eq.s32.totalorder %s19, 0
    %p212 = por %p210, %p211
    %p213 = scmp.le.s32.totalorder 1, %s13
    %p214 = scmp.lt.s32.totalorder %s13, 3
    %p215 = pnand %p213, %p214
    %p216 = pneg %p215
    // Predicated region
    $region9: #{tpu_custom_call.1} parent=5 // pred_check
      _
    $region10: #{tpu_custom_call.1} parent=5 // pred_check_branch
      %218 = sbr.rel (%p215) target = $region12
    $region11: #{tpu_custom_call.1} parent=5 // pred_region
      %s219 = ssub.s32 %s13, 1
      // Predicated region
      $region13: #{tpu_custom_call.1} parent=11 // pred_check
        %p220 = pneg %p72
      $region14: #{tpu_custom_call.1} parent=11 // pred_check_branch
        %222 = sbr.rel (%p220) target = $region16
      $region15: #{tpu_custom_call.1} parent=11 // pred_region
        _
      $region16: #{tpu_custom_call.1} parent=11 // pred_fallthru
        _
      // Predicated region
      $region17: #{tpu_custom_call.1} parent=11 // pred_check
        %p223 = pneg %p93
      $region18: #{tpu_custom_call.1} parent=11 // pred_check_branch
        %225 = sbr.rel (%p223) target = $region20
      $region19: #{tpu_custom_call.1} parent=11 // pred_region
        _
      $region20: #{tpu_custom_call.1} parent=11 // pred_fallthru
        _
      // Predicated region
      $region21: #{tpu_custom_call.1} parent=11 // pred_check
        %p226 = pneg %p114
      $region22: #{tpu_custom_call.1} parent=11 // pred_check_branch
        %228 = sbr.rel (%p226) target = $region24
      $region23: #{tpu_custom_call.1} parent=11 // pred_region
        _
      $region24: #{tpu_custom_call.1} parent=11 // pred_fallthru
        _
      // Predicated region
      $region25: #{tpu_custom_call.1} parent=11 // pred_check
        %p229 = pneg %p135
      $region26: #{tpu_custom_call.1} parent=11 // pred_check_branch
        %231 = sbr.rel (%p229) target = $region28
      $region27: #{tpu_custom_call.1} parent=11 // pred_region
        _
      $region28: #{tpu_custom_call.1} parent=11 // pred_fallthru
        _
      // Predicated region
      $region29: #{tpu_custom_call.1} parent=11 // pred_check
        %p232 = pneg %p156
      $region30: #{tpu_custom_call.1} parent=11 // pred_check_branch
        %234 = sbr.rel (%p232) target = $region32
      $region31: #{tpu_custom_call.1} parent=11 // pred_region
        _
      $region32: #{tpu_custom_call.1} parent=11 // pred_fallthru
        _
      // Predicated region
      $region33: #{tpu_custom_call.1} parent=11 // pred_check
        %p235 = pneg %p177
      $region34: #{tpu_custom_call.1} parent=11 // pred_check_branch
        %237 = sbr.rel (%p235) target = $region36
      $region35: #{tpu_custom_call.1} parent=11 // pred_region
        _
      $region36: #{tpu_custom_call.1} parent=11 // pred_fallthru
        _
    $region12: #{tpu_custom_call.1} parent=5 // pred_fallthru
      _
    %p238 = scmp.lt.s32.totalorder %s13, 2
    // Predicated region
    $region37: #{tpu_custom_call.1} parent=5 // pred_check
      %p239 = pneg %p238
    $region38: #{tpu_custom_call.1} parent=5 // pred_check_branch
      %241 = sbr.rel (%p239) target = $region40
    $region39: #{tpu_custom_call.1} parent=5 // pred_region
      // Predicated region
      $region41: #{tpu_custom_call.1} parent=39 // pred_check
        %p242 = pneg %p45
      $region42: #{tpu_custom_call.1} parent=39 // pred_check_branch
        %244 = sbr.rel (%p242) target = $region44
      $region43: #{tpu_custom_call.1} parent=39 // pred_region
        %p245 = scmp.lt.s32.totalorder %s20, 1
        %s246 = scalar_select %p245, %s20, 1
        %s247 = smul.addr %s246, 72
        %s248 = smul.addr %s247, 8
        %s249 = scalar_lea.vmem %s0, %s248
      $region44: #{tpu_custom_call.1} parent=39 // pred_fallthru
        _
    $region40: #{tpu_custom_call.1} parent=5 // pred_fallthru
      _
    %p250 = scmp.le.s32.totalorder 1, %s13
    %p251 = scmp.lt.s32.totalorder %s13, 3
    %p252 = pnand %p250, %p251
    %p253 = pneg %p252
    // Predicated region
    $region45: #{tpu_custom_call.1} parent=5 // pred_check
      _
    $region46: #{tpu_custom_call.1} parent=5 // pred_check_branch
      %255 = sbr.rel (%p252) target = $region48
    $region47: #{tpu_custom_call.1} parent=5 // pred_region
      %s256 = ssub.s32 %s13, 1
      %p257 = scmp.lt.s32.totalorder %s22, 1
      %s258 = scalar_select %p257, %s22, 1
      %s259 = smul.addr %s258, 72
      %s260 = smul.addr %s259, 8
      %s261 = scalar_lea.vmem %s0, %s260
      %p262 = pneg %p51
      %p263 = pneg %p48
      %p264 = pneg %p72
      %p265 = pneg %p69
      %p266 = pneg %p93
      %p267 = pneg %p90
      %p268 = pneg %p114
      %p269 = pneg %p111
      %p270 = pneg %p135
      %p271 = pneg %p132
      %p272 = pneg %p156
      %p273 = pneg %p153
      %p274 = pneg %p177
      %p275 = pneg %p174
      %p276 = pneg %p205
      %p277 = pneg %p202
      %s278 = smul.u32 44, %s23
      %p279 = scmp.lt.s32.totalorder %s22, 1
      %s280 = scalar_select %p279, %s22, 1
      %p281 = scmp.lt.s32.totalorder %s278, 43
      %s282 = scalar_select %p281, %s278, 43
      %s283 = smul.addr %s280, 44
      %s284 = sadd.s32 %s282, %s283
      %s285 = smul.addr %s284, 8
      %s286 = scalar_lea.vmem %s7, %s285
      %p287 = scmp.lt.s32.totalorder %s22, 1
      %s288 = scalar_select %p287, %s22, 1
      %s289 = smul.addr %s288, 72
      %s290 = smul.addr %s289, 8
      %s291 = scalar_lea.vmem %s0, %s290
      %s292 = smul.u32 44, %s23
      %p293 = scmp.lt.s32.totalorder %s22, 1
      %s294 = scalar_select %p293, %s22, 1
      %p295 = scmp.lt.s32.totalorder %s292, 43
      %s296 = scalar_select %p295, %s292, 43
      %s297 = smul.addr %s294, 44
      %s298 = sadd.s32 %s296, %s297
      %s299 = smul.addr %s298, 8
      %s300 = scalar_lea.vmem %s7, %s299
      %s301 = smul.u32 44, %s23
      %s302 = smul.u32 %s23, 352
      %s303 = sadd.s32 %s302, 132
      %v304 = vld [vmem:[%s5] sm:$0x1f]
      %v305 = vld [vmem:[%s6] sm:$0x1f]
      %s306 = scalar_lea.vmem %s291, %s303
      %v307 = vld [vmem:[%s306] sm:$0xff]
      %v308 = vld [vmem:[%s306 + $0x8] sm:$0xff]
      %v309 = vld [vmem:[%s306 + $0x10] sm:$0xff]
      %v310 = vld [vmem:[%s306 + $0x18] sm:$0xff]
      %v311 = vld [vmem:[%s306 + $0x20] sm:$0xff]
      %v312 = vld [vmem:[%s306 + $0x28] sm:$0xff]
      %v313 = vld [vmem:[%s306 + $0x30] sm:$0xff]
      %v314 = vld [vmem:[%s306 + $0x38] sm:$0xff]
      %v315 = vld [vmem:[%s306 + $0x40] sm:$0xff]
      %v316 = vld [vmem:[%s306 + $0x48] sm:$0xff]
      %v317 = vld [vmem:[%s306 + $0x50] sm:$0xff]
      %v318 = vld [vmem:[%s306 + $0x58] sm:$0xff]
      %v319 = vld [vmem:[%s306 + $0x60] sm:$0xff]
      %v320 = vld [vmem:[%s306 + $0x68] sm:$0xff]
      %v321 = vld [vmem:[%s306 + $0x70] sm:$0xff]
      %v322 = vld [vmem:[%s306 + $0x78] sm:$0xff]
      %v323 = vld [vmem:[%s306 + $0x80] sm:$0xff]
      %v324 = vld [vmem:[%s306 + $0x88] sm:$0xff]
      %v325 = vld [vmem:[%s306 + $0x90] sm:$0xff]
      %v326 = vld [vmem:[%s306 + $0x98] sm:$0xff]
      %v327 = vld [vmem:[%s306 + $0xa0] sm:$0xff]
      %v328 = vld [vmem:[%s306 + $0xa8] sm:$0xff]
      %v329 = vld [vmem:[%s306 + $0xb0] sm:$0xff]
      %v330 = vld [vmem:[%s306 + $0xb8] sm:$0xff]
      %v331 = vld [vmem:[%s306 + $0xc0] sm:$0xff]
      %v332 = vld [vmem:[%s306 + $0xc8] sm:$0xff]
      %v333 = vld [vmem:[%s306 + $0xd0] sm:$0xff]
      %v334 = vld [vmem:[%s306 + $0xd8] sm:$0xff]
      %v335 = vld [vmem:[%s306 + $0xe0] sm:$0xff]
      %v336 = vld [vmem:[%s306 + $0xe8] sm:$0xff]
      %v337 = vld [vmem:[%s306 + $0xf0] sm:$0xff]
      %v338 = vld [vmem:[%s306 + $0xf8] sm:$0xff]
      %v339 = vld [vmem:[%s306 + $0x100] sm:$0xff]
      %v340 = vld [vmem:[%s306 + $0x108] sm:$0xff]
      %v341 = vld [vmem:[%s306 + $0x110] sm:$0xff]
      %v342 = vld [vmem:[%s306 + $0x118] sm:$0xff]
      %v343 = vld [vmem:[%s306 + $0x120] sm:$0xff]
      %v344 = vld [vmem:[%s306 + $0x128] sm:$0xff]
      %v345 = vld [vmem:[%s306 + $0x130] sm:$0xff]
      %v346 = vld [vmem:[%s306 + $0x138] sm:$0xff]
      %v347 = vld [vmem:[%s306 + $0x140] sm:$0xff]
      %v348 = vld [vmem:[%s306 + $0x148] sm:$0xff]
      %v349 = vld [vmem:[%s306 + $0x150] sm:$0xff]
      %v350 = vld [vmem:[%s306 + $0x158] sm:$0xff]
      %v351 = vld [vmem:[%s2] sm:$0xf]
      %vm352 = vcmask 31744
      %v354 = vsel %vm352, %v307, 0
      %v357 = vsel %vm352, %v308, 0
      %v360 = vsel %vm352, %v309, 0
      %v363 = vsel %vm352, %v310, 0
      %v366 = vsel %vm352, %v311, 0
      %v369 = vsel %vm352, %v312, 0
      %v372 = vsel %vm352, %v313, 0
      %v375 = vsel %vm352, %v314, 0
      %v378 = vsel %vm352, %v315, 0
      %v381 = vsel %vm352, %v316, 0
      %v384 = vsel %vm352, %v317, 0
      %v387 = vsel %vm352, %v318, 0
      %v390 = vsel %vm352, %v319, 0
      %v393 = vsel %vm352, %v320, 0
      %v396 = vsel %vm352, %v321, 0
      %v399 = vsel %vm352, %v322, 0
      %v402 = vsel %vm352, %v323, 0
      %v405 = vsel %vm352, %v324, 0
      %v408 = vsel %vm352, %v325, 0
      %v411 = vsel %vm352, %v326, 0
      %v414 = vsel %vm352, %v327, 0
      %v417 = vsel %vm352, %v328, 0
      %v420 = vsel %vm352, %v329, 0
      %v423 = vsel %vm352, %v330, 0
      %v426 = vsel %vm352, %v331, 0
      %v429 = vsel %vm352, %v332, 0
      %v432 = vsel %vm352, %v333, 0
      %v435 = vsel %vm352, %v334, 0
      %v438 = vsel %vm352, %v335, 0
      %v441 = vsel %vm352, %v336, 0
      %v444 = vsel %vm352, %v337, 0
      %v447 = vsel %vm352, %v338, 0
      %v450 = vsel %vm352, %v339, 0
      %v453 = vsel %vm352, %v340, 0
      %v456 = vsel %vm352, %v341, 0
      %v459 = vsel %vm352, %v342, 0
      %v462 = vsel %vm352, %v343, 0
      %v465 = vsel %vm352, %v344, 0
      %v468 = vsel %vm352, %v345, 0
      %v471 = vsel %vm352, %v346, 0
      %v474 = vsel %vm352, %v347, 0
      %v477 = vsel %vm352, %v348, 0
      %v480 = vsel %vm352, %v349, 0
      %v483 = vsel %vm352, %v350, 0
      %vm485 = vcmask 1043456
      %v487 = vsel %vm485, %v351, 0
      %489 = vmatpush.msra.mxu0 0.0
      %490 = vmatpush.msra.mxu0 0.0
      %491 = vmatpush.msra.mxu0 0.0
      %492 = vmatpush.msra.mxu0 0.0
      %493 = vmatpush.msra.mxu0 0.0
      %494 = vmatpush.msra.mxu0 0.0
      %495 = vmatpush.msra.mxu0 0.0
      %496 = vmatpush.msra.mxu0 0.0
      %497 = vmatpush.msra.mxu0 0.0
      %498 = vmatpush.msra.mxu0 0.0
      %499 = vmatpush.msra.mxu0 0.0
      %500 = vmatpush.msra.mxu0 0.0
      %501 = vmatpush.msra.mxu0 0.0
      %502 = vmatpush.msra.mxu0 0.0
      %503 = vmatpush.msra.mxu0 0.0
      %504 = vmatpush.msra.mxu0 %v487
      %505 = vmatmul.f32.gmra.mxu0 %v354
      %v506 = vpop.f32.mrf.mxu0
      %v507 = vadd.f32 0.0, %v506
      %508 = vmatmul.f32.gmra.mxu0 %v357
      %v509 = vpop.f32.mrf.mxu0
      %v510 = vadd.f32 0.0, %v509
      %511 = vmatmul.f32.gmra.mxu0 %v360
      %v512 = vpop.f32.mrf.mxu0
      %v513 = vadd.f32 0.0, %v512
      %514 = vmatmul.f32.gmra.mxu0 %v363
      %v515 = vpop.f32.mrf.mxu0
      %v516 = vadd.f32 0.0, %v515
      %517 = vmatmul.f32.gmra.mxu0 %v366
      %v518 = vpop.f32.mrf.mxu0
      %v519 = vadd.f32 0.0, %v518
      %520 = vmatmul.f32.gmra.mxu0 %v369
      %v521 = vpop.f32.mrf.mxu0
      %v522 = vadd.f32 0.0, %v521
      %523 = vmatmul.f32.gmra.mxu0 %v372
      %v524 = vpop.f32.mrf.mxu0
      %v525 = vadd.f32 0.0, %v524
      %526 = vmatmul.f32.gmra.mxu0 %v375
      %v527 = vpop.f32.mrf.mxu0
      %v528 = vadd.f32 0.0, %v527
      %529 = vmatmul.f32.gmra.mxu0 %v378
      %v530 = vpop.f32.mrf.mxu0
      %v531 = vadd.f32 0.0, %v530
      %532 = vmatmul.f32.gmra.mxu0 %v381
      %v533 = vpop.f32.mrf.mxu0
      %v534 = vadd.f32 0.0, %v533
      %535 = vmatmul.f32.gmra.mxu0 %v384
      %v536 = vpop.f32.mrf.mxu0
      %v537 = vadd.f32 0.0, %v536
      %538 = vmatmul.f32.gmra.mxu0 %v387
      %v539 = vpop.f32.mrf.mxu0
      %v540 = vadd.f32 0.0, %v539
      %541 = vmatmul.f32.gmra.mxu0 %v390
      %v542 = vpop.f32.mrf.mxu0
      %v543 = vadd.f32 0.0, %v542
      %544 = vmatmul.f32.gmra.mxu0 %v393
      %v545 = vpop.f32.mrf.mxu0
      %v546 = vadd.f32 0.0, %v545
      %547 = vmatmul.f32.gmra.mxu0 %v396
      %v548 = vpop.f32.mrf.mxu0
      %v549 = vadd.f32 0.0, %v548
      %550 = vmatmul.f32.gmra.mxu0 %v399
      %v551 = vpop.f32.mrf.mxu0
      %v552 = vadd.f32 0.0, %v551
      %553 = vmatmul.f32.gmra.mxu0 %v402
      %v554 = vpop.f32.mrf.mxu0
      %v555 = vadd.f32 0.0, %v554
      %556 = vmatmul.f32.gmra.mxu0 %v405
      %v557 = vpop.f32.mrf.mxu0
      %v558 = vadd.f32 0.0, %v557
      %559 = vmatmul.f32.gmra.mxu0 %v408
      %v560 = vpop.f32.mrf.mxu0
      %v561 = vadd.f32 0.0, %v560
      %562 = vmatmul.f32.gmra.mxu0 %v411
      %v563 = vpop.f32.mrf.mxu0
      %v564 = vadd.f32 0.0, %v563
      %565 = vmatmul.f32.gmra.mxu0 %v414
      %v566 = vpop.f32.mrf.mxu0
      %v567 = vadd.f32 0.0, %v566
      %568 = vmatmul.f32.gmra.mxu0 %v417
      %v569 = vpop.f32.mrf.mxu0
      %v570 = vadd.f32 0.0, %v569
      %571 = vmatmul.f32.gmra.mxu0 %v420
      %v572 = vpop.f32.mrf.mxu0
      %v573 = vadd.f32 0.0, %v572
      %574 = vmatmul.f32.gmra.mxu0 %v423
      %v575 = vpop.f32.mrf.mxu0
      %v576 = vadd.f32 0.0, %v575
      %577 = vmatmul.f32.gmra.mxu0 %v426
      %v578 = vpop.f32.mrf.mxu0
      %v579 = vadd.f32 0.0, %v578
      %580 = vmatmul.f32.gmra.mxu0 %v429
      %v581 = vpop.f32.mrf.mxu0
      %v582 = vadd.f32 0.0, %v581
      %583 = vmatmul.f32.gmra.mxu0 %v432
      %v584 = vpop.f32.mrf.mxu0
      %v585 = vadd.f32 0.0, %v584
      %586 = vmatmul.f32.gmra.mxu0 %v435
      %v587 = vpop.f32.mrf.mxu0
      %v588 = vadd.f32 0.0, %v587
      %589 = vmatmul.f32.gmra.mxu0 %v438
      %v590 = vpop.f32.mrf.mxu0
      %v591 = vadd.f32 0.0, %v590
      %592 = vmatmul.f32.gmra.mxu0 %v441
      %v593 = vpop.f32.mrf.mxu0
      %v594 = vadd.f32 0.0, %v593
      %595 = vmatmul.f32.gmra.mxu0 %v444
      %v596 = vpop.f32.mrf.mxu0
      %v597 = vadd.f32 0.0, %v596
      %598 = vmatmul.f32.gmra.mxu0 %v447
      %v599 = vpop.f32.mrf.mxu0
      %v600 = vadd.f32 0.0, %v599
      %601 = vmatmul.f32.gmra.mxu0 %v450
      %v602 = vpop.f32.mrf.mxu0
      %v603 = vadd.f32 0.0, %v602
      %604 = vmatmul.f32.gmra.mxu0 %v453
      %v605 = vpop.f32.mrf.mxu0
      %v606 = vadd.f32 0.0, %v605
      %607 = vmatmul.f32.gmra.mxu0 %v456
      %v608 = vpop.f32.mrf.mxu0
      %v609 = vadd.f32 0.0, %v608
      %610 = vmatmul.f32.gmra.mxu0 %v459
      %v611 = vpop.f32.mrf.mxu0
      %v612 = vadd.f32 0.0, %v611
      %613 = vmatmul.f32.gmra.mxu0 %v462
      %v614 = vpop.f32.mrf.mxu0
      %v615 = vadd.f32 0.0, %v614
      %616 = vmatmul.f32.gmra.mxu0 %v465
      %v617 = vpop.f32.mrf.mxu0
      %v618 = vadd.f32 0.0, %v617
      %619 = vmatmul.f32.gmra.mxu0 %v468
      %v620 = vpop.f32.mrf.mxu0
      %v621 = vadd.f32 0.0, %v620
      %622 = vmatmul.f32.gmra.mxu0 %v471
      %v623 = vpop.f32.mrf.mxu0
      %v624 = vadd.f32 0.0, %v623
      %625 = vmatmul.f32.gmra.mxu0 %v474
      %v626 = vpop.f32.mrf.mxu0
      %v627 = vadd.f32 0.0, %v626
      %628 = vmatmul.f32.gmra.mxu0 %v477
      %v629 = vpop.f32.mrf.mxu0
      %v630 = vadd.f32 0.0, %v629
      %631 = vmatmul.f32.gmra.mxu0 %v480
      %v632 = vpop.f32.mrf.mxu0
      %v633 = vadd.f32 0.0, %v632
      %634 = vmatmul.f32.gmra.mxu0 %v483
      %v635 = vpop.f32.mrf.mxu0
      %v636 = vadd.f32 0.0, %v635
      %637 = vdwg.mxu0
      %v638 = vperm.slane %v304, 0
      %v639 = vmul.f32 %v507, %v638
      %v640 = vmul.f32 %v510, %v638
      %v641 = vmul.f32 %v513, %v638
      %v642 = vmul.f32 %v516, %v638
      %v643 = vmul.f32 %v519, %v638
      %v644 = vmul.f32 %v522, %v638
      %v645 = vmul.f32 %v525, %v638
      %v646 = vmul.f32 %v528, %v638
      %v647 = vmul.f32 %v531, %v638
      %v648 = vmul.f32 %v534, %v638
      %v649 = vmul.f32 %v537, %v638
      %v650 = vmul.f32 %v540, %v638
      %v651 = vmul.f32 %v543, %v638
      %v652 = vmul.f32 %v546, %v638
      %v653 = vmul.f32 %v549, %v638
      %v654 = vmul.f32 %v552, %v638
      %v655 = vmul.f32 %v555, %v638
      %v656 = vmul.f32 %v558, %v638
      %v657 = vmul.f32 %v561, %v638
      %v658 = vmul.f32 %v564, %v638
      %v659 = vmul.f32 %v567, %v638
      %v660 = vmul.f32 %v570, %v638
      %v661 = vmul.f32 %v573, %v638
      %v662 = vmul.f32 %v576, %v638
      %v663 = vmul.f32 %v579, %v638
      %v664 = vmul.f32 %v582, %v638
      %v665 = vmul.f32 %v585, %v638
      %v666 = vmul.f32 %v588, %v638
      %v667 = vmul.f32 %v591, %v638
      %v668 = vmul.f32 %v594, %v638
      %v669 = vmul.f32 %v597, %v638
      %v670 = vmul.f32 %v600, %v638
      %v671 = vmul.f32 %v603, %v638
      %v672 = vmul.f32 %v606, %v638
      %v673 = vmul.f32 %v609, %v638
      %v674 = vmul.f32 %v612, %v638
      %v675 = vmul.f32 %v615, %v638
      %v676 = vmul.f32 %v618, %v638
      %v677 = vmul.f32 %v621, %v638
      %v678 = vmul.f32 %v624, %v638
      %v679 = vmul.f32 %v627, %v638
      %v680 = vmul.f32 %v630, %v638
      %v681 = vmul.f32 %v633, %v638
      %v682 = vmul.f32 %v636, %v638
      %v683 = vperm.slane %v305, 0
      %v684 = vadd.f32 %v639, %v683
      %v685 = vadd.f32 %v640, %v683
      %v686 = vadd.f32 %v641, %v683
      %v687 = vadd.f32 %v642, %v683
      %v688 = vadd.f32 %v643, %v683
      %v689 = vadd.f32 %v644, %v683
      %v690 = vadd.f32 %v645, %v683
      %v691 = vadd.f32 %v646, %v683
      %v692 = vadd.f32 %v647, %v683
      %v693 = vadd.f32 %v648, %v683
      %v694 = vadd.f32 %v649, %v683
      %v695 = vadd.f32 %v650, %v683
      %v696 = vadd.f32 %v651, %v683
      %v697 = vadd.f32 %v652, %v683
      %v698 = vadd.f32 %v653, %v683
      %v699 = vadd.f32 %v654, %v683
      %v700 = vadd.f32 %v655, %v683
      %v701 = vadd.f32 %v656, %v683
      %v702 = vadd.f32 %v657, %v683
      %v703 = vadd.f32 %v658, %v683
      %v704 = vadd.f32 %v659, %v683
      %v705 = vadd.f32 %v660, %v683
      %v706 = vadd.f32 %v661, %v683
      %v707 = vadd.f32 %v662, %v683
      %v708 = vadd.f32 %v663, %v683
      %v709 = vadd.f32 %v664, %v683
      %v710 = vadd.f32 %v665, %v683
      %v711 = vadd.f32 %v666, %v683
      %v712 = vadd.f32 %v667, %v683
      %v713 = vadd.f32 %v668, %v683
      %v714 = vadd.f32 %v669, %v683
      %v715 = vadd.f32 %v670, %v683
      %v716 = vadd.f32 %v671, %v683
      %v717 = vadd.f32 %v672, %v683
      %v718 = vadd.f32 %v673, %v683
      %v719 = vadd.f32 %v674, %v683
      %v720 = vadd.f32 %v675, %v683
      %v721 = vadd.f32 %v676, %v683
      %v722 = vadd.f32 %v677, %v683
      %v723 = vadd.f32 %v678, %v683
      %v724 = vadd.f32 %v679, %v683
      %v725 = vadd.f32 %v680, %v683
      %v726 = vadd.f32 %v681, %v683
      %v727 = vadd.f32 %v682, %v683
      %v728 = vmax.f32 %v684, 0.0
      %v729 = vmax.f32 %v685, 0.0
      %v730 = vmax.f32 %v686, 0.0
      %v731 = vmax.f32 %v687, 0.0
      %v732 = vmax.f32 %v688, 0.0
      %v733 = vmax.f32 %v689, 0.0
      %v734 = vmax.f32 %v690, 0.0
      %v735 = vmax.f32 %v691, 0.0
      %v736 = vmax.f32 %v692, 0.0
      %v737 = vmax.f32 %v693, 0.0
      %v738 = vmax.f32 %v694, 0.0
      %v739 = vmax.f32 %v695, 0.0
      %v740 = vmax.f32 %v696, 0.0
      %v741 = vmax.f32 %v697, 0.0
      %v742 = vmax.f32 %v698, 0.0
      %v743 = vmax.f32 %v699, 0.0
      %v744 = vmax.f32 %v700, 0.0
      %v745 = vmax.f32 %v701, 0.0
      %v746 = vmax.f32 %v702, 0.0
      %v747 = vmax.f32 %v703, 0.0
      %v748 = vmax.f32 %v704, 0.0
      %v749 = vmax.f32 %v705, 0.0
      %v750 = vmax.f32 %v706, 0.0
      %v751 = vmax.f32 %v707, 0.0
      %v752 = vmax.f32 %v708, 0.0
      %v753 = vmax.f32 %v709, 0.0
      %v754 = vmax.f32 %v710, 0.0
      %v755 = vmax.f32 %v711, 0.0
      %v756 = vmax.f32 %v712, 0.0
      %v757 = vmax.f32 %v713, 0.0
      %v758 = vmax.f32 %v714, 0.0
      %v759 = vmax.f32 %v715, 0.0
      %v760 = vmax.f32 %v716, 0.0
      %v761 = vmax.f32 %v717, 0.0
      %v762 = vmax.f32 %v718, 0.0
      %v763 = vmax.f32 %v719, 0.0
      %v764 = vmax.f32 %v720, 0.0
      %v765 = vmax.f32 %v721, 0.0
      %v766 = vmax.f32 %v722, 0.0
      %v767 = vmax.f32 %v723, 0.0
      %v768 = vmax.f32 %v724, 0.0
      %v769 = vmax.f32 %v725, 0.0
      %v770 = vmax.f32 %v726, 0.0
      %v771 = vmax.f32 %v727, 0.0
      %v772 = vround.ne.pseudo %v728
      %v773 = vround.ne.pseudo %v729
      %v774 = vround.ne.pseudo %v730
      %v775 = vround.ne.pseudo %v731
      %v776 = vround.ne.pseudo %v732
      %v777 = vround.ne.pseudo %v733
      %v778 = vround.ne.pseudo %v734
      %v779 = vround.ne.pseudo %v735
      %v780 = vround.ne.pseudo %v736
      %v781 = vround.ne.pseudo %v737
      %v782 = vround.ne.pseudo %v738
      %v783 = vround.ne.pseudo %v739
      %v784 = vround.ne.pseudo %v740
      %v785 = vround.ne.pseudo %v741
      %v786 = vround.ne.pseudo %v742
      %v787 = vround.ne.pseudo %v743
      %v788 = vround.ne.pseudo %v744
      %v789 = vround.ne.pseudo %v745
      %v790 = vround.ne.pseudo %v746
      %v791 = vround.ne.pseudo %v747
      %v792 = vround.ne.pseudo %v748
      %v793 = vround.ne.pseudo %v749
      %v794 = vround.ne.pseudo %v750
      %v795 = vround.ne.pseudo %v751
      %v796 = vround.ne.pseudo %v752
      %v797 = vround.ne.pseudo %v753
      %v798 = vround.ne.pseudo %v754
      %v799 = vround.ne.pseudo %v755
      %v800 = vround.ne.pseudo %v756
      %v801 = vround.ne.pseudo %v757
      %v802 = vround.ne.pseudo %v758
      %v803 = vround.ne.pseudo %v759
      %v804 = vround.ne.pseudo %v760
      %v805 = vround.ne.pseudo %v761
      %v806 = vround.ne.pseudo %v762
      %v807 = vround.ne.pseudo %v763
      %v808 = vround.ne.pseudo %v764
      %v809 = vround.ne.pseudo %v765
      %v810 = vround.ne.pseudo %v766
      %v811 = vround.ne.pseudo %v767
      %v812 = vround.ne.pseudo %v768
      %v813 = vround.ne.pseudo %v769
      %v814 = vround.ne.pseudo %v770
      %v815 = vround.ne.pseudo %v771
      %vm816 = vcmask 64512
      %817 = vst.msk [vmem:[#allocation3] sm:$0xff] %vm816, %v772
      %818 = vst.msk [vmem:[#allocation3 + $0x8] sm:$0xff] %vm816, %v773
      %819 = vst.msk [vmem:[#allocation3 + $0x10] sm:$0xff] %vm816, %v774
      %820 = vst.msk [vmem:[#allocation3 + $0x18] sm:$0xff] %vm816, %v775
      %821 = vst.msk [vmem:[#allocation3 + $0x20] sm:$0xff] %vm816, %v776
      %822 = vst.msk [vmem:[#allocation3 + $0x28] sm:$0xff] %vm816, %v777
      %823 = vst.msk [vmem:[#allocation3 + $0x30] sm:$0xff] %vm816, %v778
      %824 = vst.msk [vmem:[#allocation3 + $0x38] sm:$0xff] %vm816, %v779
      %825 = vst.msk [vmem:[#allocation3 + $0x40] sm:$0xff] %vm816, %v780
      %826 = vst.msk [vmem:[#allocation3 + $0x48] sm:$0xff] %vm816, %v781
      %827 = vst.msk [vmem:[#allocation3 + $0x50] sm:$0xff] %vm816, %v782
      %828 = vst.msk [vmem:[#allocation3 + $0x58] sm:$0xff] %vm816, %v783
      %829 = vst.msk [vmem:[#allocation3 + $0x60] sm:$0xff] %vm816, %v784
      %830 = vst.msk [vmem:[#allocation3 + $0x68] sm:$0xff] %vm816, %v785
      %831 = vst.msk [vmem:[#allocation3 + $0x70] sm:$0xff] %vm816, %v786
      %832 = vst.msk [vmem:[#allocation3 + $0x78] sm:$0xff] %vm816, %v787
      %833 = vst.msk [vmem:[#allocation3 + $0x80] sm:$0xff] %vm816, %v788
      %834 = vst.msk [vmem:[#allocation3 + $0x88] sm:$0xff] %vm816, %v789
      %835 = vst.msk [vmem:[#allocation3 + $0x90] sm:$0xff] %vm816, %v790
      %836 = vst.msk [vmem:[#allocation3 + $0x98] sm:$0xff] %vm816, %v791
      %837 = vst.msk [vmem:[#allocation3 + $0xa0] sm:$0xff] %vm816, %v792
      %838 = vst.msk [vmem:[#allocation3 + $0xa8] sm:$0xff] %vm816, %v793
      %839 = vst.msk [vmem:[#allocation3 + $0xb0] sm:$0xff] %vm816, %v794
      %840 = vst.msk [vmem:[#allocation3 + $0xb8] sm:$0xff] %vm816, %v795
      %841 = vst.msk [vmem:[#allocation3 + $0xc0] sm:$0xff] %vm816, %v796
      %842 = vst.msk [vmem:[#allocation3 + $0xc8] sm:$0xff] %vm816, %v797
      %843 = vst.msk [vmem:[#allocation3 + $0xd0] sm:$0xff] %vm816, %v798
      %844 = vst.msk [vmem:[#allocation3 + $0xd8] sm:$0xff] %vm816, %v799
      %845 = vst.msk [vmem:[#allocation3 + $0xe0] sm:$0xff] %vm816, %v800
      %846 = vst.msk [vmem:[#allocation3 + $0xe8] sm:$0xff] %vm816, %v801
      %847 = vst.msk [vmem:[#allocation3 + $0xf0] sm:$0xff] %vm816, %v802
      %848 = vst.msk [vmem:[#allocation3 + $0xf8] sm:$0xff] %vm816, %v803
      %849 = vst.msk [vmem:[#allocation3 + $0x100] sm:$0xff] %vm816, %v804
      %850 = vst.msk [vmem:[#allocation3 + $0x108] sm:$0xff] %vm816, %v805
      %851 = vst.msk [vmem:[#allocation3 + $0x110] sm:$0xff] %vm816, %v806
      %852 = vst.msk [vmem:[#allocation3 + $0x118] sm:$0xff] %vm816, %v807
      %853 = vst.msk [vmem:[#allocation3 + $0x120] sm:$0xff] %vm816, %v808
      %854 = vst.msk [vmem:[#allocation3 + $0x128] sm:$0xff] %vm816, %v809
      %855 = vst.msk [vmem:[#allocation3 + $0x130] sm:$0xff] %vm816, %v810
      %856 = vst.msk [vmem:[#allocation3 + $0x138] sm:$0xff] %vm816, %v811
      %857 = vst.msk [vmem:[#allocation3 + $0x140] sm:$0xff] %vm816, %v812
      %858 = vst.msk [vmem:[#allocation3 + $0x148] sm:$0xff] %vm816, %v813
      %859 = vst.msk [vmem:[#allocation3 + $0x150] sm:$0xff] %vm816, %v814
      %860 = vst.msk [vmem:[#allocation3 + $0x158] sm:$0xff] %vm816, %v815
      %s861 = sadd.s32 %s302, 109
      %s862 = scalar_lea.vmem %s291, %s861
      %v863 = vld [vmem:[%s862] sm:$0xff]
      %v864 = vld [vmem:[%s862 + $0x8] sm:$0xff]
      %v865 = vld [vmem:[%s862 + $0x10] sm:$0xff]
      %v866 = vld [vmem:[%s862 + $0x18] sm:$0xff]
      %v867 = vld [vmem:[%s862 + $0x20] sm:$0xff]
      %v868 = vld [vmem:[%s862 + $0x28] sm:$0xff]
      %v869 = vld [vmem:[%s862 + $0x30] sm:$0xff]
      %v870 = vld [vmem:[%s862 + $0x38] sm:$0xff]
      %v871 = vld [vmem:[%s862 + $0x40] sm:$0xff]
      %v872 = vld [vmem:[%s862 + $0x48] sm:$0xff]
      %v873 = vld [vmem:[%s862 + $0x50] sm:$0xff]
      %v874 = vld [vmem:[%s862 + $0x58] sm:$0xff]
      %v875 = vld [vmem:[%s862 + $0x60] sm:$0xff]
      %v876 = vld [vmem:[%s862 + $0x68] sm:$0xff]
      %v877 = vld [vmem:[%s862 + $0x70] sm:$0xff]
      %v878 = vld [vmem:[%s862 + $0x78] sm:$0xff]
      %v879 = vld [vmem:[%s862 + $0x80] sm:$0xff]
      %v880 = vld [vmem:[%s862 + $0x88] sm:$0xff]
      %v881 = vld [vmem:[%s862 + $0x90] sm:$0xff]
      %v882 = vld [vmem:[%s862 + $0x98] sm:$0xff]
      %v883 = vld [vmem:[%s862 + $0xa0] sm:$0xff]
      %v884 = vld [vmem:[%s862 + $0xa8] sm:$0xff]
      %v885 = vld [vmem:[%s862 + $0xb0] sm:$0xff]
      %v886 = vld [vmem:[%s862 + $0xb8] sm:$0xff]
      %v887 = vld [vmem:[%s862 + $0xc0] sm:$0xff]
      %v888 = vld [vmem:[%s862 + $0xc8] sm:$0xff]
      %v889 = vld [vmem:[%s862 + $0xd0] sm:$0xff]
      %v890 = vld [vmem:[%s862 + $0xd8] sm:$0xff]
      %v891 = vld [vmem:[%s862 + $0xe0] sm:$0xff]
      %v892 = vld [vmem:[%s862 + $0xe8] sm:$0xff]
      %v893 = vld [vmem:[%s862 + $0xf0] sm:$0xff]
      %v894 = vld [vmem:[%s862 + $0xf8] sm:$0xff]
      %v895 = vld [vmem:[%s862 + $0x100] sm:$0xff]
      %v896 = vld [vmem:[%s862 + $0x108] sm:$0xff]
      %v897 = vld [vmem:[%s862 + $0x110] sm:$0xff]
      %v898 = vld [vmem:[%s862 + $0x118] sm:$0xff]
      %v899 = vld [vmem:[%s862 + $0x120] sm:$0xff]
      %v900 = vld [vmem:[%s862 + $0x128] sm:$0xff]
      %v901 = vld [vmem:[%s862 + $0x130] sm:$0xff]
      %v902 = vld [vmem:[%s862 + $0x138] sm:$0xff]
      %v903 = vld [vmem:[%s862 + $0x140] sm:$0xff]
      %v904 = vld [vmem:[%s862 + $0x148] sm:$0xff]
      %v905 = vld [vmem:[%s862 + $0x150] sm:$0xff]
      %v906 = vld [vmem:[%s862 + $0x158] sm:$0xff]
      %907 = vst.msk [vmem:[#allocation2] sm:$0xff] %vm352, %v863
      %908 = vst.msk [vmem:[#allocation2 + $0x8] sm:$0xff] %vm352, %v864
      %909 = vst.msk [vmem:[#allocation2 + $0x10] sm:$0xff] %vm352, %v865
      %910 = vst.msk [vmem:[#allocation2 + $0x18] sm:$0xff] %vm352, %v866
      %911 = vst.msk [vmem:[#allocation2 + $0x20] sm:$0xff] %vm352, %v867
      %912 = vst.msk [vmem:[#allocation2 + $0x28] sm:$0xff] %vm352, %v868
      %913 = vst.msk [vmem:[#allocation2 + $0x30] sm:$0xff] %vm352, %v869
      %914 = vst.msk [vmem:[#allocation2 + $0x38] sm:$0xff] %vm352, %v870
      %915 = vst.msk [vmem:[#allocation2 + $0x40] sm:$0xff] %vm352, %v871
      %916 = vst.msk [vmem:[#allocation2 + $0x48] sm:$0xff] %vm352, %v872
      %917 = vst.msk [vmem:[#allocation2 + $0x50] sm:$0xff] %vm352, %v873
      %918 = vst.msk [vmem:[#allocation2 + $0x58] sm:$0xff] %vm352, %v874
      %919 = vst.msk [vmem:[#allocation2 + $0x60] sm:$0xff] %vm352, %v875
      %920 = vst.msk [vmem:[#allocation2 + $0x68] sm:$0xff] %vm352, %v876
      %921 = vst.msk [vmem:[#allocation2 + $0x70] sm:$0xff] %vm352, %v877
      %922 = vst.msk [vmem:[#allocation2 + $0x78] sm:$0xff] %vm352, %v878
      %923 = vst.msk [vmem:[#allocation2 + $0x80] sm:$0xff] %vm352, %v879
      %924 = vst.msk [vmem:[#allocation2 + $0x88] sm:$0xff] %vm352, %v880
      %925 = vst.msk [vmem:[#allocation2 + $0x90] sm:$0xff] %vm352, %v881
      %926 = vst.msk [vmem:[#allocation2 + $0x98] sm:$0xff] %vm352, %v882
      %927 = vst.msk [vmem:[#allocation2 + $0xa0] sm:$0xff] %vm352, %v883
      %928 = vst.msk [vmem:[#allocation2 + $0xa8] sm:$0xff] %vm352, %v884
      %929 = vst.msk [vmem:[#allocation2 + $0xb0] sm:$0xff] %vm352, %v885
      %930 = vst.msk [vmem:[#allocation2 + $0xb8] sm:$0xff] %vm352, %v886
      %931 = vst.msk [vmem:[#allocation2 + $0xc0] sm:$0xff] %vm352, %v887
      %932 = vst.msk [vmem:[#allocation2 + $0xc8] sm:$0xff] %vm352, %v888
      %933 = vst.msk [vmem:[#allocation2 + $0xd0] sm:$0xff] %vm352, %v889
      %934 = vst.msk [vmem:[#allocation2 + $0xd8] sm:$0xff] %vm352, %v890
      %935 = vst.msk [vmem:[#allocation2 + $0xe0] sm:$0xff] %vm352, %v891
      %936 = vst.msk [vmem:[#allocation2 + $0xe8] sm:$0xff] %vm352, %v892
      %937 = vst.msk [vmem:[#allocation2 + $0xf0] sm:$0xff] %vm352, %v893
      %938 = vst.msk [vmem:[#allocation2 + $0xf8] sm:$0xff] %vm352, %v894
      %939 = vst.msk [vmem:[#allocation2 + $0x100] sm:$0xff] %vm352, %v895
      %940 = vst.msk [vmem:[#allocation2 + $0x108] sm:$0xff] %vm352, %v896
      %941 = vst.msk [vmem:[#allocation2 + $0x110] sm:$0xff] %vm352, %v897
      %942 = vst.msk [vmem:[#allocation2 + $0x118] sm:$0xff] %vm352, %v898
      %943 = vst.msk [vmem:[#allocation2 + $0x120] sm:$0xff] %vm352, %v899
      %944 = vst.msk [vmem:[#allocation2 + $0x128] sm:$0xff] %vm352, %v900
      %945 = vst.msk [vmem:[#allocation2 + $0x130] sm:$0xff] %vm352, %v901
      %946 = vst.msk [vmem:[#allocation2 + $0x138] sm:$0xff] %vm352, %v902
      %947 = vst.msk [vmem:[#allocation2 + $0x140] sm:$0xff] %vm352, %v903
      %948 = vst.msk [vmem:[#allocation2 + $0x148] sm:$0xff] %vm352, %v904
      %949 = vst.msk [vmem:[#allocation2 + $0x150] sm:$0xff] %vm352, %v905
      %950 = vst.msk [vmem:[#allocation2 + $0x158] sm:$0xff] %vm352, %v906
      %s951 = sadd.s32 %s302, 110
      %s952 = scalar_lea.vmem %s291, %s951
      %v953 = vld [vmem:[%s952] sm:$0xff]
      %v954 = vld [vmem:[%s952 + $0x8] sm:$0xff]
      %v955 = vld [vmem:[%s952 + $0x10] sm:$0xff]
      %v956 = vld [vmem:[%s952 + $0x18] sm:$0xff]
      %v957 = vld [vmem:[%s952 + $0x20] sm:$0xff]
      %v958 = vld [vmem:[%s952 + $0x28] sm:$0xff]
      %v959 = vld [vmem:[%s952 + $0x30] sm:$0xff]
      %v960 = vld [vmem:[%s952 + $0x38] sm:$0xff]
      %v961 = vld [vmem:[%s952 + $0x40] sm:$0xff]
      %v962 = vld [vmem:[%s952 + $0x48] sm:$0xff]
      %v963 = vld [vmem:[%s952 + $0x50] sm:$0xff]
      %v964 = vld [vmem:[%s952 + $0x58] sm:$0xff]
      %v965 = vld [vmem:[%s952 + $0x60] sm:$0xff]
      %v966 = vld [vmem:[%s952 + $0x68] sm:$0xff]
      %v967 = vld [vmem:[%s952 + $0x70] sm:$0xff]
      %v968 = vld [vmem:[%s952 + $0x78] sm:$0xff]
      %v969 = vld [vmem:[%s952 + $0x80] sm:$0xff]
      %v970 = vld [vmem:[%s952 + $0x88] sm:$0xff]
      %v971 = vld [vmem:[%s952 + $0x90] sm:$0xff]
      %v972 = vld [vmem:[%s952 + $0x98] sm:$0xff]
      %v973 = vld [vmem:[%s952 + $0xa0] sm:$0xff]
      %v974 = vld [vmem:[%s952 + $0xa8] sm:$0xff]
      %v975 = vld [vmem:[%s952 + $0xb0] sm:$0xff]
      %v976 = vld [vmem:[%s952 + $0xb8] sm:$0xff]
      %v977 = vld [vmem:[%s952 + $0xc0] sm:$0xff]
      %v978 = vld [vmem:[%s952 + $0xc8] sm:$0xff]
      %v979 = vld [vmem:[%s952 + $0xd0] sm:$0xff]
      %v980 = vld [vmem:[%s952 + $0xd8] sm:$0xff]
      %v981 = vld [vmem:[%s952 + $0xe0] sm:$0xff]
      %v982 = vld [vmem:[%s952 + $0xe8] sm:$0xff]
      %v983 = vld [vmem:[%s952 + $0xf0] sm:$0xff]
      %v984 = vld [vmem:[%s952 + $0xf8] sm:$0xff]
      %v985 = vld [vmem:[%s952 + $0x100] sm:$0xff]
      %v986 = vld [vmem:[%s952 + $0x108] sm:$0xff]
      %v987 = vld [vmem:[%s952 + $0x110] sm:$0xff]
      %v988 = vld [vmem:[%s952 + $0x118] sm:$0xff]
      %v989 = vld [vmem:[%s952 + $0x120] sm:$0xff]
      %v990 = vld [vmem:[%s952 + $0x128] sm:$0xff]
      %v991 = vld [vmem:[%s952 + $0x130] sm:$0xff]
      %v992 = vld [vmem:[%s952 + $0x138] sm:$0xff]
      %v993 = vld [vmem:[%s952 + $0x140] sm:$0xff]
      %v994 = vld [vmem:[%s952 + $0x148] sm:$0xff]
      %v995 = vld [vmem:[%s952 + $0x150] sm:$0xff]
      %v996 = vld [vmem:[%s952 + $0x158] sm:$0xff]
      %1041 = vrot.lane.b32.xlu0 %v953, 4
      %v1042 = vpop.permute.xlu0 %1041
      %1043 = vrot.lane.b32.xlu0 %v954, 4
      %v1044 = vpop.permute.xlu0 %1043
      %1045 = vrot.lane.b32.xlu0 %v955, 4
      %v1046 = vpop.permute.xlu0 %1045
      %1047 = vrot.lane.b32.xlu0 %v956, 4
      %v1048 = vpop.permute.xlu0 %1047
      %1049 = vrot.lane.b32.xlu0 %v957, 4
      %v1050 = vpop.permute.xlu0 %1049
      %1051 = vrot.lane.b32.xlu0 %v958, 4
      %v1052 = vpop.permute.xlu0 %1051
      %1053 = vrot.lane.b32.xlu0 %v959, 4
      %v1054 = vpop.permute.xlu0 %1053
      %1055 = vrot.lane.b32.xlu0 %v960, 4
      %v1056 = vpop.permute.xlu0 %1055
      %1057 = vrot.lane.b32.xlu0 %v961, 4
      %v1058 = vpop.permute.xlu0 %1057
      %1059 = vrot.lane.b32.xlu0 %v962, 4
      %v1060 = vpop.permute.xlu0 %1059
      %1061 = vrot.lane.b32.xlu0 %v963, 4
      %v1062 = vpop.permute.xlu0 %1061
      %1063 = vrot.lane.b32.xlu0 %v964, 4
      %v1064 = vpop.permute.xlu0 %1063
      %1065 = vrot.lane.b32.xlu0 %v965, 4
      %v1066 = vpop.permute.xlu0 %1065
      %1067 = vrot.lane.b32.xlu0 %v966, 4
      %v1068 = vpop.permute.xlu0 %1067
      %1069 = vrot.lane.b32.xlu0 %v967, 4
      %v1070 = vpop.permute.xlu0 %1069
      %1071 = vrot.lane.b32.xlu0 %v968, 4
      %v1072 = vpop.permute.xlu0 %1071
      %1073 = vrot.lane.b32.xlu0 %v969, 4
      %v1074 = vpop.permute.xlu0 %1073
      %1075 = vrot.lane.b32.xlu0 %v970, 4
      %v1076 = vpop.permute.xlu0 %1075
      %1077 = vrot.lane.b32.xlu0 %v971, 4
      %v1078 = vpop.permute.xlu0 %1077
      %1079 = vrot.lane.b32.xlu0 %v972, 4
      %v1080 = vpop.permute.xlu0 %1079
      %1081 = vrot.lane.b32.xlu0 %v973, 4
      %v1082 = vpop.permute.xlu0 %1081
      %1083 = vrot.lane.b32.xlu0 %v974, 4
      %v1084 = vpop.permute.xlu0 %1083
      %1085 = vrot.lane.b32.xlu0 %v975, 4
      %v1086 = vpop.permute.xlu0 %1085
      %1087 = vrot.lane.b32.xlu0 %v976, 4
      %v1088 = vpop.permute.xlu0 %1087
      %1089 = vrot.lane.b32.xlu0 %v977, 4
      %v1090 = vpop.permute.xlu0 %1089
      %1091 = vrot.lane.b32.xlu0 %v978, 4
      %v1092 = vpop.permute.xlu0 %1091
      %1093 = vrot.lane.b32.xlu0 %v979, 4
      %v1094 = vpop.permute.xlu0 %1093
      %1095 = vrot.lane.b32.xlu0 %v980, 4
      %v1096 = vpop.permute.xlu0 %1095
      %1097 = vrot.lane.b32.xlu0 %v981, 4
      %v1098 = vpop.permute.xlu0 %1097
      %1099 = vrot.lane.b32.xlu0 %v982, 4
      %v1100 = vpop.permute.xlu0 %1099
      %1101 = vrot.lane.b32.xlu0 %v983, 4
      %v1102 = vpop.permute.xlu0 %1101
      %1103 = vrot.lane.b32.xlu0 %v984, 4
      %v1104 = vpop.permute.xlu0 %1103
      %1105 = vrot.lane.b32.xlu0 %v985, 4
      %v1106 = vpop.permute.xlu0 %1105
      %1107 = vrot.lane.b32.xlu0 %v986, 4
      %v1108 = vpop.permute.xlu0 %1107
      %1109 = vrot.lane.b32.xlu0 %v987, 4
      %v1110 = vpop.permute.xlu0 %1109
      %1111 = vrot.lane.b32.xlu0 %v988, 4
      %v1112 = vpop.permute.xlu0 %1111
      %1113 = vrot.lane.b32.xlu0 %v989, 4
      %v1114 = vpop.permute.xlu0 %1113
      %1115 = vrot.lane.b32.xlu0 %v990, 4
      %v1116 = vpop.permute.xlu0 %1115
      %1117 = vrot.lane.b32.xlu0 %v991, 4
      %v1118 = vpop.permute.xlu0 %1117
      %1119 = vrot.lane.b32.xlu0 %v992, 4
      %v1120 = vpop.permute.xlu0 %1119
      %1121 = vrot.lane.b32.xlu0 %v993, 4
      %v1122 = vpop.permute.xlu0 %1121
      %1123 = vrot.lane.b32.xlu0 %v994, 4
      %v1124 = vpop.permute.xlu0 %1123
      %1125 = vrot.lane.b32.xlu0 %v995, 4
      %v1126 = vpop.permute.xlu0 %1125
      %1127 = vrot.lane.b32.xlu0 %v996, 4
      %v1128 = vpop.permute.xlu0 %1127
      %vm1173 = vcmask 64544
      %1174 = vst.msk [vmem:[#allocation2] sm:$0xff] %vm1173, %v1042
      %1175 = vst.msk [vmem:[#allocation2 + $0x8] sm:$0xff] %vm1173, %v1044
      %1176 = vst.msk [vmem:[#allocation2 + $0x10] sm:$0xff] %vm1173, %v1046
      %1177 = vst.msk [vmem:[#allocation2 + $0x18] sm:$0xff] %vm1173, %v1048
      %1178 = vst.msk [vmem:[#allocation2 + $0x20] sm:$0xff] %vm1173, %v1050
      %1179 = vst.msk [vmem:[#allocation2 + $0x28] sm:$0xff] %vm1173, %v1052
      %1180 = vst.msk [vmem:[#allocation2 + $0x30] sm:$0xff] %vm1173, %v1054
      %1181 = vst.msk [vmem:[#allocation2 + $0x38] sm:$0xff] %vm1173, %v1056
      %1182 = vst.msk [vmem:[#allocation2 + $0x40] sm:$0xff] %vm1173, %v1058
      %1183 = vst.msk [vmem:[#allocation2 + $0x48] sm:$0xff] %vm1173, %v1060
      %1184 = vst.msk [vmem:[#allocation2 + $0x50] sm:$0xff] %vm1173, %v1062
      %1185 = vst.msk [vmem:[#allocation2 + $0x58] sm:$0xff] %vm1173, %v1064
      %1186 = vst.msk [vmem:[#allocation2 + $0x60] sm:$0xff] %vm1173, %v1066
      %1187 = vst.msk [vmem:[#allocation2 + $0x68] sm:$0xff] %vm1173, %v1068
      %1188 = vst.msk [vmem:[#allocation2 + $0x70] sm:$0xff] %vm1173, %v1070
      %1189 = vst.msk [vmem:[#allocation2 + $0x78] sm:$0xff] %vm1173, %v1072
      %1190 = vst.msk [vmem:[#allocation2 + $0x80] sm:$0xff] %vm1173, %v1074
      %1191 = vst.msk [vmem:[#allocation2 + $0x88] sm:$0xff] %vm1173, %v1076
      %1192 = vst.msk [vmem:[#allocation2 + $0x90] sm:$0xff] %vm1173, %v1078
      %1193 = vst.msk [vmem:[#allocation2 + $0x98] sm:$0xff] %vm1173, %v1080
      %1194 = vst.msk [vmem:[#allocation2 + $0xa0] sm:$0xff] %vm1173, %v1082
      %1195 = vst.msk [vmem:[#allocation2 + $0xa8] sm:$0xff] %vm1173, %v1084
      %1196 = vst.msk [vmem:[#allocation2 + $0xb0] sm:$0xff] %vm1173, %v1086
      %1197 = vst.msk [vmem:[#allocation2 + $0xb8] sm:$0xff] %vm1173, %v1088
      %1198 = vst.msk [vmem:[#allocation2 + $0xc0] sm:$0xff] %vm1173, %v1090
      %1199 = vst.msk [vmem:[#allocation2 + $0xc8] sm:$0xff] %vm1173, %v1092
      %1200 = vst.msk [vmem:[#allocation2 + $0xd0] sm:$0xff] %vm1173, %v1094
      %1201 = vst.msk [vmem:[#allocation2 + $0xd8] sm:$0xff] %vm1173, %v1096
      %1202 = vst.msk [vmem:[#allocation2 + $0xe0] sm:$0xff] %vm1173, %v1098
      %1203 = vst.msk [vmem:[#allocation2 + $0xe8] sm:$0xff] %vm1173, %v1100
      %1204 = vst.msk [vmem:[#allocation2 + $0xf0] sm:$0xff] %vm1173, %v1102
      %1205 = vst.msk [vmem:[#allocation2 + $0xf8] sm:$0xff] %vm1173, %v1104
      %1206 = vst.msk [vmem:[#allocation2 + $0x100] sm:$0xff] %vm1173, %v1106
      %1207 = vst.msk [vmem:[#allocation2 + $0x108] sm:$0xff] %vm1173, %v1108
      %1208 = vst.msk [vmem:[#allocation2 + $0x110] sm:$0xff] %vm1173, %v1110
      %1209 = vst.msk [vmem:[#allocation2 + $0x118] sm:$0xff] %vm1173, %v1112
      %1210 = vst.msk [vmem:[#allocation2 + $0x120] sm:$0xff] %vm1173, %v1114
      %1211 = vst.msk [vmem:[#allocation2 + $0x128] sm:$0xff] %vm1173, %v1116
      %1212 = vst.msk [vmem:[#allocation2 + $0x130] sm:$0xff] %vm1173, %v1118
      %1213 = vst.msk [vmem:[#allocation2 + $0x138] sm:$0xff] %vm1173, %v1120
      %1214 = vst.msk [vmem:[#allocation2 + $0x140] sm:$0xff] %vm1173, %v1122
      %1215 = vst.msk [vmem:[#allocation2 + $0x148] sm:$0xff] %vm1173, %v1124
      %1216 = vst.msk [vmem:[#allocation2 + $0x150] sm:$0xff] %vm1173, %v1126
      %1217 = vst.msk [vmem:[#allocation2 + $0x158] sm:$0xff] %vm1173, %v1128
      %s1218 = sadd.s32 %s302, 111
      %s1219 = scalar_lea.vmem %s291, %s1218
      %v1220 = vld [vmem:[%s1219] sm:$0xff]
      %v1221 = vld [vmem:[%s1219 + $0x8] sm:$0xff]
      %v1222 = vld [vmem:[%s1219 + $0x10] sm:$0xff]
      %v1223 = vld [vmem:[%s1219 + $0x18] sm:$0xff]
      %v1224 = vld [vmem:[%s1219 + $0x20] sm:$0xff]
      %v1225 = vld [vmem:[%s1219 + $0x28] sm:$0xff]
      %v1226 = vld [vmem:[%s1219 + $0x30] sm:$0xff]
      %v1227 = vld [vmem:[%s1219 + $0x38] sm:$0xff]
      %v1228 = vld [vmem:[%s1219 + $0x40] sm:$0xff]
      %v1229 = vld [vmem:[%s1219 + $0x48] sm:$0xff]
      %v1230 = vld [vmem:[%s1219 + $0x50] sm:$0xff]
      %v1231 = vld [vmem:[%s1219 + $0x58] sm:$0xff]
      %v1232 = vld [vmem:[%s1219 + $0x60] sm:$0xff]
      %v1233 = vld [vmem:[%s1219 + $0x68] sm:$0xff]
      %v1234 = vld [vmem:[%s1219 + $0x70] sm:$0xff]
      %v1235 = vld [vmem:[%s1219 + $0x78] sm:$0xff]
      %v1236 = vld [vmem:[%s1219 + $0x80] sm:$0xff]
      %v1237 = vld [vmem:[%s1219 + $0x88] sm:$0xff]
      %v1238 = vld [vmem:[%s1219 + $0x90] sm:$0xff]
      %v1239 = vld [vmem:[%s1219 + $0x98] sm:$0xff]
      %v1240 = vld [vmem:[%s1219 + $0xa0] sm:$0xff]
      %v1241 = vld [vmem:[%s1219 + $0xa8] sm:$0xff]
      %v1242 = vld [vmem:[%s1219 + $0xb0] sm:$0xff]
      %v1243 = vld [vmem:[%s1219 + $0xb8] sm:$0xff]
      %v1244 = vld [vmem:[%s1219 + $0xc0] sm:$0xff]
      %v1245 = vld [vmem:[%s1219 + $0xc8] sm:$0xff]
      %v1246 = vld [vmem:[%s1219 + $0xd0] sm:$0xff]
      %v1247 = vld [vmem:[%s1219 + $0xd8] sm:$0xff]
      %v1248 = vld [vmem:[%s1219 + $0xe0] sm:$0xff]
      %v1249 = vld [vmem:[%s1219 + $0xe8] sm:$0xff]
      %v1250 = vld [vmem:[%s1219 + $0xf0] sm:$0xff]
      %v1251 = vld [vmem:[%s1219 + $0xf8] sm:$0xff]
      %v1252 = vld [vmem:[%s1219 + $0x100] sm:$0xff]
      %v1253 = vld [vmem:[%s1219 + $0x108] sm:$0xff]
      %v1254 = vld [vmem:[%s1219 + $0x110] sm:$0xff]
      %v1255 = vld [vmem:[%s1219 + $0x118] sm:$0xff]
      %v1256 = vld [vmem:[%s1219 + $0x120] sm:$0xff]
      %v1257 = vld [vmem:[%s1219 + $0x128] sm:$0xff]
      %v1258 = vld [vmem:[%s1219 + $0x130] sm:$0xff]
      %v1259 = vld [vmem:[%s1219 + $0x138] sm:$0xff]
      %v1260 = vld [vmem:[%s1219 + $0x140] sm:$0xff]
      %v1261 = vld [vmem:[%s1219 + $0x148] sm:$0xff]
      %v1262 = vld [vmem:[%s1219 + $0x150] sm:$0xff]
      %v1263 = vld [vmem:[%s1219 + $0x158] sm:$0xff]
      %1308 = vrot.lane.b32.xlu0 %v1220, 8
      %v1309 = vpop.permute.xlu0 %1308
      %1310 = vrot.lane.b32.xlu0 %v1221, 8
      %v1311 = vpop.permute.xlu0 %1310
      %1312 = vrot.lane.b32.xlu0 %v1222, 8
      %v1313 = vpop.permute.xlu0 %1312
      %1314 = vrot.lane.b32.xlu0 %v1223, 8
      %v1315 = vpop.permute.xlu0 %1314
      %1316 = vrot.lane.b32.xlu0 %v1224, 8
      %v1317 = vpop.permute.xlu0 %1316
      %1318 = vrot.lane.b32.xlu0 %v1225, 8
      %v1319 = vpop.permute.xlu0 %1318
      %1320 = vrot.lane.b32.xlu0 %v1226, 8
      %v1321 = vpop.permute.xlu0 %1320
      %1322 = vrot.lane.b32.xlu0 %v1227, 8
      %v1323 = vpop.permute.xlu0 %1322
      %1324 = vrot.lane.b32.xlu0 %v1228, 8
      %v1325 = vpop.permute.xlu0 %1324
      %1326 = vrot.lane.b32.xlu0 %v1229, 8
      %v1327 = vpop.permute.xlu0 %1326
      %1328 = vrot.lane.b32.xlu0 %v1230, 8
      %v1329 = vpop.permute.xlu0 %1328
      %1330 = vrot.lane.b32.xlu0 %v1231, 8
      %v1331 = vpop.permute.xlu0 %1330
      %1332 = vrot.lane.b32.xlu0 %v1232, 8
      %v1333 = vpop.permute.xlu0 %1332
      %1334 = vrot.lane.b32.xlu0 %v1233, 8
      %v1335 = vpop.permute.xlu0 %1334
      %1336 = vrot.lane.b32.xlu0 %v1234, 8
      %v1337 = vpop.permute.xlu0 %1336
      %1338 = vrot.lane.b32.xlu0 %v1235, 8
      %v1339 = vpop.permute.xlu0 %1338
      %1340 = vrot.lane.b32.xlu0 %v1236, 8
      %v1341 = vpop.permute.xlu0 %1340
      %1342 = vrot.lane.b32.xlu0 %v1237, 8
      %v1343 = vpop.permute.xlu0 %1342
      %1344 = vrot.lane.b32.xlu0 %v1238, 8
      %v1345 = vpop.permute.xlu0 %1344
      %1346 = vrot.lane.b32.xlu0 %v1239, 8
      %v1347 = vpop.permute.xlu0 %1346
      %1348 = vrot.lane.b32.xlu0 %v1240, 8
      %v1349 = vpop.permute.xlu0 %1348
      %1350 = vrot.lane.b32.xlu0 %v1241, 8
      %v1351 = vpop.permute.xlu0 %1350
      %1352 = vrot.lane.b32.xlu0 %v1242, 8
      %v1353 = vpop.permute.xlu0 %1352
      %1354 = vrot.lane.b32.xlu0 %v1243, 8
      %v1355 = vpop.permute.xlu0 %1354
      %1356 = vrot.lane.b32.xlu0 %v1244, 8
      %v1357 = vpop.permute.xlu0 %1356
      %1358 = vrot.lane.b32.xlu0 %v1245, 8
      %v1359 = vpop.permute.xlu0 %1358
      %1360 = vrot.lane.b32.xlu0 %v1246, 8
      %v1361 = vpop.permute.xlu0 %1360
      %1362 = vrot.lane.b32.xlu0 %v1247, 8
      %v1363 = vpop.permute.xlu0 %1362
      %1364 = vrot.lane.b32.xlu0 %v1248, 8
      %v1365 = vpop.permute.xlu0 %1364
      %1366 = vrot.lane.b32.xlu0 %v1249, 8
      %v1367 = vpop.permute.xlu0 %1366
      %1368 = vrot.lane.b32.xlu0 %v1250, 8
      %v1369 = vpop.permute.xlu0 %1368
      %1370 = vrot.lane.b32.xlu0 %v1251, 8
      %v1371 = vpop.permute.xlu0 %1370
      %1372 = vrot.lane.b32.xlu0 %v1252, 8
      %v1373 = vpop.permute.xlu0 %1372
      %1374 = vrot.lane.b32.xlu0 %v1253, 8
      %v1375 = vpop.permute.xlu0 %1374
      %1376 = vrot.lane.b32.xlu0 %v1254, 8
      %v1377 = vpop.permute.xlu0 %1376
      %1378 = vrot.lane.b32.xlu0 %v1255, 8
      %v1379 = vpop.permute.xlu0 %1378
      %1380 = vrot.lane.b32.xlu0 %v1256, 8
      %v1381 = vpop.permute.xlu0 %1380
      %1382 = vrot.lane.b32.xlu0 %v1257, 8
      %v1383 = vpop.permute.xlu0 %1382
      %1384 = vrot.lane.b32.xlu0 %v1258, 8
      %v1385 = vpop.permute.xlu0 %1384
      %1386 = vrot.lane.b32.xlu0 %v1259, 8
      %v1387 = vpop.permute.xlu0 %1386
      %1388 = vrot.lane.b32.xlu0 %v1260, 8
      %v1389 = vpop.permute.xlu0 %1388
      %1390 = vrot.lane.b32.xlu0 %v1261, 8
      %v1391 = vpop.permute.xlu0 %1390
      %1392 = vrot.lane.b32.xlu0 %v1262, 8
      %v1393 = vpop.permute.xlu0 %1392
      %1394 = vrot.lane.b32.xlu0 %v1263, 8
      %v1395 = vpop.permute.xlu0 %1394
      %vm1440 = vcmask 97344
      %1441 = vst.msk [vmem:[#allocation2] sm:$0xff] %vm1440, %v1309
      %1442 = vst.msk [vmem:[#allocation2 + $0x8] sm:$0xff] %vm1440, %v1311
      %1443 = vst.msk [vmem:[#allocation2 + $0x10] sm:$0xff] %vm1440, %v1313
      %1444 = vst.msk [vmem:[#allocation2 + $0x18] sm:$0xff] %vm1440, %v1315
      %1445 = vst.msk [vmem:[#allocation2 + $0x20] sm:$0xff] %vm1440, %v1317
      %1446 = vst.msk [vmem:[#allocation2 + $0x28] sm:$0xff] %vm1440, %v1319
      %1447 = vst.msk [vmem:[#allocation2 + $0x30] sm:$0xff] %vm1440, %v1321
      %1448 = vst.msk [vmem:[#allocation2 + $0x38] sm:$0xff] %vm1440, %v1323
      %1449 = vst.msk [vmem:[#allocation2 + $0x40] sm:$0xff] %vm1440, %v1325
      %1450 = vst.msk [vmem:[#allocation2 + $0x48] sm:$0xff] %vm1440, %v1327
      %1451 = vst.msk [vmem:[#allocation2 + $0x50] sm:$0xff] %vm1440, %v1329
      %1452 = vst.msk [vmem:[#allocation2 + $0x58] sm:$0xff] %vm1440, %v1331
      %1453 = vst.msk [vmem:[#allocation2 + $0x60] sm:$0xff] %vm1440, %v1333
      %1454 = vst.msk [vmem:[#allocation2 + $0x68] sm:$0xff] %vm1440, %v1335
      %1455 = vst.msk [vmem:[#allocation2 + $0x70] sm:$0xff] %vm1440, %v1337
      %1456 = vst.msk [vmem:[#allocation2 + $0x78] sm:$0xff] %vm1440, %v1339
      %1457 = vst.msk [vmem:[#allocation2 + $0x80] sm:$0xff] %vm1440, %v1341
      %1458 = vst.msk [vmem:[#allocation2 + $0x88] sm:$0xff] %vm1440, %v1343
      %1459 = vst.msk [vmem:[#allocation2 + $0x90] sm:$0xff] %vm1440, %v1345
      %1460 = vst.msk [vmem:[#allocation2 + $0x98] sm:$0xff] %vm1440, %v1347
      %1461 = vst.msk [vmem:[#allocation2 + $0xa0] sm:$0xff] %vm1440, %v1349
      %1462 = vst.msk [vmem:[#allocation2 + $0xa8] sm:$0xff] %vm1440, %v1351
      %1463 = vst.msk [vmem:[#allocation2 + $0xb0] sm:$0xff] %vm1440, %v1353
      %1464 = vst.msk [vmem:[#allocation2 + $0xb8] sm:$0xff] %vm1440, %v1355
      %1465 = vst.msk [vmem:[#allocation2 + $0xc0] sm:$0xff] %vm1440, %v1357
      %1466 = vst.msk [vmem:[#allocation2 + $0xc8] sm:$0xff] %vm1440, %v1359
      %1467 = vst.msk [vmem:[#allocation2 + $0xd0] sm:$0xff] %vm1440, %v1361
      %1468 = vst.msk [vmem:[#allocation2 + $0xd8] sm:$0xff] %vm1440, %v1363
      %1469 = vst.msk [vmem:[#allocation2 + $0xe0] sm:$0xff] %vm1440, %v1365
      %1470 = vst.msk [vmem:[#allocation2 + $0xe8] sm:$0xff] %vm1440, %v1367
      %1471 = vst.msk [vmem:[#allocation2 + $0xf0] sm:$0xff] %vm1440, %v1369
      %1472 = vst.msk [vmem:[#allocation2 + $0xf8] sm:$0xff] %vm1440, %v1371
      %1473 = vst.msk [vmem:[#allocation2 + $0x100] sm:$0xff] %vm1440, %v1373
      %1474 = vst.msk [vmem:[#allocation2 + $0x108] sm:$0xff] %vm1440, %v1375
      %1475 = vst.msk [vmem:[#allocation2 + $0x110] sm:$0xff] %vm1440, %v1377
      %1476 = vst.msk [vmem:[#allocation2 + $0x118] sm:$0xff] %vm1440, %v1379
      %1477 = vst.msk [vmem:[#allocation2 + $0x120] sm:$0xff] %vm1440, %v1381
      %1478 = vst.msk [vmem:[#allocation2 + $0x128] sm:$0xff] %vm1440, %v1383
      %1479 = vst.msk [vmem:[#allocation2 + $0x130] sm:$0xff] %vm1440, %v1385
      %1480 = vst.msk [vmem:[#allocation2 + $0x138] sm:$0xff] %vm1440, %v1387
      %1481 = vst.msk [vmem:[#allocation2 + $0x140] sm:$0xff] %vm1440, %v1389
      %1482 = vst.msk [vmem:[#allocation2 + $0x148] sm:$0xff] %vm1440, %v1391
      %1483 = vst.msk [vmem:[#allocation2 + $0x150] sm:$0xff] %vm1440, %v1393
      %1484 = vst.msk [vmem:[#allocation2 + $0x158] sm:$0xff] %vm1440, %v1395
      %s1485 = sadd.s32 %s302, 131
      %s1486 = scalar_lea.vmem %s291, %s1485
      %v1487 = vld [vmem:[%s1486] sm:$0xff]
      %v1488 = vld [vmem:[%s1486 + $0x8] sm:$0xff]
      %v1489 = vld [vmem:[%s1486 + $0x10] sm:$0xff]
      %v1490 = vld [vmem:[%s1486 + $0x18] sm:$0xff]
      %v1491 = vld [vmem:[%s1486 + $0x20] sm:$0xff]
      %v1492 = vld [vmem:[%s1486 + $0x28] sm:$0xff]
      %v1493 = vld [vmem:[%s1486 + $0x30] sm:$0xff]
      %v1494 = vld [vmem:[%s1486 + $0x38] sm:$0xff]
      %v1495 = vld [vmem:[%s1486 + $0x40] sm:$0xff]
      %v1496 = vld [vmem:[%s1486 + $0x48] sm:$0xff]
      %v1497 = vld [vmem:[%s1486 + $0x50] sm:$0xff]
      %v1498 = vld [vmem:[%s1486 + $0x58] sm:$0xff]
      %v1499 = vld [vmem:[%s1486 + $0x60] sm:$0xff]
      %v1500 = vld [vmem:[%s1486 + $0x68] sm:$0xff]
      %v1501 = vld [vmem:[%s1486 + $0x70] sm:$0xff]
      %v1502 = vld [vmem:[%s1486 + $0x78] sm:$0xff]
      %v1503 = vld [vmem:[%s1486 + $0x80] sm:$0xff]
      %v1504 = vld [vmem:[%s1486 + $0x88] sm:$0xff]
      %v1505 = vld [vmem:[%s1486 + $0x90] sm:$0xff]
      %v1506 = vld [vmem:[%s1486 + $0x98] sm:$0xff]
      %v1507 = vld [vmem:[%s1486 + $0xa0] sm:$0xff]
      %v1508 = vld [vmem:[%s1486 + $0xa8] sm:$0xff]
      %v1509 = vld [vmem:[%s1486 + $0xb0] sm:$0xff]
      %v1510 = vld [vmem:[%s1486 + $0xb8] sm:$0xff]
      %v1511 = vld [vmem:[%s1486 + $0xc0] sm:$0xff]
      %v1512 = vld [vmem:[%s1486 + $0xc8] sm:$0xff]
      %v1513 = vld [vmem:[%s1486 + $0xd0] sm:$0xff]
      %v1514 = vld [vmem:[%s1486 + $0xd8] sm:$0xff]
      %v1515 = vld [vmem:[%s1486 + $0xe0] sm:$0xff]
      %v1516 = vld [vmem:[%s1486 + $0xe8] sm:$0xff]
      %v1517 = vld [vmem:[%s1486 + $0xf0] sm:$0xff]
      %v1518 = vld [vmem:[%s1486 + $0xf8] sm:$0xff]
      %v1519 = vld [vmem:[%s1486 + $0x100] sm:$0xff]
      %v1520 = vld [vmem:[%s1486 + $0x108] sm:$0xff]
      %v1521 = vld [vmem:[%s1486 + $0x110] sm:$0xff]
      %v1522 = vld [vmem:[%s1486 + $0x118] sm:$0xff]
      %v1523 = vld [vmem:[%s1486 + $0x120] sm:$0xff]
      %v1524 = vld [vmem:[%s1486 + $0x128] sm:$0xff]
      %v1525 = vld [vmem:[%s1486 + $0x130] sm:$0xff]
      %v1526 = vld [vmem:[%s1486 + $0x138] sm:$0xff]
      %v1527 = vld [vmem:[%s1486 + $0x140] sm:$0xff]
      %v1528 = vld [vmem:[%s1486 + $0x148] sm:$0xff]
      %v1529 = vld [vmem:[%s1486 + $0x150] sm:$0xff]
      %v1530 = vld [vmem:[%s1486 + $0x158] sm:$0xff]
      %1575 = vrot.lane.b32.xlu0 %v1487, 12
      %v1576 = vpop.permute.xlu0 %1575
      %1577 = vrot.lane.b32.xlu0 %v1488, 12
      %v1578 = vpop.permute.xlu0 %1577
      %1579 = vrot.lane.b32.xlu0 %v1489, 12
      %v1580 = vpop.permute.xlu0 %1579
      %1581 = vrot.lane.b32.xlu0 %v1490, 12
      %v1582 = vpop.permute.xlu0 %1581
      %1583 = vrot.lane.b32.xlu0 %v1491, 12
      %v1584 = vpop.permute.xlu0 %1583
      %1585 = vrot.lane.b32.xlu0 %v1492, 12
      %v1586 = vpop.permute.xlu0 %1585
      %1587 = vrot.lane.b32.xlu0 %v1493, 12
      %v1588 = vpop.permute.xlu0 %1587
      %1589 = vrot.lane.b32.xlu0 %v1494, 12
      %v1590 = vpop.permute.xlu0 %1589
      %1591 = vrot.lane.b32.xlu0 %v1495, 12
      %v1592 = vpop.permute.xlu0 %1591
      %1593 = vrot.lane.b32.xlu0 %v1496, 12
      %v1594 = vpop.permute.xlu0 %1593
      %1595 = vrot.lane.b32.xlu0 %v1497, 12
      %v1596 = vpop.permute.xlu0 %1595
      %1597 = vrot.lane.b32.xlu0 %v1498, 12
      %v1598 = vpop.permute.xlu0 %1597
      %1599 = vrot.lane.b32.xlu0 %v1499, 12
      %v1600 = vpop.permute.xlu0 %1599
      %1601 = vrot.lane.b32.xlu0 %v1500, 12
      %v1602 = vpop.permute.xlu0 %1601
      %1603 = vrot.lane.b32.xlu0 %v1501, 12
      %v1604 = vpop.permute.xlu0 %1603
      %1605 = vrot.lane.b32.xlu0 %v1502, 12
      %v1606 = vpop.permute.xlu0 %1605
      %1607 = vrot.lane.b32.xlu0 %v1503, 12
      %v1608 = vpop.permute.xlu0 %1607
      %1609 = vrot.lane.b32.xlu0 %v1504, 12
      %v1610 = vpop.permute.xlu0 %1609
      %1611 = vrot.lane.b32.xlu0 %v1505, 12
      %v1612 = vpop.permute.xlu0 %1611
      %1613 = vrot.lane.b32.xlu0 %v1506, 12
      %v1614 = vpop.permute.xlu0 %1613
      %1615 = vrot.lane.b32.xlu0 %v1507, 12
      %v1616 = vpop.permute.xlu0 %1615
      %1617 = vrot.lane.b32.xlu0 %v1508, 12
      %v1618 = vpop.permute.xlu0 %1617
      %1619 = vrot.lane.b32.xlu0 %v1509, 12
      %v1620 = vpop.permute.xlu0 %1619
      %1621 = vrot.lane.b32.xlu0 %v1510, 12
      %v1622 = vpop.permute.xlu0 %1621
      %1623 = vrot.lane.b32.xlu0 %v1511, 12
      %v1624 = vpop.permute.xlu0 %1623
      %1625 = vrot.lane.b32.xlu0 %v1512, 12
      %v1626 = vpop.permute.xlu0 %1625
      %1627 = vrot.lane.b32.xlu0 %v1513, 12
      %v1628 = vpop.permute.xlu0 %1627
      %1629 = vrot.lane.b32.xlu0 %v1514, 12
      %v1630 = vpop.permute.xlu0 %1629
      %1631 = vrot.lane.b32.xlu0 %v1515, 12
      %v1632 = vpop.permute.xlu0 %1631
      %1633 = vrot.lane.b32.xlu0 %v1516, 12
      %v1634 = vpop.permute.xlu0 %1633
      %1635 = vrot.lane.b32.xlu0 %v1517, 12
      %v1636 = vpop.permute.xlu0 %1635
      %1637 = vrot.lane.b32.xlu0 %v1518, 12
      %v1638 = vpop.permute.xlu0 %1637
      %1639 = vrot.lane.b32.xlu0 %v1519, 12
      %v1640 = vpop.permute.xlu0 %1639
      %1641 = vrot.lane.b32.xlu0 %v1520, 12
      %v1642 = vpop.permute.xlu0 %1641
      %1643 = vrot.lane.b32.xlu0 %v1521, 12
      %v1644 = vpop.permute.xlu0 %1643
      %1645 = vrot.lane.b32.xlu0 %v1522, 12
      %v1646 = vpop.permute.xlu0 %1645
      %1647 = vrot.lane.b32.xlu0 %v1523, 12
      %v1648 = vpop.permute.xlu0 %1647
      %1649 = vrot.lane.b32.xlu0 %v1524, 12
      %v1650 = vpop.permute.xlu0 %1649
      %1651 = vrot.lane.b32.xlu0 %v1525, 12
      %v1652 = vpop.permute.xlu0 %1651
      %1653 = vrot.lane.b32.xlu0 %v1526, 12
      %v1654 = vpop.permute.xlu0 %1653
      %1655 = vrot.lane.b32.xlu0 %v1527, 12
      %v1656 = vpop.permute.xlu0 %1655
      %1657 = vrot.lane.b32.xlu0 %v1528, 12
      %v1658 = vpop.permute.xlu0 %1657
      %1659 = vrot.lane.b32.xlu0 %v1529, 12
      %v1660 = vpop.permute.xlu0 %1659
      %1661 = vrot.lane.b32.xlu0 %v1530, 12
      %v1662 = vpop.permute.xlu0 %1661
      %vm1707 = vcmask 130144
      %1708 = vst.msk [vmem:[#allocation2] sm:$0xff] %vm1707, %v1576
      %1709 = vst.msk [vmem:[#allocation2 + $0x8] sm:$0xff] %vm1707, %v1578
      %1710 = vst.msk [vmem:[#allocation2 + $0x10] sm:$0xff] %vm1707, %v1580
      %1711 = vst.msk [vmem:[#allocation2 + $0x18] sm:$0xff] %vm1707, %v1582
      %1712 = vst.msk [vmem:[#allocation2 + $0x20] sm:$0xff] %vm1707, %v1584
      %1713 = vst.msk [vmem:[#allocation2 + $0x28] sm:$0xff] %vm1707, %v1586
      %1714 = vst.msk [vmem:[#allocation2 + $0x30] sm:$0xff] %vm1707, %v1588
      %1715 = vst.msk [vmem:[#allocation2 + $0x38] sm:$0xff] %vm1707, %v1590
      %1716 = vst.msk [vmem:[#allocation2 + $0x40] sm:$0xff] %vm1707, %v1592
      %1717 = vst.msk [vmem:[#allocation2 + $0x48] sm:$0xff] %vm1707, %v1594
      %1718 = vst.msk [vmem:[#allocation2 + $0x50] sm:$0xff] %vm1707, %v1596
      %1719 = vst.msk [vmem:[#allocation2 + $0x58] sm:$0xff] %vm1707, %v1598
      %1720 = vst.msk [vmem:[#allocation2 + $0x60] sm:$0xff] %vm1707, %v1600
      %1721 = vst.msk [vmem:[#allocation2 + $0x68] sm:$0xff] %vm1707, %v1602
      %1722 = vst.msk [vmem:[#allocation2 + $0x70] sm:$0xff] %vm1707, %v1604
      %1723 = vst.msk [vmem:[#allocation2 + $0x78] sm:$0xff] %vm1707, %v1606
      %1724 = vst.msk [vmem:[#allocation2 + $0x80] sm:$0xff] %vm1707, %v1608
      %1725 = vst.msk [vmem:[#allocation2 + $0x88] sm:$0xff] %vm1707, %v1610
      %1726 = vst.msk [vmem:[#allocation2 + $0x90] sm:$0xff] %vm1707, %v1612
      %1727 = vst.msk [vmem:[#allocation2 + $0x98] sm:$0xff] %vm1707, %v1614
      %1728 = vst.msk [vmem:[#allocation2 + $0xa0] sm:$0xff] %vm1707, %v1616
      %1729 = vst.msk [vmem:[#allocation2 + $0xa8] sm:$0xff] %vm1707, %v1618
      %1730 = vst.msk [vmem:[#allocation2 + $0xb0] sm:$0xff] %vm1707, %v1620
      %1731 = vst.msk [vmem:[#allocation2 + $0xb8] sm:$0xff] %vm1707, %v1622
      %1732 = vst.msk [vmem:[#allocation2 + $0xc0] sm:$0xff] %vm1707, %v1624
      %1733 = vst.msk [vmem:[#allocation2 + $0xc8] sm:$0xff] %vm1707, %v1626
      %1734 = vst.msk [vmem:[#allocation2 + $0xd0] sm:$0xff] %vm1707, %v1628
      %1735 = vst.msk [vmem:[#allocation2 + $0xd8] sm:$0xff] %vm1707, %v1630
      %1736 = vst.msk [vmem:[#allocation2 + $0xe0] sm:$0xff] %vm1707, %v1632
      %1737 = vst.msk [vmem:[#allocation2 + $0xe8] sm:$0xff] %vm1707, %v1634
      %1738 = vst.msk [vmem:[#allocation2 + $0xf0] sm:$0xff] %vm1707, %v1636
      %1739 = vst.msk [vmem:[#allocation2 + $0xf8] sm:$0xff] %vm1707, %v1638
      %1740 = vst.msk [vmem:[#allocation2 + $0x100] sm:$0xff] %vm1707, %v1640
      %1741 = vst.msk [vmem:[#allocation2 + $0x108] sm:$0xff] %vm1707, %v1642
      %1742 = vst.msk [vmem:[#allocation2 + $0x110] sm:$0xff] %vm1707, %v1644
      %1743 = vst.msk [vmem:[#allocation2 + $0x118] sm:$0xff] %vm1707, %v1646
      %1744 = vst.msk [vmem:[#allocation2 + $0x120] sm:$0xff] %vm1707, %v1648
      %1745 = vst.msk [vmem:[#allocation2 + $0x128] sm:$0xff] %vm1707, %v1650
      %1746 = vst.msk [vmem:[#allocation2 + $0x130] sm:$0xff] %vm1707, %v1652
      %1747 = vst.msk [vmem:[#allocation2 + $0x138] sm:$0xff] %vm1707, %v1654
      %1748 = vst.msk [vmem:[#allocation2 + $0x140] sm:$0xff] %vm1707, %v1656
      %1749 = vst.msk [vmem:[#allocation2 + $0x148] sm:$0xff] %vm1707, %v1658
      %1750 = vst.msk [vmem:[#allocation2 + $0x150] sm:$0xff] %vm1707, %v1660
      %1751 = vst.msk [vmem:[#allocation2 + $0x158] sm:$0xff] %vm1707, %v1662
      %v1752 = vld [vmem:[%s306] sm:$0xff]
      %v1753 = vld [vmem:[%s306 + $0x8] sm:$0xff]
      %v1754 = vld [vmem:[%s306 + $0x10] sm:$0xff]
      %v1755 = vld [vmem:[%s306 + $0x18] sm:$0xff]
      %v1756 = vld [vmem:[%s306 + $0x20] sm:$0xff]
      %v1757 = vld [vmem:[%s306 + $0x28] sm:$0xff]
      %v1758 = vld [vmem:[%s306 + $0x30] sm:$0xff]
      %v1759 = vld [vmem:[%s306 + $0x38] sm:$0xff]
      %v1760 = vld [vmem:[%s306 + $0x40] sm:$0xff]
      %v1761 = vld [vmem:[%s306 + $0x48] sm:$0xff]
      %v1762 = vld [vmem:[%s306 + $0x50] sm:$0xff]
      %v1763 = vld [vmem:[%s306 + $0x58] sm:$0xff]
      %v1764 = vld [vmem:[%s306 + $0x60] sm:$0xff]
      %v1765 = vld [vmem:[%s306 + $0x68] sm:$0xff]
      %v1766 = vld [vmem:[%s306 + $0x70] sm:$0xff]
      %v1767 = vld [vmem:[%s306 + $0x78] sm:$0xff]
      %v1768 = vld [vmem:[%s306 + $0x80] sm:$0xff]
      %v1769 = vld [vmem:[%s306 + $0x88] sm:$0xff]
      %v1770 = vld [vmem:[%s306 + $0x90] sm:$0xff]
      %v1771 = vld [vmem:[%s306 + $0x98] sm:$0xff]
      %v1772 = vld [vmem:[%s306 + $0xa0] sm:$0xff]
      %v1773 = vld [vmem:[%s306 + $0xa8] sm:$0xff]
      %v1774 = vld [vmem:[%s306 + $0xb0] sm:$0xff]
      %v1775 = vld [vmem:[%s306 + $0xb8] sm:$0xff]
      %v1776 = vld [vmem:[%s306 + $0xc0] sm:$0xff]
      %v1777 = vld [vmem:[%s306 + $0xc8] sm:$0xff]
      %v1778 = vld [vmem:[%s306 + $0xd0] sm:$0xff]
      %v1779 = vld [vmem:[%s306 + $0xd8] sm:$0xff]
      %v1780 = vld [vmem:[%s306 + $0xe0] sm:$0xff]
      %v1781 = vld [vmem:[%s306 + $0xe8] sm:$0xff]
      %v1782 = vld [vmem:[%s306 + $0xf0] sm:$0xff]
      %v1783 = vld [vmem:[%s306 + $0xf8] sm:$0xff]
      %v1784 = vld [vmem:[%s306 + $0x100] sm:$0xff]
      %v1785 = vld [vmem:[%s306 + $0x108] sm:$0xff]
      %v1786 = vld [vmem:[%s306 + $0x110] sm:$0xff]
      %v1787 = vld [vmem:[%s306 + $0x118] sm:$0xff]
      %v1788 = vld [vmem:[%s306 + $0x120] sm:$0xff]
      %v1789 = vld [vmem:[%s306 + $0x128] sm:$0xff]
      %v1790 = vld [vmem:[%s306 + $0x130] sm:$0xff]
      %v1791 = vld [vmem:[%s306 + $0x138] sm:$0xff]
      %v1792 = vld [vmem:[%s306 + $0x140] sm:$0xff]
      %v1793 = vld [vmem:[%s306 + $0x148] sm:$0xff]
      %v1794 = vld [vmem:[%s306 + $0x150] sm:$0xff]
      %v1795 = vld [vmem:[%s306 + $0x158] sm:$0xff]
      %1840 = vrot.lane.b32.xlu0 %v1752, 16
      %v1841 = vpop.permute.xlu0 %1840
      %1842 = vrot.lane.b32.xlu0 %v1753, 16
      %v1843 = vpop.permute.xlu0 %1842
      %1844 = vrot.lane.b32.xlu0 %v1754, 16
      %v1845 = vpop.permute.xlu0 %1844
      %1846 = vrot.lane.b32.xlu0 %v1755, 16
      %v1847 = vpop.permute.xlu0 %1846
      %1848 = vrot.lane.b32.xlu0 %v1756, 16
      %v1849 = vpop.permute.xlu0 %1848
      %1850 = vrot.lane.b32.xlu0 %v1757, 16
      %v1851 = vpop.permute.xlu0 %1850
      %1852 = vrot.lane.b32.xlu0 %v1758, 16
      %v1853 = vpop.permute.xlu0 %1852
      %1854 = vrot.lane.b32.xlu0 %v1759, 16
      %v1855 = vpop.permute.xlu0 %1854
      %1856 = vrot.lane.b32.xlu0 %v1760, 16
      %v1857 = vpop.permute.xlu0 %1856
      %1858 = vrot.lane.b32.xlu0 %v1761, 16
      %v1859 = vpop.permute.xlu0 %1858
      %1860 = vrot.lane.b32.xlu0 %v1762, 16
      %v1861 = vpop.permute.xlu0 %1860
      %1862 = vrot.lane.b32.xlu0 %v1763, 16
      %v1863 = vpop.permute.xlu0 %1862
      %1864 = vrot.lane.b32.xlu0 %v1764, 16
      %v1865 = vpop.permute.xlu0 %1864
      %1866 = vrot.lane.b32.xlu0 %v1765, 16
      %v1867 = vpop.permute.xlu0 %1866
      %1868 = vrot.lane.b32.xlu0 %v1766, 16
      %v1869 = vpop.permute.xlu0 %1868
      %1870 = vrot.lane.b32.xlu0 %v1767, 16
      %v1871 = vpop.permute.xlu0 %1870
      %1872 = vrot.lane.b32.xlu0 %v1768, 16
      %v1873 = vpop.permute.xlu0 %1872
      %1874 = vrot.lane.b32.xlu0 %v1769, 16
      %v1875 = vpop.permute.xlu0 %1874
      %1876 = vrot.lane.b32.xlu0 %v1770, 16
      %v1877 = vpop.permute.xlu0 %1876
      %1878 = vrot.lane.b32.xlu0 %v1771, 16
      %v1879 = vpop.permute.xlu0 %1878
      %1880 = vrot.lane.b32.xlu0 %v1772, 16
      %v1881 = vpop.permute.xlu0 %1880
      %1882 = vrot.lane.b32.xlu0 %v1773, 16
      %v1883 = vpop.permute.xlu0 %1882
      %1884 = vrot.lane.b32.xlu0 %v1774, 16
      %v1885 = vpop.permute.xlu0 %1884
      %1886 = vrot.lane.b32.xlu0 %v1775, 16
      %v1887 = vpop.permute.xlu0 %1886
      %1888 = vrot.lane.b32.xlu0 %v1776, 16
      %v1889 = vpop.permute.xlu0 %1888
      %1890 = vrot.lane.b32.xlu0 %v1777, 16
      %v1891 = vpop.permute.xlu0 %1890
      %1892 = vrot.lane.b32.xlu0 %v1778, 16
      %v1893 = vpop.permute.xlu0 %1892
      %1894 = vrot.lane.b32.xlu0 %v1779, 16
      %v1895 = vpop.permute.xlu0 %1894
      %1896 = vrot.lane.b32.xlu0 %v1780, 16
      %v1897 = vpop.permute.xlu0 %1896
      %1898 = vrot.lane.b32.xlu0 %v1781, 16
      %v1899 = vpop.permute.xlu0 %1898
      %1900 = vrot.lane.b32.xlu0 %v1782, 16
      %v1901 = vpop.permute.xlu0 %1900
      %1902 = vrot.lane.b32.xlu0 %v1783, 16
      %v1903 = vpop.permute.xlu0 %1902
      %1904 = vrot.lane.b32.xlu0 %v1784, 16
      %v1905 = vpop.permute.xlu0 %1904
      %1906 = vrot.lane.b32.xlu0 %v1785, 16
      %v1907 = vpop.permute.xlu0 %1906
      %1908 = vrot.lane.b32.xlu0 %v1786, 16
      %v1909 = vpop.permute.xlu0 %1908
      %1910 = vrot.lane.b32.xlu0 %v1787, 16
      %v1911 = vpop.permute.xlu0 %1910
      %1912 = vrot.lane.b32.xlu0 %v1788, 16
      %v1913 = vpop.permute.xlu0 %1912
      %1914 = vrot.lane.b32.xlu0 %v1789, 16
      %v1915 = vpop.permute.xlu0 %1914
      %1916 = vrot.lane.b32.xlu0 %v1790, 16
      %v1917 = vpop.permute.xlu0 %1916
      %1918 = vrot.lane.b32.xlu0 %v1791, 16
      %v1919 = vpop.permute.xlu0 %1918
      %1920 = vrot.lane.b32.xlu0 %v1792, 16
      %v1921 = vpop.permute.xlu0 %1920
      %1922 = vrot.lane.b32.xlu0 %v1793, 16
      %v1923 = vpop.permute.xlu0 %1922
      %1924 = vrot.lane.b32.xlu0 %v1794, 16
      %v1925 = vpop.permute.xlu0 %1924
      %1926 = vrot.lane.b32.xlu0 %v1795, 16
      %v1927 = vpop.permute.xlu0 %1926
      %vm1972 = vcmask 162944
      %1973 = vst.msk [vmem:[#allocation2] sm:$0xff] %vm1972, %v1841
      %1974 = vst.msk [vmem:[#allocation2 + $0x8] sm:$0xff] %vm1972, %v1843
      %1975 = vst.msk [vmem:[#allocation2 + $0x10] sm:$0xff] %vm1972, %v1845
      %1976 = vst.msk [vmem:[#allocation2 + $0x18] sm:$0xff] %vm1972, %v1847
      %1977 = vst.msk [vmem:[#allocation2 + $0x20] sm:$0xff] %vm1972, %v1849
      %1978 = vst.msk [vmem:[#allocation2 + $0x28] sm:$0xff] %vm1972, %v1851
      %1979 = vst.msk [vmem:[#allocation2 + $0x30] sm:$0xff] %vm1972, %v1853
      %1980 = vst.msk [vmem:[#allocation2 + $0x38] sm:$0xff] %vm1972, %v1855
      %1981 = vst.msk [vmem:[#allocation2 + $0x40] sm:$0xff] %vm1972, %v1857
      %1982 = vst.msk [vmem:[#allocation2 + $0x48] sm:$0xff] %vm1972, %v1859
      %1983 = vst.msk [vmem:[#allocation2 + $0x50] sm:$0xff] %vm1972, %v1861
      %1984 = vst.msk [vmem:[#allocation2 + $0x58] sm:$0xff] %vm1972, %v1863
      %1985 = vst.msk [vmem:[#allocation2 + $0x60] sm:$0xff] %vm1972, %v1865
      %1986 = vst.msk [vmem:[#allocation2 + $0x68] sm:$0xff] %vm1972, %v1867
      %1987 = vst.msk [vmem:[#allocation2 + $0x70] sm:$0xff] %vm1972, %v1869
      %1988 = vst.msk [vmem:[#allocation2 + $0x78] sm:$0xff] %vm1972, %v1871
      %1989 = vst.msk [vmem:[#allocation2 + $0x80] sm:$0xff] %vm1972, %v1873
      %1990 = vst.msk [vmem:[#allocation2 + $0x88] sm:$0xff] %vm1972, %v1875
      %1991 = vst.msk [vmem:[#allocation2 + $0x90] sm:$0xff] %vm1972, %v1877
      %1992 = vst.msk [vmem:[#allocation2 + $0x98] sm:$0xff] %vm1972, %v1879
      %1993 = vst.msk [vmem:[#allocation2 + $0xa0] sm:$0xff] %vm1972, %v1881
      %1994 = vst.msk [vmem:[#allocation2 + $0xa8] sm:$0xff] %vm1972, %v1883
      %1995 = vst.msk [vmem:[#allocation2 + $0xb0] sm:$0xff] %vm1972, %v1885
      %1996 = vst.msk [vmem:[#allocation2 + $0xb8] sm:$0xff] %vm1972, %v1887
      %1997 = vst.msk [vmem:[#allocation2 + $0xc0] sm:$0xff] %vm1972, %v1889
      %1998 = vst.msk [vmem:[#allocation2 + $0xc8] sm:$0xff] %vm1972, %v1891
      %1999 = vst.msk [vmem:[#allocation2 + $0xd0] sm:$0xff] %vm1972, %v1893
      %2000 = vst.msk [vmem:[#allocation2 + $0xd8] sm:$0xff] %vm1972, %v1895
      %2001 = vst.msk [vmem:[#allocation2 + $0xe0] sm:$0xff] %vm1972, %v1897
      %2002 = vst.msk [vmem:[#allocation2 + $0xe8] sm:$0xff] %vm1972, %v1899
      %2003 = vst.msk [vmem:[#allocation2 + $0xf0] sm:$0xff] %vm1972, %v1901
      %2004 = vst.msk [vmem:[#allocation2 + $0xf8] sm:$0xff] %vm1972, %v1903
      %2005 = vst.msk [vmem:[#allocation2 + $0x100] sm:$0xff] %vm1972, %v1905
      %2006 = vst.msk [vmem:[#allocation2 + $0x108] sm:$0xff] %vm1972, %v1907
      %2007 = vst.msk [vmem:[#allocation2 + $0x110] sm:$0xff] %vm1972, %v1909
      %2008 = vst.msk [vmem:[#allocation2 + $0x118] sm:$0xff] %vm1972, %v1911
      %2009 = vst.msk [vmem:[#allocation2 + $0x120] sm:$0xff] %vm1972, %v1913
      %2010 = vst.msk [vmem:[#allocation2 + $0x128] sm:$0xff] %vm1972, %v1915
      %2011 = vst.msk [vmem:[#allocation2 + $0x130] sm:$0xff] %vm1972, %v1917
      %2012 = vst.msk [vmem:[#allocation2 + $0x138] sm:$0xff] %vm1972, %v1919
      %2013 = vst.msk [vmem:[#allocation2 + $0x140] sm:$0xff] %vm1972, %v1921
      %2014 = vst.msk [vmem:[#allocation2 + $0x148] sm:$0xff] %vm1972, %v1923
      %2015 = vst.msk [vmem:[#allocation2 + $0x150] sm:$0xff] %vm1972, %v1925
      %2016 = vst.msk [vmem:[#allocation2 + $0x158] sm:$0xff] %vm1972, %v1927
      %s2017 = sadd.s32 %s302, 133
      %s2018 = scalar_lea.vmem %s291, %s2017
      %v2019 = vld [vmem:[%s2018] sm:$0xff]
      %v2020 = vld [vmem:[%s2018 + $0x8] sm:$0xff]
      %v2021 = vld [vmem:[%s2018 + $0x10] sm:$0xff]
      %v2022 = vld [vmem:[%s2018 + $0x18] sm:$0xff]
      %v2023 = vld [vmem:[%s2018 + $0x20] sm:$0xff]
      %v2024 = vld [vmem:[%s2018 + $0x28] sm:$0xff]
      %v2025 = vld [vmem:[%s2018 + $0x30] sm:$0xff]
      %v2026 = vld [vmem:[%s2018 + $0x38] sm:$0xff]
      %v2027 = vld [vmem:[%s2018 + $0x40] sm:$0xff]
      %v2028 = vld [vmem:[%s2018 + $0x48] sm:$0xff]
      %v2029 = vld [vmem:[%s2018 + $0x50] sm:$0xff]
      %v2030 = vld [vmem:[%s2018 + $0x58] sm:$0xff]
      %v2031 = vld [vmem:[%s2018 + $0x60] sm:$0xff]
      %v2032 = vld [vmem:[%s2018 + $0x68] sm:$0xff]
      %v2033 = vld [vmem:[%s2018 + $0x70] sm:$0xff]
      %v2034 = vld [vmem:[%s2018 + $0x78] sm:$0xff]
      %v2035 = vld [vmem:[%s2018 + $0x80] sm:$0xff]
      %v2036 = vld [vmem:[%s2018 + $0x88] sm:$0xff]
      %v2037 = vld [vmem:[%s2018 + $0x90] sm:$0xff]
      %v2038 = vld [vmem:[%s2018 + $0x98] sm:$0xff]
      %v2039 = vld [vmem:[%s2018 + $0xa0] sm:$0xff]
      %v2040 = vld [vmem:[%s2018 + $0xa8] sm:$0xff]
      %v2041 = vld [vmem:[%s2018 + $0xb0] sm:$0xff]
      %v2042 = vld [vmem:[%s2018 + $0xb8] sm:$0xff]
      %v2043 = vld [vmem:[%s2018 + $0xc0] sm:$0xff]
      %v2044 = vld [vmem:[%s2018 + $0xc8] sm:$0xff]
      %v2045 = vld [vmem:[%s2018 + $0xd0] sm:$0xff]
      %v2046 = vld [vmem:[%s2018 + $0xd8] sm:$0xff]
      %v2047 = vld [vmem:[%s2018 + $0xe0] sm:$0xff]
      %v2048 = vld [vmem:[%s2018 + $0xe8] sm:$0xff]
      %v2049 = vld [vmem:[%s2018 + $0xf0] sm:$0xff]
      %v2050 = vld [vmem:[%s2018 + $0xf8] sm:$0xff]
      %v2051 = vld [vmem:[%s2018 + $0x100] sm:$0xff]
      %v2052 = vld [vmem:[%s2018 + $0x108] sm:$0xff]
      %v2053 = vld [vmem:[%s2018 + $0x110] sm:$0xff]
      %v2054 = vld [vmem:[%s2018 + $0x118] sm:$0xff]
      %v2055 = vld [vmem:[%s2018 + $0x120] sm:$0xff]
      %v2056 = vld [vmem:[%s2018 + $0x128] sm:$0xff]
      %v2057 = vld [vmem:[%s2018 + $0x130] sm:$0xff]
      %v2058 = vld [vmem:[%s2018 + $0x138] sm:$0xff]
      %v2059 = vld [vmem:[%s2018 + $0x140] sm:$0xff]
      %v2060 = vld [vmem:[%s2018 + $0x148] sm:$0xff]
      %v2061 = vld [vmem:[%s2018 + $0x150] sm:$0xff]
      %v2062 = vld [vmem:[%s2018 + $0x158] sm:$0xff]
      %2107 = vrot.lane.b32.xlu0 %v2019, 20
      %v2108 = vpop.permute.xlu0 %2107
      %2109 = vrot.lane.b32.xlu0 %v2020, 20
      %v2110 = vpop.permute.xlu0 %2109
      %2111 = vrot.lane.b32.xlu0 %v2021, 20
      %v2112 = vpop.permute.xlu0 %2111
      %2113 = vrot.lane.b32.xlu0 %v2022, 20
      %v2114 = vpop.permute.xlu0 %2113
      %2115 = vrot.lane.b32.xlu0 %v2023, 20
      %v2116 = vpop.permute.xlu0 %2115
      %2117 = vrot.lane.b32.xlu0 %v2024, 20
      %v2118 = vpop.permute.xlu0 %2117
      %2119 = vrot.lane.b32.xlu0 %v2025, 20
      %v2120 = vpop.permute.xlu0 %2119
      %2121 = vrot.lane.b32.xlu0 %v2026, 20
      %v2122 = vpop.permute.xlu0 %2121
      %2123 = vrot.lane.b32.xlu0 %v2027, 20
      %v2124 = vpop.permute.xlu0 %2123
      %2125 = vrot.lane.b32.xlu0 %v2028, 20
      %v2126 = vpop.permute.xlu0 %2125
      %2127 = vrot.lane.b32.xlu0 %v2029, 20
      %v2128 = vpop.permute.xlu0 %2127
      %2129 = vrot.lane.b32.xlu0 %v2030, 20
      %v2130 = vpop.permute.xlu0 %2129
      %2131 = vrot.lane.b32.xlu0 %v2031, 20
      %v2132 = vpop.permute.xlu0 %2131
      %2133 = vrot.lane.b32.xlu0 %v2032, 20
      %v2134 = vpop.permute.xlu0 %2133
      %2135 = vrot.lane.b32.xlu0 %v2033, 20
      %v2136 = vpop.permute.xlu0 %2135
      %2137 = vrot.lane.b32.xlu0 %v2034, 20
      %v2138 = vpop.permute.xlu0 %2137
      %2139 = vrot.lane.b32.xlu0 %v2035, 20
      %v2140 = vpop.permute.xlu0 %2139
      %2141 = vrot.lane.b32.xlu0 %v2036, 20
      %v2142 = vpop.permute.xlu0 %2141
      %2143 = vrot.lane.b32.xlu0 %v2037, 20
      %v2144 = vpop.permute.xlu0 %2143
      %2145 = vrot.lane.b32.xlu0 %v2038, 20
      %v2146 = vpop.permute.xlu0 %2145
      %2147 = vrot.lane.b32.xlu0 %v2039, 20
      %v2148 = vpop.permute.xlu0 %2147
      %2149 = vrot.lane.b32.xlu0 %v2040, 20
      %v2150 = vpop.permute.xlu0 %2149
      %2151 = vrot.lane.b32.xlu0 %v2041, 20
      %v2152 = vpop.permute.xlu0 %2151
      %2153 = vrot.lane.b32.xlu0 %v2042, 20
      %v2154 = vpop.permute.xlu0 %2153
      %2155 = vrot.lane.b32.xlu0 %v2043, 20
      %v2156 = vpop.permute.xlu0 %2155
      %2157 = vrot.lane.b32.xlu0 %v2044, 20
      %v2158 = vpop.permute.xlu0 %2157
      %2159 = vrot.lane.b32.xlu0 %v2045, 20
      %v2160 = vpop.permute.xlu0 %2159
      %2161 = vrot.lane.b32.xlu0 %v2046, 20
      %v2162 = vpop.permute.xlu0 %2161
      %2163 = vrot.lane.b32.xlu0 %v2047, 20
      %v2164 = vpop.permute.xlu0 %2163
      %2165 = vrot.lane.b32.xlu0 %v2048, 20
      %v2166 = vpop.permute.xlu0 %2165
      %2167 = vrot.lane.b32.xlu0 %v2049, 20
      %v2168 = vpop.permute.xlu0 %2167
      %2169 = vrot.lane.b32.xlu0 %v2050, 20
      %v2170 = vpop.permute.xlu0 %2169
      %2171 = vrot.lane.b32.xlu0 %v2051, 20
      %v2172 = vpop.permute.xlu0 %2171
      %2173 = vrot.lane.b32.xlu0 %v2052, 20
      %v2174 = vpop.permute.xlu0 %2173
      %2175 = vrot.lane.b32.xlu0 %v2053, 20
      %v2176 = vpop.permute.xlu0 %2175
      %2177 = vrot.lane.b32.xlu0 %v2054, 20
      %v2178 = vpop.permute.xlu0 %2177
      %2179 = vrot.lane.b32.xlu0 %v2055, 20
      %v2180 = vpop.permute.xlu0 %2179
      %2181 = vrot.lane.b32.xlu0 %v2056, 20
      %v2182 = vpop.permute.xlu0 %2181
      %2183 = vrot.lane.b32.xlu0 %v2057, 20
      %v2184 = vpop.permute.xlu0 %2183
      %2185 = vrot.lane.b32.xlu0 %v2058, 20
      %v2186 = vpop.permute.xlu0 %2185
      %2187 = vrot.lane.b32.xlu0 %v2059, 20
      %v2188 = vpop.permute.xlu0 %2187
      %2189 = vrot.lane.b32.xlu0 %v2060, 20
      %v2190 = vpop.permute.xlu0 %2189
      %2191 = vrot.lane.b32.xlu0 %v2061, 20
      %v2192 = vpop.permute.xlu0 %2191
      %2193 = vrot.lane.b32.xlu0 %v2062, 20
      %v2194 = vpop.permute.xlu0 %2193
      %vm2239 = vcmask 195744
      %2240 = vst.msk [vmem:[#allocation2] sm:$0xff] %vm2239, %v2108
      %2241 = vst.msk [vmem:[#allocation2 + $0x8] sm:$0xff] %vm2239, %v2110
      %2242 = vst.msk [vmem:[#allocation2 + $0x10] sm:$0xff] %vm2239, %v2112
      %2243 = vst.msk [vmem:[#allocation2 + $0x18] sm:$0xff] %vm2239, %v2114
      %2244 = vst.msk [vmem:[#allocation2 + $0x20] sm:$0xff] %vm2239, %v2116
      %2245 = vst.msk [vmem:[#allocation2 + $0x28] sm:$0xff] %vm2239, %v2118
      %2246 = vst.msk [vmem:[#allocation2 + $0x30] sm:$0xff] %vm2239, %v2120
      %2247 = vst.msk [vmem:[#allocation2 + $0x38] sm:$0xff] %vm2239, %v2122
      %2248 = vst.msk [vmem:[#allocation2 + $0x40] sm:$0xff] %vm2239, %v2124
      %2249 = vst.msk [vmem:[#allocation2 + $0x48] sm:$0xff] %vm2239, %v2126
      %2250 = vst.msk [vmem:[#allocation2 + $0x50] sm:$0xff] %vm2239, %v2128
      %2251 = vst.msk [vmem:[#allocation2 + $0x58] sm:$0xff] %vm2239, %v2130
      %2252 = vst.msk [vmem:[#allocation2 + $0x60] sm:$0xff] %vm2239, %v2132
      %2253 = vst.msk [vmem:[#allocation2 + $0x68] sm:$0xff] %vm2239, %v2134
      %2254 = vst.msk [vmem:[#allocation2 + $0x70] sm:$0xff] %vm2239, %v2136
      %2255 = vst.msk [vmem:[#allocation2 + $0x78] sm:$0xff] %vm2239, %v2138
      %2256 = vst.msk [vmem:[#allocation2 + $0x80] sm:$0xff] %vm2239, %v2140
      %2257 = vst.msk [vmem:[#allocation2 + $0x88] sm:$0xff] %vm2239, %v2142
      %2258 = vst.msk [vmem:[#allocation2 + $0x90] sm:$0xff] %vm2239, %v2144
      %2259 = vst.msk [vmem:[#allocation2 + $0x98] sm:$0xff] %vm2239, %v2146
      %2260 = vst.msk [vmem:[#allocation2 + $0xa0] sm:$0xff] %vm2239, %v2148
      %2261 = vst.msk [vmem:[#allocation2 + $0xa8] sm:$0xff] %vm2239, %v2150
      %2262 = vst.msk [vmem:[#allocation2 + $0xb0] sm:$0xff] %vm2239, %v2152
      %2263 = vst.msk [vmem:[#allocation2 + $0xb8] sm:$0xff] %vm2239, %v2154
      %2264 = vst.msk [vmem:[#allocation2 + $0xc0] sm:$0xff] %vm2239, %v2156
      %2265 = vst.msk [vmem:[#allocation2 + $0xc8] sm:$0xff] %vm2239, %v2158
      %2266 = vst.msk [vmem:[#allocation2 + $0xd0] sm:$0xff] %vm2239, %v2160
      %2267 = vst.msk [vmem:[#allocation2 + $0xd8] sm:$0xff] %vm2239, %v2162
      %2268 = vst.msk [vmem:[#allocation2 + $0xe0] sm:$0xff] %vm2239, %v2164
      %2269 = vst.msk [vmem:[#allocation2 + $0xe8] sm:$0xff] %vm2239, %v2166
      %2270 = vst.msk [vmem:[#allocation2 + $0xf0] sm:$0xff] %vm2239, %v2168
      %2271 = vst.msk [vmem:[#allocation2 + $0xf8] sm:$0xff] %vm2239, %v2170
      %2272 = vst.msk [vmem:[#allocation2 + $0x100] sm:$0xff] %vm2239, %v2172
      %2273 = vst.msk [vmem:[#allocation2 + $0x108] sm:$0xff] %vm2239, %v2174
      %2274 = vst.msk [vmem:[#allocation2 + $0x110] sm:$0xff] %vm2239, %v2176
      %2275 = vst.msk [vmem:[#allocation2 + $0x118] sm:$0xff] %vm2239, %v2178
      %2276 = vst.msk [vmem:[#allocation2 + $0x120] sm:$0xff] %vm2239, %v2180
      %2277 = vst.msk [vmem:[#allocation2 + $0x128] sm:$0xff] %vm2239, %v2182
      %2278 = vst.msk [vmem:[#allocation2 + $0x130] sm:$0xff] %vm2239, %v2184
      %2279 = vst.msk [vmem:[#allocation2 + $0x138] sm:$0xff] %vm2239, %v2186
      %2280 = vst.msk [vmem:[#allocation2 + $0x140] sm:$0xff] %vm2239, %v2188
      %2281 = vst.msk [vmem:[#allocation2 + $0x148] sm:$0xff] %vm2239, %v2190
      %2282 = vst.msk [vmem:[#allocation2 + $0x150] sm:$0xff] %vm2239, %v2192
      %2283 = vst.msk [vmem:[#allocation2 + $0x158] sm:$0xff] %vm2239, %v2194
      %s2284 = sadd.s32 %s302, 153
      %s2285 = scalar_lea.vmem %s291, %s2284
      %v2286 = vld [vmem:[%s2285] sm:$0xff]
      %v2287 = vld [vmem:[%s2285 + $0x8] sm:$0xff]
      %v2288 = vld [vmem:[%s2285 + $0x10] sm:$0xff]
      %v2289 = vld [vmem:[%s2285 + $0x18] sm:$0xff]
      %v2290 = vld [vmem:[%s2285 + $0x20] sm:$0xff]
      %v2291 = vld [vmem:[%s2285 + $0x28] sm:$0xff]
      %v2292 = vld [vmem:[%s2285 + $0x30] sm:$0xff]
      %v2293 = vld [vmem:[%s2285 + $0x38] sm:$0xff]
      %v2294 = vld [vmem:[%s2285 + $0x40] sm:$0xff]
      %v2295 = vld [vmem:[%s2285 + $0x48] sm:$0xff]
      %v2296 = vld [vmem:[%s2285 + $0x50] sm:$0xff]
      %v2297 = vld [vmem:[%s2285 + $0x58] sm:$0xff]
      %v2298 = vld [vmem:[%s2285 + $0x60] sm:$0xff]
      %v2299 = vld [vmem:[%s2285 + $0x68] sm:$0xff]
      %v2300 = vld [vmem:[%s2285 + $0x70] sm:$0xff]
      %v2301 = vld [vmem:[%s2285 + $0x78] sm:$0xff]
      %v2302 = vld [vmem:[%s2285 + $0x80] sm:$0xff]
      %v2303 = vld [vmem:[%s2285 + $0x88] sm:$0xff]
      %v2304 = vld [vmem:[%s2285 + $0x90] sm:$0xff]
      %v2305 = vld [vmem:[%s2285 + $0x98] sm:$0xff]
      %v2306 = vld [vmem:[%s2285 + $0xa0] sm:$0xff]
      %v2307 = vld [vmem:[%s2285 + $0xa8] sm:$0xff]
      %v2308 = vld [vmem:[%s2285 + $0xb0] sm:$0xff]
      %v2309 = vld [vmem:[%s2285 + $0xb8] sm:$0xff]
      %v2310 = vld [vmem:[%s2285 + $0xc0] sm:$0xff]
      %v2311 = vld [vmem:[%s2285 + $0xc8] sm:$0xff]
      %v2312 = vld [vmem:[%s2285 + $0xd0] sm:$0xff]
      %v2313 = vld [vmem:[%s2285 + $0xd8] sm:$0xff]
      %v2314 = vld [vmem:[%s2285 + $0xe0] sm:$0xff]
      %v2315 = vld [vmem:[%s2285 + $0xe8] sm:$0xff]
      %v2316 = vld [vmem:[%s2285 + $0xf0] sm:$0xff]
      %v2317 = vld [vmem:[%s2285 + $0xf8] sm:$0xff]
      %v2318 = vld [vmem:[%s2285 + $0x100] sm:$0xff]
      %v2319 = vld [vmem:[%s2285 + $0x108] sm:$0xff]
      %v2320 = vld [vmem:[%s2285 + $0x110] sm:$0xff]
      %v2321 = vld [vmem:[%s2285 + $0x118] sm:$0xff]
      %v2322 = vld [vmem:[%s2285 + $0x120] sm:$0xff]
      %v2323 = vld [vmem:[%s2285 + $0x128] sm:$0xff]
      %v2324 = vld [vmem:[%s2285 + $0x130] sm:$0xff]
      %v2325 = vld [vmem:[%s2285 + $0x138] sm:$0xff]
      %v2326 = vld [vmem:[%s2285 + $0x140] sm:$0xff]
      %v2327 = vld [vmem:[%s2285 + $0x148] sm:$0xff]
      %v2328 = vld [vmem:[%s2285 + $0x150] sm:$0xff]
      %v2329 = vld [vmem:[%s2285 + $0x158] sm:$0xff]
      %2374 = vrot.lane.b32.xlu0 %v2286, 24
      %v2375 = vpop.permute.xlu0 %2374
      %2376 = vrot.lane.b32.xlu0 %v2287, 24
      %v2377 = vpop.permute.xlu0 %2376
      %2378 = vrot.lane.b32.xlu0 %v2288, 24
      %v2379 = vpop.permute.xlu0 %2378
      %2380 = vrot.lane.b32.xlu0 %v2289, 24
      %v2381 = vpop.permute.xlu0 %2380
      %2382 = vrot.lane.b32.xlu0 %v2290, 24
      %v2383 = vpop.permute.xlu0 %2382
      %2384 = vrot.lane.b32.xlu0 %v2291, 24
      %v2385 = vpop.permute.xlu0 %2384
      %2386 = vrot.lane.b32.xlu0 %v2292, 24
      %v2387 = vpop.permute.xlu0 %2386
      %2388 = vrot.lane.b32.xlu0 %v2293, 24
      %v2389 = vpop.permute.xlu0 %2388
      %2390 = vrot.lane.b32.xlu0 %v2294, 24
      %v2391 = vpop.permute.xlu0 %2390
      %2392 = vrot.lane.b32.xlu0 %v2295, 24
      %v2393 = vpop.permute.xlu0 %2392
      %2394 = vrot.lane.b32.xlu0 %v2296, 24
      %v2395 = vpop.permute.xlu0 %2394
      %2396 = vrot.lane.b32.xlu0 %v2297, 24
      %v2397 = vpop.permute.xlu0 %2396
      %2398 = vrot.lane.b32.xlu0 %v2298, 24
      %v2399 = vpop.permute.xlu0 %2398
      %2400 = vrot.lane.b32.xlu0 %v2299, 24
      %v2401 = vpop.permute.xlu0 %2400
      %2402 = vrot.lane.b32.xlu0 %v2300, 24
      %v2403 = vpop.permute.xlu0 %2402
      %2404 = vrot.lane.b32.xlu0 %v2301, 24
      %v2405 = vpop.permute.xlu0 %2404
      %2406 = vrot.lane.b32.xlu0 %v2302, 24
      %v2407 = vpop.permute.xlu0 %2406
      %2408 = vrot.lane.b32.xlu0 %v2303, 24
      %v2409 = vpop.permute.xlu0 %2408
      %2410 = vrot.lane.b32.xlu0 %v2304, 24
      %v2411 = vpop.permute.xlu0 %2410
      %2412 = vrot.lane.b32.xlu0 %v2305, 24
      %v2413 = vpop.permute.xlu0 %2412
      %2414 = vrot.lane.b32.xlu0 %v2306, 24
      %v2415 = vpop.permute.xlu0 %2414
      %2416 = vrot.lane.b32.xlu0 %v2307, 24
      %v2417 = vpop.permute.xlu0 %2416
      %2418 = vrot.lane.b32.xlu0 %v2308, 24
      %v2419 = vpop.permute.xlu0 %2418
      %2420 = vrot.lane.b32.xlu0 %v2309, 24
      %v2421 = vpop.permute.xlu0 %2420
      %2422 = vrot.lane.b32.xlu0 %v2310, 24
      %v2423 = vpop.permute.xlu0 %2422
      %2424 = vrot.lane.b32.xlu0 %v2311, 24
      %v2425 = vpop.permute.xlu0 %2424
      %2426 = vrot.lane.b32.xlu0 %v2312, 24
      %v2427 = vpop.permute.xlu0 %2426
      %2428 = vrot.lane.b32.xlu0 %v2313, 24
      %v2429 = vpop.permute.xlu0 %2428
      %2430 = vrot.lane.b32.xlu0 %v2314, 24
      %v2431 = vpop.permute.xlu0 %2430
      %2432 = vrot.lane.b32.xlu0 %v2315, 24
      %v2433 = vpop.permute.xlu0 %2432
      %2434 = vrot.lane.b32.xlu0 %v2316, 24
      %v2435 = vpop.permute.xlu0 %2434
      %2436 = vrot.lane.b32.xlu0 %v2317, 24
      %v2437 = vpop.permute.xlu0 %2436
      %2438 = vrot.lane.b32.xlu0 %v2318, 24
      %v2439 = vpop.permute.xlu0 %2438
      %2440 = vrot.lane.b32.xlu0 %v2319, 24
      %v2441 = vpop.permute.xlu0 %2440
      %2442 = vrot.lane.b32.xlu0 %v2320, 24
      %v2443 = vpop.permute.xlu0 %2442
      %2444 = vrot.lane.b32.xlu0 %v2321, 24
      %v2445 = vpop.permute.xlu0 %2444
      %2446 = vrot.lane.b32.xlu0 %v2322, 24
      %v2447 = vpop.permute.xlu0 %2446
      %2448 = vrot.lane.b32.xlu0 %v2323, 24
      %v2449 = vpop.permute.xlu0 %2448
      %2450 = vrot.lane.b32.xlu0 %v2324, 24
      %v2451 = vpop.permute.xlu0 %2450
      %2452 = vrot.lane.b32.xlu0 %v2325, 24
      %v2453 = vpop.permute.xlu0 %2452
      %2454 = vrot.lane.b32.xlu0 %v2326, 24
      %v2455 = vpop.permute.xlu0 %2454
      %2456 = vrot.lane.b32.xlu0 %v2327, 24
      %v2457 = vpop.permute.xlu0 %2456
      %2458 = vrot.lane.b32.xlu0 %v2328, 24
      %v2459 = vpop.permute.xlu0 %2458
      %2460 = vrot.lane.b32.xlu0 %v2329, 24
      %v2461 = vpop.permute.xlu0 %2460
      %vm2506 = vcmask 228544
      %2507 = vst.msk [vmem:[#allocation2] sm:$0xff] %vm2506, %v2375
      %2508 = vst.msk [vmem:[#allocation2 + $0x8] sm:$0xff] %vm2506, %v2377
      %2509 = vst.msk [vmem:[#allocation2 + $0x10] sm:$0xff] %vm2506, %v2379
      %2510 = vst.msk [vmem:[#allocation2 + $0x18] sm:$0xff] %vm2506, %v2381
      %2511 = vst.msk [vmem:[#allocation2 + $0x20] sm:$0xff] %vm2506, %v2383
      %2512 = vst.msk [vmem:[#allocation2 + $0x28] sm:$0xff] %vm2506, %v2385
      %2513 = vst.msk [vmem:[#allocation2 + $0x30] sm:$0xff] %vm2506, %v2387
      %2514 = vst.msk [vmem:[#allocation2 + $0x38] sm:$0xff] %vm2506, %v2389
      %2515 = vst.msk [vmem:[#allocation2 + $0x40] sm:$0xff] %vm2506, %v2391
      %2516 = vst.msk [vmem:[#allocation2 + $0x48] sm:$0xff] %vm2506, %v2393
      %2517 = vst.msk [vmem:[#allocation2 + $0x50] sm:$0xff] %vm2506, %v2395
      %2518 = vst.msk [vmem:[#allocation2 + $0x58] sm:$0xff] %vm2506, %v2397
      %2519 = vst.msk [vmem:[#allocation2 + $0x60] sm:$0xff] %vm2506, %v2399
      %2520 = vst.msk [vmem:[#allocation2 + $0x68] sm:$0xff] %vm2506, %v2401
      %2521 = vst.msk [vmem:[#allocation2 + $0x70] sm:$0xff] %vm2506, %v2403
      %2522 = vst.msk [vmem:[#allocation2 + $0x78] sm:$0xff] %vm2506, %v2405
      %2523 = vst.msk [vmem:[#allocation2 + $0x80] sm:$0xff] %vm2506, %v2407
      %2524 = vst.msk [vmem:[#allocation2 + $0x88] sm:$0xff] %vm2506, %v2409
      %2525 = vst.msk [vmem:[#allocation2 + $0x90] sm:$0xff] %vm2506, %v2411
      %2526 = vst.msk [vmem:[#allocation2 + $0x98] sm:$0xff] %vm2506, %v2413
      %2527 = vst.msk [vmem:[#allocation2 + $0xa0] sm:$0xff] %vm2506, %v2415
      %2528 = vst.msk [vmem:[#allocation2 + $0xa8] sm:$0xff] %vm2506, %v2417
      %2529 = vst.msk [vmem:[#allocation2 + $0xb0] sm:$0xff] %vm2506, %v2419
      %2530 = vst.msk [vmem:[#allocation2 + $0xb8] sm:$0xff] %vm2506, %v2421
      %2531 = vst.msk [vmem:[#allocation2 + $0xc0] sm:$0xff] %vm2506, %v2423
      %2532 = vst.msk [vmem:[#allocation2 + $0xc8] sm:$0xff] %vm2506, %v2425
      %2533 = vst.msk [vmem:[#allocation2 + $0xd0] sm:$0xff] %vm2506, %v2427
      %2534 = vst.msk [vmem:[#allocation2 + $0xd8] sm:$0xff] %vm2506, %v2429
      %2535 = vst.msk [vmem:[#allocation2 + $0xe0] sm:$0xff] %vm2506, %v2431
      %2536 = vst.msk [vmem:[#allocation2 + $0xe8] sm:$0xff] %vm2506, %v2433
      %2537 = vst.msk [vmem:[#allocation2 + $0xf0] sm:$0xff] %vm2506, %v2435
      %2538 = vst.msk [vmem:[#allocation2 + $0xf8] sm:$0xff] %vm2506, %v2437
      %2539 = vst.msk [vmem:[#allocation2 + $0x100] sm:$0xff] %vm2506, %v2439
      %2540 = vst.msk [vmem:[#allocation2 + $0x108] sm:$0xff] %vm2506, %v2441
      %2541 = vst.msk [vmem:[#allocation2 + $0x110] sm:$0xff] %vm2506, %v2443
      %2542 = vst.msk [vmem:[#allocation2 + $0x118] sm:$0xff] %vm2506, %v2445
      %2543 = vst.msk [vmem:[#allocation2 + $0x120] sm:$0xff] %vm2506, %v2447
      %2544 = vst.msk [vmem:[#allocation2 + $0x128] sm:$0xff] %vm2506, %v2449
      %2545 = vst.msk [vmem:[#allocation2 + $0x130] sm:$0xff] %vm2506, %v2451
      %2546 = vst.msk [vmem:[#allocation2 + $0x138] sm:$0xff] %vm2506, %v2453
      %2547 = vst.msk [vmem:[#allocation2 + $0x140] sm:$0xff] %vm2506, %v2455
      %2548 = vst.msk [vmem:[#allocation2 + $0x148] sm:$0xff] %vm2506, %v2457
      %2549 = vst.msk [vmem:[#allocation2 + $0x150] sm:$0xff] %vm2506, %v2459
      %2550 = vst.msk [vmem:[#allocation2 + $0x158] sm:$0xff] %vm2506, %v2461
      %s2551 = sadd.s32 %s302, 154
      %s2552 = scalar_lea.vmem %s291, %s2551
      %v2553 = vld [vmem:[%s2552] sm:$0xff]
      %v2554 = vld [vmem:[%s2552 + $0x8] sm:$0xff]
      %v2555 = vld [vmem:[%s2552 + $0x10] sm:$0xff]
      %v2556 = vld [vmem:[%s2552 + $0x18] sm:$0xff]
      %v2557 = vld [vmem:[%s2552 + $0x20] sm:$0xff]
      %v2558 = vld [vmem:[%s2552 + $0x28] sm:$0xff]
      %v2559 = vld [vmem:[%s2552 + $0x30] sm:$0xff]
      %v2560 = vld [vmem:[%s2552 + $0x38] sm:$0xff]
      %v2561 = vld [vmem:[%s2552 + $0x40] sm:$0xff]
      %v2562 = vld [vmem:[%s2552 + $0x48] sm:$0xff]
      %v2563 = vld [vmem:[%s2552 + $0x50] sm:$0xff]
      %v2564 = vld [vmem:[%s2552 + $0x58] sm:$0xff]
      %v2565 = vld [vmem:[%s2552 + $0x60] sm:$0xff]
      %v2566 = vld [vmem:[%s2552 + $0x68] sm:$0xff]
      %v2567 = vld [vmem:[%s2552 + $0x70] sm:$0xff]
      %v2568 = vld [vmem:[%s2552 + $0x78] sm:$0xff]
      %v2569 = vld [vmem:[%s2552 + $0x80] sm:$0xff]
      %v2570 = vld [vmem:[%s2552 + $0x88] sm:$0xff]
      %v2571 = vld [vmem:[%s2552 + $0x90] sm:$0xff]
      %v2572 = vld [vmem:[%s2552 + $0x98] sm:$0xff]
      %v2573 = vld [vmem:[%s2552 + $0xa0] sm:$0xff]
      %v2574 = vld [vmem:[%s2552 + $0xa8] sm:$0xff]
      %v2575 = vld [vmem:[%s2552 + $0xb0] sm:$0xff]
      %v2576 = vld [vmem:[%s2552 + $0xb8] sm:$0xff]
      %v2577 = vld [vmem:[%s2552 + $0xc0] sm:$0xff]
      %v2578 = vld [vmem:[%s2552 + $0xc8] sm:$0xff]
      %v2579 = vld [vmem:[%s2552 + $0xd0] sm:$0xff]
      %v2580 = vld [vmem:[%s2552 + $0xd8] sm:$0xff]
      %v2581 = vld [vmem:[%s2552 + $0xe0] sm:$0xff]
      %v2582 = vld [vmem:[%s2552 + $0xe8] sm:$0xff]
      %v2583 = vld [vmem:[%s2552 + $0xf0] sm:$0xff]
      %v2584 = vld [vmem:[%s2552 + $0xf8] sm:$0xff]
      %v2585 = vld [vmem:[%s2552 + $0x100] sm:$0xff]
      %v2586 = vld [vmem:[%s2552 + $0x108] sm:$0xff]
      %v2587 = vld [vmem:[%s2552 + $0x110] sm:$0xff]
      %v2588 = vld [vmem:[%s2552 + $0x118] sm:$0xff]
      %v2589 = vld [vmem:[%s2552 + $0x120] sm:$0xff]
      %v2590 = vld [vmem:[%s2552 + $0x128] sm:$0xff]
      %v2591 = vld [vmem:[%s2552 + $0x130] sm:$0xff]
      %v2592 = vld [vmem:[%s2552 + $0x138] sm:$0xff]
      %v2593 = vld [vmem:[%s2552 + $0x140] sm:$0xff]
      %v2594 = vld [vmem:[%s2552 + $0x148] sm:$0xff]
      %v2595 = vld [vmem:[%s2552 + $0x150] sm:$0xff]
      %v2596 = vld [vmem:[%s2552 + $0x158] sm:$0xff]
      %2641 = vrot.lane.b32.xlu0 %v2553, 28
      %v2642 = vpop.permute.xlu0 %2641
      %2643 = vrot.lane.b32.xlu0 %v2554, 28
      %v2644 = vpop.permute.xlu0 %2643
      %2645 = vrot.lane.b32.xlu0 %v2555, 28
      %v2646 = vpop.permute.xlu0 %2645
      %2647 = vrot.lane.b32.xlu0 %v2556, 28
      %v2648 = vpop.permute.xlu0 %2647
      %2649 = vrot.lane.b32.xlu0 %v2557, 28
      %v2650 = vpop.permute.xlu0 %2649
      %2651 = vrot.lane.b32.xlu0 %v2558, 28
      %v2652 = vpop.permute.xlu0 %2651
      %2653 = vrot.lane.b32.xlu0 %v2559, 28
      %v2654 = vpop.permute.xlu0 %2653
      %2655 = vrot.lane.b32.xlu0 %v2560, 28
      %v2656 = vpop.permute.xlu0 %2655
      %2657 = vrot.lane.b32.xlu0 %v2561, 28
      %v2658 = vpop.permute.xlu0 %2657
      %2659 = vrot.lane.b32.xlu0 %v2562, 28
      %v2660 = vpop.permute.xlu0 %2659
      %2661 = vrot.lane.b32.xlu0 %v2563, 28
      %v2662 = vpop.permute.xlu0 %2661
      %2663 = vrot.lane.b32.xlu0 %v2564, 28
      %v2664 = vpop.permute.xlu0 %2663
      %2665 = vrot.lane.b32.xlu0 %v2565, 28
      %v2666 = vpop.permute.xlu0 %2665
      %2667 = vrot.lane.b32.xlu0 %v2566, 28
      %v2668 = vpop.permute.xlu0 %2667
      %2669 = vrot.lane.b32.xlu0 %v2567, 28
      %v2670 = vpop.permute.xlu0 %2669
      %2671 = vrot.lane.b32.xlu0 %v2568, 28
      %v2672 = vpop.permute.xlu0 %2671
      %2673 = vrot.lane.b32.xlu0 %v2569, 28
      %v2674 = vpop.permute.xlu0 %2673
      %2675 = vrot.lane.b32.xlu0 %v2570, 28
      %v2676 = vpop.permute.xlu0 %2675
      %2677 = vrot.lane.b32.xlu0 %v2571, 28
      %v2678 = vpop.permute.xlu0 %2677
      %2679 = vrot.lane.b32.xlu0 %v2572, 28
      %v2680 = vpop.permute.xlu0 %2679
      %2681 = vrot.lane.b32.xlu0 %v2573, 28
      %v2682 = vpop.permute.xlu0 %2681
      %2683 = vrot.lane.b32.xlu0 %v2574, 28
      %v2684 = vpop.permute.xlu0 %2683
      %2685 = vrot.lane.b32.xlu0 %v2575, 28
      %v2686 = vpop.permute.xlu0 %2685
      %2687 = vrot.lane.b32.xlu0 %v2576, 28
      %v2688 = vpop.permute.xlu0 %2687
      %2689 = vrot.lane.b32.xlu0 %v2577, 28
      %v2690 = vpop.permute.xlu0 %2689
      %2691 = vrot.lane.b32.xlu0 %v2578, 28
      %v2692 = vpop.permute.xlu0 %2691
      %2693 = vrot.lane.b32.xlu0 %v2579, 28
      %v2694 = vpop.permute.xlu0 %2693
      %2695 = vrot.lane.b32.xlu0 %v2580, 28
      %v2696 = vpop.permute.xlu0 %2695
      %2697 = vrot.lane.b32.xlu0 %v2581, 28
      %v2698 = vpop.permute.xlu0 %2697
      %2699 = vrot.lane.b32.xlu0 %v2582, 28
      %v2700 = vpop.permute.xlu0 %2699
      %2701 = vrot.lane.b32.xlu0 %v2583, 28
      %v2702 = vpop.permute.xlu0 %2701
      %2703 = vrot.lane.b32.xlu0 %v2584, 28
      %v2704 = vpop.permute.xlu0 %2703
      %2705 = vrot.lane.b32.xlu0 %v2585, 28
      %v2706 = vpop.permute.xlu0 %2705
      %2707 = vrot.lane.b32.xlu0 %v2586, 28
      %v2708 = vpop.permute.xlu0 %2707
      %2709 = vrot.lane.b32.xlu0 %v2587, 28
      %v2710 = vpop.permute.xlu0 %2709
      %2711 = vrot.lane.b32.xlu0 %v2588, 28
      %v2712 = vpop.permute.xlu0 %2711
      %2713 = vrot.lane.b32.xlu0 %v2589, 28
      %v2714 = vpop.permute.xlu0 %2713
      %2715 = vrot.lane.b32.xlu0 %v2590, 28
      %v2716 = vpop.permute.xlu0 %2715
      %2717 = vrot.lane.b32.xlu0 %v2591, 28
      %v2718 = vpop.permute.xlu0 %2717
      %2719 = vrot.lane.b32.xlu0 %v2592, 28
      %v2720 = vpop.permute.xlu0 %2719
      %2721 = vrot.lane.b32.xlu0 %v2593, 28
      %v2722 = vpop.permute.xlu0 %2721
      %2723 = vrot.lane.b32.xlu0 %v2594, 28
      %v2724 = vpop.permute.xlu0 %2723
      %2725 = vrot.lane.b32.xlu0 %v2595, 28
      %v2726 = vpop.permute.xlu0 %2725
      %2727 = vrot.lane.b32.xlu0 %v2596, 28
      %v2728 = vpop.permute.xlu0 %2727
      %vm2773 = vcmask 261344
      %2774 = vst.msk [vmem:[#allocation2] sm:$0xff] %vm2773, %v2642
      %2775 = vst.msk [vmem:[#allocation2 + $0x8] sm:$0xff] %vm2773, %v2644
      %2776 = vst.msk [vmem:[#allocation2 + $0x10] sm:$0xff] %vm2773, %v2646
      %2777 = vst.msk [vmem:[#allocation2 + $0x18] sm:$0xff] %vm2773, %v2648
      %2778 = vst.msk [vmem:[#allocation2 + $0x20] sm:$0xff] %vm2773, %v2650
      %2779 = vst.msk [vmem:[#allocation2 + $0x28] sm:$0xff] %vm2773, %v2652
      %2780 = vst.msk [vmem:[#allocation2 + $0x30] sm:$0xff] %vm2773, %v2654
      %2781 = vst.msk [vmem:[#allocation2 + $0x38] sm:$0xff] %vm2773, %v2656
      %2782 = vst.msk [vmem:[#allocation2 + $0x40] sm:$0xff] %vm2773, %v2658
      %2783 = vst.msk [vmem:[#allocation2 + $0x48] sm:$0xff] %vm2773, %v2660
      %2784 = vst.msk [vmem:[#allocation2 + $0x50] sm:$0xff] %vm2773, %v2662
      %2785 = vst.msk [vmem:[#allocation2 + $0x58] sm:$0xff] %vm2773, %v2664
      %2786 = vst.msk [vmem:[#allocation2 + $0x60] sm:$0xff] %vm2773, %v2666
      %2787 = vst.msk [vmem:[#allocation2 + $0x68] sm:$0xff] %vm2773, %v2668
      %2788 = vst.msk [vmem:[#allocation2 + $0x70] sm:$0xff] %vm2773, %v2670
      %2789 = vst.msk [vmem:[#allocation2 + $0x78] sm:$0xff] %vm2773, %v2672
      %2790 = vst.msk [vmem:[#allocation2 + $0x80] sm:$0xff] %vm2773, %v2674
      %2791 = vst.msk [vmem:[#allocation2 + $0x88] sm:$0xff] %vm2773, %v2676
      %2792 = vst.msk [vmem:[#allocation2 + $0x90] sm:$0xff] %vm2773, %v2678
      %2793 = vst.msk [vmem:[#allocation2 + $0x98] sm:$0xff] %vm2773, %v2680
      %2794 = vst.msk [vmem:[#allocation2 + $0xa0] sm:$0xff] %vm2773, %v2682
      %2795 = vst.msk [vmem:[#allocation2 + $0xa8] sm:$0xff] %vm2773, %v2684
      %2796 = vst.msk [vmem:[#allocation2 + $0xb0] sm:$0xff] %vm2773, %v2686
      %2797 = vst.msk [vmem:[#allocation2 + $0xb8] sm:$0xff] %vm2773, %v2688
      %2798 = vst.msk [vmem:[#allocation2 + $0xc0] sm:$0xff] %vm2773, %v2690
      %2799 = vst.msk [vmem:[#allocation2 + $0xc8] sm:$0xff] %vm2773, %v2692
      %2800 = vst.msk [vmem:[#allocation2 + $0xd0] sm:$0xff] %vm2773, %v2694
      %2801 = vst.msk [vmem:[#allocation2 + $0xd8] sm:$0xff] %vm2773, %v2696
      %2802 = vst.msk [vmem:[#allocation2 + $0xe0] sm:$0xff] %vm2773, %v2698
      %2803 = vst.msk [vmem:[#allocation2 + $0xe8] sm:$0xff] %vm2773, %v2700
      %2804 = vst.msk [vmem:[#allocation2 + $0xf0] sm:$0xff] %vm2773, %v2702
      %2805 = vst.msk [vmem:[#allocation2 + $0xf8] sm:$0xff] %vm2773, %v2704
      %2806 = vst.msk [vmem:[#allocation2 + $0x100] sm:$0xff] %vm2773, %v2706
      %2807 = vst.msk [vmem:[#allocation2 + $0x108] sm:$0xff] %vm2773, %v2708
      %2808 = vst.msk [vmem:[#allocation2 + $0x110] sm:$0xff] %vm2773, %v2710
      %2809 = vst.msk [vmem:[#allocation2 + $0x118] sm:$0xff] %vm2773, %v2712
      %2810 = vst.msk [vmem:[#allocation2 + $0x120] sm:$0xff] %vm2773, %v2714
      %2811 = vst.msk [vmem:[#allocation2 + $0x128] sm:$0xff] %vm2773, %v2716
      %2812 = vst.msk [vmem:[#allocation2 + $0x130] sm:$0xff] %vm2773, %v2718
      %2813 = vst.msk [vmem:[#allocation2 + $0x138] sm:$0xff] %vm2773, %v2720
      %2814 = vst.msk [vmem:[#allocation2 + $0x140] sm:$0xff] %vm2773, %v2722
      %2815 = vst.msk [vmem:[#allocation2 + $0x148] sm:$0xff] %vm2773, %v2724
      %2816 = vst.msk [vmem:[#allocation2 + $0x150] sm:$0xff] %vm2773, %v2726
      %2817 = vst.msk [vmem:[#allocation2 + $0x158] sm:$0xff] %vm2773, %v2728
      %s2818 = sadd.s32 %s302, 155
      %s2819 = scalar_lea.vmem %s291, %s2818
      %v2820 = vld [vmem:[%s2819] sm:$0xff]
      %v2821 = vld [vmem:[%s2819 + $0x8] sm:$0xff]
      %v2822 = vld [vmem:[%s2819 + $0x10] sm:$0xff]
      %v2823 = vld [vmem:[%s2819 + $0x18] sm:$0xff]
      %v2824 = vld [vmem:[%s2819 + $0x20] sm:$0xff]
      %v2825 = vld [vmem:[%s2819 + $0x28] sm:$0xff]
      %v2826 = vld [vmem:[%s2819 + $0x30] sm:$0xff]
      %v2827 = vld [vmem:[%s2819 + $0x38] sm:$0xff]
      %v2828 = vld [vmem:[%s2819 + $0x40] sm:$0xff]
      %v2829 = vld [vmem:[%s2819 + $0x48] sm:$0xff]
      %v2830 = vld [vmem:[%s2819 + $0x50] sm:$0xff]
      %v2831 = vld [vmem:[%s2819 + $0x58] sm:$0xff]
      %v2832 = vld [vmem:[%s2819 + $0x60] sm:$0xff]
      %v2833 = vld [vmem:[%s2819 + $0x68] sm:$0xff]
      %v2834 = vld [vmem:[%s2819 + $0x70] sm:$0xff]
      %v2835 = vld [vmem:[%s2819 + $0x78] sm:$0xff]
      %v2836 = vld [vmem:[%s2819 + $0x80] sm:$0xff]
      %v2837 = vld [vmem:[%s2819 + $0x88] sm:$0xff]
      %v2838 = vld [vmem:[%s2819 + $0x90] sm:$0xff]
      %v2839 = vld [vmem:[%s2819 + $0x98] sm:$0xff]
      %v2840 = vld [vmem:[%s2819 + $0xa0] sm:$0xff]
      %v2841 = vld [vmem:[%s2819 + $0xa8] sm:$0xff]
      %v2842 = vld [vmem:[%s2819 + $0xb0] sm:$0xff]
      %v2843 = vld [vmem:[%s2819 + $0xb8] sm:$0xff]
      %v2844 = vld [vmem:[%s2819 + $0xc0] sm:$0xff]
      %v2845 = vld [vmem:[%s2819 + $0xc8] sm:$0xff]
      %v2846 = vld [vmem:[%s2819 + $0xd0] sm:$0xff]
      %v2847 = vld [vmem:[%s2819 + $0xd8] sm:$0xff]
      %v2848 = vld [vmem:[%s2819 + $0xe0] sm:$0xff]
      %v2849 = vld [vmem:[%s2819 + $0xe8] sm:$0xff]
      %v2850 = vld [vmem:[%s2819 + $0xf0] sm:$0xff]
      %v2851 = vld [vmem:[%s2819 + $0xf8] sm:$0xff]
      %v2852 = vld [vmem:[%s2819 + $0x100] sm:$0xff]
      %v2853 = vld [vmem:[%s2819 + $0x108] sm:$0xff]
      %v2854 = vld [vmem:[%s2819 + $0x110] sm:$0xff]
      %v2855 = vld [vmem:[%s2819 + $0x118] sm:$0xff]
      %v2856 = vld [vmem:[%s2819 + $0x120] sm:$0xff]
      %v2857 = vld [vmem:[%s2819 + $0x128] sm:$0xff]
      %v2858 = vld [vmem:[%s2819 + $0x130] sm:$0xff]
      %v2859 = vld [vmem:[%s2819 + $0x138] sm:$0xff]
      %v2860 = vld [vmem:[%s2819 + $0x140] sm:$0xff]
      %v2861 = vld [vmem:[%s2819 + $0x148] sm:$0xff]
      %v2862 = vld [vmem:[%s2819 + $0x150] sm:$0xff]
      %v2863 = vld [vmem:[%s2819 + $0x158] sm:$0xff]
      %2908 = vrot.lane.b32.xlu0 %v2820, 32
      %v2909 = vpop.permute.xlu0 %2908
      %2910 = vrot.lane.b32.xlu0 %v2821, 32
      %v2911 = vpop.permute.xlu0 %2910
      %2912 = vrot.lane.b32.xlu0 %v2822, 32
      %v2913 = vpop.permute.xlu0 %2912
      %2914 = vrot.lane.b32.xlu0 %v2823, 32
      %v2915 = vpop.permute.xlu0 %2914
      %2916 = vrot.lane.b32.xlu0 %v2824, 32
      %v2917 = vpop.permute.xlu0 %2916
      %2918 = vrot.lane.b32.xlu0 %v2825, 32
      %v2919 = vpop.permute.xlu0 %2918
      %2920 = vrot.lane.b32.xlu0 %v2826, 32
      %v2921 = vpop.permute.xlu0 %2920
      %2922 = vrot.lane.b32.xlu0 %v2827, 32
      %v2923 = vpop.permute.xlu0 %2922
      %2924 = vrot.lane.b32.xlu0 %v2828, 32
      %v2925 = vpop.permute.xlu0 %2924
      %2926 = vrot.lane.b32.xlu0 %v2829, 32
      %v2927 = vpop.permute.xlu0 %2926
      %2928 = vrot.lane.b32.xlu0 %v2830, 32
      %v2929 = vpop.permute.xlu0 %2928
      %2930 = vrot.lane.b32.xlu0 %v2831, 32
      %v2931 = vpop.permute.xlu0 %2930
      %2932 = vrot.lane.b32.xlu0 %v2832, 32
      %v2933 = vpop.permute.xlu0 %2932
      %2934 = vrot.lane.b32.xlu0 %v2833, 32
      %v2935 = vpop.permute.xlu0 %2934
      %2936 = vrot.lane.b32.xlu0 %v2834, 32
      %v2937 = vpop.permute.xlu0 %2936
      %2938 = vrot.lane.b32.xlu0 %v2835, 32
      %v2939 = vpop.permute.xlu0 %2938
      %2940 = vrot.lane.b32.xlu0 %v2836, 32
      %v2941 = vpop.permute.xlu0 %2940
      %2942 = vrot.lane.b32.xlu0 %v2837, 32
      %v2943 = vpop.permute.xlu0 %2942
      %2944 = vrot.lane.b32.xlu0 %v2838, 32
      %v2945 = vpop.permute.xlu0 %2944
      %2946 = vrot.lane.b32.xlu0 %v2839, 32
      %v2947 = vpop.permute.xlu0 %2946
      %2948 = vrot.lane.b32.xlu0 %v2840, 32
      %v2949 = vpop.permute.xlu0 %2948
      %2950 = vrot.lane.b32.xlu0 %v2841, 32
      %v2951 = vpop.permute.xlu0 %2950
      %2952 = vrot.lane.b32.xlu0 %v2842, 32
      %v2953 = vpop.permute.xlu0 %2952
      %2954 = vrot.lane.b32.xlu0 %v2843, 32
      %v2955 = vpop.permute.xlu0 %2954
      %2956 = vrot.lane.b32.xlu0 %v2844, 32
      %v2957 = vpop.permute.xlu0 %2956
      %2958 = vrot.lane.b32.xlu0 %v2845, 32
      %v2959 = vpop.permute.xlu0 %2958
      %2960 = vrot.lane.b32.xlu0 %v2846, 32
      %v2961 = vpop.permute.xlu0 %2960
      %2962 = vrot.lane.b32.xlu0 %v2847, 32
      %v2963 = vpop.permute.xlu0 %2962
      %2964 = vrot.lane.b32.xlu0 %v2848, 32
      %v2965 = vpop.permute.xlu0 %2964
      %2966 = vrot.lane.b32.xlu0 %v2849, 32
      %v2967 = vpop.permute.xlu0 %2966
      %2968 = vrot.lane.b32.xlu0 %v2850, 32
      %v2969 = vpop.permute.xlu0 %2968
      %2970 = vrot.lane.b32.xlu0 %v2851, 32
      %v2971 = vpop.permute.xlu0 %2970
      %2972 = vrot.lane.b32.xlu0 %v2852, 32
      %v2973 = vpop.permute.xlu0 %2972
      %2974 = vrot.lane.b32.xlu0 %v2853, 32
      %v2975 = vpop.permute.xlu0 %2974
      %2976 = vrot.lane.b32.xlu0 %v2854, 32
      %v2977 = vpop.permute.xlu0 %2976
      %2978 = vrot.lane.b32.xlu0 %v2855, 32
      %v2979 = vpop.permute.xlu0 %2978
      %2980 = vrot.lane.b32.xlu0 %v2856, 32
      %v2981 = vpop.permute.xlu0 %2980
      %2982 = vrot.lane.b32.xlu0 %v2857, 32
      %v2983 = vpop.permute.xlu0 %2982
      %2984 = vrot.lane.b32.xlu0 %v2858, 32
      %v2985 = vpop.permute.xlu0 %2984
      %2986 = vrot.lane.b32.xlu0 %v2859, 32
      %v2987 = vpop.permute.xlu0 %2986
      %2988 = vrot.lane.b32.xlu0 %v2860, 32
      %v2989 = vpop.permute.xlu0 %2988
      %2990 = vrot.lane.b32.xlu0 %v2861, 32
      %v2991 = vpop.permute.xlu0 %2990
      %2992 = vrot.lane.b32.xlu0 %v2862, 32
      %v2993 = vpop.permute.xlu0 %2992
      %2994 = vrot.lane.b32.xlu0 %v2863, 32
      %v2995 = vpop.permute.xlu0 %2994
      %vm3040 = vcmask 294144
      %3041 = vst.msk [vmem:[#allocation2] sm:$0xff] %vm3040, %v2909
      %3042 = vst.msk [vmem:[#allocation2 + $0x8] sm:$0xff] %vm3040, %v2911
      %3043 = vst.msk [vmem:[#allocation2 + $0x10] sm:$0xff] %vm3040, %v2913
      %3044 = vst.msk [vmem:[#allocation2 + $0x18] sm:$0xff] %vm3040, %v2915
      %3045 = vst.msk [vmem:[#allocation2 + $0x20] sm:$0xff] %vm3040, %v2917
      %3046 = vst.msk [vmem:[#allocation2 + $0x28] sm:$0xff] %vm3040, %v2919
      %3047 = vst.msk [vmem:[#allocation2 + $0x30] sm:$0xff] %vm3040, %v2921
      %3048 = vst.msk [vmem:[#allocation2 + $0x38] sm:$0xff] %vm3040, %v2923
      %3049 = vst.msk [vmem:[#allocation2 + $0x40] sm:$0xff] %vm3040, %v2925
      %3050 = vst.msk [vmem:[#allocation2 + $0x48] sm:$0xff] %vm3040, %v2927
      %3051 = vst.msk [vmem:[#allocation2 + $0x50] sm:$0xff] %vm3040, %v2929
      %3052 = vst.msk [vmem:[#allocation2 + $0x58] sm:$0xff] %vm3040, %v2931
      %3053 = vst.msk [vmem:[#allocation2 + $0x60] sm:$0xff] %vm3040, %v2933
      %3054 = vst.msk [vmem:[#allocation2 + $0x68] sm:$0xff] %vm3040, %v2935
      %3055 = vst.msk [vmem:[#allocation2 + $0x70] sm:$0xff] %vm3040, %v2937
      %3056 = vst.msk [vmem:[#allocation2 + $0x78] sm:$0xff] %vm3040, %v2939
      %3057 = vst.msk [vmem:[#allocation2 + $0x80] sm:$0xff] %vm3040, %v2941
      %3058 = vst.msk [vmem:[#allocation2 + $0x88] sm:$0xff] %vm3040, %v2943
      %3059 = vst.msk [vmem:[#allocation2 + $0x90] sm:$0xff] %vm3040, %v2945
      %3060 = vst.msk [vmem:[#allocation2 + $0x98] sm:$0xff] %vm3040, %v2947
      %3061 = vst.msk [vmem:[#allocation2 + $0xa0] sm:$0xff] %vm3040, %v2949
      %3062 = vst.msk [vmem:[#allocation2 + $0xa8] sm:$0xff] %vm3040, %v2951
      %3063 = vst.msk [vmem:[#allocation2 + $0xb0] sm:$0xff] %vm3040, %v2953
      %3064 = vst.msk [vmem:[#allocation2 + $0xb8] sm:$0xff] %vm3040, %v2955
      %3065 = vst.msk [vmem:[#allocation2 + $0xc0] sm:$0xff] %vm3040, %v2957
      %3066 = vst.msk [vmem:[#allocation2 + $0xc8] sm:$0xff] %vm3040, %v2959
      %3067 = vst.msk [vmem:[#allocation2 + $0xd0] sm:$0xff] %vm3040, %v2961
      %3068 = vst.msk [vmem:[#allocation2 + $0xd8] sm:$0xff] %vm3040, %v2963
      %3069 = vst.msk [vmem:[#allocation2 + $0xe0] sm:$0xff] %vm3040, %v2965
      %3070 = vst.msk [vmem:[#allocation2 + $0xe8] sm:$0xff] %vm3040, %v2967
      %3071 = vst.msk [vmem:[#allocation2 + $0xf0] sm:$0xff] %vm3040, %v2969
      %3072 = vst.msk [vmem:[#allocation2 + $0xf8] sm:$0xff] %vm3040, %v2971
      %3073 = vst.msk [vmem:[#allocation2 + $0x100] sm:$0xff] %vm3040, %v2973
      %3074 = vst.msk [vmem:[#allocation2 + $0x108] sm:$0xff] %vm3040, %v2975
      %3075 = vst.msk [vmem:[#allocation2 + $0x110] sm:$0xff] %vm3040, %v2977
      %3076 = vst.msk [vmem:[#allocation2 + $0x118] sm:$0xff] %vm3040, %v2979
      %3077 = vst.msk [vmem:[#allocation2 + $0x120] sm:$0xff] %vm3040, %v2981
      %3078 = vst.msk [vmem:[#allocation2 + $0x128] sm:$0xff] %vm3040, %v2983
      %3079 = vst.msk [vmem:[#allocation2 + $0x130] sm:$0xff] %vm3040, %v2985
      %3080 = vst.msk [vmem:[#allocation2 + $0x138] sm:$0xff] %vm3040, %v2987
      %3081 = vst.msk [vmem:[#allocation2 + $0x140] sm:$0xff] %vm3040, %v2989
      %3082 = vst.msk [vmem:[#allocation2 + $0x148] sm:$0xff] %vm3040, %v2991
      %3083 = vst.msk [vmem:[#allocation2 + $0x150] sm:$0xff] %vm3040, %v2993
      %3084 = vst.msk [vmem:[#allocation2 + $0x158] sm:$0xff] %vm3040, %v2995
      %v3085 = vld [vmem:[#allocation2] sm:$0xff]
      %v3086 = vld [vmem:[#allocation2 + $0x8] sm:$0xff]
      %v3087 = vld [vmem:[#allocation2 + $0x10] sm:$0xff]
      %v3088 = vld [vmem:[#allocation2 + $0x18] sm:$0xff]
      %v3089 = vld [vmem:[#allocation2 + $0x20] sm:$0xff]
      %v3090 = vld [vmem:[#allocation2 + $0x28] sm:$0xff]
      %v3091 = vld [vmem:[#allocation2 + $0x30] sm:$0xff]
      %v3092 = vld [vmem:[#allocation2 + $0x38] sm:$0xff]
      %v3093 = vld [vmem:[#allocation2 + $0x40] sm:$0xff]
      %v3094 = vld [vmem:[#allocation2 + $0x48] sm:$0xff]
      %v3095 = vld [vmem:[#allocation2 + $0x50] sm:$0xff]
      %v3096 = vld [vmem:[#allocation2 + $0x58] sm:$0xff]
      %v3097 = vld [vmem:[#allocation2 + $0x60] sm:$0xff]
      %v3098 = vld [vmem:[#allocation2 + $0x68] sm:$0xff]
      %v3099 = vld [vmem:[#allocation2 + $0x70] sm:$0xff]
      %v3100 = vld [vmem:[#allocation2 + $0x78] sm:$0xff]
      %v3101 = vld [vmem:[#allocation2 + $0x80] sm:$0xff]
      %v3102 = vld [vmem:[#allocation2 + $0x88] sm:$0xff]
      %v3103 = vld [vmem:[#allocation2 + $0x90] sm:$0xff]
      %v3104 = vld [vmem:[#allocation2 + $0x98] sm:$0xff]
      %v3105 = vld [vmem:[#allocation2 + $0xa0] sm:$0xff]
      %v3106 = vld [vmem:[#allocation2 + $0xa8] sm:$0xff]
      %v3107 = vld [vmem:[#allocation2 + $0xb0] sm:$0xff]
      %v3108 = vld [vmem:[#allocation2 + $0xb8] sm:$0xff]
      %v3109 = vld [vmem:[#allocation2 + $0xc0] sm:$0xff]
      %v3110 = vld [vmem:[#allocation2 + $0xc8] sm:$0xff]
      %v3111 = vld [vmem:[#allocation2 + $0xd0] sm:$0xff]
      %v3112 = vld [vmem:[#allocation2 + $0xd8] sm:$0xff]
      %v3113 = vld [vmem:[#allocation2 + $0xe0] sm:$0xff]
      %v3114 = vld [vmem:[#allocation2 + $0xe8] sm:$0xff]
      %v3115 = vld [vmem:[#allocation2 + $0xf0] sm:$0xff]
      %v3116 = vld [vmem:[#allocation2 + $0xf8] sm:$0xff]
      %v3117 = vld [vmem:[#allocation2 + $0x100] sm:$0xff]
      %v3118 = vld [vmem:[#allocation2 + $0x108] sm:$0xff]
      %v3119 = vld [vmem:[#allocation2 + $0x110] sm:$0xff]
      %v3120 = vld [vmem:[#allocation2 + $0x118] sm:$0xff]
      %v3121 = vld [vmem:[#allocation2 + $0x120] sm:$0xff]
      %v3122 = vld [vmem:[#allocation2 + $0x128] sm:$0xff]
      %v3123 = vld [vmem:[#allocation2 + $0x130] sm:$0xff]
      %v3124 = vld [vmem:[#allocation2 + $0x138] sm:$0xff]
      %v3125 = vld [vmem:[#allocation2 + $0x140] sm:$0xff]
      %v3126 = vld [vmem:[#allocation2 + $0x148] sm:$0xff]
      %v3127 = vld [vmem:[#allocation2 + $0x150] sm:$0xff]
      %v3128 = vld [vmem:[#allocation2 + $0x158] sm:$0xff]
      %v3129 = vld [vmem:[%s3] sm:$0xff]
      %v3130 = vld [vmem:[%s3 + $0x8] sm:$0xff]
      %v3131 = vld [vmem:[%s3 + $0x10] sm:$0xff]
      %v3132 = vld [vmem:[%s3 + $0x18] sm:$0xff]
      %v3133 = vld [vmem:[%s3 + $0x20] sm:$0xf]
      %vm3134 = vcmask 293888
      %v3136 = vsel %vm3134, %v3085, 0
      %v3139 = vsel %vm3134, %v3086, 0
      %v3142 = vsel %vm3134, %v3087, 0
      %v3145 = vsel %vm3134, %v3088, 0
      %v3148 = vsel %vm3134, %v3089, 0
      %v3151 = vsel %vm3134, %v3090, 0
      %v3154 = vsel %vm3134, %v3091, 0
      %v3157 = vsel %vm3134, %v3092, 0
      %v3160 = vsel %vm3134, %v3093, 0
      %v3163 = vsel %vm3134, %v3094, 0
      %v3166 = vsel %vm3134, %v3095, 0
      %v3169 = vsel %vm3134, %v3096, 0
      %v3172 = vsel %vm3134, %v3097, 0
      %v3175 = vsel %vm3134, %v3098, 0
      %v3178 = vsel %vm3134, %v3099, 0
      %v3181 = vsel %vm3134, %v3100, 0
      %v3184 = vsel %vm3134, %v3101, 0
      %v3187 = vsel %vm3134, %v3102, 0
      %v3190 = vsel %vm3134, %v3103, 0
      %v3193 = vsel %vm3134, %v3104, 0
      %v3196 = vsel %vm3134, %v3105, 0
      %v3199 = vsel %vm3134, %v3106, 0
      %v3202 = vsel %vm3134, %v3107, 0
      %v3205 = vsel %vm3134, %v3108, 0
      %v3208 = vsel %vm3134, %v3109, 0
      %v3211 = vsel %vm3134, %v3110, 0
      %v3214 = vsel %vm3134, %v3111, 0
      %v3217 = vsel %vm3134, %v3112, 0
      %v3220 = vsel %vm3134, %v3113, 0
      %v3223 = vsel %vm3134, %v3114, 0
      %v3226 = vsel %vm3134, %v3115, 0
      %v3229 = vsel %vm3134, %v3116, 0
      %v3232 = vsel %vm3134, %v3117, 0
      %v3235 = vsel %vm3134, %v3118, 0
      %v3238 = vsel %vm3134, %v3119, 0
      %v3241 = vsel %vm3134, %v3120, 0
      %v3244 = vsel %vm3134, %v3121, 0
      %v3247 = vsel %vm3134, %v3122, 0
      %v3250 = vsel %vm3134, %v3123, 0
      %v3253 = vsel %vm3134, %v3124, 0
      %v3256 = vsel %vm3134, %v3125, 0
      %v3259 = vsel %vm3134, %v3126, 0
      %v3262 = vsel %vm3134, %v3127, 0
      %v3265 = vsel %vm3134, %v3128, 0
      %v3268 = vsel %vm485, %v3133, 0
      %3270 = vmatpush.msra.mxu0 0.0
      %3271 = vmatpush.msra.mxu0 0.0
      %3272 = vmatpush.msra.mxu0 0.0
      %3273 = vmatpush.msra.mxu0 0.0
      %3274 = vmatpush.msra.mxu0 0.0
      %3275 = vmatpush.msra.mxu0 0.0
      %3276 = vmatpush.msra.mxu0 0.0
      %3277 = vmatpush.msra.mxu0 0.0
      %3278 = vmatpush.msra.mxu0 0.0
      %3279 = vmatpush.msra.mxu0 0.0
      %3280 = vmatpush.msra.mxu0 0.0
      %3281 = vmatpush.msra.mxu0 %v3268
      %3282 = vmatpush.msra.mxu0 %v3132
      %3283 = vmatpush.msra.mxu0 %v3131
      %3284 = vmatpush.msra.mxu0 %v3130
      %3285 = vmatpush.msra.mxu0 %v3129
      %3286 = vmatmul.f32.gmra.mxu0 %v3136
      %v3287 = vpop.f32.mrf.mxu0
      %v3288 = vadd.f32 0.0, %v3287
      %3289 = vmatmul.f32.gmra.mxu0 %v3139
      %v3290 = vpop.f32.mrf.mxu0
      %v3291 = vadd.f32 0.0, %v3290
      %3292 = vmatmul.f32.gmra.mxu0 %v3142
      %v3293 = vpop.f32.mrf.mxu0
      %v3294 = vadd.f32 0.0, %v3293
      %3295 = vmatmul.f32.gmra.mxu0 %v3145
      %v3296 = vpop.f32.mrf.mxu0
      %v3297 = vadd.f32 0.0, %v3296
      %3298 = vmatmul.f32.gmra.mxu0 %v3148
      %v3299 = vpop.f32.mrf.mxu0
      %v3300 = vadd.f32 0.0, %v3299
      %3301 = vmatmul.f32.gmra.mxu0 %v3151
      %v3302 = vpop.f32.mrf.mxu0
      %v3303 = vadd.f32 0.0, %v3302
      %3304 = vmatmul.f32.gmra.mxu0 %v3154
      %v3305 = vpop.f32.mrf.mxu0
      %v3306 = vadd.f32 0.0, %v3305
      %3307 = vmatmul.f32.gmra.mxu0 %v3157
      %v3308 = vpop.f32.mrf.mxu0
      %v3309 = vadd.f32 0.0, %v3308
      %3310 = vmatmul.f32.gmra.mxu0 %v3160
      %v3311 = vpop.f32.mrf.mxu0
      %v3312 = vadd.f32 0.0, %v3311
      %3313 = vmatmul.f32.gmra.mxu0 %v3163
      %v3314 = vpop.f32.mrf.mxu0
      %v3315 = vadd.f32 0.0, %v3314
      %3316 = vmatmul.f32.gmra.mxu0 %v3166
      %v3317 = vpop.f32.mrf.mxu0
      %v3318 = vadd.f32 0.0, %v3317
      %3319 = vmatmul.f32.gmra.mxu0 %v3169
      %v3320 = vpop.f32.mrf.mxu0
      %v3321 = vadd.f32 0.0, %v3320
      %3322 = vmatmul.f32.gmra.mxu0 %v3172
      %v3323 = vpop.f32.mrf.mxu0
      %v3324 = vadd.f32 0.0, %v3323
      %3325 = vmatmul.f32.gmra.mxu0 %v3175
      %v3326 = vpop.f32.mrf.mxu0
      %v3327 = vadd.f32 0.0, %v3326
      %3328 = vmatmul.f32.gmra.mxu0 %v3178
      %v3329 = vpop.f32.mrf.mxu0
      %v3330 = vadd.f32 0.0, %v3329
      %3331 = vmatmul.f32.gmra.mxu0 %v3181
      %v3332 = vpop.f32.mrf.mxu0
      %v3333 = vadd.f32 0.0, %v3332
      %3334 = vmatmul.f32.gmra.mxu0 %v3184
      %v3335 = vpop.f32.mrf.mxu0
      %v3336 = vadd.f32 0.0, %v3335
      %3337 = vmatmul.f32.gmra.mxu0 %v3187
      %v3338 = vpop.f32.mrf.mxu0
      %v3339 = vadd.f32 0.0, %v3338
      %3340 = vmatmul.f32.gmra.mxu0 %v3190
      %v3341 = vpop.f32.mrf.mxu0
      %v3342 = vadd.f32 0.0, %v3341
      %3343 = vmatmul.f32.gmra.mxu0 %v3193
      %v3344 = vpop.f32.mrf.mxu0
      %v3345 = vadd.f32 0.0, %v3344
      %3346 = vmatmul.f32.gmra.mxu0 %v3196
      %v3347 = vpop.f32.mrf.mxu0
      %v3348 = vadd.f32 0.0, %v3347
      %3349 = vmatmul.f32.gmra.mxu0 %v3199
      %v3350 = vpop.f32.mrf.mxu0
      %v3351 = vadd.f32 0.0, %v3350
      %3352 = vmatmul.f32.gmra.mxu0 %v3202
      %v3353 = vpop.f32.mrf.mxu0
      %v3354 = vadd.f32 0.0, %v3353
      %3355 = vmatmul.f32.gmra.mxu0 %v3205
      %v3356 = vpop.f32.mrf.mxu0
      %v3357 = vadd.f32 0.0, %v3356
      %3358 = vmatmul.f32.gmra.mxu0 %v3208
      %v3359 = vpop.f32.mrf.mxu0
      %v3360 = vadd.f32 0.0, %v3359
      %3361 = vmatmul.f32.gmra.mxu0 %v3211
      %v3362 = vpop.f32.mrf.mxu0
      %v3363 = vadd.f32 0.0, %v3362
      %3364 = vmatmul.f32.gmra.mxu0 %v3214
      %v3365 = vpop.f32.mrf.mxu0
      %v3366 = vadd.f32 0.0, %v3365
      %3367 = vmatmul.f32.gmra.mxu0 %v3217
      %v3368 = vpop.f32.mrf.mxu0
      %v3369 = vadd.f32 0.0, %v3368
      %3370 = vmatmul.f32.gmra.mxu0 %v3220
      %v3371 = vpop.f32.mrf.mxu0
      %v3372 = vadd.f32 0.0, %v3371
      %3373 = vmatmul.f32.gmra.mxu0 %v3223
      %v3374 = vpop.f32.mrf.mxu0
      %v3375 = vadd.f32 0.0, %v3374
      %3376 = vmatmul.f32.gmra.mxu0 %v3226
      %v3377 = vpop.f32.mrf.mxu0
      %v3378 = vadd.f32 0.0, %v3377
      %3379 = vmatmul.f32.gmra.mxu0 %v3229
      %v3380 = vpop.f32.mrf.mxu0
      %v3381 = vadd.f32 0.0, %v3380
      %3382 = vmatmul.f32.gmra.mxu0 %v3232
      %v3383 = vpop.f32.mrf.mxu0
      %v3384 = vadd.f32 0.0, %v3383
      %3385 = vmatmul.f32.gmra.mxu0 %v3235
      %v3386 = vpop.f32.mrf.mxu0
      %v3387 = vadd.f32 0.0, %v3386
      %3388 = vmatmul.f32.gmra.mxu0 %v3238
      %v3389 = vpop.f32.mrf.mxu0
      %v3390 = vadd.f32 0.0, %v3389
      %3391 = vmatmul.f32.gmra.mxu0 %v3241
      %v3392 = vpop.f32.mrf.mxu0
      %v3393 = vadd.f32 0.0, %v3392
      %3394 = vmatmul.f32.gmra.mxu0 %v3244
      %v3395 = vpop.f32.mrf.mxu0
      %v3396 = vadd.f32 0.0, %v3395
      %3397 = vmatmul.f32.gmra.mxu0 %v3247
      %v3398 = vpop.f32.mrf.mxu0
      %v3399 = vadd.f32 0.0, %v3398
      %3400 = vmatmul.f32.gmra.mxu0 %v3250
      %v3401 = vpop.f32.mrf.mxu0
      %v3402 = vadd.f32 0.0, %v3401
      %3403 = vmatmul.f32.gmra.mxu0 %v3253
      %v3404 = vpop.f32.mrf.mxu0
      %v3405 = vadd.f32 0.0, %v3404
      %3406 = vmatmul.f32.gmra.mxu0 %v3256
      %v3407 = vpop.f32.mrf.mxu0
      %v3408 = vadd.f32 0.0, %v3407
      %3409 = vmatmul.f32.gmra.mxu0 %v3259
      %v3410 = vpop.f32.mrf.mxu0
      %v3411 = vadd.f32 0.0, %v3410
      %3412 = vmatmul.f32.gmra.mxu0 %v3262
      %v3413 = vpop.f32.mrf.mxu0
      %v3414 = vadd.f32 0.0, %v3413
      %3415 = vmatmul.f32.gmra.mxu0 %v3265
      %v3416 = vpop.f32.mrf.mxu0
      %v3417 = vadd.f32 0.0, %v3416
      %3418 = vdwg.mxu0
      %v3419 = vperm.slane %v304, 1
      %v3420 = vmul.f32 %v3288, %v3419
      %v3421 = vmul.f32 %v3291, %v3419
      %v3422 = vmul.f32 %v3294, %v3419
      %v3423 = vmul.f32 %v3297, %v3419
      %v3424 = vmul.f32 %v3300, %v3419
      %v3425 = vmul.f32 %v3303, %v3419
      %v3426 = vmul.f32 %v3306, %v3419
      %v3427 = vmul.f32 %v3309, %v3419
      %v3428 = vmul.f32 %v3312, %v3419
      %v3429 = vmul.f32 %v3315, %v3419
      %v3430 = vmul.f32 %v3318, %v3419
      %v3431 = vmul.f32 %v3321, %v3419
      %v3432 = vmul.f32 %v3324, %v3419
      %v3433 = vmul.f32 %v3327, %v3419
      %v3434 = vmul.f32 %v3330, %v3419
      %v3435 = vmul.f32 %v3333, %v3419
      %v3436 = vmul.f32 %v3336, %v3419
      %v3437 = vmul.f32 %v3339, %v3419
      %v3438 = vmul.f32 %v3342, %v3419
      %v3439 = vmul.f32 %v3345, %v3419
      %v3440 = vmul.f32 %v3348, %v3419
      %v3441 = vmul.f32 %v3351, %v3419
      %v3442 = vmul.f32 %v3354, %v3419
      %v3443 = vmul.f32 %v3357, %v3419
      %v3444 = vmul.f32 %v3360, %v3419
      %v3445 = vmul.f32 %v3363, %v3419
      %v3446 = vmul.f32 %v3366, %v3419
      %v3447 = vmul.f32 %v3369, %v3419
      %v3448 = vmul.f32 %v3372, %v3419
      %v3449 = vmul.f32 %v3375, %v3419
      %v3450 = vmul.f32 %v3378, %v3419
      %v3451 = vmul.f32 %v3381, %v3419
      %v3452 = vmul.f32 %v3384, %v3419
      %v3453 = vmul.f32 %v3387, %v3419
      %v3454 = vmul.f32 %v3390, %v3419
      %v3455 = vmul.f32 %v3393, %v3419
      %v3456 = vmul.f32 %v3396, %v3419
      %v3457 = vmul.f32 %v3399, %v3419
      %v3458 = vmul.f32 %v3402, %v3419
      %v3459 = vmul.f32 %v3405, %v3419
      %v3460 = vmul.f32 %v3408, %v3419
      %v3461 = vmul.f32 %v3411, %v3419
      %v3462 = vmul.f32 %v3414, %v3419
      %v3463 = vmul.f32 %v3417, %v3419
      %v3464 = vperm.slane %v305, 1
      %v3465 = vadd.f32 %v3420, %v3464
      %v3466 = vadd.f32 %v3421, %v3464
      %v3467 = vadd.f32 %v3422, %v3464
      %v3468 = vadd.f32 %v3423, %v3464
      %v3469 = vadd.f32 %v3424, %v3464
      %v3470 = vadd.f32 %v3425, %v3464
      %v3471 = vadd.f32 %v3426, %v3464
      %v3472 = vadd.f32 %v3427, %v3464
      %v3473 = vadd.f32 %v3428, %v3464
      %v3474 = vadd.f32 %v3429, %v3464
      %v3475 = vadd.f32 %v3430, %v3464
      %v3476 = vadd.f32 %v3431, %v3464
      %v3477 = vadd.f32 %v3432, %v3464
      %v3478 = vadd.f32 %v3433, %v3464
      %v3479 = vadd.f32 %v3434, %v3464
      %v3480 = vadd.f32 %v3435, %v3464
      %v3481 = vadd.f32 %v3436, %v3464
      %v3482 = vadd.f32 %v3437, %v3464
      %v3483 = vadd.f32 %v3438, %v3464
      %v3484 = vadd.f32 %v3439, %v3464
      %v3485 = vadd.f32 %v3440, %v3464
      %v3486 = vadd.f32 %v3441, %v3464
      %v3487 = vadd.f32 %v3442, %v3464
      %v3488 = vadd.f32 %v3443, %v3464
      %v3489 = vadd.f32 %v3444, %v3464
      %v3490 = vadd.f32 %v3445, %v3464
      %v3491 = vadd.f32 %v3446, %v3464
      %v3492 = vadd.f32 %v3447, %v3464
      %v3493 = vadd.f32 %v3448, %v3464
      %v3494 = vadd.f32 %v3449, %v3464
      %v3495 = vadd.f32 %v3450, %v3464
      %v3496 = vadd.f32 %v3451, %v3464
      %v3497 = vadd.f32 %v3452, %v3464
      %v3498 = vadd.f32 %v3453, %v3464
      %v3499 = vadd.f32 %v3454, %v3464
      %v3500 = vadd.f32 %v3455, %v3464
      %v3501 = vadd.f32 %v3456, %v3464
      %v3502 = vadd.f32 %v3457, %v3464
      %v3503 = vadd.f32 %v3458, %v3464
      %v3504 = vadd.f32 %v3459, %v3464
      %v3505 = vadd.f32 %v3460, %v3464
      %v3506 = vadd.f32 %v3461, %v3464
      %v3507 = vadd.f32 %v3462, %v3464
      %v3508 = vadd.f32 %v3463, %v3464
      %v3509 = vmax.f32 %v3465, 0.0
      %v3510 = vmax.f32 %v3466, 0.0
      %v3511 = vmax.f32 %v3467, 0.0
      %v3512 = vmax.f32 %v3468, 0.0
      %v3513 = vmax.f32 %v3469, 0.0
      %v3514 = vmax.f32 %v3470, 0.0
      %v3515 = vmax.f32 %v3471, 0.0
      %v3516 = vmax.f32 %v3472, 0.0
      %v3517 = vmax.f32 %v3473, 0.0
      %v3518 = vmax.f32 %v3474, 0.0
      %v3519 = vmax.f32 %v3475, 0.0
      %v3520 = vmax.f32 %v3476, 0.0
      %v3521 = vmax.f32 %v3477, 0.0
      %v3522 = vmax.f32 %v3478, 0.0
      %v3523 = vmax.f32 %v3479, 0.0
      %v3524 = vmax.f32 %v3480, 0.0
      %v3525 = vmax.f32 %v3481, 0.0
      %v3526 = vmax.f32 %v3482, 0.0
      %v3527 = vmax.f32 %v3483, 0.0
      %v3528 = vmax.f32 %v3484, 0.0
      %v3529 = vmax.f32 %v3485, 0.0
      %v3530 = vmax.f32 %v3486, 0.0
      %v3531 = vmax.f32 %v3487, 0.0
      %v3532 = vmax.f32 %v3488, 0.0
      %v3533 = vmax.f32 %v3489, 0.0
      %v3534 = vmax.f32 %v3490, 0.0
      %v3535 = vmax.f32 %v3491, 0.0
      %v3536 = vmax.f32 %v3492, 0.0
      %v3537 = vmax.f32 %v3493, 0.0
      %v3538 = vmax.f32 %v3494, 0.0
      %v3539 = vmax.f32 %v3495, 0.0
      %v3540 = vmax.f32 %v3496, 0.0
      %v3541 = vmax.f32 %v3497, 0.0
      %v3542 = vmax.f32 %v3498, 0.0
      %v3543 = vmax.f32 %v3499, 0.0
      %v3544 = vmax.f32 %v3500, 0.0
      %v3545 = vmax.f32 %v3501, 0.0
      %v3546 = vmax.f32 %v3502, 0.0
      %v3547 = vmax.f32 %v3503, 0.0
      %v3548 = vmax.f32 %v3504, 0.0
      %v3549 = vmax.f32 %v3505, 0.0
      %v3550 = vmax.f32 %v3506, 0.0
      %v3551 = vmax.f32 %v3507, 0.0
      %v3552 = vmax.f32 %v3508, 0.0
      %v3553 = vround.ne.pseudo %v3509
      %v3554 = vround.ne.pseudo %v3510
      %v3555 = vround.ne.pseudo %v3511
      %v3556 = vround.ne.pseudo %v3512
      %v3557 = vround.ne.pseudo %v3513
      %v3558 = vround.ne.pseudo %v3514
      %v3559 = vround.ne.pseudo %v3515
      %v3560 = vround.ne.pseudo %v3516
      %v3561 = vround.ne.pseudo %v3517
      %v3562 = vround.ne.pseudo %v3518
      %v3563 = vround.ne.pseudo %v3519
      %v3564 = vround.ne.pseudo %v3520
      %v3565 = vround.ne.pseudo %v3521
      %v3566 = vround.ne.pseudo %v3522
      %v3567 = vround.ne.pseudo %v3523
      %v3568 = vround.ne.pseudo %v3524
      %v3569 = vround.ne.pseudo %v3525
      %v3570 = vround.ne.pseudo %v3526
      %v3571 = vround.ne.pseudo %v3527
      %v3572 = vround.ne.pseudo %v3528
      %v3573 = vround.ne.pseudo %v3529
      %v3574 = vround.ne.pseudo %v3530
      %v3575 = vround.ne.pseudo %v3531
      %v3576 = vround.ne.pseudo %v3532
      %v3577 = vround.ne.pseudo %v3533
      %v3578 = vround.ne.pseudo %v3534
      %v3579 = vround.ne.pseudo %v3535
      %v3580 = vround.ne.pseudo %v3536
      %v3581 = vround.ne.pseudo %v3537
      %v3582 = vround.ne.pseudo %v3538
      %v3583 = vround.ne.pseudo %v3539
      %v3584 = vround.ne.pseudo %v3540
      %v3585 = vround.ne.pseudo %v3541
      %v3586 = vround.ne.pseudo %v3542
      %v3587 = vround.ne.pseudo %v3543
      %v3588 = vround.ne.pseudo %v3544
      %v3589 = vround.ne.pseudo %v3545
      %v3590 = vround.ne.pseudo %v3546
      %v3591 = vround.ne.pseudo %v3547
      %v3592 = vround.ne.pseudo %v3548
      %v3593 = vround.ne.pseudo %v3549
      %v3594 = vround.ne.pseudo %v3550
      %v3595 = vround.ne.pseudo %v3551
      %v3596 = vround.ne.pseudo %v3552
      %3641 = vrot.lane.b32.xlu0 %v3553, 8
      %v3642 = vpop.permute.xlu0 %3641
      %3643 = vrot.lane.b32.xlu0 %v3554, 8
      %v3644 = vpop.permute.xlu0 %3643
      %3645 = vrot.lane.b32.xlu0 %v3555, 8
      %v3646 = vpop.permute.xlu0 %3645
      %3647 = vrot.lane.b32.xlu0 %v3556, 8
      %v3648 = vpop.permute.xlu0 %3647
      %3649 = vrot.lane.b32.xlu0 %v3557, 8
      %v3650 = vpop.permute.xlu0 %3649
      %3651 = vrot.lane.b32.xlu0 %v3558, 8
      %v3652 = vpop.permute.xlu0 %3651
      %3653 = vrot.lane.b32.xlu0 %v3559, 8
      %v3654 = vpop.permute.xlu0 %3653
      %3655 = vrot.lane.b32.xlu0 %v3560, 8
      %v3656 = vpop.permute.xlu0 %3655
      %3657 = vrot.lane.b32.xlu0 %v3561, 8
      %v3658 = vpop.permute.xlu0 %3657
      %3659 = vrot.lane.b32.xlu0 %v3562, 8
      %v3660 = vpop.permute.xlu0 %3659
      %3661 = vrot.lane.b32.xlu0 %v3563, 8
      %v3662 = vpop.permute.xlu0 %3661
      %3663 = vrot.lane.b32.xlu0 %v3564, 8
      %v3664 = vpop.permute.xlu0 %3663
      %3665 = vrot.lane.b32.xlu0 %v3565, 8
      %v3666 = vpop.permute.xlu0 %3665
      %3667 = vrot.lane.b32.xlu0 %v3566, 8
      %v3668 = vpop.permute.xlu0 %3667
      %3669 = vrot.lane.b32.xlu0 %v3567, 8
      %v3670 = vpop.permute.xlu0 %3669
      %3671 = vrot.lane.b32.xlu0 %v3568, 8
      %v3672 = vpop.permute.xlu0 %3671
      %3673 = vrot.lane.b32.xlu0 %v3569, 8
      %v3674 = vpop.permute.xlu0 %3673
      %3675 = vrot.lane.b32.xlu0 %v3570, 8
      %v3676 = vpop.permute.xlu0 %3675
      %3677 = vrot.lane.b32.xlu0 %v3571, 8
      %v3678 = vpop.permute.xlu0 %3677
      %3679 = vrot.lane.b32.xlu0 %v3572, 8
      %v3680 = vpop.permute.xlu0 %3679
      %3681 = vrot.lane.b32.xlu0 %v3573, 8
      %v3682 = vpop.permute.xlu0 %3681
      %3683 = vrot.lane.b32.xlu0 %v3574, 8
      %v3684 = vpop.permute.xlu0 %3683
      %3685 = vrot.lane.b32.xlu0 %v3575, 8
      %v3686 = vpop.permute.xlu0 %3685
      %3687 = vrot.lane.b32.xlu0 %v3576, 8
      %v3688 = vpop.permute.xlu0 %3687
      %3689 = vrot.lane.b32.xlu0 %v3577, 8
      %v3690 = vpop.permute.xlu0 %3689
      %3691 = vrot.lane.b32.xlu0 %v3578, 8
      %v3692 = vpop.permute.xlu0 %3691
      %3693 = vrot.lane.b32.xlu0 %v3579, 8
      %v3694 = vpop.permute.xlu0 %3693
      %3695 = vrot.lane.b32.xlu0 %v3580, 8
      %v3696 = vpop.permute.xlu0 %3695
      %3697 = vrot.lane.b32.xlu0 %v3581, 8
      %v3698 = vpop.permute.xlu0 %3697
      %3699 = vrot.lane.b32.xlu0 %v3582, 8
      %v3700 = vpop.permute.xlu0 %3699
      %3701 = vrot.lane.b32.xlu0 %v3583, 8
      %v3702 = vpop.permute.xlu0 %3701
      %3703 = vrot.lane.b32.xlu0 %v3584, 8
      %v3704 = vpop.permute.xlu0 %3703
      %3705 = vrot.lane.b32.xlu0 %v3585, 8
      %v3706 = vpop.permute.xlu0 %3705
      %3707 = vrot.lane.b32.xlu0 %v3586, 8
      %v3708 = vpop.permute.xlu0 %3707
      %3709 = vrot.lane.b32.xlu0 %v3587, 8
      %v3710 = vpop.permute.xlu0 %3709
      %3711 = vrot.lane.b32.xlu0 %v3588, 8
      %v3712 = vpop.permute.xlu0 %3711
      %3713 = vrot.lane.b32.xlu0 %v3589, 8
      %v3714 = vpop.permute.xlu0 %3713
      %3715 = vrot.lane.b32.xlu0 %v3590, 8
      %v3716 = vpop.permute.xlu0 %3715
      %3717 = vrot.lane.b32.xlu0 %v3591, 8
      %v3718 = vpop.permute.xlu0 %3717
      %3719 = vrot.lane.b32.xlu0 %v3592, 8
      %v3720 = vpop.permute.xlu0 %3719
      %3721 = vrot.lane.b32.xlu0 %v3593, 8
      %v3722 = vpop.permute.xlu0 %3721
      %3723 = vrot.lane.b32.xlu0 %v3594, 8
      %v3724 = vpop.permute.xlu0 %3723
      %3725 = vrot.lane.b32.xlu0 %v3595, 8
      %v3726 = vpop.permute.xlu0 %3725
      %3727 = vrot.lane.b32.xlu0 %v3596, 8
      %v3728 = vpop.permute.xlu0 %3727
      %vm3773 = vcmask 130112
      %3774 = vst.msk [vmem:[#allocation3] sm:$0xff] %vm3773, %v3642
      %3775 = vst.msk [vmem:[#allocation3 + $0x8] sm:$0xff] %vm3773, %v3644
      %3776 = vst.msk [vmem:[#allocation3 + $0x10] sm:$0xff] %vm3773, %v3646
      %3777 = vst.msk [vmem:[#allocation3 + $0x18] sm:$0xff] %vm3773, %v3648
      %3778 = vst.msk [vmem:[#allocation3 + $0x20] sm:$0xff] %vm3773, %v3650
      %3779 = vst.msk [vmem:[#allocation3 + $0x28] sm:$0xff] %vm3773, %v3652
      %3780 = vst.msk [vmem:[#allocation3 + $0x30] sm:$0xff] %vm3773, %v3654
      %3781 = vst.msk [vmem:[#allocation3 + $0x38] sm:$0xff] %vm3773, %v3656
      %3782 = vst.msk [vmem:[#allocation3 + $0x40] sm:$0xff] %vm3773, %v3658
      %3783 = vst.msk [vmem:[#allocation3 + $0x48] sm:$0xff] %vm3773, %v3660
      %3784 = vst.msk [vmem:[#allocation3 + $0x50] sm:$0xff] %vm3773, %v3662
      %3785 = vst.msk [vmem:[#allocation3 + $0x58] sm:$0xff] %vm3773, %v3664
      %3786 = vst.msk [vmem:[#allocation3 + $0x60] sm:$0xff] %vm3773, %v3666
      %3787 = vst.msk [vmem:[#allocation3 + $0x68] sm:$0xff] %vm3773, %v3668
      %3788 = vst.msk [vmem:[#allocation3 + $0x70] sm:$0xff] %vm3773, %v3670
      %3789 = vst.msk [vmem:[#allocation3 + $0x78] sm:$0xff] %vm3773, %v3672
      %3790 = vst.msk [vmem:[#allocation3 + $0x80] sm:$0xff] %vm3773, %v3674
      %3791 = vst.msk [vmem:[#allocation3 + $0x88] sm:$0xff] %vm3773, %v3676
      %3792 = vst.msk [vmem:[#allocation3 + $0x90] sm:$0xff] %vm3773, %v3678
      %3793 = vst.msk [vmem:[#allocation3 + $0x98] sm:$0xff] %vm3773, %v3680
      %3794 = vst.msk [vmem:[#allocation3 + $0xa0] sm:$0xff] %vm3773, %v3682
      %3795 = vst.msk [vmem:[#allocation3 + $0xa8] sm:$0xff] %vm3773, %v3684
      %3796 = vst.msk [vmem:[#allocation3 + $0xb0] sm:$0xff] %vm3773, %v3686
      %3797 = vst.msk [vmem:[#allocation3 + $0xb8] sm:$0xff] %vm3773, %v3688
      %3798 = vst.msk [vmem:[#allocation3 + $0xc0] sm:$0xff] %vm3773, %v3690
      %3799 = vst.msk [vmem:[#allocation3 + $0xc8] sm:$0xff] %vm3773, %v3692
      %3800 = vst.msk [vmem:[#allocation3 + $0xd0] sm:$0xff] %vm3773, %v3694
      %3801 = vst.msk [vmem:[#allocation3 + $0xd8] sm:$0xff] %vm3773, %v3696
      %3802 = vst.msk [vmem:[#allocation3 + $0xe0] sm:$0xff] %vm3773, %v3698
      %3803 = vst.msk [vmem:[#allocation3 + $0xe8] sm:$0xff] %vm3773, %v3700
      %3804 = vst.msk [vmem:[#allocation3 + $0xf0] sm:$0xff] %vm3773, %v3702
      %3805 = vst.msk [vmem:[#allocation3 + $0xf8] sm:$0xff] %vm3773, %v3704
      %3806 = vst.msk [vmem:[#allocation3 + $0x100] sm:$0xff] %vm3773, %v3706
      %3807 = vst.msk [vmem:[#allocation3 + $0x108] sm:$0xff] %vm3773, %v3708
      %3808 = vst.msk [vmem:[#allocation3 + $0x110] sm:$0xff] %vm3773, %v3710
      %3809 = vst.msk [vmem:[#allocation3 + $0x118] sm:$0xff] %vm3773, %v3712
      %3810 = vst.msk [vmem:[#allocation3 + $0x120] sm:$0xff] %vm3773, %v3714
      %3811 = vst.msk [vmem:[#allocation3 + $0x128] sm:$0xff] %vm3773, %v3716
      %3812 = vst.msk [vmem:[#allocation3 + $0x130] sm:$0xff] %vm3773, %v3718
      %3813 = vst.msk [vmem:[#allocation3 + $0x138] sm:$0xff] %vm3773, %v3720
      %3814 = vst.msk [vmem:[#allocation3 + $0x140] sm:$0xff] %vm3773, %v3722
      %3815 = vst.msk [vmem:[#allocation3 + $0x148] sm:$0xff] %vm3773, %v3724
      %3816 = vst.msk [vmem:[#allocation3 + $0x150] sm:$0xff] %vm3773, %v3726
      %3817 = vst.msk [vmem:[#allocation3 + $0x158] sm:$0xff] %vm3773, %v3728
      %s3818 = sadd.s32 %s302, 86
      %s3819 = scalar_lea.vmem %s291, %s3818
      %v3820 = vld [vmem:[%s3819] sm:$0xff]
      %v3821 = vld [vmem:[%s3819 + $0x8] sm:$0xff]
      %v3822 = vld [vmem:[%s3819 + $0x10] sm:$0xff]
      %v3823 = vld [vmem:[%s3819 + $0x18] sm:$0xff]
      %v3824 = vld [vmem:[%s3819 + $0x20] sm:$0xff]
      %v3825 = vld [vmem:[%s3819 + $0x28] sm:$0xff]
      %v3826 = vld [vmem:[%s3819 + $0x30] sm:$0xff]
      %v3827 = vld [vmem:[%s3819 + $0x38] sm:$0xff]
      %v3828 = vld [vmem:[%s3819 + $0x40] sm:$0xff]
      %v3829 = vld [vmem:[%s3819 + $0x48] sm:$0xff]
      %v3830 = vld [vmem:[%s3819 + $0x50] sm:$0xff]
      %v3831 = vld [vmem:[%s3819 + $0x58] sm:$0xff]
      %v3832 = vld [vmem:[%s3819 + $0x60] sm:$0xff]
      %v3833 = vld [vmem:[%s3819 + $0x68] sm:$0xff]
      %v3834 = vld [vmem:[%s3819 + $0x70] sm:$0xff]
      %v3835 = vld [vmem:[%s3819 + $0x78] sm:$0xff]
      %v3836 = vld [vmem:[%s3819 + $0x80] sm:$0xff]
      %v3837 = vld [vmem:[%s3819 + $0x88] sm:$0xff]
      %v3838 = vld [vmem:[%s3819 + $0x90] sm:$0xff]
      %v3839 = vld [vmem:[%s3819 + $0x98] sm:$0xff]
      %v3840 = vld [vmem:[%s3819 + $0xa0] sm:$0xff]
      %v3841 = vld [vmem:[%s3819 + $0xa8] sm:$0xff]
      %v3842 = vld [vmem:[%s3819 + $0xb0] sm:$0xff]
      %v3843 = vld [vmem:[%s3819 + $0xb8] sm:$0xff]
      %v3844 = vld [vmem:[%s3819 + $0xc0] sm:$0xff]
      %v3845 = vld [vmem:[%s3819 + $0xc8] sm:$0xff]
      %v3846 = vld [vmem:[%s3819 + $0xd0] sm:$0xff]
      %v3847 = vld [vmem:[%s3819 + $0xd8] sm:$0xff]
      %v3848 = vld [vmem:[%s3819 + $0xe0] sm:$0xff]
      %v3849 = vld [vmem:[%s3819 + $0xe8] sm:$0xff]
      %v3850 = vld [vmem:[%s3819 + $0xf0] sm:$0xff]
      %v3851 = vld [vmem:[%s3819 + $0xf8] sm:$0xff]
      %v3852 = vld [vmem:[%s3819 + $0x100] sm:$0xff]
      %v3853 = vld [vmem:[%s3819 + $0x108] sm:$0xff]
      %v3854 = vld [vmem:[%s3819 + $0x110] sm:$0xff]
      %v3855 = vld [vmem:[%s3819 + $0x118] sm:$0xff]
      %v3856 = vld [vmem:[%s3819 + $0x120] sm:$0xff]
      %v3857 = vld [vmem:[%s3819 + $0x128] sm:$0xff]
      %v3858 = vld [vmem:[%s3819 + $0x130] sm:$0xff]
      %v3859 = vld [vmem:[%s3819 + $0x138] sm:$0xff]
      %v3860 = vld [vmem:[%s3819 + $0x140] sm:$0xff]
      %v3861 = vld [vmem:[%s3819 + $0x148] sm:$0xff]
      %v3862 = vld [vmem:[%s3819 + $0x150] sm:$0xff]
      %v3863 = vld [vmem:[%s3819 + $0x158] sm:$0xff]
      %3864 = vst.msk [vmem:[#allocation2] sm:$0xff] %vm352, %v3820
      %3865 = vst.msk [vmem:[#allocation2 + $0x8] sm:$0xff] %vm352, %v3821
      %3866 = vst.msk [vmem:[#allocation2 + $0x10] sm:$0xff] %vm352, %v3822
      %3867 = vst.msk [vmem:[#allocation2 + $0x18] sm:$0xff] %vm352, %v3823
      %3868 = vst.msk [vmem:[#allocation2 + $0x20] sm:$0xff] %vm352, %v3824
      %3869 = vst.msk [vmem:[#allocation2 + $0x28] sm:$0xff] %vm352, %v3825
      %3870 = vst.msk [vmem:[#allocation2 + $0x30] sm:$0xff] %vm352, %v3826
      %3871 = vst.msk [vmem:[#allocation2 + $0x38] sm:$0xff] %vm352, %v3827
      %3872 = vst.msk [vmem:[#allocation2 + $0x40] sm:$0xff] %vm352, %v3828
      %3873 = vst.msk [vmem:[#allocation2 + $0x48] sm:$0xff] %vm352, %v3829
      %3874 = vst.msk [vmem:[#allocation2 + $0x50] sm:$0xff] %vm352, %v3830
      %3875 = vst.msk [vmem:[#allocation2 + $0x58] sm:$0xff] %vm352, %v3831
      %3876 = vst.msk [vmem:[#allocation2 + $0x60] sm:$0xff] %vm352, %v3832
      %3877 = vst.msk [vmem:[#allocation2 + $0x68] sm:$0xff] %vm352, %v3833
      %3878 = vst.msk [vmem:[#allocation2 + $0x70] sm:$0xff] %vm352, %v3834
      %3879 = vst.msk [vmem:[#allocation2 + $0x78] sm:$0xff] %vm352, %v3835
      %3880 = vst.msk [vmem:[#allocation2 + $0x80] sm:$0xff] %vm352, %v3836
      %3881 = vst.msk [vmem:[#allocation2 + $0x88] sm:$0xff] %vm352, %v3837
      %3882 = vst.msk [vmem:[#allocation2 + $0x90] sm:$0xff] %vm352, %v3838
      %3883 = vst.msk [vmem:[#allocation2 + $0x98] sm:$0xff] %vm352, %v3839
      %3884 = vst.msk [vmem:[#allocation2 + $0xa0] sm:$0xff] %vm352, %v3840
      %3885 = vst.msk [vmem:[#allocation2 + $0xa8] sm:$0xff] %vm352, %v3841
      %3886 = vst.msk [vmem:[#allocation2 + $0xb0] sm:$0xff] %vm352, %v3842
      %3887 = vst.msk [vmem:[#allocation2 + $0xb8] sm:$0xff] %vm352, %v3843
      %3888 = vst.msk [vmem:[#allocation2 + $0xc0] sm:$0xff] %vm352, %v3844
      %3889 = vst.msk [vmem:[#allocation2 + $0xc8] sm:$0xff] %vm352, %v3845
      %3890 = vst.msk [vmem:[#allocation2 + $0xd0] sm:$0xff] %vm352, %v3846
      %3891 = vst.msk [vmem:[#allocation2 + $0xd8] sm:$0xff] %vm352, %v3847
      %3892 = vst.msk [vmem:[#allocation2 + $0xe0] sm:$0xff] %vm352, %v3848
      %3893 = vst.msk [vmem:[#allocation2 + $0xe8] sm:$0xff] %vm352, %v3849
      %3894 = vst.msk [vmem:[#allocation2 + $0xf0] sm:$0xff] %vm352, %v3850
      %3895 = vst.msk [vmem:[#allocation2 + $0xf8] sm:$0xff] %vm352, %v3851
      %3896 = vst.msk [vmem:[#allocation2 + $0x100] sm:$0xff] %vm352, %v3852
      %3897 = vst.msk [vmem:[#allocation2 + $0x108] sm:$0xff] %vm352, %v3853
      %3898 = vst.msk [vmem:[#allocation2 + $0x110] sm:$0xff] %vm352, %v3854
      %3899 = vst.msk [vmem:[#allocation2 + $0x118] sm:$0xff] %vm352, %v3855
      %3900 = vst.msk [vmem:[#allocation2 + $0x120] sm:$0xff] %vm352, %v3856
      %3901 = vst.msk [vmem:[#allocation2 + $0x128] sm:$0xff] %vm352, %v3857
      %3902 = vst.msk [vmem:[#allocation2 + $0x130] sm:$0xff] %vm352, %v3858
      %3903 = vst.msk [vmem:[#allocation2 + $0x138] sm:$0xff] %vm352, %v3859
      %3904 = vst.msk [vmem:[#allocation2 + $0x140] sm:$0xff] %vm352, %v3860
      %3905 = vst.msk [vmem:[#allocation2 + $0x148] sm:$0xff] %vm352, %v3861
      %3906 = vst.msk [vmem:[#allocation2 + $0x150] sm:$0xff] %vm352, %v3862
      %3907 = vst.msk [vmem:[#allocation2 + $0x158] sm:$0xff] %vm352, %v3863
      %s3908 = sadd.s32 %s302, 88
      %s3909 = scalar_lea.vmem %s291, %s3908
      %v3910 = vld [vmem:[%s3909] sm:$0xff]
      %v3911 = vld [vmem:[%s3909 + $0x8] sm:$0xff]
      %v3912 = vld [vmem:[%s3909 + $0x10] sm:$0xff]
      %v3913 = vld [vmem:[%s3909 + $0x18] sm:$0xff]
      %v3914 = vld [vmem:[%s3909 + $0x20] sm:$0xff]
      %v3915 = vld [vmem:[%s3909 + $0x28] sm:$0xff]
      %v3916 = vld [vmem:[%s3909 + $0x30] sm:$0xff]
      %v3917 = vld [vmem:[%s3909 + $0x38] sm:$0xff]
      %v3918 = vld [vmem:[%s3909 + $0x40] sm:$0xff]
      %v3919 = vld [vmem:[%s3909 + $0x48] sm:$0xff]
      %v3920 = vld [vmem:[%s3909 + $0x50] sm:$0xff]
      %v3921 = vld [vmem:[%s3909 + $0x58] sm:$0xff]
      %v3922 = vld [vmem:[%s3909 + $0x60] sm:$0xff]
      %v3923 = vld [vmem:[%s3909 + $0x68] sm:$0xff]
      %v3924 = vld [vmem:[%s3909 + $0x70] sm:$0xff]
      %v3925 = vld [vmem:[%s3909 + $0x78] sm:$0xff]
      %v3926 = vld [vmem:[%s3909 + $0x80] sm:$0xff]
      %v3927 = vld [vmem:[%s3909 + $0x88] sm:$0xff]
      %v3928 = vld [vmem:[%s3909 + $0x90] sm:$0xff]
      %v3929 = vld [vmem:[%s3909 + $0x98] sm:$0xff]
      %v3930 = vld [vmem:[%s3909 + $0xa0] sm:$0xff]
      %v3931 = vld [vmem:[%s3909 + $0xa8] sm:$0xff]
      %v3932 = vld [vmem:[%s3909 + $0xb0] sm:$0xff]
      %v3933 = vld [vmem:[%s3909 + $0xb8] sm:$0xff]
      %v3934 = vld [vmem:[%s3909 + $0xc0] sm:$0xff]
      %v3935 = vld [vmem:[%s3909 + $0xc8] sm:$0xff]
      %v3936 = vld [vmem:[%s3909 + $0xd0] sm:$0xff]
      %v3937 = vld [vmem:[%s3909 + $0xd8] sm:$0xff]
      %v3938 = vld [vmem:[%s3909 + $0xe0] sm:$0xff]
      %v3939 = vld [vmem:[%s3909 + $0xe8] sm:$0xff]
      %v3940 = vld [vmem:[%s3909 + $0xf0] sm:$0xff]
      %v3941 = vld [vmem:[%s3909 + $0xf8] sm:$0xff]
      %v3942 = vld [vmem:[%s3909 + $0x100] sm:$0xff]
      %v3943 = vld [vmem:[%s3909 + $0x108] sm:$0xff]
      %v3944 = vld [vmem:[%s3909 + $0x110] sm:$0xff]
      %v3945 = vld [vmem:[%s3909 + $0x118] sm:$0xff]
      %v3946 = vld [vmem:[%s3909 + $0x120] sm:$0xff]
      %v3947 = vld [vmem:[%s3909 + $0x128] sm:$0xff]
      %v3948 = vld [vmem:[%s3909 + $0x130] sm:$0xff]
      %v3949 = vld [vmem:[%s3909 + $0x138] sm:$0xff]
      %v3950 = vld [vmem:[%s3909 + $0x140] sm:$0xff]
      %v3951 = vld [vmem:[%s3909 + $0x148] sm:$0xff]
      %v3952 = vld [vmem:[%s3909 + $0x150] sm:$0xff]
      %v3953 = vld [vmem:[%s3909 + $0x158] sm:$0xff]
      %3998 = vrot.lane.b32.xlu0 %v3910, 4
      %v3999 = vpop.permute.xlu0 %3998
      %4000 = vrot.lane.b32.xlu0 %v3911, 4
      %v4001 = vpop.permute.xlu0 %4000
      %4002 = vrot.lane.b32.xlu0 %v3912, 4
      %v4003 = vpop.permute.xlu0 %4002
      %4004 = vrot.lane.b32.xlu0 %v3913, 4
      %v4005 = vpop.permute.xlu0 %4004
      %4006 = vrot.lane.b32.xlu0 %v3914, 4
      %v4007 = vpop.permute.xlu0 %4006
      %4008 = vrot.lane.b32.xlu0 %v3915, 4
      %v4009 = vpop.permute.xlu0 %4008
      %4010 = vrot.lane.b32.xlu0 %v3916, 4
      %v4011 = vpop.permute.xlu0 %4010
      %4012 = vrot.lane.b32.xlu0 %v3917, 4
      %v4013 = vpop.permute.xlu0 %4012
      %4014 = vrot.lane.b32.xlu0 %v3918, 4
      %v4015 = vpop.permute.xlu0 %4014
      %4016 = vrot.lane.b32.xlu0 %v3919, 4
      %v4017 = vpop.permute.xlu0 %4016
      %4018 = vrot.lane.b32.xlu0 %v3920, 4
      %v4019 = vpop.permute.xlu0 %4018
      %4020 = vrot.lane.b32.xlu0 %v3921, 4
      %v4021 = vpop.permute.xlu0 %4020
      %4022 = vrot.lane.b32.xlu0 %v3922, 4
      %v4023 = vpop.permute.xlu0 %4022
      %4024 = vrot.lane.b32.xlu0 %v3923, 4
      %v4025 = vpop.permute.xlu0 %4024
      %4026 = vrot.lane.b32.xlu0 %v3924, 4
      %v4027 = vpop.permute.xlu0 %4026
      %4028 = vrot.lane.b32.xlu0 %v3925, 4
      %v4029 = vpop.permute.xlu0 %4028
      %4030 = vrot.lane.b32.xlu0 %v3926, 4
      %v4031 = vpop.permute.xlu0 %4030
      %4032 = vrot.lane.b32.xlu0 %v3927, 4
      %v4033 = vpop.permute.xlu0 %4032
      %4034 = vrot.lane.b32.xlu0 %v3928, 4
      %v4035 = vpop.permute.xlu0 %4034
      %4036 = vrot.lane.b32.xlu0 %v3929, 4
      %v4037 = vpop.permute.xlu0 %4036
      %4038 = vrot.lane.b32.xlu0 %v3930, 4
      %v4039 = vpop.permute.xlu0 %4038
      %4040 = vrot.lane.b32.xlu0 %v3931, 4
      %v4041 = vpop.permute.xlu0 %4040
      %4042 = vrot.lane.b32.xlu0 %v3932, 4
      %v4043 = vpop.permute.xlu0 %4042
      %4044 = vrot.lane.b32.xlu0 %v3933, 4
      %v4045 = vpop.permute.xlu0 %4044
      %4046 = vrot.lane.b32.xlu0 %v3934, 4
      %v4047 = vpop.permute.xlu0 %4046
      %4048 = vrot.lane.b32.xlu0 %v3935, 4
      %v4049 = vpop.permute.xlu0 %4048
      %4050 = vrot.lane.b32.xlu0 %v3936, 4
      %v4051 = vpop.permute.xlu0 %4050
      %4052 = vrot.lane.b32.xlu0 %v3937, 4
      %v4053 = vpop.permute.xlu0 %4052
      %4054 = vrot.lane.b32.xlu0 %v3938, 4
      %v4055 = vpop.permute.xlu0 %4054
      %4056 = vrot.lane.b32.xlu0 %v3939, 4
      %v4057 = vpop.permute.xlu0 %4056
      %4058 = vrot.lane.b32.xlu0 %v3940, 4
      %v4059 = vpop.permute.xlu0 %4058
      %4060 = vrot.lane.b32.xlu0 %v3941, 4
      %v4061 = vpop.permute.xlu0 %4060
      %4062 = vrot.lane.b32.xlu0 %v3942, 4
      %v4063 = vpop.permute.xlu0 %4062
      %4064 = vrot.lane.b32.xlu0 %v3943, 4
      %v4065 = vpop.permute.xlu0 %4064
      %4066 = vrot.lane.b32.xlu0 %v3944, 4
      %v4067 = vpop.permute.xlu0 %4066
      %4068 = vrot.lane.b32.xlu0 %v3945, 4
      %v4069 = vpop.permute.xlu0 %4068
      %4070 = vrot.lane.b32.xlu0 %v3946, 4
      %v4071 = vpop.permute.xlu0 %4070
      %4072 = vrot.lane.b32.xlu0 %v3947, 4
      %v4073 = vpop.permute.xlu0 %4072
      %4074 = vrot.lane.b32.xlu0 %v3948, 4
      %v4075 = vpop.permute.xlu0 %4074
      %4076 = vrot.lane.b32.xlu0 %v3949, 4
      %v4077 = vpop.permute.xlu0 %4076
      %4078 = vrot.lane.b32.xlu0 %v3950, 4
      %v4079 = vpop.permute.xlu0 %4078
      %4080 = vrot.lane.b32.xlu0 %v3951, 4
      %v4081 = vpop.permute.xlu0 %4080
      %4082 = vrot.lane.b32.xlu0 %v3952, 4
      %v4083 = vpop.permute.xlu0 %4082
      %4084 = vrot.lane.b32.xlu0 %v3953, 4
      %v4085 = vpop.permute.xlu0 %4084
      %4130 = vst.msk [vmem:[#allocation2] sm:$0xff] %vm1173, %v3999
      %4131 = vst.msk [vmem:[#allocation2 + $0x8] sm:$0xff] %vm1173, %v4001
      %4132 = vst.msk [vmem:[#allocation2 + $0x10] sm:$0xff] %vm1173, %v4003
      %4133 = vst.msk [vmem:[#allocation2 + $0x18] sm:$0xff] %vm1173, %v4005
      %4134 = vst.msk [vmem:[#allocation2 + $0x20] sm:$0xff] %vm1173, %v4007
      %4135 = vst.msk [vmem:[#allocation2 + $0x28] sm:$0xff] %vm1173, %v4009
      %4136 = vst.msk [vmem:[#allocation2 + $0x30] sm:$0xff] %vm1173, %v4011
      %4137 = vst.msk [vmem:[#allocation2 + $0x38] sm:$0xff] %vm1173, %v4013
      %4138 = vst.msk [vmem:[#allocation2 + $0x40] sm:$0xff] %vm1173, %v4015
      %4139 = vst.msk [vmem:[#allocation2 + $0x48] sm:$0xff] %vm1173, %v4017
      %4140 = vst.msk [vmem:[#allocation2 + $0x50] sm:$0xff] %vm1173, %v4019
      %4141 = vst.msk [vmem:[#allocation2 + $0x58] sm:$0xff] %vm1173, %v4021
      %4142 = vst.msk [vmem:[#allocation2 + $0x60] sm:$0xff] %vm1173, %v4023
      %4143 = vst.msk [vmem:[#allocation2 + $0x68] sm:$0xff] %vm1173, %v4025
      %4144 = vst.msk [vmem:[#allocation2 + $0x70] sm:$0xff] %vm1173, %v4027
      %4145 = vst.msk [vmem:[#allocation2 + $0x78] sm:$0xff] %vm1173, %v4029
      %4146 = vst.msk [vmem:[#allocation2 + $0x80] sm:$0xff] %vm1173, %v4031
      %4147 = vst.msk [vmem:[#allocation2 + $0x88] sm:$0xff] %vm1173, %v4033
      %4148 = vst.msk [vmem:[#allocation2 + $0x90] sm:$0xff] %vm1173, %v4035
      %4149 = vst.msk [vmem:[#allocation2 + $0x98] sm:$0xff] %vm1173, %v4037
      %4150 = vst.msk [vmem:[#allocation2 + $0xa0] sm:$0xff] %vm1173, %v4039
      %4151 = vst.msk [vmem:[#allocation2 + $0xa8] sm:$0xff] %vm1173, %v4041
      %4152 = vst.msk [vmem:[#allocation2 + $0xb0] sm:$0xff] %vm1173, %v4043
      %4153 = vst.msk [vmem:[#allocation2 + $0xb8] sm:$0xff] %vm1173, %v4045
      %4154 = vst.msk [vmem:[#allocation2 + $0xc0] sm:$0xff] %vm1173, %v4047
      %4155 = vst.msk [vmem:[#allocation2 + $0xc8] sm:$0xff] %vm1173, %v4049
      %4156 = vst.msk [vmem:[#allocation2 + $0xd0] sm:$0xff] %vm1173, %v4051
      %4157 = vst.msk [vmem:[#allocation2 + $0xd8] sm:$0xff] %vm1173, %v4053
      %4158 = vst.msk [vmem:[#allocation2 + $0xe0] sm:$0xff] %vm1173, %v4055
      %4159 = vst.msk [vmem:[#allocation2 + $0xe8] sm:$0xff] %vm1173, %v4057
      %4160 = vst.msk [vmem:[#allocation2 + $0xf0] sm:$0xff] %vm1173, %v4059
      %4161 = vst.msk [vmem:[#allocation2 + $0xf8] sm:$0xff] %vm1173, %v4061
      %4162 = vst.msk [vmem:[#allocation2 + $0x100] sm:$0xff] %vm1173, %v4063
      %4163 = vst.msk [vmem:[#allocation2 + $0x108] sm:$0xff] %vm1173, %v4065
      %4164 = vst.msk [vmem:[#allocation2 + $0x110] sm:$0xff] %vm1173, %v4067
      %4165 = vst.msk [vmem:[#allocation2 + $0x118] sm:$0xff] %vm1173, %v4069
      %4166 = vst.msk [vmem:[#allocation2 + $0x120] sm:$0xff] %vm1173, %v4071
      %4167 = vst.msk [vmem:[#allocation2 + $0x128] sm:$0xff] %vm1173, %v4073
      %4168 = vst.msk [vmem:[#allocation2 + $0x130] sm:$0xff] %vm1173, %v4075
      %4169 = vst.msk [vmem:[#allocation2 + $0x138] sm:$0xff] %vm1173, %v4077
      %4170 = vst.msk [vmem:[#allocation2 + $0x140] sm:$0xff] %vm1173, %v4079
      %4171 = vst.msk [vmem:[#allocation2 + $0x148] sm:$0xff] %vm1173, %v4081
      %4172 = vst.msk [vmem:[#allocation2 + $0x150] sm:$0xff] %vm1173, %v4083
      %4173 = vst.msk [vmem:[#allocation2 + $0x158] sm:$0xff] %vm1173, %v4085
      %s4174 = sadd.s32 %s302, 90
      %s4175 = scalar_lea.vmem %s291, %s4174
      %v4176 = vld [vmem:[%s4175] sm:$0xff]
      %v4177 = vld [vmem:[%s4175 + $0x8] sm:$0xff]
      %v4178 = vld [vmem:[%s4175 + $0x10] sm:$0xff]
      %v4179 = vld [vmem:[%s4175 + $0x18] sm:$0xff]
      %v4180 = vld [vmem:[%s4175 + $0x20] sm:$0xff]
      %v4181 = vld [vmem:[%s4175 + $0x28] sm:$0xff]
      %v4182 = vld [vmem:[%s4175 + $0x30] sm:$0xff]
      %v4183 = vld [vmem:[%s4175 + $0x38] sm:$0xff]
      %v4184 = vld [vmem:[%s4175 + $0x40] sm:$0xff]
      %v4185 = vld [vmem:[%s4175 + $0x48] sm:$0xff]
      %v4186 = vld [vmem:[%s4175 + $0x50] sm:$0xff]
      %v4187 = vld [vmem:[%s4175 + $0x58] sm:$0xff]
      %v4188 = vld [vmem:[%s4175 + $0x60] sm:$0xff]
      %v4189 = vld [vmem:[%s4175 + $0x68] sm:$0xff]
      %v4190 = vld [vmem:[%s4175 + $0x70] sm:$0xff]
      %v4191 = vld [vmem:[%s4175 + $0x78] sm:$0xff]
      %v4192 = vld [vmem:[%s4175 + $0x80] sm:$0xff]
      %v4193 = vld [vmem:[%s4175 + $0x88] sm:$0xff]
      %v4194 = vld [vmem:[%s4175 + $0x90] sm:$0xff]
      %v4195 = vld [vmem:[%s4175 + $0x98] sm:$0xff]
      %v4196 = vld [vmem:[%s4175 + $0xa0] sm:$0xff]
      %v4197 = vld [vmem:[%s4175 + $0xa8] sm:$0xff]
      %v4198 = vld [vmem:[%s4175 + $0xb0] sm:$0xff]
      %v4199 = vld [vmem:[%s4175 + $0xb8] sm:$0xff]
      %v4200 = vld [vmem:[%s4175 + $0xc0] sm:$0xff]
      %v4201 = vld [vmem:[%s4175 + $0xc8] sm:$0xff]
      %v4202 = vld [vmem:[%s4175 + $0xd0] sm:$0xff]
      %v4203 = vld [vmem:[%s4175 + $0xd8] sm:$0xff]
      %v4204 = vld [vmem:[%s4175 + $0xe0] sm:$0xff]
      %v4205 = vld [vmem:[%s4175 + $0xe8] sm:$0xff]
      %v4206 = vld [vmem:[%s4175 + $0xf0] sm:$0xff]
      %v4207 = vld [vmem:[%s4175 + $0xf8] sm:$0xff]
      %v4208 = vld [vmem:[%s4175 + $0x100] sm:$0xff]
      %v4209 = vld [vmem:[%s4175 + $0x108] sm:$0xff]
      %v4210 = vld [vmem:[%s4175 + $0x110] sm:$0xff]
      %v4211 = vld [vmem:[%s4175 + $0x118] sm:$0xff]
      %v4212 = vld [vmem:[%s4175 + $0x120] sm:$0xff]
      %v4213 = vld [vmem:[%s4175 + $0x128] sm:$0xff]
      %v4214 = vld [vmem:[%s4175 + $0x130] sm:$0xff]
      %v4215 = vld [vmem:[%s4175 + $0x138] sm:$0xff]
      %v4216 = vld [vmem:[%s4175 + $0x140] sm:$0xff]
      %v4217 = vld [vmem:[%s4175 + $0x148] sm:$0xff]
      %v4218 = vld [vmem:[%s4175 + $0x150] sm:$0xff]
      %v4219 = vld [vmem:[%s4175 + $0x158] sm:$0xff]
      %4264 = vrot.lane.b32.xlu0 %v4176, 8
      %v4265 = vpop.permute.xlu0 %4264
      %4266 = vrot.lane.b32.xlu0 %v4177, 8
      %v4267 = vpop.permute.xlu0 %4266
      %4268 = vrot.lane.b32.xlu0 %v4178, 8
      %v4269 = vpop.permute.xlu0 %4268
      %4270 = vrot.lane.b32.xlu0 %v4179, 8
      %v4271 = vpop.permute.xlu0 %4270
      %4272 = vrot.lane.b32.xlu0 %v4180, 8
      %v4273 = vpop.permute.xlu0 %4272
      %4274 = vrot.lane.b32.xlu0 %v4181, 8
      %v4275 = vpop.permute.xlu0 %4274
      %4276 = vrot.lane.b32.xlu0 %v4182, 8
      %v4277 = vpop.permute.xlu0 %4276
      %4278 = vrot.lane.b32.xlu0 %v4183, 8
      %v4279 = vpop.permute.xlu0 %4278
      %4280 = vrot.lane.b32.xlu0 %v4184, 8
      %v4281 = vpop.permute.xlu0 %4280
      %4282 = vrot.lane.b32.xlu0 %v4185, 8
      %v4283 = vpop.permute.xlu0 %4282
      %4284 = vrot.lane.b32.xlu0 %v4186, 8
      %v4285 = vpop.permute.xlu0 %4284
      %4286 = vrot.lane.b32.xlu0 %v4187, 8
      %v4287 = vpop.permute.xlu0 %4286
      %4288 = vrot.lane.b32.xlu0 %v4188, 8
      %v4289 = vpop.permute.xlu0 %4288
      %4290 = vrot.lane.b32.xlu0 %v4189, 8
      %v4291 = vpop.permute.xlu0 %4290
      %4292 = vrot.lane.b32.xlu0 %v4190, 8
      %v4293 = vpop.permute.xlu0 %4292
      %4294 = vrot.lane.b32.xlu0 %v4191, 8
      %v4295 = vpop.permute.xlu0 %4294
      %4296 = vrot.lane.b32.xlu0 %v4192, 8
      %v4297 = vpop.permute.xlu0 %4296
      %4298 = vrot.lane.b32.xlu0 %v4193, 8
      %v4299 = vpop.permute.xlu0 %4298
      %4300 = vrot.lane.b32.xlu0 %v4194, 8
      %v4301 = vpop.permute.xlu0 %4300
      %4302 = vrot.lane.b32.xlu0 %v4195, 8
      %v4303 = vpop.permute.xlu0 %4302
      %4304 = vrot.lane.b32.xlu0 %v4196, 8
      %v4305 = vpop.permute.xlu0 %4304
      %4306 = vrot.lane.b32.xlu0 %v4197, 8
      %v4307 = vpop.permute.xlu0 %4306
      %4308 = vrot.lane.b32.xlu0 %v4198, 8
      %v4309 = vpop.permute.xlu0 %4308
      %4310 = vrot.lane.b32.xlu0 %v4199, 8
      %v4311 = vpop.permute.xlu0 %4310
      %4312 = vrot.lane.b32.xlu0 %v4200, 8
      %v4313 = vpop.permute.xlu0 %4312
      %4314 = vrot.lane.b32.xlu0 %v4201, 8
      %v4315 = vpop.permute.xlu0 %4314
      %4316 = vrot.lane.b32.xlu0 %v4202, 8
      %v4317 = vpop.permute.xlu0 %4316
      %4318 = vrot.lane.b32.xlu0 %v4203, 8
      %v4319 = vpop.permute.xlu0 %4318
      %4320 = vrot.lane.b32.xlu0 %v4204, 8
      %v4321 = vpop.permute.xlu0 %4320
      %4322 = vrot.lane.b32.xlu0 %v4205, 8
      %v4323 = vpop.permute.xlu0 %4322
      %4324 = vrot.lane.b32.xlu0 %v4206, 8
      %v4325 = vpop.permute.xlu0 %4324
      %4326 = vrot.lane.b32.xlu0 %v4207, 8
      %v4327 = vpop.permute.xlu0 %4326
      %4328 = vrot.lane.b32.xlu0 %v4208, 8
      %v4329 = vpop.permute.xlu0 %4328
      %4330 = vrot.lane.b32.xlu0 %v4209, 8
      %v4331 = vpop.permute.xlu0 %4330
      %4332 = vrot.lane.b32.xlu0 %v4210, 8
      %v4333 = vpop.permute.xlu0 %4332
      %4334 = vrot.lane.b32.xlu0 %v4211, 8
      %v4335 = vpop.permute.xlu0 %4334
      %4336 = vrot.lane.b32.xlu0 %v4212, 8
      %v4337 = vpop.permute.xlu0 %4336
      %4338 = vrot.lane.b32.xlu0 %v4213, 8
      %v4339 = vpop.permute.xlu0 %4338
      %4340 = vrot.lane.b32.xlu0 %v4214, 8
      %v4341 = vpop.permute.xlu0 %4340
      %4342 = vrot.lane.b32.xlu0 %v4215, 8
      %v4343 = vpop.permute.xlu0 %4342
      %4344 = vrot.lane.b32.xlu0 %v4216, 8
      %v4345 = vpop.permute.xlu0 %4344
      %4346 = vrot.lane.b32.xlu0 %v4217, 8
      %v4347 = vpop.permute.xlu0 %4346
      %4348 = vrot.lane.b32.xlu0 %v4218, 8
      %v4349 = vpop.permute.xlu0 %4348
      %4350 = vrot.lane.b32.xlu0 %v4219, 8
      %v4351 = vpop.permute.xlu0 %4350
      %4396 = vst.msk [vmem:[#allocation2] sm:$0xff] %vm1440, %v4265
      %4397 = vst.msk [vmem:[#allocation2 + $0x8] sm:$0xff] %vm1440, %v4267
      %4398 = vst.msk [vmem:[#allocation2 + $0x10] sm:$0xff] %vm1440, %v4269
      %4399 = vst.msk [vmem:[#allocation2 + $0x18] sm:$0xff] %vm1440, %v4271
      %4400 = vst.msk [vmem:[#allocation2 + $0x20] sm:$0xff] %vm1440, %v4273
      %4401 = vst.msk [vmem:[#allocation2 + $0x28] sm:$0xff] %vm1440, %v4275
      %4402 = vst.msk [vmem:[#allocation2 + $0x30] sm:$0xff] %vm1440, %v4277
      %4403 = vst.msk [vmem:[#allocation2 + $0x38] sm:$0xff] %vm1440, %v4279
      %4404 = vst.msk [vmem:[#allocation2 + $0x40] sm:$0xff] %vm1440, %v4281
      %4405 = vst.msk [vmem:[#allocation2 + $0x48] sm:$0xff] %vm1440, %v4283
      %4406 = vst.msk [vmem:[#allocation2 + $0x50] sm:$0xff] %vm1440, %v4285
      %4407 = vst.msk [vmem:[#allocation2 + $0x58] sm:$0xff] %vm1440, %v4287
      %4408 = vst.msk [vmem:[#allocation2 + $0x60] sm:$0xff] %vm1440, %v4289
      %4409 = vst.msk [vmem:[#allocation2 + $0x68] sm:$0xff] %vm1440, %v4291
      %4410 = vst.msk [vmem:[#allocation2 + $0x70] sm:$0xff] %vm1440, %v4293
      %4411 = vst.msk [vmem:[#allocation2 + $0x78] sm:$0xff] %vm1440, %v4295
      %4412 = vst.msk [vmem:[#allocation2 + $0x80] sm:$0xff] %vm1440, %v4297
      %4413 = vst.msk [vmem:[#allocation2 + $0x88] sm:$0xff] %vm1440, %v4299
      %4414 = vst.msk [vmem:[#allocation2 + $0x90] sm:$0xff] %vm1440, %v4301
      %4415 = vst.msk [vmem:[#allocation2 + $0x98] sm:$0xff] %vm1440, %v4303
      %4416 = vst.msk [vmem:[#allocation2 + $0xa0] sm:$0xff] %vm1440, %v4305
      %4417 = vst.msk [vmem:[#allocation2 + $0xa8] sm:$0xff] %vm1440, %v4307
      %4418 = vst.msk [vmem:[#allocation2 + $0xb0] sm:$0xff] %vm1440, %v4309
      %4419 = vst.msk [vmem:[#allocation2 + $0xb8] sm:$0xff] %vm1440, %v4311
      %4420 = vst.msk [vmem:[#allocation2 + $0xc0] sm:$0xff] %vm1440, %v4313
      %4421 = vst.msk [vmem:[#allocation2 + $0xc8] sm:$0xff] %vm1440, %v4315
      %4422 = vst.msk [vmem:[#allocation2 + $0xd0] sm:$0xff] %vm1440, %v4317
      %4423 = vst.msk [vmem:[#allocation2 + $0xd8] sm:$0xff] %vm1440, %v4319
      %4424 = vst.msk [vmem:[#allocation2 + $0xe0] sm:$0xff] %vm1440, %v4321
      %4425 = vst.msk [vmem:[#allocation2 + $0xe8] sm:$0xff] %vm1440, %v4323
      %4426 = vst.msk [vmem:[#allocation2 + $0xf0] sm:$0xff] %vm1440, %v4325
      %4427 = vst.msk [vmem:[#allocation2 + $0xf8] sm:$0xff] %vm1440, %v4327
      %4428 = vst.msk [vmem:[#allocation2 + $0x100] sm:$0xff] %vm1440, %v4329
      %4429 = vst.msk [vmem:[#allocation2 + $0x108] sm:$0xff] %vm1440, %v4331
      %4430 = vst.msk [vmem:[#allocation2 + $0x110] sm:$0xff] %vm1440, %v4333
      %4431 = vst.msk [vmem:[#allocation2 + $0x118] sm:$0xff] %vm1440, %v4335
      %4432 = vst.msk [vmem:[#allocation2 + $0x120] sm:$0xff] %vm1440, %v4337
      %4433 = vst.msk [vmem:[#allocation2 + $0x128] sm:$0xff] %vm1440, %v4339
      %4434 = vst.msk [vmem:[#allocation2 + $0x130] sm:$0xff] %vm1440, %v4341
      %4435 = vst.msk [vmem:[#allocation2 + $0x138] sm:$0xff] %vm1440, %v4343
      %4436 = vst.msk [vmem:[#allocation2 + $0x140] sm:$0xff] %vm1440, %v4345
      %4437 = vst.msk [vmem:[#allocation2 + $0x148] sm:$0xff] %vm1440, %v4347
      %4438 = vst.msk [vmem:[#allocation2 + $0x150] sm:$0xff] %vm1440, %v4349
      %4439 = vst.msk [vmem:[#allocation2 + $0x158] sm:$0xff] %vm1440, %v4351
      %s4440 = sadd.s32 %s302, 130
      %s4441 = scalar_lea.vmem %s291, %s4440
      %v4442 = vld [vmem:[%s4441] sm:$0xff]
      %v4443 = vld [vmem:[%s4441 + $0x8] sm:$0xff]
      %v4444 = vld [vmem:[%s4441 + $0x10] sm:$0xff]
      %v4445 = vld [vmem:[%s4441 + $0x18] sm:$0xff]
      %v4446 = vld [vmem:[%s4441 + $0x20] sm:$0xff]
      %v4447 = vld [vmem:[%s4441 + $0x28] sm:$0xff]
      %v4448 = vld [vmem:[%s4441 + $0x30] sm:$0xff]
      %v4449 = vld [vmem:[%s4441 + $0x38] sm:$0xff]
      %v4450 = vld [vmem:[%s4441 + $0x40] sm:$0xff]
      %v4451 = vld [vmem:[%s4441 + $0x48] sm:$0xff]
      %v4452 = vld [vmem:[%s4441 + $0x50] sm:$0xff]
      %v4453 = vld [vmem:[%s4441 + $0x58] sm:$0xff]
      %v4454 = vld [vmem:[%s4441 + $0x60] sm:$0xff]
      %v4455 = vld [vmem:[%s4441 + $0x68] sm:$0xff]
      %v4456 = vld [vmem:[%s4441 + $0x70] sm:$0xff]
      %v4457 = vld [vmem:[%s4441 + $0x78] sm:$0xff]
      %v4458 = vld [vmem:[%s4441 + $0x80] sm:$0xff]
      %v4459 = vld [vmem:[%s4441 + $0x88] sm:$0xff]
      %v4460 = vld [vmem:[%s4441 + $0x90] sm:$0xff]
      %v4461 = vld [vmem:[%s4441 + $0x98] sm:$0xff]
      %v4462 = vld [vmem:[%s4441 + $0xa0] sm:$0xff]
      %v4463 = vld [vmem:[%s4441 + $0xa8] sm:$0xff]
      %v4464 = vld [vmem:[%s4441 + $0xb0] sm:$0xff]
      %v4465 = vld [vmem:[%s4441 + $0xb8] sm:$0xff]
      %v4466 = vld [vmem:[%s4441 + $0xc0] sm:$0xff]
      %v4467 = vld [vmem:[%s4441 + $0xc8] sm:$0xff]
      %v4468 = vld [vmem:[%s4441 + $0xd0] sm:$0xff]
      %v4469 = vld [vmem:[%s4441 + $0xd8] sm:$0xff]
      %v4470 = vld [vmem:[%s4441 + $0xe0] sm:$0xff]
      %v4471 = vld [vmem:[%s4441 + $0xe8] sm:$0xff]
      %v4472 = vld [vmem:[%s4441 + $0xf0] sm:$0xff]
      %v4473 = vld [vmem:[%s4441 + $0xf8] sm:$0xff]
      %v4474 = vld [vmem:[%s4441 + $0x100] sm:$0xff]
      %v4475 = vld [vmem:[%s4441 + $0x108] sm:$0xff]
      %v4476 = vld [vmem:[%s4441 + $0x110] sm:$0xff]
      %v4477 = vld [vmem:[%s4441 + $0x118] sm:$0xff]
      %v4478 = vld [vmem:[%s4441 + $0x120] sm:$0xff]
      %v4479 = vld [vmem:[%s4441 + $0x128] sm:$0xff]
      %v4480 = vld [vmem:[%s4441 + $0x130] sm:$0xff]
      %v4481 = vld [vmem:[%s4441 + $0x138] sm:$0xff]
      %v4482 = vld [vmem:[%s4441 + $0x140] sm:$0xff]
      %v4483 = vld [vmem:[%s4441 + $0x148] sm:$0xff]
      %v4484 = vld [vmem:[%s4441 + $0x150] sm:$0xff]
      %v4485 = vld [vmem:[%s4441 + $0x158] sm:$0xff]
      %4530 = vrot.lane.b32.xlu0 %v4442, 12
      %v4531 = vpop.permute.xlu0 %4530
      %4532 = vrot.lane.b32.xlu0 %v4443, 12
      %v4533 = vpop.permute.xlu0 %4532
      %4534 = vrot.lane.b32.xlu0 %v4444, 12
      %v4535 = vpop.permute.xlu0 %4534
      %4536 = vrot.lane.b32.xlu0 %v4445, 12
      %v4537 = vpop.permute.xlu0 %4536
      %4538 = vrot.lane.b32.xlu0 %v4446, 12
      %v4539 = vpop.permute.xlu0 %4538
      %4540 = vrot.lane.b32.xlu0 %v4447, 12
      %v4541 = vpop.permute.xlu0 %4540
      %4542 = vrot.lane.b32.xlu0 %v4448, 12
      %v4543 = vpop.permute.xlu0 %4542
      %4544 = vrot.lane.b32.xlu0 %v4449, 12
      %v4545 = vpop.permute.xlu0 %4544
      %4546 = vrot.lane.b32.xlu0 %v4450, 12
      %v4547 = vpop.permute.xlu0 %4546
      %4548 = vrot.lane.b32.xlu0 %v4451, 12
      %v4549 = vpop.permute.xlu0 %4548
      %4550 = vrot.lane.b32.xlu0 %v4452, 12
      %v4551 = vpop.permute.xlu0 %4550
      %4552 = vrot.lane.b32.xlu0 %v4453, 12
      %v4553 = vpop.permute.xlu0 %4552
      %4554 = vrot.lane.b32.xlu0 %v4454, 12
      %v4555 = vpop.permute.xlu0 %4554
      %4556 = vrot.lane.b32.xlu0 %v4455, 12
      %v4557 = vpop.permute.xlu0 %4556
      %4558 = vrot.lane.b32.xlu0 %v4456, 12
      %v4559 = vpop.permute.xlu0 %4558
      %4560 = vrot.lane.b32.xlu0 %v4457, 12
      %v4561 = vpop.permute.xlu0 %4560
      %4562 = vrot.lane.b32.xlu0 %v4458, 12
      %v4563 = vpop.permute.xlu0 %4562
      %4564 = vrot.lane.b32.xlu0 %v4459, 12
      %v4565 = vpop.permute.xlu0 %4564
      %4566 = vrot.lane.b32.xlu0 %v4460, 12
      %v4567 = vpop.permute.xlu0 %4566
      %4568 = vrot.lane.b32.xlu0 %v4461, 12
      %v4569 = vpop.permute.xlu0 %4568
      %4570 = vrot.lane.b32.xlu0 %v4462, 12
      %v4571 = vpop.permute.xlu0 %4570
      %4572 = vrot.lane.b32.xlu0 %v4463, 12
      %v4573 = vpop.permute.xlu0 %4572
      %4574 = vrot.lane.b32.xlu0 %v4464, 12
      %v4575 = vpop.permute.xlu0 %4574
      %4576 = vrot.lane.b32.xlu0 %v4465, 12
      %v4577 = vpop.permute.xlu0 %4576
      %4578 = vrot.lane.b32.xlu0 %v4466, 12
      %v4579 = vpop.permute.xlu0 %4578
      %4580 = vrot.lane.b32.xlu0 %v4467, 12
      %v4581 = vpop.permute.xlu0 %4580
      %4582 = vrot.lane.b32.xlu0 %v4468, 12
      %v4583 = vpop.permute.xlu0 %4582
      %4584 = vrot.lane.b32.xlu0 %v4469, 12
      %v4585 = vpop.permute.xlu0 %4584
      %4586 = vrot.lane.b32.xlu0 %v4470, 12
      %v4587 = vpop.permute.xlu0 %4586
      %4588 = vrot.lane.b32.xlu0 %v4471, 12
      %v4589 = vpop.permute.xlu0 %4588
      %4590 = vrot.lane.b32.xlu0 %v4472, 12
      %v4591 = vpop.permute.xlu0 %4590
      %4592 = vrot.lane.b32.xlu0 %v4473, 12
      %v4593 = vpop.permute.xlu0 %4592
      %4594 = vrot.lane.b32.xlu0 %v4474, 12
      %v4595 = vpop.permute.xlu0 %4594
      %4596 = vrot.lane.b32.xlu0 %v4475, 12
      %v4597 = vpop.permute.xlu0 %4596
      %4598 = vrot.lane.b32.xlu0 %v4476, 12
      %v4599 = vpop.permute.xlu0 %4598
      %4600 = vrot.lane.b32.xlu0 %v4477, 12
      %v4601 = vpop.permute.xlu0 %4600
      %4602 = vrot.lane.b32.xlu0 %v4478, 12
      %v4603 = vpop.permute.xlu0 %4602
      %4604 = vrot.lane.b32.xlu0 %v4479, 12
      %v4605 = vpop.permute.xlu0 %4604
      %4606 = vrot.lane.b32.xlu0 %v4480, 12
      %v4607 = vpop.permute.xlu0 %4606
      %4608 = vrot.lane.b32.xlu0 %v4481, 12
      %v4609 = vpop.permute.xlu0 %4608
      %4610 = vrot.lane.b32.xlu0 %v4482, 12
      %v4611 = vpop.permute.xlu0 %4610
      %4612 = vrot.lane.b32.xlu0 %v4483, 12
      %v4613 = vpop.permute.xlu0 %4612
      %4614 = vrot.lane.b32.xlu0 %v4484, 12
      %v4615 = vpop.permute.xlu0 %4614
      %4616 = vrot.lane.b32.xlu0 %v4485, 12
      %v4617 = vpop.permute.xlu0 %4616
      %4662 = vst.msk [vmem:[#allocation2] sm:$0xff] %vm1707, %v4531
      %4663 = vst.msk [vmem:[#allocation2 + $0x8] sm:$0xff] %vm1707, %v4533
      %4664 = vst.msk [vmem:[#allocation2 + $0x10] sm:$0xff] %vm1707, %v4535
      %4665 = vst.msk [vmem:[#allocation2 + $0x18] sm:$0xff] %vm1707, %v4537
      %4666 = vst.msk [vmem:[#allocation2 + $0x20] sm:$0xff] %vm1707, %v4539
      %4667 = vst.msk [vmem:[#allocation2 + $0x28] sm:$0xff] %vm1707, %v4541
      %4668 = vst.msk [vmem:[#allocation2 + $0x30] sm:$0xff] %vm1707, %v4543
      %4669 = vst.msk [vmem:[#allocation2 + $0x38] sm:$0xff] %vm1707, %v4545
      %4670 = vst.msk [vmem:[#allocation2 + $0x40] sm:$0xff] %vm1707, %v4547
      %4671 = vst.msk [vmem:[#allocation2 + $0x48] sm:$0xff] %vm1707, %v4549
      %4672 = vst.msk [vmem:[#allocation2 + $0x50] sm:$0xff] %vm1707, %v4551
      %4673 = vst.msk [vmem:[#allocation2 + $0x58] sm:$0xff] %vm1707, %v4553
      %4674 = vst.msk [vmem:[#allocation2 + $0x60] sm:$0xff] %vm1707, %v4555
      %4675 = vst.msk [vmem:[#allocation2 + $0x68] sm:$0xff] %vm1707, %v4557
      %4676 = vst.msk [vmem:[#allocation2 + $0x70] sm:$0xff] %vm1707, %v4559
      %4677 = vst.msk [vmem:[#allocation2 + $0x78] sm:$0xff] %vm1707, %v4561
      %4678 = vst.msk [vmem:[#allocation2 + $0x80] sm:$0xff] %vm1707, %v4563
      %4679 = vst.msk [vmem:[#allocation2 + $0x88] sm:$0xff] %vm1707, %v4565
      %4680 = vst.msk [vmem:[#allocation2 + $0x90] sm:$0xff] %vm1707, %v4567
      %4681 = vst.msk [vmem:[#allocation2 + $0x98] sm:$0xff] %vm1707, %v4569
      %4682 = vst.msk [vmem:[#allocation2 + $0xa0] sm:$0xff] %vm1707, %v4571
      %4683 = vst.msk [vmem:[#allocation2 + $0xa8] sm:$0xff] %vm1707, %v4573
      %4684 = vst.msk [vmem:[#allocation2 + $0xb0] sm:$0xff] %vm1707, %v4575
      %4685 = vst.msk [vmem:[#allocation2 + $0xb8] sm:$0xff] %vm1707, %v4577
      %4686 = vst.msk [vmem:[#allocation2 + $0xc0] sm:$0xff] %vm1707, %v4579
      %4687 = vst.msk [vmem:[#allocation2 + $0xc8] sm:$0xff] %vm1707, %v4581
      %4688 = vst.msk [vmem:[#allocation2 + $0xd0] sm:$0xff] %vm1707, %v4583
      %4689 = vst.msk [vmem:[#allocation2 + $0xd8] sm:$0xff] %vm1707, %v4585
      %4690 = vst.msk [vmem:[#allocation2 + $0xe0] sm:$0xff] %vm1707, %v4587
      %4691 = vst.msk [vmem:[#allocation2 + $0xe8] sm:$0xff] %vm1707, %v4589
      %4692 = vst.msk [vmem:[#allocation2 + $0xf0] sm:$0xff] %vm1707, %v4591
      %4693 = vst.msk [vmem:[#allocation2 + $0xf8] sm:$0xff] %vm1707, %v4593
      %4694 = vst.msk [vmem:[#allocation2 + $0x100] sm:$0xff] %vm1707, %v4595
      %4695 = vst.msk [vmem:[#allocation2 + $0x108] sm:$0xff] %vm1707, %v4597
      %4696 = vst.msk [vmem:[#allocation2 + $0x110] sm:$0xff] %vm1707, %v4599
      %4697 = vst.msk [vmem:[#allocation2 + $0x118] sm:$0xff] %vm1707, %v4601
      %4698 = vst.msk [vmem:[#allocation2 + $0x120] sm:$0xff] %vm1707, %v4603
      %4699 = vst.msk [vmem:[#allocation2 + $0x128] sm:$0xff] %vm1707, %v4605
      %4700 = vst.msk [vmem:[#allocation2 + $0x130] sm:$0xff] %vm1707, %v4607
      %4701 = vst.msk [vmem:[#allocation2 + $0x138] sm:$0xff] %vm1707, %v4609
      %4702 = vst.msk [vmem:[#allocation2 + $0x140] sm:$0xff] %vm1707, %v4611
      %4703 = vst.msk [vmem:[#allocation2 + $0x148] sm:$0xff] %vm1707, %v4613
      %4704 = vst.msk [vmem:[#allocation2 + $0x150] sm:$0xff] %vm1707, %v4615
      %4705 = vst.msk [vmem:[#allocation2 + $0x158] sm:$0xff] %vm1707, %v4617
      %v4706 = vld [vmem:[%s306] sm:$0xff]
      %v4707 = vld [vmem:[%s306 + $0x8] sm:$0xff]
      %v4708 = vld [vmem:[%s306 + $0x10] sm:$0xff]
      %v4709 = vld [vmem:[%s306 + $0x18] sm:$0xff]
      %v4710 = vld [vmem:[%s306 + $0x20] sm:$0xff]
      %v4711 = vld [vmem:[%s306 + $0x28] sm:$0xff]
      %v4712 = vld [vmem:[%s306 + $0x30] sm:$0xff]
      %v4713 = vld [vmem:[%s306 + $0x38] sm:$0xff]
      %v4714 = vld [vmem:[%s306 + $0x40] sm:$0xff]
      %v4715 = vld [vmem:[%s306 + $0x48] sm:$0xff]
      %v4716 = vld [vmem:[%s306 + $0x50] sm:$0xff]
      %v4717 = vld [vmem:[%s306 + $0x58] sm:$0xff]
      %v4718 = vld [vmem:[%s306 + $0x60] sm:$0xff]
      %v4719 = vld [vmem:[%s306 + $0x68] sm:$0xff]
      %v4720 = vld [vmem:[%s306 + $0x70] sm:$0xff]
      %v4721 = vld [vmem:[%s306 + $0x78] sm:$0xff]
      %v4722 = vld [vmem:[%s306 + $0x80] sm:$0xff]
      %v4723 = vld [vmem:[%s306 + $0x88] sm:$0xff]
      %v4724 = vld [vmem:[%s306 + $0x90] sm:$0xff]
      %v4725 = vld [vmem:[%s306 + $0x98] sm:$0xff]
      %v4726 = vld [vmem:[%s306 + $0xa0] sm:$0xff]
      %v4727 = vld [vmem:[%s306 + $0xa8] sm:$0xff]
      %v4728 = vld [vmem:[%s306 + $0xb0] sm:$0xff]
      %v4729 = vld [vmem:[%s306 + $0xb8] sm:$0xff]
      %v4730 = vld [vmem:[%s306 + $0xc0] sm:$0xff]
      %v4731 = vld [vmem:[%s306 + $0xc8] sm:$0xff]
      %v4732 = vld [vmem:[%s306 + $0xd0] sm:$0xff]
      %v4733 = vld [vmem:[%s306 + $0xd8] sm:$0xff]
      %v4734 = vld [vmem:[%s306 + $0xe0] sm:$0xff]
      %v4735 = vld [vmem:[%s306 + $0xe8] sm:$0xff]
      %v4736 = vld [vmem:[%s306 + $0xf0] sm:$0xff]
      %v4737 = vld [vmem:[%s306 + $0xf8] sm:$0xff]
      %v4738 = vld [vmem:[%s306 + $0x100] sm:$0xff]
      %v4739 = vld [vmem:[%s306 + $0x108] sm:$0xff]
      %v4740 = vld [vmem:[%s306 + $0x110] sm:$0xff]
      %v4741 = vld [vmem:[%s306 + $0x118] sm:$0xff]
      %v4742 = vld [vmem:[%s306 + $0x120] sm:$0xff]
      %v4743 = vld [vmem:[%s306 + $0x128] sm:$0xff]
      %v4744 = vld [vmem:[%s306 + $0x130] sm:$0xff]
      %v4745 = vld [vmem:[%s306 + $0x138] sm:$0xff]
      %v4746 = vld [vmem:[%s306 + $0x140] sm:$0xff]
      %v4747 = vld [vmem:[%s306 + $0x148] sm:$0xff]
      %v4748 = vld [vmem:[%s306 + $0x150] sm:$0xff]
      %v4749 = vld [vmem:[%s306 + $0x158] sm:$0xff]
      %4794 = vrot.lane.b32.xlu0 %v4706, 16
      %v4795 = vpop.permute.xlu0 %4794
      %4796 = vrot.lane.b32.xlu0 %v4707, 16
      %v4797 = vpop.permute.xlu0 %4796
      %4798 = vrot.lane.b32.xlu0 %v4708, 16
      %v4799 = vpop.permute.xlu0 %4798
      %4800 = vrot.lane.b32.xlu0 %v4709, 16
      %v4801 = vpop.permute.xlu0 %4800
      %4802 = vrot.lane.b32.xlu0 %v4710, 16
      %v4803 = vpop.permute.xlu0 %4802
      %4804 = vrot.lane.b32.xlu0 %v4711, 16
      %v4805 = vpop.permute.xlu0 %4804
      %4806 = vrot.lane.b32.xlu0 %v4712, 16
      %v4807 = vpop.permute.xlu0 %4806
      %4808 = vrot.lane.b32.xlu0 %v4713, 16
      %v4809 = vpop.permute.xlu0 %4808
      %4810 = vrot.lane.b32.xlu0 %v4714, 16
      %v4811 = vpop.permute.xlu0 %4810
      %4812 = vrot.lane.b32.xlu0 %v4715, 16
      %v4813 = vpop.permute.xlu0 %4812
      %4814 = vrot.lane.b32.xlu0 %v4716, 16
      %v4815 = vpop.permute.xlu0 %4814
      %4816 = vrot.lane.b32.xlu0 %v4717, 16
      %v4817 = vpop.permute.xlu0 %4816
      %4818 = vrot.lane.b32.xlu0 %v4718, 16
      %v4819 = vpop.permute.xlu0 %4818
      %4820 = vrot.lane.b32.xlu0 %v4719, 16
      %v4821 = vpop.permute.xlu0 %4820
      %4822 = vrot.lane.b32.xlu0 %v4720, 16
      %v4823 = vpop.permute.xlu0 %4822
      %4824 = vrot.lane.b32.xlu0 %v4721, 16
      %v4825 = vpop.permute.xlu0 %4824
      %4826 = vrot.lane.b32.xlu0 %v4722, 16
      %v4827 = vpop.permute.xlu0 %4826
      %4828 = vrot.lane.b32.xlu0 %v4723, 16
      %v4829 = vpop.permute.xlu0 %4828
      %4830 = vrot.lane.b32.xlu0 %v4724, 16
      %v4831 = vpop.permute.xlu0 %4830
      %4832 = vrot.lane.b32.xlu0 %v4725, 16
      %v4833 = vpop.permute.xlu0 %4832
      %4834 = vrot.lane.b32.xlu0 %v4726, 16
      %v4835 = vpop.permute.xlu0 %4834
      %4836 = vrot.lane.b32.xlu0 %v4727, 16
      %v4837 = vpop.permute.xlu0 %4836
      %4838 = vrot.lane.b32.xlu0 %v4728, 16
      %v4839 = vpop.permute.xlu0 %4838
      %4840 = vrot.lane.b32.xlu0 %v4729, 16
      %v4841 = vpop.permute.xlu0 %4840
      %4842 = vrot.lane.b32.xlu0 %v4730, 16
      %v4843 = vpop.permute.xlu0 %4842
      %4844 = vrot.lane.b32.xlu0 %v4731, 16
      %v4845 = vpop.permute.xlu0 %4844
      %4846 = vrot.lane.b32.xlu0 %v4732, 16
      %v4847 = vpop.permute.xlu0 %4846
      %4848 = vrot.lane.b32.xlu0 %v4733, 16
      %v4849 = vpop.permute.xlu0 %4848
      %4850 = vrot.lane.b32.xlu0 %v4734, 16
      %v4851 = vpop.permute.xlu0 %4850
      %4852 = vrot.lane.b32.xlu0 %v4735, 16
      %v4853 = vpop.permute.xlu0 %4852
      %4854 = vrot.lane.b32.xlu0 %v4736, 16
      %v4855 = vpop.permute.xlu0 %4854
      %4856 = vrot.lane.b32.xlu0 %v4737, 16
      %v4857 = vpop.permute.xlu0 %4856
      %4858 = vrot.lane.b32.xlu0 %v4738, 16
      %v4859 = vpop.permute.xlu0 %4858
      %4860 = vrot.lane.b32.xlu0 %v4739, 16
      %v4861 = vpop.permute.xlu0 %4860
      %4862 = vrot.lane.b32.xlu0 %v4740, 16
      %v4863 = vpop.permute.xlu0 %4862
      %4864 = vrot.lane.b32.xlu0 %v4741, 16
      %v4865 = vpop.permute.xlu0 %4864
      %4866 = vrot.lane.b32.xlu0 %v4742, 16
      %v4867 = vpop.permute.xlu0 %4866
      %4868 = vrot.lane.b32.xlu0 %v4743, 16
      %v4869 = vpop.permute.xlu0 %4868
      %4870 = vrot.lane.b32.xlu0 %v4744, 16
      %v4871 = vpop.permute.xlu0 %4870
      %4872 = vrot.lane.b32.xlu0 %v4745, 16
      %v4873 = vpop.permute.xlu0 %4872
      %4874 = vrot.lane.b32.xlu0 %v4746, 16
      %v4875 = vpop.permute.xlu0 %4874
      %4876 = vrot.lane.b32.xlu0 %v4747, 16
      %v4877 = vpop.permute.xlu0 %4876
      %4878 = vrot.lane.b32.xlu0 %v4748, 16
      %v4879 = vpop.permute.xlu0 %4878
      %4880 = vrot.lane.b32.xlu0 %v4749, 16
      %v4881 = vpop.permute.xlu0 %4880
      %4926 = vst.msk [vmem:[#allocation2] sm:$0xff] %vm1972, %v4795
      %4927 = vst.msk [vmem:[#allocation2 + $0x8] sm:$0xff] %vm1972, %v4797
      %4928 = vst.msk [vmem:[#allocation2 + $0x10] sm:$0xff] %vm1972, %v4799
      %4929 = vst.msk [vmem:[#allocation2 + $0x18] sm:$0xff] %vm1972, %v4801
      %4930 = vst.msk [vmem:[#allocation2 + $0x20] sm:$0xff] %vm1972, %v4803
      %4931 = vst.msk [vmem:[#allocation2 + $0x28] sm:$0xff] %vm1972, %v4805
      %4932 = vst.msk [vmem:[#allocation2 + $0x30] sm:$0xff] %vm1972, %v4807
      %4933 = vst.msk [vmem:[#allocation2 + $0x38] sm:$0xff] %vm1972, %v4809
      %4934 = vst.msk [vmem:[#allocation2 + $0x40] sm:$0xff] %vm1972, %v4811
      %4935 = vst.msk [vmem:[#allocation2 + $0x48] sm:$0xff] %vm1972, %v4813
      %4936 = vst.msk [vmem:[#allocation2 + $0x50] sm:$0xff] %vm1972, %v4815
      %4937 = vst.msk [vmem:[#allocation2 + $0x58] sm:$0xff] %vm1972, %v4817
      %4938 = vst.msk [vmem:[#allocation2 + $0x60] sm:$0xff] %vm1972, %v4819
      %4939 = vst.msk [vmem:[#allocation2 + $0x68] sm:$0xff] %vm1972, %v4821
      %4940 = vst.msk [vmem:[#allocation2 + $0x70] sm:$0xff] %vm1972, %v4823
      %4941 = vst.msk [vmem:[#allocation2 + $0x78] sm:$0xff] %vm1972, %v4825
      %4942 = vst.msk [vmem:[#allocation2 + $0x80] sm:$0xff] %vm1972, %v4827
      %4943 = vst.msk [vmem:[#allocation2 + $0x88] sm:$0xff] %vm1972, %v4829
      %4944 = vst.msk [vmem:[#allocation2 + $0x90] sm:$0xff] %vm1972, %v4831
      %4945 = vst.msk [vmem:[#allocation2 + $0x98] sm:$0xff] %vm1972, %v4833
      %4946 = vst.msk [vmem:[#allocation2 + $0xa0] sm:$0xff] %vm1972, %v4835
      %4947 = vst.msk [vmem:[#allocation2 + $0xa8] sm:$0xff] %vm1972, %v4837
      %4948 = vst.msk [vmem:[#allocation2 + $0xb0] sm:$0xff] %vm1972, %v4839
      %4949 = vst.msk [vmem:[#allocation2 + $0xb8] sm:$0xff] %vm1972, %v4841
      %4950 = vst.msk [vmem:[#allocation2 + $0xc0] sm:$0xff] %vm1972, %v4843
      %4951 = vst.msk [vmem:[#allocation2 + $0xc8] sm:$0xff] %vm1972, %v4845
      %4952 = vst.msk [vmem:[#allocation2 + $0xd0] sm:$0xff] %vm1972, %v4847
      %4953 = vst.msk [vmem:[#allocation2 + $0xd8] sm:$0xff] %vm1972, %v4849
      %4954 = vst.msk [vmem:[#allocation2 + $0xe0] sm:$0xff] %vm1972, %v4851
      %4955 = vst.msk [vmem:[#allocation2 + $0xe8] sm:$0xff] %vm1972, %v4853
      %4956 = vst.msk [vmem:[#allocation2 + $0xf0] sm:$0xff] %vm1972, %v4855
      %4957 = vst.msk [vmem:[#allocation2 + $0xf8] sm:$0xff] %vm1972, %v4857
      %4958 = vst.msk [vmem:[#allocation2 + $0x100] sm:$0xff] %vm1972, %v4859
      %4959 = vst.msk [vmem:[#allocation2 + $0x108] sm:$0xff] %vm1972, %v4861
      %4960 = vst.msk [vmem:[#allocation2 + $0x110] sm:$0xff] %vm1972, %v4863
      %4961 = vst.msk [vmem:[#allocation2 + $0x118] sm:$0xff] %vm1972, %v4865
      %4962 = vst.msk [vmem:[#allocation2 + $0x120] sm:$0xff] %vm1972, %v4867
      %4963 = vst.msk [vmem:[#allocation2 + $0x128] sm:$0xff] %vm1972, %v4869
      %4964 = vst.msk [vmem:[#allocation2 + $0x130] sm:$0xff] %vm1972, %v4871
      %4965 = vst.msk [vmem:[#allocation2 + $0x138] sm:$0xff] %vm1972, %v4873
      %4966 = vst.msk [vmem:[#allocation2 + $0x140] sm:$0xff] %vm1972, %v4875
      %4967 = vst.msk [vmem:[#allocation2 + $0x148] sm:$0xff] %vm1972, %v4877
      %4968 = vst.msk [vmem:[#allocation2 + $0x150] sm:$0xff] %vm1972, %v4879
      %4969 = vst.msk [vmem:[#allocation2 + $0x158] sm:$0xff] %vm1972, %v4881
      %s4970 = sadd.s32 %s302, 134
      %s4971 = scalar_lea.vmem %s291, %s4970
      %v4972 = vld [vmem:[%s4971] sm:$0xff]
      %v4973 = vld [vmem:[%s4971 + $0x8] sm:$0xff]
      %v4974 = vld [vmem:[%s4971 + $0x10] sm:$0xff]
      %v4975 = vld [vmem:[%s4971 + $0x18] sm:$0xff]
      %v4976 = vld [vmem:[%s4971 + $0x20] sm:$0xff]
      %v4977 = vld [vmem:[%s4971 + $0x28] sm:$0xff]
      %v4978 = vld [vmem:[%s4971 + $0x30] sm:$0xff]
      %v4979 = vld [vmem:[%s4971 + $0x38] sm:$0xff]
      %v4980 = vld [vmem:[%s4971 + $0x40] sm:$0xff]
      %v4981 = vld [vmem:[%s4971 + $0x48] sm:$0xff]
      %v4982 = vld [vmem:[%s4971 + $0x50] sm:$0xff]
      %v4983 = vld [vmem:[%s4971 + $0x58] sm:$0xff]
      %v4984 = vld [vmem:[%s4971 + $0x60] sm:$0xff]
      %v4985 = vld [vmem:[%s4971 + $0x68] sm:$0xff]
      %v4986 = vld [vmem:[%s4971 + $0x70] sm:$0xff]
      %v4987 = vld [vmem:[%s4971 + $0x78] sm:$0xff]
      %v4988 = vld [vmem:[%s4971 + $0x80] sm:$0xff]
      %v4989 = vld [vmem:[%s4971 + $0x88] sm:$0xff]
      %v4990 = vld [vmem:[%s4971 + $0x90] sm:$0xff]
      %v4991 = vld [vmem:[%s4971 + $0x98] sm:$0xff]
      %v4992 = vld [vmem:[%s4971 + $0xa0] sm:$0xff]
      %v4993 = vld [vmem:[%s4971 + $0xa8] sm:$0xff]
      %v4994 = vld [vmem:[%s4971 + $0xb0] sm:$0xff]
      %v4995 = vld [vmem:[%s4971 + $0xb8] sm:$0xff]
      %v4996 = vld [vmem:[%s4971 + $0xc0] sm:$0xff]
      %v4997 = vld [vmem:[%s4971 + $0xc8] sm:$0xff]
      %v4998 = vld [vmem:[%s4971 + $0xd0] sm:$0xff]
      %v4999 = vld [vmem:[%s4971 + $0xd8] sm:$0xff]
      %v5000 = vld [vmem:[%s4971 + $0xe0] sm:$0xff]
      %v5001 = vld [vmem:[%s4971 + $0xe8] sm:$0xff]
      %v5002 = vld [vmem:[%s4971 + $0xf0] sm:$0xff]
      %v5003 = vld [vmem:[%s4971 + $0xf8] sm:$0xff]
      %v5004 = vld [vmem:[%s4971 + $0x100] sm:$0xff]
      %v5005 = vld [vmem:[%s4971 + $0x108] sm:$0xff]
      %v5006 = vld [vmem:[%s4971 + $0x110] sm:$0xff]
      %v5007 = vld [vmem:[%s4971 + $0x118] sm:$0xff]
      %v5008 = vld [vmem:[%s4971 + $0x120] sm:$0xff]
      %v5009 = vld [vmem:[%s4971 + $0x128] sm:$0xff]
      %v5010 = vld [vmem:[%s4971 + $0x130] sm:$0xff]
      %v5011 = vld [vmem:[%s4971 + $0x138] sm:$0xff]
      %v5012 = vld [vmem:[%s4971 + $0x140] sm:$0xff]
      %v5013 = vld [vmem:[%s4971 + $0x148] sm:$0xff]
      %v5014 = vld [vmem:[%s4971 + $0x150] sm:$0xff]
      %v5015 = vld [vmem:[%s4971 + $0x158] sm:$0xff]
      %5060 = vrot.lane.b32.xlu0 %v4972, 20
      %v5061 = vpop.permute.xlu0 %5060
      %5062 = vrot.lane.b32.xlu0 %v4973, 20
      %v5063 = vpop.permute.xlu0 %5062
      %5064 = vrot.lane.b32.xlu0 %v4974, 20
      %v5065 = vpop.permute.xlu0 %5064
      %5066 = vrot.lane.b32.xlu0 %v4975, 20
      %v5067 = vpop.permute.xlu0 %5066
      %5068 = vrot.lane.b32.xlu0 %v4976, 20
      %v5069 = vpop.permute.xlu0 %5068
      %5070 = vrot.lane.b32.xlu0 %v4977, 20
      %v5071 = vpop.permute.xlu0 %5070
      %5072 = vrot.lane.b32.xlu0 %v4978, 20
      %v5073 = vpop.permute.xlu0 %5072
      %5074 = vrot.lane.b32.xlu0 %v4979, 20
      %v5075 = vpop.permute.xlu0 %5074
      %5076 = vrot.lane.b32.xlu0 %v4980, 20
      %v5077 = vpop.permute.xlu0 %5076
      %5078 = vrot.lane.b32.xlu0 %v4981, 20
      %v5079 = vpop.permute.xlu0 %5078
      %5080 = vrot.lane.b32.xlu0 %v4982, 20
      %v5081 = vpop.permute.xlu0 %5080
      %5082 = vrot.lane.b32.xlu0 %v4983, 20
      %v5083 = vpop.permute.xlu0 %5082
      %5084 = vrot.lane.b32.xlu0 %v4984, 20
      %v5085 = vpop.permute.xlu0 %5084
      %5086 = vrot.lane.b32.xlu0 %v4985, 20
      %v5087 = vpop.permute.xlu0 %5086
      %5088 = vrot.lane.b32.xlu0 %v4986, 20
      %v5089 = vpop.permute.xlu0 %5088
      %5090 = vrot.lane.b32.xlu0 %v4987, 20
      %v5091 = vpop.permute.xlu0 %5090
      %5092 = vrot.lane.b32.xlu0 %v4988, 20
      %v5093 = vpop.permute.xlu0 %5092
      %5094 = vrot.lane.b32.xlu0 %v4989, 20
      %v5095 = vpop.permute.xlu0 %5094
      %5096 = vrot.lane.b32.xlu0 %v4990, 20
      %v5097 = vpop.permute.xlu0 %5096
      %5098 = vrot.lane.b32.xlu0 %v4991, 20
      %v5099 = vpop.permute.xlu0 %5098
      %5100 = vrot.lane.b32.xlu0 %v4992, 20
      %v5101 = vpop.permute.xlu0 %5100
      %5102 = vrot.lane.b32.xlu0 %v4993, 20
      %v5103 = vpop.permute.xlu0 %5102
      %5104 = vrot.lane.b32.xlu0 %v4994, 20
      %v5105 = vpop.permute.xlu0 %5104
      %5106 = vrot.lane.b32.xlu0 %v4995, 20
      %v5107 = vpop.permute.xlu0 %5106
      %5108 = vrot.lane.b32.xlu0 %v4996, 20
      %v5109 = vpop.permute.xlu0 %5108
      %5110 = vrot.lane.b32.xlu0 %v4997, 20
      %v5111 = vpop.permute.xlu0 %5110
      %5112 = vrot.lane.b32.xlu0 %v4998, 20
      %v5113 = vpop.permute.xlu0 %5112
      %5114 = vrot.lane.b32.xlu0 %v4999, 20
      %v5115 = vpop.permute.xlu0 %5114
      %5116 = vrot.lane.b32.xlu0 %v5000, 20
      %v5117 = vpop.permute.xlu0 %5116
      %5118 = vrot.lane.b32.xlu0 %v5001, 20
      %v5119 = vpop.permute.xlu0 %5118
      %5120 = vrot.lane.b32.xlu0 %v5002, 20
      %v5121 = vpop.permute.xlu0 %5120
      %5122 = vrot.lane.b32.xlu0 %v5003, 20
      %v5123 = vpop.permute.xlu0 %5122
      %5124 = vrot.lane.b32.xlu0 %v5004, 20
      %v5125 = vpop.permute.xlu0 %5124
      %5126 = vrot.lane.b32.xlu0 %v5005, 20
      %v5127 = vpop.permute.xlu0 %5126
      %5128 = vrot.lane.b32.xlu0 %v5006, 20
      %v5129 = vpop.permute.xlu0 %5128
      %5130 = vrot.lane.b32.xlu0 %v5007, 20
      %v5131 = vpop.permute.xlu0 %5130
      %5132 = vrot.lane.b32.xlu0 %v5008, 20
      %v5133 = vpop.permute.xlu0 %5132
      %5134 = vrot.lane.b32.xlu0 %v5009, 20
      %v5135 = vpop.permute.xlu0 %5134
      %5136 = vrot.lane.b32.xlu0 %v5010, 20
      %v5137 = vpop.permute.xlu0 %5136
      %5138 = vrot.lane.b32.xlu0 %v5011, 20
      %v5139 = vpop.permute.xlu0 %5138
      %5140 = vrot.lane.b32.xlu0 %v5012, 20
      %v5141 = vpop.permute.xlu0 %5140
      %5142 = vrot.lane.b32.xlu0 %v5013, 20
      %v5143 = vpop.permute.xlu0 %5142
      %5144 = vrot.lane.b32.xlu0 %v5014, 20
      %v5145 = vpop.permute.xlu0 %5144
      %5146 = vrot.lane.b32.xlu0 %v5015, 20
      %v5147 = vpop.permute.xlu0 %5146
      %5192 = vst.msk [vmem:[#allocation2] sm:$0xff] %vm2239, %v5061
      %5193 = vst.msk [vmem:[#allocation2 + $0x8] sm:$0xff] %vm2239, %v5063
      %5194 = vst.msk [vmem:[#allocation2 + $0x10] sm:$0xff] %vm2239, %v5065
      %5195 = vst.msk [vmem:[#allocation2 + $0x18] sm:$0xff] %vm2239, %v5067
      %5196 = vst.msk [vmem:[#allocation2 + $0x20] sm:$0xff] %vm2239, %v5069
      %5197 = vst.msk [vmem:[#allocation2 + $0x28] sm:$0xff] %vm2239, %v5071
      %5198 = vst.msk [vmem:[#allocation2 + $0x30] sm:$0xff] %vm2239, %v5073
      %5199 = vst.msk [vmem:[#allocation2 + $0x38] sm:$0xff] %vm2239, %v5075
      %5200 = vst.msk [vmem:[#allocation2 + $0x40] sm:$0xff] %vm2239, %v5077
      %5201 = vst.msk [vmem:[#allocation2 + $0x48] sm:$0xff] %vm2239, %v5079
      %5202 = vst.msk [vmem:[#allocation2 + $0x50] sm:$0xff] %vm2239, %v5081
      %5203 = vst.msk [vmem:[#allocation2 + $0x58] sm:$0xff] %vm2239, %v5083
      %5204 = vst.msk [vmem:[#allocation2 + $0x60] sm:$0xff] %vm2239, %v5085
      %5205 = vst.msk [vmem:[#allocation2 + $0x68] sm:$0xff] %vm2239, %v5087
      %5206 = vst.msk [vmem:[#allocation2 + $0x70] sm:$0xff] %vm2239, %v5089
      %5207 = vst.msk [vmem:[#allocation2 + $0x78] sm:$0xff] %vm2239, %v5091
      %5208 = vst.msk [vmem:[#allocation2 + $0x80] sm:$0xff] %vm2239, %v5093
      %5209 = vst.msk [vmem:[#allocation2 + $0x88] sm:$0xff] %vm2239, %v5095
      %5210 = vst.msk [vmem:[#allocation2 + $0x90] sm:$0xff] %vm2239, %v5097
      %5211 = vst.msk [vmem:[#allocation2 + $0x98] sm:$0xff] %vm2239, %v5099
      %5212 = vst.msk [vmem:[#allocation2 + $0xa0] sm:$0xff] %vm2239, %v5101
      %5213 = vst.msk [vmem:[#allocation2 + $0xa8] sm:$0xff] %vm2239, %v5103
      %5214 = vst.msk [vmem:[#allocation2 + $0xb0] sm:$0xff] %vm2239, %v5105
      %5215 = vst.msk [vmem:[#allocation2 + $0xb8] sm:$0xff] %vm2239, %v5107
      %5216 = vst.msk [vmem:[#allocation2 + $0xc0] sm:$0xff] %vm2239, %v5109
      %5217 = vst.msk [vmem:[#allocation2 + $0xc8] sm:$0xff] %vm2239, %v5111
      %5218 = vst.msk [vmem:[#allocation2 + $0xd0] sm:$0xff] %vm2239, %v5113
      %5219 = vst.msk [vmem:[#allocation2 + $0xd8] sm:$0xff] %vm2239, %v5115
      %5220 = vst.msk [vmem:[#allocation2 + $0xe0] sm:$0xff] %vm2239, %v5117
      %5221 = vst.msk [vmem:[#allocation2 + $0xe8] sm:$0xff] %vm2239, %v5119
      %5222 = vst.msk [vmem:[#allocation2 + $0xf0] sm:$0xff] %vm2239, %v5121
      %5223 = vst.msk [vmem:[#allocation2 + $0xf8] sm:$0xff] %vm2239, %v5123
      %5224 = vst.msk [vmem:[#allocation2 + $0x100] sm:$0xff] %vm2239, %v5125
      %5225 = vst.msk [vmem:[#allocation2 + $0x108] sm:$0xff] %vm2239, %v5127
      %5226 = vst.msk [vmem:[#allocation2 + $0x110] sm:$0xff] %vm2239, %v5129
      %5227 = vst.msk [vmem:[#allocation2 + $0x118] sm:$0xff] %vm2239, %v5131
      %5228 = vst.msk [vmem:[#allocation2 + $0x120] sm:$0xff] %vm2239, %v5133
      %5229 = vst.msk [vmem:[#allocation2 + $0x128] sm:$0xff] %vm2239, %v5135
      %5230 = vst.msk [vmem:[#allocation2 + $0x130] sm:$0xff] %vm2239, %v5137
      %5231 = vst.msk [vmem:[#allocation2 + $0x138] sm:$0xff] %vm2239, %v5139
      %5232 = vst.msk [vmem:[#allocation2 + $0x140] sm:$0xff] %vm2239, %v5141
      %5233 = vst.msk [vmem:[#allocation2 + $0x148] sm:$0xff] %vm2239, %v5143
      %5234 = vst.msk [vmem:[#allocation2 + $0x150] sm:$0xff] %vm2239, %v5145
      %5235 = vst.msk [vmem:[#allocation2 + $0x158] sm:$0xff] %vm2239, %v5147
      %s5236 = sadd.s32 %s302, 174
      %s5237 = scalar_lea.vmem %s291, %s5236
      %v5238 = vld [vmem:[%s5237] sm:$0xff]
      %v5239 = vld [vmem:[%s5237 + $0x8] sm:$0xff]
      %v5240 = vld [vmem:[%s5237 + $0x10] sm:$0xff]
      %v5241 = vld [vmem:[%s5237 + $0x18] sm:$0xff]
      %v5242 = vld [vmem:[%s5237 + $0x20] sm:$0xff]
      %v5243 = vld [vmem:[%s5237 + $0x28] sm:$0xff]
      %v5244 = vld [vmem:[%s5237 + $0x30] sm:$0xff]
      %v5245 = vld [vmem:[%s5237 + $0x38] sm:$0xff]
      %v5246 = vld [vmem:[%s5237 + $0x40] sm:$0xff]
      %v5247 = vld [vmem:[%s5237 + $0x48] sm:$0xff]
      %v5248 = vld [vmem:[%s5237 + $0x50] sm:$0xff]
      %v5249 = vld [vmem:[%s5237 + $0x58] sm:$0xff]
      %v5250 = vld [vmem:[%s5237 + $0x60] sm:$0xff]
      %v5251 = vld [vmem:[%s5237 + $0x68] sm:$0xff]
      %v5252 = vld [vmem:[%s5237 + $0x70] sm:$0xff]
      %v5253 = vld [vmem:[%s5237 + $0x78] sm:$0xff]
      %v5254 = vld [vmem:[%s5237 + $0x80] sm:$0xff]
      %v5255 = vld [vmem:[%s5237 + $0x88] sm:$0xff]
      %v5256 = vld [vmem:[%s5237 + $0x90] sm:$0xff]
      %v5257 = vld [vmem:[%s5237 + $0x98] sm:$0xff]
      %v5258 = vld [vmem:[%s5237 + $0xa0] sm:$0xff]
      %v5259 = vld [vmem:[%s5237 + $0xa8] sm:$0xff]
      %v5260 = vld [vmem:[%s5237 + $0xb0] sm:$0xff]
      %v5261 = vld [vmem:[%s5237 + $0xb8] sm:$0xff]
      %v5262 = vld [vmem:[%s5237 + $0xc0] sm:$0xff]
      %v5263 = vld [vmem:[%s5237 + $0xc8] sm:$0xff]
      %v5264 = vld [vmem:[%s5237 + $0xd0] sm:$0xff]
      %v5265 = vld [vmem:[%s5237 + $0xd8] sm:$0xff]
      %v5266 = vld [vmem:[%s5237 + $0xe0] sm:$0xff]
      %v5267 = vld [vmem:[%s5237 + $0xe8] sm:$0xff]
      %v5268 = vld [vmem:[%s5237 + $0xf0] sm:$0xff]
      %v5269 = vld [vmem:[%s5237 + $0xf8] sm:$0xff]
      %v5270 = vld [vmem:[%s5237 + $0x100] sm:$0xff]
      %v5271 = vld [vmem:[%s5237 + $0x108] sm:$0xff]
      %v5272 = vld [vmem:[%s5237 + $0x110] sm:$0xff]
      %v5273 = vld [vmem:[%s5237 + $0x118] sm:$0xff]
      %v5274 = vld [vmem:[%s5237 + $0x120] sm:$0xff]
      %v5275 = vld [vmem:[%s5237 + $0x128] sm:$0xff]
      %v5276 = vld [vmem:[%s5237 + $0x130] sm:$0xff]
      %v5277 = vld [vmem:[%s5237 + $0x138] sm:$0xff]
      %v5278 = vld [vmem:[%s5237 + $0x140] sm:$0xff]
      %v5279 = vld [vmem:[%s5237 + $0x148] sm:$0xff]
      %v5280 = vld [vmem:[%s5237 + $0x150] sm:$0xff]
      %v5281 = vld [vmem:[%s5237 + $0x158] sm:$0xff]
      %5326 = vrot.lane.b32.xlu0 %v5238, 24
      %v5327 = vpop.permute.xlu0 %5326
      %5328 = vrot.lane.b32.xlu0 %v5239, 24
      %v5329 = vpop.permute.xlu0 %5328
      %5330 = vrot.lane.b32.xlu0 %v5240, 24
      %v5331 = vpop.permute.xlu0 %5330
      %5332 = vrot.lane.b32.xlu0 %v5241, 24
      %v5333 = vpop.permute.xlu0 %5332
      %5334 = vrot.lane.b32.xlu0 %v5242, 24
      %v5335 = vpop.permute.xlu0 %5334
      %5336 = vrot.lane.b32.xlu0 %v5243, 24
      %v5337 = vpop.permute.xlu0 %5336
      %5338 = vrot.lane.b32.xlu0 %v5244, 24
      %v5339 = vpop.permute.xlu0 %5338
      %5340 = vrot.lane.b32.xlu0 %v5245, 24
      %v5341 = vpop.permute.xlu0 %5340
      %5342 = vrot.lane.b32.xlu0 %v5246, 24
      %v5343 = vpop.permute.xlu0 %5342
      %5344 = vrot.lane.b32.xlu0 %v5247, 24
      %v5345 = vpop.permute.xlu0 %5344
      %5346 = vrot.lane.b32.xlu0 %v5248, 24
      %v5347 = vpop.permute.xlu0 %5346
      %5348 = vrot.lane.b32.xlu0 %v5249, 24
      %v5349 = vpop.permute.xlu0 %5348
      %5350 = vrot.lane.b32.xlu0 %v5250, 24
      %v5351 = vpop.permute.xlu0 %5350
      %5352 = vrot.lane.b32.xlu0 %v5251, 24
      %v5353 = vpop.permute.xlu0 %5352
      %5354 = vrot.lane.b32.xlu0 %v5252, 24
      %v5355 = vpop.permute.xlu0 %5354
      %5356 = vrot.lane.b32.xlu0 %v5253, 24
      %v5357 = vpop.permute.xlu0 %5356
      %5358 = vrot.lane.b32.xlu0 %v5254, 24
      %v5359 = vpop.permute.xlu0 %5358
      %5360 = vrot.lane.b32.xlu0 %v5255, 24
      %v5361 = vpop.permute.xlu0 %5360
      %5362 = vrot.lane.b32.xlu0 %v5256, 24
      %v5363 = vpop.permute.xlu0 %5362
      %5364 = vrot.lane.b32.xlu0 %v5257, 24
      %v5365 = vpop.permute.xlu0 %5364
      %5366 = vrot.lane.b32.xlu0 %v5258, 24
      %v5367 = vpop.permute.xlu0 %5366
      %5368 = vrot.lane.b32.xlu0 %v5259, 24
      %v5369 = vpop.permute.xlu0 %5368
      %5370 = vrot.lane.b32.xlu0 %v5260, 24
      %v5371 = vpop.permute.xlu0 %5370
      %5372 = vrot.lane.b32.xlu0 %v5261, 24
      %v5373 = vpop.permute.xlu0 %5372
      %5374 = vrot.lane.b32.xlu0 %v5262, 24
      %v5375 = vpop.permute.xlu0 %5374
      %5376 = vrot.lane.b32.xlu0 %v5263, 24
      %v5377 = vpop.permute.xlu0 %5376
      %5378 = vrot.lane.b32.xlu0 %v5264, 24
      %v5379 = vpop.permute.xlu0 %5378
      %5380 = vrot.lane.b32.xlu0 %v5265, 24
      %v5381 = vpop.permute.xlu0 %5380
      %5382 = vrot.lane.b32.xlu0 %v5266, 24
      %v5383 = vpop.permute.xlu0 %5382
      %5384 = vrot.lane.b32.xlu0 %v5267, 24
      %v5385 = vpop.permute.xlu0 %5384
      %5386 = vrot.lane.b32.xlu0 %v5268, 24
      %v5387 = vpop.permute.xlu0 %5386
      %5388 = vrot.lane.b32.xlu0 %v5269, 24
      %v5389 = vpop.permute.xlu0 %5388
      %5390 = vrot.lane.b32.xlu0 %v5270, 24
      %v5391 = vpop.permute.xlu0 %5390
      %5392 = vrot.lane.b32.xlu0 %v5271, 24
      %v5393 = vpop.permute.xlu0 %5392
      %5394 = vrot.lane.b32.xlu0 %v5272, 24
      %v5395 = vpop.permute.xlu0 %5394
      %5396 = vrot.lane.b32.xlu0 %v5273, 24
      %v5397 = vpop.permute.xlu0 %5396
      %5398 = vrot.lane.b32.xlu0 %v5274, 24
      %v5399 = vpop.permute.xlu0 %5398
      %5400 = vrot.lane.b32.xlu0 %v5275, 24
      %v5401 = vpop.permute.xlu0 %5400
      %5402 = vrot.lane.b32.xlu0 %v5276, 24
      %v5403 = vpop.permute.xlu0 %5402
      %5404 = vrot.lane.b32.xlu0 %v5277, 24
      %v5405 = vpop.permute.xlu0 %5404
      %5406 = vrot.lane.b32.xlu0 %v5278, 24
      %v5407 = vpop.permute.xlu0 %5406
      %5408 = vrot.lane.b32.xlu0 %v5279, 24
      %v5409 = vpop.permute.xlu0 %5408
      %5410 = vrot.lane.b32.xlu0 %v5280, 24
      %v5411 = vpop.permute.xlu0 %5410
      %5412 = vrot.lane.b32.xlu0 %v5281, 24
      %v5413 = vpop.permute.xlu0 %5412
      %5458 = vst.msk [vmem:[#allocation2] sm:$0xff] %vm2506, %v5327
      %5459 = vst.msk [vmem:[#allocation2 + $0x8] sm:$0xff] %vm2506, %v5329
      %5460 = vst.msk [vmem:[#allocation2 + $0x10] sm:$0xff] %vm2506, %v5331
      %5461 = vst.msk [vmem:[#allocation2 + $0x18] sm:$0xff] %vm2506, %v5333
      %5462 = vst.msk [vmem:[#allocation2 + $0x20] sm:$0xff] %vm2506, %v5335
      %5463 = vst.msk [vmem:[#allocation2 + $0x28] sm:$0xff] %vm2506, %v5337
      %5464 = vst.msk [vmem:[#allocation2 + $0x30] sm:$0xff] %vm2506, %v5339
      %5465 = vst.msk [vmem:[#allocation2 + $0x38] sm:$0xff] %vm2506, %v5341
      %5466 = vst.msk [vmem:[#allocation2 + $0x40] sm:$0xff] %vm2506, %v5343
      %5467 = vst.msk [vmem:[#allocation2 + $0x48] sm:$0xff] %vm2506, %v5345
      %5468 = vst.msk [vmem:[#allocation2 + $0x50] sm:$0xff] %vm2506, %v5347
      %5469 = vst.msk [vmem:[#allocation2 + $0x58] sm:$0xff] %vm2506, %v5349
      %5470 = vst.msk [vmem:[#allocation2 + $0x60] sm:$0xff] %vm2506, %v5351
      %5471 = vst.msk [vmem:[#allocation2 + $0x68] sm:$0xff] %vm2506, %v5353
      %5472 = vst.msk [vmem:[#allocation2 + $0x70] sm:$0xff] %vm2506, %v5355
      %5473 = vst.msk [vmem:[#allocation2 + $0x78] sm:$0xff] %vm2506, %v5357
      %5474 = vst.msk [vmem:[#allocation2 + $0x80] sm:$0xff] %vm2506, %v5359
      %5475 = vst.msk [vmem:[#allocation2 + $0x88] sm:$0xff] %vm2506, %v5361
      %5476 = vst.msk [vmem:[#allocation2 + $0x90] sm:$0xff] %vm2506, %v5363
      %5477 = vst.msk [vmem:[#allocation2 + $0x98] sm:$0xff] %vm2506, %v5365
      %5478 = vst.msk [vmem:[#allocation2 + $0xa0] sm:$0xff] %vm2506, %v5367
      %5479 = vst.msk [vmem:[#allocation2 + $0xa8] sm:$0xff] %vm2506, %v5369
      %5480 = vst.msk [vmem:[#allocation2 + $0xb0] sm:$0xff] %vm2506, %v5371
      %5481 = vst.msk [vmem:[#allocation2 + $0xb8] sm:$0xff] %vm2506, %v5373
      %5482 = vst.msk [vmem:[#allocation2 + $0xc0] sm:$0xff] %vm2506, %v5375
      %5483 = vst.msk [vmem:[#allocation2 + $0xc8] sm:$0xff] %vm2506, %v5377
      %5484 = vst.msk [vmem:[#allocation2 + $0xd0] sm:$0xff] %vm2506, %v5379
      %5485 = vst.msk [vmem:[#allocation2 + $0xd8] sm:$0xff] %vm2506, %v5381
      %5486 = vst.msk [vmem:[#allocation2 + $0xe0] sm:$0xff] %vm2506, %v5383
      %5487 = vst.msk [vmem:[#allocation2 + $0xe8] sm:$0xff] %vm2506, %v5385
      %5488 = vst.msk [vmem:[#allocation2 + $0xf0] sm:$0xff] %vm2506, %v5387
      %5489 = vst.msk [vmem:[#allocation2 + $0xf8] sm:$0xff] %vm2506, %v5389
      %5490 = vst.msk [vmem:[#allocation2 + $0x100] sm:$0xff] %vm2506, %v5391
      %5491 = vst.msk [vmem:[#allocation2 + $0x108] sm:$0xff] %vm2506, %v5393
      %5492 = vst.msk [vmem:[#allocation2 + $0x110] sm:$0xff] %vm2506, %v5395
      %5493 = vst.msk [vmem:[#allocation2 + $0x118] sm:$0xff] %vm2506, %v5397
      %5494 = vst.msk [vmem:[#allocation2 + $0x120] sm:$0xff] %vm2506, %v5399
      %5495 = vst.msk [vmem:[#allocation2 + $0x128] sm:$0xff] %vm2506, %v5401
      %5496 = vst.msk [vmem:[#allocation2 + $0x130] sm:$0xff] %vm2506, %v5403
      %5497 = vst.msk [vmem:[#allocation2 + $0x138] sm:$0xff] %vm2506, %v5405
      %5498 = vst.msk [vmem:[#allocation2 + $0x140] sm:$0xff] %vm2506, %v5407
      %5499 = vst.msk [vmem:[#allocation2 + $0x148] sm:$0xff] %vm2506, %v5409
      %5500 = vst.msk [vmem:[#allocation2 + $0x150] sm:$0xff] %vm2506, %v5411
      %5501 = vst.msk [vmem:[#allocation2 + $0x158] sm:$0xff] %vm2506, %v5413
      %s5502 = sadd.s32 %s302, 176
      %s5503 = scalar_lea.vmem %s291, %s5502
      %v5504 = vld [vmem:[%s5503] sm:$0xff]
      %v5505 = vld [vmem:[%s5503 + $0x8] sm:$0xff]
      %v5506 = vld [vmem:[%s5503 + $0x10] sm:$0xff]
      %v5507 = vld [vmem:[%s5503 + $0x18] sm:$0xff]
      %v5508 = vld [vmem:[%s5503 + $0x20] sm:$0xff]
      %v5509 = vld [vmem:[%s5503 + $0x28] sm:$0xff]
      %v5510 = vld [vmem:[%s5503 + $0x30] sm:$0xff]
      %v5511 = vld [vmem:[%s5503 + $0x38] sm:$0xff]
      %v5512 = vld [vmem:[%s5503 + $0x40] sm:$0xff]
      %v5513 = vld [vmem:[%s5503 + $0x48] sm:$0xff]
      %v5514 = vld [vmem:[%s5503 + $0x50] sm:$0xff]
      %v5515 = vld [vmem:[%s5503 + $0x58] sm:$0xff]
      %v5516 = vld [vmem:[%s5503 + $0x60] sm:$0xff]
      %v5517 = vld [vmem:[%s5503 + $0x68] sm:$0xff]
      %v5518 = vld [vmem:[%s5503 + $0x70] sm:$0xff]
      %v5519 = vld [vmem:[%s5503 + $0x78] sm:$0xff]
      %v5520 = vld [vmem:[%s5503 + $0x80] sm:$0xff]
      %v5521 = vld [vmem:[%s5503 + $0x88] sm:$0xff]
      %v5522 = vld [vmem:[%s5503 + $0x90] sm:$0xff]
      %v5523 = vld [vmem:[%s5503 + $0x98] sm:$0xff]
      %v5524 = vld [vmem:[%s5503 + $0xa0] sm:$0xff]
      %v5525 = vld [vmem:[%s5503 + $0xa8] sm:$0xff]
      %v5526 = vld [vmem:[%s5503 + $0xb0] sm:$0xff]
      %v5527 = vld [vmem:[%s5503 + $0xb8] sm:$0xff]
      %v5528 = vld [vmem:[%s5503 + $0xc0] sm:$0xff]
      %v5529 = vld [vmem:[%s5503 + $0xc8] sm:$0xff]
      %v5530 = vld [vmem:[%s5503 + $0xd0] sm:$0xff]
      %v5531 = vld [vmem:[%s5503 + $0xd8] sm:$0xff]
      %v5532 = vld [vmem:[%s5503 + $0xe0] sm:$0xff]
      %v5533 = vld [vmem:[%s5503 + $0xe8] sm:$0xff]
      %v5534 = vld [vmem:[%s5503 + $0xf0] sm:$0xff]
      %v5535 = vld [vmem:[%s5503 + $0xf8] sm:$0xff]
      %v5536 = vld [vmem:[%s5503 + $0x100] sm:$0xff]
      %v5537 = vld [vmem:[%s5503 + $0x108] sm:$0xff]
      %v5538 = vld [vmem:[%s5503 + $0x110] sm:$0xff]
      %v5539 = vld [vmem:[%s5503 + $0x118] sm:$0xff]
      %v5540 = vld [vmem:[%s5503 + $0x120] sm:$0xff]
      %v5541 = vld [vmem:[%s5503 + $0x128] sm:$0xff]
      %v5542 = vld [vmem:[%s5503 + $0x130] sm:$0xff]
      %v5543 = vld [vmem:[%s5503 + $0x138] sm:$0xff]
      %v5544 = vld [vmem:[%s5503 + $0x140] sm:$0xff]
      %v5545 = vld [vmem:[%s5503 + $0x148] sm:$0xff]
      %v5546 = vld [vmem:[%s5503 + $0x150] sm:$0xff]
      %v5547 = vld [vmem:[%s5503 + $0x158] sm:$0xff]
      %5592 = vrot.lane.b32.xlu0 %v5504, 28
      %v5593 = vpop.permute.xlu0 %5592
      %5594 = vrot.lane.b32.xlu0 %v5505, 28
      %v5595 = vpop.permute.xlu0 %5594
      %5596 = vrot.lane.b32.xlu0 %v5506, 28
      %v5597 = vpop.permute.xlu0 %5596
      %5598 = vrot.lane.b32.xlu0 %v5507, 28
      %v5599 = vpop.permute.xlu0 %5598
      %5600 = vrot.lane.b32.xlu0 %v5508, 28
      %v5601 = vpop.permute.xlu0 %5600
      %5602 = vrot.lane.b32.xlu0 %v5509, 28
      %v5603 = vpop.permute.xlu0 %5602
      %5604 = vrot.lane.b32.xlu0 %v5510, 28
      %v5605 = vpop.permute.xlu0 %5604
      %5606 = vrot.lane.b32.xlu0 %v5511, 28
      %v5607 = vpop.permute.xlu0 %5606
      %5608 = vrot.lane.b32.xlu0 %v5512, 28
      %v5609 = vpop.permute.xlu0 %5608
      %5610 = vrot.lane.b32.xlu0 %v5513, 28
      %v5611 = vpop.permute.xlu0 %5610
      %5612 = vrot.lane.b32.xlu0 %v5514, 28
      %v5613 = vpop.permute.xlu0 %5612
      %5614 = vrot.lane.b32.xlu0 %v5515, 28
      %v5615 = vpop.permute.xlu0 %5614
      %5616 = vrot.lane.b32.xlu0 %v5516, 28
      %v5617 = vpop.permute.xlu0 %5616
      %5618 = vrot.lane.b32.xlu0 %v5517, 28
      %v5619 = vpop.permute.xlu0 %5618
      %5620 = vrot.lane.b32.xlu0 %v5518, 28
      %v5621 = vpop.permute.xlu0 %5620
      %5622 = vrot.lane.b32.xlu0 %v5519, 28
      %v5623 = vpop.permute.xlu0 %5622
      %5624 = vrot.lane.b32.xlu0 %v5520, 28
      %v5625 = vpop.permute.xlu0 %5624
      %5626 = vrot.lane.b32.xlu0 %v5521, 28
      %v5627 = vpop.permute.xlu0 %5626
      %5628 = vrot.lane.b32.xlu0 %v5522, 28
      %v5629 = vpop.permute.xlu0 %5628
      %5630 = vrot.lane.b32.xlu0 %v5523, 28
      %v5631 = vpop.permute.xlu0 %5630
      %5632 = vrot.lane.b32.xlu0 %v5524, 28
      %v5633 = vpop.permute.xlu0 %5632
      %5634 = vrot.lane.b32.xlu0 %v5525, 28
      %v5635 = vpop.permute.xlu0 %5634
      %5636 = vrot.lane.b32.xlu0 %v5526, 28
      %v5637 = vpop.permute.xlu0 %5636
      %5638 = vrot.lane.b32.xlu0 %v5527, 28
      %v5639 = vpop.permute.xlu0 %5638
      %5640 = vrot.lane.b32.xlu0 %v5528, 28
      %v5641 = vpop.permute.xlu0 %5640
      %5642 = vrot.lane.b32.xlu0 %v5529, 28
      %v5643 = vpop.permute.xlu0 %5642
      %5644 = vrot.lane.b32.xlu0 %v5530, 28
      %v5645 = vpop.permute.xlu0 %5644
      %5646 = vrot.lane.b32.xlu0 %v5531, 28
      %v5647 = vpop.permute.xlu0 %5646
      %5648 = vrot.lane.b32.xlu0 %v5532, 28
      %v5649 = vpop.permute.xlu0 %5648
      %5650 = vrot.lane.b32.xlu0 %v5533, 28
      %v5651 = vpop.permute.xlu0 %5650
      %5652 = vrot.lane.b32.xlu0 %v5534, 28
      %v5653 = vpop.permute.xlu0 %5652
      %5654 = vrot.lane.b32.xlu0 %v5535, 28
      %v5655 = vpop.permute.xlu0 %5654
      %5656 = vrot.lane.b32.xlu0 %v5536, 28
      %v5657 = vpop.permute.xlu0 %5656
      %5658 = vrot.lane.b32.xlu0 %v5537, 28
      %v5659 = vpop.permute.xlu0 %5658
      %5660 = vrot.lane.b32.xlu0 %v5538, 28
      %v5661 = vpop.permute.xlu0 %5660
      %5662 = vrot.lane.b32.xlu0 %v5539, 28
      %v5663 = vpop.permute.xlu0 %5662
      %5664 = vrot.lane.b32.xlu0 %v5540, 28
      %v5665 = vpop.permute.xlu0 %5664
      %5666 = vrot.lane.b32.xlu0 %v5541, 28
      %v5667 = vpop.permute.xlu0 %5666
      %5668 = vrot.lane.b32.xlu0 %v5542, 28
      %v5669 = vpop.permute.xlu0 %5668
      %5670 = vrot.lane.b32.xlu0 %v5543, 28
      %v5671 = vpop.permute.xlu0 %5670
      %5672 = vrot.lane.b32.xlu0 %v5544, 28
      %v5673 = vpop.permute.xlu0 %5672
      %5674 = vrot.lane.b32.xlu0 %v5545, 28
      %v5675 = vpop.permute.xlu0 %5674
      %5676 = vrot.lane.b32.xlu0 %v5546, 28
      %v5677 = vpop.permute.xlu0 %5676
      %5678 = vrot.lane.b32.xlu0 %v5547, 28
      %v5679 = vpop.permute.xlu0 %5678
      %5724 = vst.msk [vmem:[#allocation2] sm:$0xff] %vm2773, %v5593
      %5725 = vst.msk [vmem:[#allocation2 + $0x8] sm:$0xff] %vm2773, %v5595
      %5726 = vst.msk [vmem:[#allocation2 + $0x10] sm:$0xff] %vm2773, %v5597
      %5727 = vst.msk [vmem:[#allocation2 + $0x18] sm:$0xff] %vm2773, %v5599
      %5728 = vst.msk [vmem:[#allocation2 + $0x20] sm:$0xff] %vm2773, %v5601
      %5729 = vst.msk [vmem:[#allocation2 + $0x28] sm:$0xff] %vm2773, %v5603
      %5730 = vst.msk [vmem:[#allocation2 + $0x30] sm:$0xff] %vm2773, %v5605
      %5731 = vst.msk [vmem:[#allocation2 + $0x38] sm:$0xff] %vm2773, %v5607
      %5732 = vst.msk [vmem:[#allocation2 + $0x40] sm:$0xff] %vm2773, %v5609
      %5733 = vst.msk [vmem:[#allocation2 + $0x48] sm:$0xff] %vm2773, %v5611
      %5734 = vst.msk [vmem:[#allocation2 + $0x50] sm:$0xff] %vm2773, %v5613
      %5735 = vst.msk [vmem:[#allocation2 + $0x58] sm:$0xff] %vm2773, %v5615
      %5736 = vst.msk [vmem:[#allocation2 + $0x60] sm:$0xff] %vm2773, %v5617
      %5737 = vst.msk [vmem:[#allocation2 + $0x68] sm:$0xff] %vm2773, %v5619
      %5738 = vst.msk [vmem:[#allocation2 + $0x70] sm:$0xff] %vm2773, %v5621
      %5739 = vst.msk [vmem:[#allocation2 + $0x78] sm:$0xff] %vm2773, %v5623
      %5740 = vst.msk [vmem:[#allocation2 + $0x80] sm:$0xff] %vm2773, %v5625
      %5741 = vst.msk [vmem:[#allocation2 + $0x88] sm:$0xff] %vm2773, %v5627
      %5742 = vst.msk [vmem:[#allocation2 + $0x90] sm:$0xff] %vm2773, %v5629
      %5743 = vst.msk [vmem:[#allocation2 + $0x98] sm:$0xff] %vm2773, %v5631
      %5744 = vst.msk [vmem:[#allocation2 + $0xa0] sm:$0xff] %vm2773, %v5633
      %5745 = vst.msk [vmem:[#allocation2 + $0xa8] sm:$0xff] %vm2773, %v5635
      %5746 = vst.msk [vmem:[#allocation2 + $0xb0] sm:$0xff] %vm2773, %v5637
      %5747 = vst.msk [vmem:[#allocation2 + $0xb8] sm:$0xff] %vm2773, %v5639
      %5748 = vst.msk [vmem:[#allocation2 + $0xc0] sm:$0xff] %vm2773, %v5641
      %5749 = vst.msk [vmem:[#allocation2 + $0xc8] sm:$0xff] %vm2773, %v5643
      %5750 = vst.msk [vmem:[#allocation2 + $0xd0] sm:$0xff] %vm2773, %v5645
      %5751 = vst.msk [vmem:[#allocation2 + $0xd8] sm:$0xff] %vm2773, %v5647
      %5752 = vst.msk [vmem:[#allocation2 + $0xe0] sm:$0xff] %vm2773, %v5649
      %5753 = vst.msk [vmem:[#allocation2 + $0xe8] sm:$0xff] %vm2773, %v5651
      %5754 = vst.msk [vmem:[#allocation2 + $0xf0] sm:$0xff] %vm2773, %v5653
      %5755 = vst.msk [vmem:[#allocation2 + $0xf8] sm:$0xff] %vm2773, %v5655
      %5756 = vst.msk [vmem:[#allocation2 + $0x100] sm:$0xff] %vm2773, %v5657
      %5757 = vst.msk [vmem:[#allocation2 + $0x108] sm:$0xff] %vm2773, %v5659
      %5758 = vst.msk [vmem:[#allocation2 + $0x110] sm:$0xff] %vm2773, %v5661
      %5759 = vst.msk [vmem:[#allocation2 + $0x118] sm:$0xff] %vm2773, %v5663
      %5760 = vst.msk [vmem:[#allocation2 + $0x120] sm:$0xff] %vm2773, %v5665
      %5761 = vst.msk [vmem:[#allocation2 + $0x128] sm:$0xff] %vm2773, %v5667
      %5762 = vst.msk [vmem:[#allocation2 + $0x130] sm:$0xff] %vm2773, %v5669
      %5763 = vst.msk [vmem:[#allocation2 + $0x138] sm:$0xff] %vm2773, %v5671
      %5764 = vst.msk [vmem:[#allocation2 + $0x140] sm:$0xff] %vm2773, %v5673
      %5765 = vst.msk [vmem:[#allocation2 + $0x148] sm:$0xff] %vm2773, %v5675
      %5766 = vst.msk [vmem:[#allocation2 + $0x150] sm:$0xff] %vm2773, %v5677
      %5767 = vst.msk [vmem:[#allocation2 + $0x158] sm:$0xff] %vm2773, %v5679
      %s5768 = sadd.s32 %s302, 178
      %s5769 = scalar_lea.vmem %s291, %s5768
      %v5770 = vld [vmem:[%s5769] sm:$0xff]
      %v5771 = vld [vmem:[%s5769 + $0x8] sm:$0xff]
      %v5772 = vld [vmem:[%s5769 + $0x10] sm:$0xff]
      %v5773 = vld [vmem:[%s5769 + $0x18] sm:$0xff]
      %v5774 = vld [vmem:[%s5769 + $0x20] sm:$0xff]
      %v5775 = vld [vmem:[%s5769 + $0x28] sm:$0xff]
      %v5776 = vld [vmem:[%s5769 + $0x30] sm:$0xff]
      %v5777 = vld [vmem:[%s5769 + $0x38] sm:$0xff]
      %v5778 = vld [vmem:[%s5769 + $0x40] sm:$0xff]
      %v5779 = vld [vmem:[%s5769 + $0x48] sm:$0xff]
      %v5780 = vld [vmem:[%s5769 + $0x50] sm:$0xff]
      %v5781 = vld [vmem:[%s5769 + $0x58] sm:$0xff]
      %v5782 = vld [vmem:[%s5769 + $0x60] sm:$0xff]
      %v5783 = vld [vmem:[%s5769 + $0x68] sm:$0xff]
      %v5784 = vld [vmem:[%s5769 + $0x70] sm:$0xff]
      %v5785 = vld [vmem:[%s5769 + $0x78] sm:$0xff]
      %v5786 = vld [vmem:[%s5769 + $0x80] sm:$0xff]
      %v5787 = vld [vmem:[%s5769 + $0x88] sm:$0xff]
      %v5788 = vld [vmem:[%s5769 + $0x90] sm:$0xff]
      %v5789 = vld [vmem:[%s5769 + $0x98] sm:$0xff]
      %v5790 = vld [vmem:[%s5769 + $0xa0] sm:$0xff]
      %v5791 = vld [vmem:[%s5769 + $0xa8] sm:$0xff]
      %v5792 = vld [vmem:[%s5769 + $0xb0] sm:$0xff]
      %v5793 = vld [vmem:[%s5769 + $0xb8] sm:$0xff]
      %v5794 = vld [vmem:[%s5769 + $0xc0] sm:$0xff]
      %v5795 = vld [vmem:[%s5769 + $0xc8] sm:$0xff]
      %v5796 = vld [vmem:[%s5769 + $0xd0] sm:$0xff]
      %v5797 = vld [vmem:[%s5769 + $0xd8] sm:$0xff]
      %v5798 = vld [vmem:[%s5769 + $0xe0] sm:$0xff]
      %v5799 = vld [vmem:[%s5769 + $0xe8] sm:$0xff]
      %v5800 = vld [vmem:[%s5769 + $0xf0] sm:$0xff]
      %v5801 = vld [vmem:[%s5769 + $0xf8] sm:$0xff]
      %v5802 = vld [vmem:[%s5769 + $0x100] sm:$0xff]
      %v5803 = vld [vmem:[%s5769 + $0x108] sm:$0xff]
      %v5804 = vld [vmem:[%s5769 + $0x110] sm:$0xff]
      %v5805 = vld [vmem:[%s5769 + $0x118] sm:$0xff]
      %v5806 = vld [vmem:[%s5769 + $0x120] sm:$0xff]
      %v5807 = vld [vmem:[%s5769 + $0x128] sm:$0xff]
      %v5808 = vld [vmem:[%s5769 + $0x130] sm:$0xff]
      %v5809 = vld [vmem:[%s5769 + $0x138] sm:$0xff]
      %v5810 = vld [vmem:[%s5769 + $0x140] sm:$0xff]
      %v5811 = vld [vmem:[%s5769 + $0x148] sm:$0xff]
      %v5812 = vld [vmem:[%s5769 + $0x150] sm:$0xff]
      %v5813 = vld [vmem:[%s5769 + $0x158] sm:$0xff]
      %5858 = vrot.lane.b32.xlu0 %v5770, 32
      %v5859 = vpop.permute.xlu0 %5858
      %5860 = vrot.lane.b32.xlu0 %v5771, 32
      %v5861 = vpop.permute.xlu0 %5860
      %5862 = vrot.lane.b32.xlu0 %v5772, 32
      %v5863 = vpop.permute.xlu0 %5862
      %5864 = vrot.lane.b32.xlu0 %v5773, 32
      %v5865 = vpop.permute.xlu0 %5864
      %5866 = vrot.lane.b32.xlu0 %v5774, 32
      %v5867 = vpop.permute.xlu0 %5866
      %5868 = vrot.lane.b32.xlu0 %v5775, 32
      %v5869 = vpop.permute.xlu0 %5868
      %5870 = vrot.lane.b32.xlu0 %v5776, 32
      %v5871 = vpop.permute.xlu0 %5870
      %5872 = vrot.lane.b32.xlu0 %v5777, 32
      %v5873 = vpop.permute.xlu0 %5872
      %5874 = vrot.lane.b32.xlu0 %v5778, 32
      %v5875 = vpop.permute.xlu0 %5874
      %5876 = vrot.lane.b32.xlu0 %v5779, 32
      %v5877 = vpop.permute.xlu0 %5876
      %5878 = vrot.lane.b32.xlu0 %v5780, 32
      %v5879 = vpop.permute.xlu0 %5878
      %5880 = vrot.lane.b32.xlu0 %v5781, 32
      %v5881 = vpop.permute.xlu0 %5880
      %5882 = vrot.lane.b32.xlu0 %v5782, 32
      %v5883 = vpop.permute.xlu0 %5882
      %5884 = vrot.lane.b32.xlu0 %v5783, 32
      %v5885 = vpop.permute.xlu0 %5884
      %5886 = vrot.lane.b32.xlu0 %v5784, 32
      %v5887 = vpop.permute.xlu0 %5886
      %5888 = vrot.lane.b32.xlu0 %v5785, 32
      %v5889 = vpop.permute.xlu0 %5888
      %5890 = vrot.lane.b32.xlu0 %v5786, 32
      %v5891 = vpop.permute.xlu0 %5890
      %5892 = vrot.lane.b32.xlu0 %v5787, 32
      %v5893 = vpop.permute.xlu0 %5892
      %5894 = vrot.lane.b32.xlu0 %v5788, 32
      %v5895 = vpop.permute.xlu0 %5894
      %5896 = vrot.lane.b32.xlu0 %v5789, 32
      %v5897 = vpop.permute.xlu0 %5896
      %5898 = vrot.lane.b32.xlu0 %v5790, 32
      %v5899 = vpop.permute.xlu0 %5898
      %5900 = vrot.lane.b32.xlu0 %v5791, 32
      %v5901 = vpop.permute.xlu0 %5900
      %5902 = vrot.lane.b32.xlu0 %v5792, 32
      %v5903 = vpop.permute.xlu0 %5902
      %5904 = vrot.lane.b32.xlu0 %v5793, 32
      %v5905 = vpop.permute.xlu0 %5904
      %5906 = vrot.lane.b32.xlu0 %v5794, 32
      %v5907 = vpop.permute.xlu0 %5906
      %5908 = vrot.lane.b32.xlu0 %v5795, 32
      %v5909 = vpop.permute.xlu0 %5908
      %5910 = vrot.lane.b32.xlu0 %v5796, 32
      %v5911 = vpop.permute.xlu0 %5910
      %5912 = vrot.lane.b32.xlu0 %v5797, 32
      %v5913 = vpop.permute.xlu0 %5912
      %5914 = vrot.lane.b32.xlu0 %v5798, 32
      %v5915 = vpop.permute.xlu0 %5914
      %5916 = vrot.lane.b32.xlu0 %v5799, 32
      %v5917 = vpop.permute.xlu0 %5916
      %5918 = vrot.lane.b32.xlu0 %v5800, 32
      %v5919 = vpop.permute.xlu0 %5918
      %5920 = vrot.lane.b32.xlu0 %v5801, 32
      %v5921 = vpop.permute.xlu0 %5920
      %5922 = vrot.lane.b32.xlu0 %v5802, 32
      %v5923 = vpop.permute.xlu0 %5922
      %5924 = vrot.lane.b32.xlu0 %v5803, 32
      %v5925 = vpop.permute.xlu0 %5924
      %5926 = vrot.lane.b32.xlu0 %v5804, 32
      %v5927 = vpop.permute.xlu0 %5926
      %5928 = vrot.lane.b32.xlu0 %v5805, 32
      %v5929 = vpop.permute.xlu0 %5928
      %5930 = vrot.lane.b32.xlu0 %v5806, 32
      %v5931 = vpop.permute.xlu0 %5930
      %5932 = vrot.lane.b32.xlu0 %v5807, 32
      %v5933 = vpop.permute.xlu0 %5932
      %5934 = vrot.lane.b32.xlu0 %v5808, 32
      %v5935 = vpop.permute.xlu0 %5934
      %5936 = vrot.lane.b32.xlu0 %v5809, 32
      %v5937 = vpop.permute.xlu0 %5936
      %5938 = vrot.lane.b32.xlu0 %v5810, 32
      %v5939 = vpop.permute.xlu0 %5938
      %5940 = vrot.lane.b32.xlu0 %v5811, 32
      %v5941 = vpop.permute.xlu0 %5940
      %5942 = vrot.lane.b32.xlu0 %v5812, 32
      %v5943 = vpop.permute.xlu0 %5942
      %5944 = vrot.lane.b32.xlu0 %v5813, 32
      %v5945 = vpop.permute.xlu0 %5944
      %5990 = vst.msk [vmem:[#allocation2] sm:$0xff] %vm3040, %v5859
      %5991 = vst.msk [vmem:[#allocation2 + $0x8] sm:$0xff] %vm3040, %v5861
      %5992 = vst.msk [vmem:[#allocation2 + $0x10] sm:$0xff] %vm3040, %v5863
      %5993 = vst.msk [vmem:[#allocation2 + $0x18] sm:$0xff] %vm3040, %v5865
      %5994 = vst.msk [vmem:[#allocation2 + $0x20] sm:$0xff] %vm3040, %v5867
      %5995 = vst.msk [vmem:[#allocation2 + $0x28] sm:$0xff] %vm3040, %v5869
      %5996 = vst.msk [vmem:[#allocation2 + $0x30] sm:$0xff] %vm3040, %v5871
      %5997 = vst.msk [vmem:[#allocation2 + $0x38] sm:$0xff] %vm3040, %v5873
      %5998 = vst.msk [vmem:[#allocation2 + $0x40] sm:$0xff] %vm3040, %v5875
      %5999 = vst.msk [vmem:[#allocation2 + $0x48] sm:$0xff] %vm3040, %v5877
      %6000 = vst.msk [vmem:[#allocation2 + $0x50] sm:$0xff] %vm3040, %v5879
      %6001 = vst.msk [vmem:[#allocation2 + $0x58] sm:$0xff] %vm3040, %v5881
      %6002 = vst.msk [vmem:[#allocation2 + $0x60] sm:$0xff] %vm3040, %v5883
      %6003 = vst.msk [vmem:[#allocation2 + $0x68] sm:$0xff] %vm3040, %v5885
      %6004 = vst.msk [vmem:[#allocation2 + $0x70] sm:$0xff] %vm3040, %v5887
      %6005 = vst.msk [vmem:[#allocation2 + $0x78] sm:$0xff] %vm3040, %v5889
      %6006 = vst.msk [vmem:[#allocation2 + $0x80] sm:$0xff] %vm3040, %v5891
      %6007 = vst.msk [vmem:[#allocation2 + $0x88] sm:$0xff] %vm3040, %v5893
      %6008 = vst.msk [vmem:[#allocation2 + $0x90] sm:$0xff] %vm3040, %v5895
      %6009 = vst.msk [vmem:[#allocation2 + $0x98] sm:$0xff] %vm3040, %v5897
      %6010 = vst.msk [vmem:[#allocation2 + $0xa0] sm:$0xff] %vm3040, %v5899
      %6011 = vst.msk [vmem:[#allocation2 + $0xa8] sm:$0xff] %vm3040, %v5901
      %6012 = vst.msk [vmem:[#allocation2 + $0xb0] sm:$0xff] %vm3040, %v5903
      %6013 = vst.msk [vmem:[#allocation2 + $0xb8] sm:$0xff] %vm3040, %v5905
      %6014 = vst.msk [vmem:[#allocation2 + $0xc0] sm:$0xff] %vm3040, %v5907
      %6015 = vst.msk [vmem:[#allocation2 + $0xc8] sm:$0xff] %vm3040, %v5909
      %6016 = vst.msk [vmem:[#allocation2 + $0xd0] sm:$0xff] %vm3040, %v5911
      %6017 = vst.msk [vmem:[#allocation2 + $0xd8] sm:$0xff] %vm3040, %v5913
      %6018 = vst.msk [vmem:[#allocation2 + $0xe0] sm:$0xff] %vm3040, %v5915
      %6019 = vst.msk [vmem:[#allocation2 + $0xe8] sm:$0xff] %vm3040, %v5917
      %6020 = vst.msk [vmem:[#allocation2 + $0xf0] sm:$0xff] %vm3040, %v5919
      %6021 = vst.msk [vmem:[#allocation2 + $0xf8] sm:$0xff] %vm3040, %v5921
      %6022 = vst.msk [vmem:[#allocation2 + $0x100] sm:$0xff] %vm3040, %v5923
      %6023 = vst.msk [vmem:[#allocation2 + $0x108] sm:$0xff] %vm3040, %v5925
      %6024 = vst.msk [vmem:[#allocation2 + $0x110] sm:$0xff] %vm3040, %v5927
      %6025 = vst.msk [vmem:[#allocation2 + $0x118] sm:$0xff] %vm3040, %v5929
      %6026 = vst.msk [vmem:[#allocation2 + $0x120] sm:$0xff] %vm3040, %v5931
      %6027 = vst.msk [vmem:[#allocation2 + $0x128] sm:$0xff] %vm3040, %v5933
      %6028 = vst.msk [vmem:[#allocation2 + $0x130] sm:$0xff] %vm3040, %v5935
      %6029 = vst.msk [vmem:[#allocation2 + $0x138] sm:$0xff] %vm3040, %v5937
      %6030 = vst.msk [vmem:[#allocation2 + $0x140] sm:$0xff] %vm3040, %v5939
      %6031 = vst.msk [vmem:[#allocation2 + $0x148] sm:$0xff] %vm3040, %v5941
      %6032 = vst.msk [vmem:[#allocation2 + $0x150] sm:$0xff] %vm3040, %v5943
      %6033 = vst.msk [vmem:[#allocation2 + $0x158] sm:$0xff] %vm3040, %v5945
      %v6034 = vld [vmem:[#allocation2] sm:$0xff]
      %v6035 = vld [vmem:[#allocation2 + $0x8] sm:$0xff]
      %v6036 = vld [vmem:[#allocation2 + $0x10] sm:$0xff]
      %v6037 = vld [vmem:[#allocation2 + $0x18] sm:$0xff]
      %v6038 = vld [vmem:[#allocation2 + $0x20] sm:$0xff]
      %v6039 = vld [vmem:[#allocation2 + $0x28] sm:$0xff]
      %v6040 = vld [vmem:[#allocation2 + $0x30] sm:$0xff]
      %v6041 = vld [vmem:[#allocation2 + $0x38] sm:$0xff]
      %v6042 = vld [vmem:[#allocation2 + $0x40] sm:$0xff]
      %v6043 = vld [vmem:[#allocation2 + $0x48] sm:$0xff]
      %v6044 = vld [vmem:[#allocation2 + $0x50] sm:$0xff]
      %v6045 = vld [vmem:[#allocation2 + $0x58] sm:$0xff]
      %v6046 = vld [vmem:[#allocation2 + $0x60] sm:$0xff]
      %v6047 = vld [vmem:[#allocation2 + $0x68] sm:$0xff]
      %v6048 = vld [vmem:[#allocation2 + $0x70] sm:$0xff]
      %v6049 = vld [vmem:[#allocation2 + $0x78] sm:$0xff]
      %v6050 = vld [vmem:[#allocation2 + $0x80] sm:$0xff]
      %v6051 = vld [vmem:[#allocation2 + $0x88] sm:$0xff]
      %v6052 = vld [vmem:[#allocation2 + $0x90] sm:$0xff]
      %v6053 = vld [vmem:[#allocation2 + $0x98] sm:$0xff]
      %v6054 = vld [vmem:[#allocation2 + $0xa0] sm:$0xff]
      %v6055 = vld [vmem:[#allocation2 + $0xa8] sm:$0xff]
      %v6056 = vld [vmem:[#allocation2 + $0xb0] sm:$0xff]
      %v6057 = vld [vmem:[#allocation2 + $0xb8] sm:$0xff]
      %v6058 = vld [vmem:[#allocation2 + $0xc0] sm:$0xff]
      %v6059 = vld [vmem:[#allocation2 + $0xc8] sm:$0xff]
      %v6060 = vld [vmem:[#allocation2 + $0xd0] sm:$0xff]
      %v6061 = vld [vmem:[#allocation2 + $0xd8] sm:$0xff]
      %v6062 = vld [vmem:[#allocation2 + $0xe0] sm:$0xff]
      %v6063 = vld [vmem:[#allocation2 + $0xe8] sm:$0xff]
      %v6064 = vld [vmem:[#allocation2 + $0xf0] sm:$0xff]
      %v6065 = vld [vmem:[#allocation2 + $0xf8] sm:$0xff]
      %v6066 = vld [vmem:[#allocation2 + $0x100] sm:$0xff]
      %v6067 = vld [vmem:[#allocation2 + $0x108] sm:$0xff]
      %v6068 = vld [vmem:[#allocation2 + $0x110] sm:$0xff]
      %v6069 = vld [vmem:[#allocation2 + $0x118] sm:$0xff]
      %v6070 = vld [vmem:[#allocation2 + $0x120] sm:$0xff]
      %v6071 = vld [vmem:[#allocation2 + $0x128] sm:$0xff]
      %v6072 = vld [vmem:[#allocation2 + $0x130] sm:$0xff]
      %v6073 = vld [vmem:[#allocation2 + $0x138] sm:$0xff]
      %v6074 = vld [vmem:[#allocation2 + $0x140] sm:$0xff]
      %v6075 = vld [vmem:[#allocation2 + $0x148] sm:$0xff]
      %v6076 = vld [vmem:[#allocation2 + $0x150] sm:$0xff]
      %v6077 = vld [vmem:[#allocation2 + $0x158] sm:$0xff]
      %s6078 = scalar_lea.vmem %s3, 40
      %v6079 = vld [vmem:[%s6078] sm:$0xff]
      %v6080 = vld [vmem:[%s6078 + $0x8] sm:$0xff]
      %v6081 = vld [vmem:[%s6078 + $0x10] sm:$0xff]
      %v6082 = vld [vmem:[%s6078 + $0x18] sm:$0xff]
      %v6083 = vld [vmem:[%s6078 + $0x20] sm:$0xf]
      %v6085 = vsel %vm3134, %v6034, 0
      %v6088 = vsel %vm3134, %v6035, 0
      %v6091 = vsel %vm3134, %v6036, 0
      %v6094 = vsel %vm3134, %v6037, 0
      %v6097 = vsel %vm3134, %v6038, 0
      %v6100 = vsel %vm3134, %v6039, 0
      %v6103 = vsel %vm3134, %v6040, 0
      %v6106 = vsel %vm3134, %v6041, 0
      %v6109 = vsel %vm3134, %v6042, 0
      %v6112 = vsel %vm3134, %v6043, 0
      %v6115 = vsel %vm3134, %v6044, 0
      %v6118 = vsel %vm3134, %v6045, 0
      %v6121 = vsel %vm3134, %v6046, 0
      %v6124 = vsel %vm3134, %v6047, 0
      %v6127 = vsel %vm3134, %v6048, 0
      %v6130 = vsel %vm3134, %v6049, 0
      %v6133 = vsel %vm3134, %v6050, 0
      %v6136 = vsel %vm3134, %v6051, 0
      %v6139 = vsel %vm3134, %v6052, 0
      %v6142 = vsel %vm3134, %v6053, 0
      %v6145 = vsel %vm3134, %v6054, 0
      %v6148 = vsel %vm3134, %v6055, 0
      %v6151 = vsel %vm3134, %v6056, 0
      %v6154 = vsel %vm3134, %v6057, 0
      %v6157 = vsel %vm3134, %v6058, 0
      %v6160 = vsel %vm3134, %v6059, 0
      %v6163 = vsel %vm3134, %v6060, 0
      %v6166 = vsel %vm3134, %v6061, 0
      %v6169 = vsel %vm3134, %v6062, 0
      %v6172 = vsel %vm3134, %v6063, 0
      %v6175 = vsel %vm3134, %v6064, 0
      %v6178 = vsel %vm3134, %v6065, 0
      %v6181 = vsel %vm3134, %v6066, 0
      %v6184 = vsel %vm3134, %v6067, 0
      %v6187 = vsel %vm3134, %v6068, 0
      %v6190 = vsel %vm3134, %v6069, 0
      %v6193 = vsel %vm3134, %v6070, 0
      %v6196 = vsel %vm3134, %v6071, 0
      %v6199 = vsel %vm3134, %v6072, 0
      %v6202 = vsel %vm3134, %v6073, 0
      %v6205 = vsel %vm3134, %v6074, 0
      %v6208 = vsel %vm3134, %v6075, 0
      %v6211 = vsel %vm3134, %v6076, 0
      %v6214 = vsel %vm3134, %v6077, 0
      %v6217 = vsel %vm485, %v6083, 0
      %6219 = vmatpush.msra.mxu0 0.0
      %6220 = vmatpush.msra.mxu0 0.0
      %6221 = vmatpush.msra.mxu0 0.0
      %6222 = vmatpush.msra.mxu0 0.0
      %6223 = vmatpush.msra.mxu0 0.0
      %6224 = vmatpush.msra.mxu0 0.0
      %6225 = vmatpush.msra.mxu0 0.0
      %6226 = vmatpush.msra.mxu0 0.0
      %6227 = vmatpush.msra.mxu0 0.0
      %6228 = vmatpush.msra.mxu0 0.0
      %6229 = vmatpush.msra.mxu0 0.0
      %6230 = vmatpush.msra.mxu0 %v6217
      %6231 = vmatpush.msra.mxu0 %v6082
      %6232 = vmatpush.msra.mxu0 %v6081
      %6233 = vmatpush.msra.mxu0 %v6080
      %6234 = vmatpush.msra.mxu0 %v6079
      %6235 = vmatmul.f32.gmra.mxu0 %v6085
      %v6236 = vpop.f32.mrf.mxu0
      %v6237 = vadd.f32 0.0, %v6236
      %6238 = vmatmul.f32.gmra.mxu0 %v6088
      %v6239 = vpop.f32.mrf.mxu0
      %v6240 = vadd.f32 0.0, %v6239
      %6241 = vmatmul.f32.gmra.mxu0 %v6091
      %v6242 = vpop.f32.mrf.mxu0
      %v6243 = vadd.f32 0.0, %v6242
      %6244 = vmatmul.f32.gmra.mxu0 %v6094
      %v6245 = vpop.f32.mrf.mxu0
      %v6246 = vadd.f32 0.0, %v6245
      %6247 = vmatmul.f32.gmra.mxu0 %v6097
      %v6248 = vpop.f32.mrf.mxu0
      %v6249 = vadd.f32 0.0, %v6248
      %6250 = vmatmul.f32.gmra.mxu0 %v6100
      %v6251 = vpop.f32.mrf.mxu0
      %v6252 = vadd.f32 0.0, %v6251
      %6253 = vmatmul.f32.gmra.mxu0 %v6103
      %v6254 = vpop.f32.mrf.mxu0
      %v6255 = vadd.f32 0.0, %v6254
      %6256 = vmatmul.f32.gmra.mxu0 %v6106
      %v6257 = vpop.f32.mrf.mxu0
      %v6258 = vadd.f32 0.0, %v6257
      %6259 = vmatmul.f32.gmra.mxu0 %v6109
      %v6260 = vpop.f32.mrf.mxu0
      %v6261 = vadd.f32 0.0, %v6260
      %6262 = vmatmul.f32.gmra.mxu0 %v6112
      %v6263 = vpop.f32.mrf.mxu0
      %v6264 = vadd.f32 0.0, %v6263
      %6265 = vmatmul.f32.gmra.mxu0 %v6115
      %v6266 = vpop.f32.mrf.mxu0
      %v6267 = vadd.f32 0.0, %v6266
      %6268 = vmatmul.f32.gmra.mxu0 %v6118
      %v6269 = vpop.f32.mrf.mxu0
      %v6270 = vadd.f32 0.0, %v6269
      %6271 = vmatmul.f32.gmra.mxu0 %v6121
      %v6272 = vpop.f32.mrf.mxu0
      %v6273 = vadd.f32 0.0, %v6272
      %6274 = vmatmul.f32.gmra.mxu0 %v6124
      %v6275 = vpop.f32.mrf.mxu0
      %v6276 = vadd.f32 0.0, %v6275
      %6277 = vmatmul.f32.gmra.mxu0 %v6127
      %v6278 = vpop.f32.mrf.mxu0
      %v6279 = vadd.f32 0.0, %v6278
      %6280 = vmatmul.f32.gmra.mxu0 %v6130
      %v6281 = vpop.f32.mrf.mxu0
      %v6282 = vadd.f32 0.0, %v6281
      %6283 = vmatmul.f32.gmra.mxu0 %v6133
      %v6284 = vpop.f32.mrf.mxu0
      %v6285 = vadd.f32 0.0, %v6284
      %6286 = vmatmul.f32.gmra.mxu0 %v6136
      %v6287 = vpop.f32.mrf.mxu0
      %v6288 = vadd.f32 0.0, %v6287
      %6289 = vmatmul.f32.gmra.mxu0 %v6139
      %v6290 = vpop.f32.mrf.mxu0
      %v6291 = vadd.f32 0.0, %v6290
      %6292 = vmatmul.f32.gmra.mxu0 %v6142
      %v6293 = vpop.f32.mrf.mxu0
      %v6294 = vadd.f32 0.0, %v6293
      %6295 = vmatmul.f32.gmra.mxu0 %v6145
      %v6296 = vpop.f32.mrf.mxu0
      %v6297 = vadd.f32 0.0, %v6296
      %6298 = vmatmul.f32.gmra.mxu0 %v6148
      %v6299 = vpop.f32.mrf.mxu0
      %v6300 = vadd.f32 0.0, %v6299
      %6301 = vmatmul.f32.gmra.mxu0 %v6151
      %v6302 = vpop.f32.mrf.mxu0
      %v6303 = vadd.f32 0.0, %v6302
      %6304 = vmatmul.f32.gmra.mxu0 %v6154
      %v6305 = vpop.f32.mrf.mxu0
      %v6306 = vadd.f32 0.0, %v6305
      %6307 = vmatmul.f32.gmra.mxu0 %v6157
      %v6308 = vpop.f32.mrf.mxu0
      %v6309 = vadd.f32 0.0, %v6308
      %6310 = vmatmul.f32.gmra.mxu0 %v6160
      %v6311 = vpop.f32.mrf.mxu0
      %v6312 = vadd.f32 0.0, %v6311
      %6313 = vmatmul.f32.gmra.mxu0 %v6163
      %v6314 = vpop.f32.mrf.mxu0
      %v6315 = vadd.f32 0.0, %v6314
      %6316 = vmatmul.f32.gmra.mxu0 %v6166
      %v6317 = vpop.f32.mrf.mxu0
      %v6318 = vadd.f32 0.0, %v6317
      %6319 = vmatmul.f32.gmra.mxu0 %v6169
      %v6320 = vpop.f32.mrf.mxu0
      %v6321 = vadd.f32 0.0, %v6320
      %6322 = vmatmul.f32.gmra.mxu0 %v6172
      %v6323 = vpop.f32.mrf.mxu0
      %v6324 = vadd.f32 0.0, %v6323
      %6325 = vmatmul.f32.gmra.mxu0 %v6175
      %v6326 = vpop.f32.mrf.mxu0
      %v6327 = vadd.f32 0.0, %v6326
      %6328 = vmatmul.f32.gmra.mxu0 %v6178
      %v6329 = vpop.f32.mrf.mxu0
      %v6330 = vadd.f32 0.0, %v6329
      %6331 = vmatmul.f32.gmra.mxu0 %v6181
      %v6332 = vpop.f32.mrf.mxu0
      %v6333 = vadd.f32 0.0, %v6332
      %6334 = vmatmul.f32.gmra.mxu0 %v6184
      %v6335 = vpop.f32.mrf.mxu0
      %v6336 = vadd.f32 0.0, %v6335
      %6337 = vmatmul.f32.gmra.mxu0 %v6187
      %v6338 = vpop.f32.mrf.mxu0
      %v6339 = vadd.f32 0.0, %v6338
      %6340 = vmatmul.f32.gmra.mxu0 %v6190
      %v6341 = vpop.f32.mrf.mxu0
      %v6342 = vadd.f32 0.0, %v6341
      %6343 = vmatmul.f32.gmra.mxu0 %v6193
      %v6344 = vpop.f32.mrf.mxu0
      %v6345 = vadd.f32 0.0, %v6344
      %6346 = vmatmul.f32.gmra.mxu0 %v6196
      %v6347 = vpop.f32.mrf.mxu0
      %v6348 = vadd.f32 0.0, %v6347
      %6349 = vmatmul.f32.gmra.mxu0 %v6199
      %v6350 = vpop.f32.mrf.mxu0
      %v6351 = vadd.f32 0.0, %v6350
      %6352 = vmatmul.f32.gmra.mxu0 %v6202
      %v6353 = vpop.f32.mrf.mxu0
      %v6354 = vadd.f32 0.0, %v6353
      %6355 = vmatmul.f32.gmra.mxu0 %v6205
      %v6356 = vpop.f32.mrf.mxu0
      %v6357 = vadd.f32 0.0, %v6356
      %6358 = vmatmul.f32.gmra.mxu0 %v6208
      %v6359 = vpop.f32.mrf.mxu0
      %v6360 = vadd.f32 0.0, %v6359
      %6361 = vmatmul.f32.gmra.mxu0 %v6211
      %v6362 = vpop.f32.mrf.mxu0
      %v6363 = vadd.f32 0.0, %v6362
      %6364 = vmatmul.f32.gmra.mxu0 %v6214
      %v6365 = vpop.f32.mrf.mxu0
      %v6366 = vadd.f32 0.0, %v6365
      %6367 = vdwg.mxu0
      %v6368 = vperm.slane %v304, 2
      %v6369 = vmul.f32 %v6237, %v6368
      %v6370 = vmul.f32 %v6240, %v6368
      %v6371 = vmul.f32 %v6243, %v6368
      %v6372 = vmul.f32 %v6246, %v6368
      %v6373 = vmul.f32 %v6249, %v6368
      %v6374 = vmul.f32 %v6252, %v6368
      %v6375 = vmul.f32 %v6255, %v6368
      %v6376 = vmul.f32 %v6258, %v6368
      %v6377 = vmul.f32 %v6261, %v6368
      %v6378 = vmul.f32 %v6264, %v6368
      %v6379 = vmul.f32 %v6267, %v6368
      %v6380 = vmul.f32 %v6270, %v6368
      %v6381 = vmul.f32 %v6273, %v6368
      %v6382 = vmul.f32 %v6276, %v6368
      %v6383 = vmul.f32 %v6279, %v6368
      %v6384 = vmul.f32 %v6282, %v6368
      %v6385 = vmul.f32 %v6285, %v6368
      %v6386 = vmul.f32 %v6288, %v6368
      %v6387 = vmul.f32 %v6291, %v6368
      %v6388 = vmul.f32 %v6294, %v6368
      %v6389 = vmul.f32 %v6297, %v6368
      %v6390 = vmul.f32 %v6300, %v6368
      %v6391 = vmul.f32 %v6303, %v6368
      %v6392 = vmul.f32 %v6306, %v6368
      %v6393 = vmul.f32 %v6309, %v6368
      %v6394 = vmul.f32 %v6312, %v6368
      %v6395 = vmul.f32 %v6315, %v6368
      %v6396 = vmul.f32 %v6318, %v6368
      %v6397 = vmul.f32 %v6321, %v6368
      %v6398 = vmul.f32 %v6324, %v6368
      %v6399 = vmul.f32 %v6327, %v6368
      %v6400 = vmul.f32 %v6330, %v6368
      %v6401 = vmul.f32 %v6333, %v6368
      %v6402 = vmul.f32 %v6336, %v6368
      %v6403 = vmul.f32 %v6339, %v6368
      %v6404 = vmul.f32 %v6342, %v6368
      %v6405 = vmul.f32 %v6345, %v6368
      %v6406 = vmul.f32 %v6348, %v6368
      %v6407 = vmul.f32 %v6351, %v6368
      %v6408 = vmul.f32 %v6354, %v6368
      %v6409 = vmul.f32 %v6357, %v6368
      %v6410 = vmul.f32 %v6360, %v6368
      %v6411 = vmul.f32 %v6363, %v6368
      %v6412 = vmul.f32 %v6366, %v6368
      %v6413 = vperm.slane %v305, 2
      %v6414 = vadd.f32 %v6369, %v6413
      %v6415 = vadd.f32 %v6370, %v6413
      %v6416 = vadd.f32 %v6371, %v6413
      %v6417 = vadd.f32 %v6372, %v6413
      %v6418 = vadd.f32 %v6373, %v6413
      %v6419 = vadd.f32 %v6374, %v6413
      %v6420 = vadd.f32 %v6375, %v6413
      %v6421 = vadd.f32 %v6376, %v6413
      %v6422 = vadd.f32 %v6377, %v6413
      %v6423 = vadd.f32 %v6378, %v6413
      %v6424 = vadd.f32 %v6379, %v6413
      %v6425 = vadd.f32 %v6380, %v6413
      %v6426 = vadd.f32 %v6381, %v6413
      %v6427 = vadd.f32 %v6382, %v6413
      %v6428 = vadd.f32 %v6383, %v6413
      %v6429 = vadd.f32 %v6384, %v6413
      %v6430 = vadd.f32 %v6385, %v6413
      %v6431 = vadd.f32 %v6386, %v6413
      %v6432 = vadd.f32 %v6387, %v6413
      %v6433 = vadd.f32 %v6388, %v6413
      %v6434 = vadd.f32 %v6389, %v6413
      %v6435 = vadd.f32 %v6390, %v6413
      %v6436 = vadd.f32 %v6391, %v6413
      %v6437 = vadd.f32 %v6392, %v6413
      %v6438 = vadd.f32 %v6393, %v6413
      %v6439 = vadd.f32 %v6394, %v6413
      %v6440 = vadd.f32 %v6395, %v6413
      %v6441 = vadd.f32 %v6396, %v6413
      %v6442 = vadd.f32 %v6397, %v6413
      %v6443 = vadd.f32 %v6398, %v6413
      %v6444 = vadd.f32 %v6399, %v6413
      %v6445 = vadd.f32 %v6400, %v6413
      %v6446 = vadd.f32 %v6401, %v6413
      %v6447 = vadd.f32 %v6402, %v6413
      %v6448 = vadd.f32 %v6403, %v6413
      %v6449 = vadd.f32 %v6404, %v6413
      %v6450 = vadd.f32 %v6405, %v6413
      %v6451 = vadd.f32 %v6406, %v6413
      %v6452 = vadd.f32 %v6407, %v6413
      %v6453 = vadd.f32 %v6408, %v6413
      %v6454 = vadd.f32 %v6409, %v6413
      %v6455 = vadd.f32 %v6410, %v6413
      %v6456 = vadd.f32 %v6411, %v6413
      %v6457 = vadd.f32 %v6412, %v6413
      %v6458 = vmax.f32 %v6414, 0.0
      %v6459 = vmax.f32 %v6415, 0.0
      %v6460 = vmax.f32 %v6416, 0.0
      %v6461 = vmax.f32 %v6417, 0.0
      %v6462 = vmax.f32 %v6418, 0.0
      %v6463 = vmax.f32 %v6419, 0.0
      %v6464 = vmax.f32 %v6420, 0.0
      %v6465 = vmax.f32 %v6421, 0.0
      %v6466 = vmax.f32 %v6422, 0.0
      %v6467 = vmax.f32 %v6423, 0.0
      %v6468 = vmax.f32 %v6424, 0.0
      %v6469 = vmax.f32 %v6425, 0.0
      %v6470 = vmax.f32 %v6426, 0.0
      %v6471 = vmax.f32 %v6427, 0.0
      %v6472 = vmax.f32 %v6428, 0.0
      %v6473 = vmax.f32 %v6429, 0.0
      %v6474 = vmax.f32 %v6430, 0.0
      %v6475 = vmax.f32 %v6431, 0.0
      %v6476 = vmax.f32 %v6432, 0.0
      %v6477 = vmax.f32 %v6433, 0.0
      %v6478 = vmax.f32 %v6434, 0.0
      %v6479 = vmax.f32 %v6435, 0.0
      %v6480 = vmax.f32 %v6436, 0.0
      %v6481 = vmax.f32 %v6437, 0.0
      %v6482 = vmax.f32 %v6438, 0.0
      %v6483 = vmax.f32 %v6439, 0.0
      %v6484 = vmax.f32 %v6440, 0.0
      %v6485 = vmax.f32 %v6441, 0.0
      %v6486 = vmax.f32 %v6442, 0.0
      %v6487 = vmax.f32 %v6443, 0.0
      %v6488 = vmax.f32 %v6444, 0.0
      %v6489 = vmax.f32 %v6445, 0.0
      %v6490 = vmax.f32 %v6446, 0.0
      %v6491 = vmax.f32 %v6447, 0.0
      %v6492 = vmax.f32 %v6448, 0.0
      %v6493 = vmax.f32 %v6449, 0.0
      %v6494 = vmax.f32 %v6450, 0.0
      %v6495 = vmax.f32 %v6451, 0.0
      %v6496 = vmax.f32 %v6452, 0.0
      %v6497 = vmax.f32 %v6453, 0.0
      %v6498 = vmax.f32 %v6454, 0.0
      %v6499 = vmax.f32 %v6455, 0.0
      %v6500 = vmax.f32 %v6456, 0.0
      %v6501 = vmax.f32 %v6457, 0.0
      %v6502 = vround.ne.pseudo %v6458
      %v6503 = vround.ne.pseudo %v6459
      %v6504 = vround.ne.pseudo %v6460
      %v6505 = vround.ne.pseudo %v6461
      %v6506 = vround.ne.pseudo %v6462
      %v6507 = vround.ne.pseudo %v6463
      %v6508 = vround.ne.pseudo %v6464
      %v6509 = vround.ne.pseudo %v6465
      %v6510 = vround.ne.pseudo %v6466
      %v6511 = vround.ne.pseudo %v6467
      %v6512 = vround.ne.pseudo %v6468
      %v6513 = vround.ne.pseudo %v6469
      %v6514 = vround.ne.pseudo %v6470
      %v6515 = vround.ne.pseudo %v6471
      %v6516 = vround.ne.pseudo %v6472
      %v6517 = vround.ne.pseudo %v6473
      %v6518 = vround.ne.pseudo %v6474
      %v6519 = vround.ne.pseudo %v6475
      %v6520 = vround.ne.pseudo %v6476
      %v6521 = vround.ne.pseudo %v6477
      %v6522 = vround.ne.pseudo %v6478
      %v6523 = vround.ne.pseudo %v6479
      %v6524 = vround.ne.pseudo %v6480
      %v6525 = vround.ne.pseudo %v6481
      %v6526 = vround.ne.pseudo %v6482
      %v6527 = vround.ne.pseudo %v6483
      %v6528 = vround.ne.pseudo %v6484
      %v6529 = vround.ne.pseudo %v6485
      %v6530 = vround.ne.pseudo %v6486
      %v6531 = vround.ne.pseudo %v6487
      %v6532 = vround.ne.pseudo %v6488
      %v6533 = vround.ne.pseudo %v6489
      %v6534 = vround.ne.pseudo %v6490
      %v6535 = vround.ne.pseudo %v6491
      %v6536 = vround.ne.pseudo %v6492
      %v6537 = vround.ne.pseudo %v6493
      %v6538 = vround.ne.pseudo %v6494
      %v6539 = vround.ne.pseudo %v6495
      %v6540 = vround.ne.pseudo %v6496
      %v6541 = vround.ne.pseudo %v6497
      %v6542 = vround.ne.pseudo %v6498
      %v6543 = vround.ne.pseudo %v6499
      %v6544 = vround.ne.pseudo %v6500
      %v6545 = vround.ne.pseudo %v6501
      %6590 = vrot.lane.b32.xlu0 %v6502, 16
      %v6591 = vpop.permute.xlu0 %6590
      %6592 = vrot.lane.b32.xlu0 %v6503, 16
      %v6593 = vpop.permute.xlu0 %6592
      %6594 = vrot.lane.b32.xlu0 %v6504, 16
      %v6595 = vpop.permute.xlu0 %6594
      %6596 = vrot.lane.b32.xlu0 %v6505, 16
      %v6597 = vpop.permute.xlu0 %6596
      %6598 = vrot.lane.b32.xlu0 %v6506, 16
      %v6599 = vpop.permute.xlu0 %6598
      %6600 = vrot.lane.b32.xlu0 %v6507, 16
      %v6601 = vpop.permute.xlu0 %6600
      %6602 = vrot.lane.b32.xlu0 %v6508, 16
      %v6603 = vpop.permute.xlu0 %6602
      %6604 = vrot.lane.b32.xlu0 %v6509, 16
      %v6605 = vpop.permute.xlu0 %6604
      %6606 = vrot.lane.b32.xlu0 %v6510, 16
      %v6607 = vpop.permute.xlu0 %6606
      %6608 = vrot.lane.b32.xlu0 %v6511, 16
      %v6609 = vpop.permute.xlu0 %6608
      %6610 = vrot.lane.b32.xlu0 %v6512, 16
      %v6611 = vpop.permute.xlu0 %6610
      %6612 = vrot.lane.b32.xlu0 %v6513, 16
      %v6613 = vpop.permute.xlu0 %6612
      %6614 = vrot.lane.b32.xlu0 %v6514, 16
      %v6615 = vpop.permute.xlu0 %6614
      %6616 = vrot.lane.b32.xlu0 %v6515, 16
      %v6617 = vpop.permute.xlu0 %6616
      %6618 = vrot.lane.b32.xlu0 %v6516, 16
      %v6619 = vpop.permute.xlu0 %6618
      %6620 = vrot.lane.b32.xlu0 %v6517, 16
      %v6621 = vpop.permute.xlu0 %6620
      %6622 = vrot.lane.b32.xlu0 %v6518, 16
      %v6623 = vpop.permute.xlu0 %6622
      %6624 = vrot.lane.b32.xlu0 %v6519, 16
      %v6625 = vpop.permute.xlu0 %6624
      %6626 = vrot.lane.b32.xlu0 %v6520, 16
      %v6627 = vpop.permute.xlu0 %6626
      %6628 = vrot.lane.b32.xlu0 %v6521, 16
      %v6629 = vpop.permute.xlu0 %6628
      %6630 = vrot.lane.b32.xlu0 %v6522, 16
      %v6631 = vpop.permute.xlu0 %6630
      %6632 = vrot.lane.b32.xlu0 %v6523, 16
      %v6633 = vpop.permute.xlu0 %6632
      %6634 = vrot.lane.b32.xlu0 %v6524, 16
      %v6635 = vpop.permute.xlu0 %6634
      %6636 = vrot.lane.b32.xlu0 %v6525, 16
      %v6637 = vpop.permute.xlu0 %6636
      %6638 = vrot.lane.b32.xlu0 %v6526, 16
      %v6639 = vpop.permute.xlu0 %6638
      %6640 = vrot.lane.b32.xlu0 %v6527, 16
      %v6641 = vpop.permute.xlu0 %6640
      %6642 = vrot.lane.b32.xlu0 %v6528, 16
      %v6643 = vpop.permute.xlu0 %6642
      %6644 = vrot.lane.b32.xlu0 %v6529, 16
      %v6645 = vpop.permute.xlu0 %6644
      %6646 = vrot.lane.b32.xlu0 %v6530, 16
      %v6647 = vpop.permute.xlu0 %6646
      %6648 = vrot.lane.b32.xlu0 %v6531, 16
      %v6649 = vpop.permute.xlu0 %6648
      %6650 = vrot.lane.b32.xlu0 %v6532, 16
      %v6651 = vpop.permute.xlu0 %6650
      %6652 = vrot.lane.b32.xlu0 %v6533, 16
      %v6653 = vpop.permute.xlu0 %6652
      %6654 = vrot.lane.b32.xlu0 %v6534, 16
      %v6655 = vpop.permute.xlu0 %6654
      %6656 = vrot.lane.b32.xlu0 %v6535, 16
      %v6657 = vpop.permute.xlu0 %6656
      %6658 = vrot.lane.b32.xlu0 %v6536, 16
      %v6659 = vpop.permute.xlu0 %6658
      %6660 = vrot.lane.b32.xlu0 %v6537, 16
      %v6661 = vpop.permute.xlu0 %6660
      %6662 = vrot.lane.b32.xlu0 %v6538, 16
      %v6663 = vpop.permute.xlu0 %6662
      %6664 = vrot.lane.b32.xlu0 %v6539, 16
      %v6665 = vpop.permute.xlu0 %6664
      %6666 = vrot.lane.b32.xlu0 %v6540, 16
      %v6667 = vpop.permute.xlu0 %6666
      %6668 = vrot.lane.b32.xlu0 %v6541, 16
      %v6669 = vpop.permute.xlu0 %6668
      %6670 = vrot.lane.b32.xlu0 %v6542, 16
      %v6671 = vpop.permute.xlu0 %6670
      %6672 = vrot.lane.b32.xlu0 %v6543, 16
      %v6673 = vpop.permute.xlu0 %6672
      %6674 = vrot.lane.b32.xlu0 %v6544, 16
      %v6675 = vpop.permute.xlu0 %6674
      %6676 = vrot.lane.b32.xlu0 %v6545, 16
      %v6677 = vpop.permute.xlu0 %6676
      %vm6722 = vcmask 195712
      %6723 = vst.msk [vmem:[#allocation3] sm:$0xff] %vm6722, %v6591
      %6724 = vst.msk [vmem:[#allocation3 + $0x8] sm:$0xff] %vm6722, %v6593
      %6725 = vst.msk [vmem:[#allocation3 + $0x10] sm:$0xff] %vm6722, %v6595
      %6726 = vst.msk [vmem:[#allocation3 + $0x18] sm:$0xff] %vm6722, %v6597
      %6727 = vst.msk [vmem:[#allocation3 + $0x20] sm:$0xff] %vm6722, %v6599
      %6728 = vst.msk [vmem:[#allocation3 + $0x28] sm:$0xff] %vm6722, %v6601
      %6729 = vst.msk [vmem:[#allocation3 + $0x30] sm:$0xff] %vm6722, %v6603
      %6730 = vst.msk [vmem:[#allocation3 + $0x38] sm:$0xff] %vm6722, %v6605
      %6731 = vst.msk [vmem:[#allocation3 + $0x40] sm:$0xff] %vm6722, %v6607
      %6732 = vst.msk [vmem:[#allocation3 + $0x48] sm:$0xff] %vm6722, %v6609
      %6733 = vst.msk [vmem:[#allocation3 + $0x50] sm:$0xff] %vm6722, %v6611
      %6734 = vst.msk [vmem:[#allocation3 + $0x58] sm:$0xff] %vm6722, %v6613
      %6735 = vst.msk [vmem:[#allocation3 + $0x60] sm:$0xff] %vm6722, %v6615
      %6736 = vst.msk [vmem:[#allocation3 + $0x68] sm:$0xff] %vm6722, %v6617
      %6737 = vst.msk [vmem:[#allocation3 + $0x70] sm:$0xff] %vm6722, %v6619
      %6738 = vst.msk [vmem:[#allocation3 + $0x78] sm:$0xff] %vm6722, %v6621
      %6739 = vst.msk [vmem:[#allocation3 + $0x80] sm:$0xff] %vm6722, %v6623
      %6740 = vst.msk [vmem:[#allocation3 + $0x88] sm:$0xff] %vm6722, %v6625
      %6741 = vst.msk [vmem:[#allocation3 + $0x90] sm:$0xff] %vm6722, %v6627
      %6742 = vst.msk [vmem:[#allocation3 + $0x98] sm:$0xff] %vm6722, %v6629
      %6743 = vst.msk [vmem:[#allocation3 + $0xa0] sm:$0xff] %vm6722, %v6631
      %6744 = vst.msk [vmem:[#allocation3 + $0xa8] sm:$0xff] %vm6722, %v6633
      %6745 = vst.msk [vmem:[#allocation3 + $0xb0] sm:$0xff] %vm6722, %v6635
      %6746 = vst.msk [vmem:[#allocation3 + $0xb8] sm:$0xff] %vm6722, %v6637
      %6747 = vst.msk [vmem:[#allocation3 + $0xc0] sm:$0xff] %vm6722, %v6639
      %6748 = vst.msk [vmem:[#allocation3 + $0xc8] sm:$0xff] %vm6722, %v6641
      %6749 = vst.msk [vmem:[#allocation3 + $0xd0] sm:$0xff] %vm6722, %v6643
      %6750 = vst.msk [vmem:[#allocation3 + $0xd8] sm:$0xff] %vm6722, %v6645
      %6751 = vst.msk [vmem:[#allocation3 + $0xe0] sm:$0xff] %vm6722, %v6647
      %6752 = vst.msk [vmem:[#allocation3 + $0xe8] sm:$0xff] %vm6722, %v6649
      %6753 = vst.msk [vmem:[#allocation3 + $0xf0] sm:$0xff] %vm6722, %v6651
      %6754 = vst.msk [vmem:[#allocation3 + $0xf8] sm:$0xff] %vm6722, %v6653
      %6755 = vst.msk [vmem:[#allocation3 + $0x100] sm:$0xff] %vm6722, %v6655
      %6756 = vst.msk [vmem:[#allocation3 + $0x108] sm:$0xff] %vm6722, %v6657
      %6757 = vst.msk [vmem:[#allocation3 + $0x110] sm:$0xff] %vm6722, %v6659
      %6758 = vst.msk [vmem:[#allocation3 + $0x118] sm:$0xff] %vm6722, %v6661
      %6759 = vst.msk [vmem:[#allocation3 + $0x120] sm:$0xff] %vm6722, %v6663
      %6760 = vst.msk [vmem:[#allocation3 + $0x128] sm:$0xff] %vm6722, %v6665
      %6761 = vst.msk [vmem:[#allocation3 + $0x130] sm:$0xff] %vm6722, %v6667
      %6762 = vst.msk [vmem:[#allocation3 + $0x138] sm:$0xff] %vm6722, %v6669
      %6763 = vst.msk [vmem:[#allocation3 + $0x140] sm:$0xff] %vm6722, %v6671
      %6764 = vst.msk [vmem:[#allocation3 + $0x148] sm:$0xff] %vm6722, %v6673
      %6765 = vst.msk [vmem:[#allocation3 + $0x150] sm:$0xff] %vm6722, %v6675
      %6766 = vst.msk [vmem:[#allocation3 + $0x158] sm:$0xff] %vm6722, %v6677
      %s6767 = sadd.s32 %s302, 63
      %s6768 = scalar_lea.vmem %s291, %s6767
      %v6769 = vld [vmem:[%s6768] sm:$0xff]
      %v6770 = vld [vmem:[%s6768 + $0x8] sm:$0xff]
      %v6771 = vld [vmem:[%s6768 + $0x10] sm:$0xff]
      %v6772 = vld [vmem:[%s6768 + $0x18] sm:$0xff]
      %v6773 = vld [vmem:[%s6768 + $0x20] sm:$0xff]
      %v6774 = vld [vmem:[%s6768 + $0x28] sm:$0xff]
      %v6775 = vld [vmem:[%s6768 + $0x30] sm:$0xff]
      %v6776 = vld [vmem:[%s6768 + $0x38] sm:$0xff]
      %v6777 = vld [vmem:[%s6768 + $0x40] sm:$0xff]
      %v6778 = vld [vmem:[%s6768 + $0x48] sm:$0xff]
      %v6779 = vld [vmem:[%s6768 + $0x50] sm:$0xff]
      %v6780 = vld [vmem:[%s6768 + $0x58] sm:$0xff]
      %v6781 = vld [vmem:[%s6768 + $0x60] sm:$0xff]
      %v6782 = vld [vmem:[%s6768 + $0x68] sm:$0xff]
      %v6783 = vld [vmem:[%s6768 + $0x70] sm:$0xff]
      %v6784 = vld [vmem:[%s6768 + $0x78] sm:$0xff]
      %v6785 = vld [vmem:[%s6768 + $0x80] sm:$0xff]
      %v6786 = vld [vmem:[%s6768 + $0x88] sm:$0xff]
      %v6787 = vld [vmem:[%s6768 + $0x90] sm:$0xff]
      %v6788 = vld [vmem:[%s6768 + $0x98] sm:$0xff]
      %v6789 = vld [vmem:[%s6768 + $0xa0] sm:$0xff]
      %v6790 = vld [vmem:[%s6768 + $0xa8] sm:$0xff]
      %v6791 = vld [vmem:[%s6768 + $0xb0] sm:$0xff]
      %v6792 = vld [vmem:[%s6768 + $0xb8] sm:$0xff]
      %v6793 = vld [vmem:[%s6768 + $0xc0] sm:$0xff]
      %v6794 = vld [vmem:[%s6768 + $0xc8] sm:$0xff]
      %v6795 = vld [vmem:[%s6768 + $0xd0] sm:$0xff]
      %v6796 = vld [vmem:[%s6768 + $0xd8] sm:$0xff]
      %v6797 = vld [vmem:[%s6768 + $0xe0] sm:$0xff]
      %v6798 = vld [vmem:[%s6768 + $0xe8] sm:$0xff]
      %v6799 = vld [vmem:[%s6768 + $0xf0] sm:$0xff]
      %v6800 = vld [vmem:[%s6768 + $0xf8] sm:$0xff]
      %v6801 = vld [vmem:[%s6768 + $0x100] sm:$0xff]
      %v6802 = vld [vmem:[%s6768 + $0x108] sm:$0xff]
      %v6803 = vld [vmem:[%s6768 + $0x110] sm:$0xff]
      %v6804 = vld [vmem:[%s6768 + $0x118] sm:$0xff]
      %v6805 = vld [vmem:[%s6768 + $0x120] sm:$0xff]
      %v6806 = vld [vmem:[%s6768 + $0x128] sm:$0xff]
      %v6807 = vld [vmem:[%s6768 + $0x130] sm:$0xff]
      %v6808 = vld [vmem:[%s6768 + $0x138] sm:$0xff]
      %v6809 = vld [vmem:[%s6768 + $0x140] sm:$0xff]
      %v6810 = vld [vmem:[%s6768 + $0x148] sm:$0xff]
      %v6811 = vld [vmem:[%s6768 + $0x150] sm:$0xff]
      %v6812 = vld [vmem:[%s6768 + $0x158] sm:$0xff]
      %6813 = vst.msk [vmem:[#allocation2] sm:$0xff] %vm352, %v6769
      %6814 = vst.msk [vmem:[#allocation2 + $0x8] sm:$0xff] %vm352, %v6770
      %6815 = vst.msk [vmem:[#allocation2 + $0x10] sm:$0xff] %vm352, %v6771
      %6816 = vst.msk [vmem:[#allocation2 + $0x18] sm:$0xff] %vm352, %v6772
      %6817 = vst.msk [vmem:[#allocation2 + $0x20] sm:$0xff] %vm352, %v6773
      %6818 = vst.msk [vmem:[#allocation2 + $0x28] sm:$0xff] %vm352, %v6774
      %6819 = vst.msk [vmem:[#allocation2 + $0x30] sm:$0xff] %vm352, %v6775
      %6820 = vst.msk [vmem:[#allocation2 + $0x38] sm:$0xff] %vm352, %v6776
      %6821 = vst.msk [vmem:[#allocation2 + $0x40] sm:$0xff] %vm352, %v6777
      %6822 = vst.msk [vmem:[#allocation2 + $0x48] sm:$0xff] %vm352, %v6778
      %6823 = vst.msk [vmem:[#allocation2 + $0x50] sm:$0xff] %vm352, %v6779
      %6824 = vst.msk [vmem:[#allocation2 + $0x58] sm:$0xff] %vm352, %v6780
      %6825 = vst.msk [vmem:[#allocation2 + $0x60] sm:$0xff] %vm352, %v6781
      %6826 = vst.msk [vmem:[#allocation2 + $0x68] sm:$0xff] %vm352, %v6782
      %6827 = vst.msk [vmem:[#allocation2 + $0x70] sm:$0xff] %vm352, %v6783
      %6828 = vst.msk [vmem:[#allocation2 + $0x78] sm:$0xff] %vm352, %v6784
      %6829 = vst.msk [vmem:[#allocation2 + $0x80] sm:$0xff] %vm352, %v6785
      %6830 = vst.msk [vmem:[#allocation2 + $0x88] sm:$0xff] %vm352, %v6786
      %6831 = vst.msk [vmem:[#allocation2 + $0x90] sm:$0xff] %vm352, %v6787
      %6832 = vst.msk [vmem:[#allocation2 + $0x98] sm:$0xff] %vm352, %v6788
      %6833 = vst.msk [vmem:[#allocation2 + $0xa0] sm:$0xff] %vm352, %v6789
      %6834 = vst.msk [vmem:[#allocation2 + $0xa8] sm:$0xff] %vm352, %v6790
      %6835 = vst.msk [vmem:[#allocation2 + $0xb0] sm:$0xff] %vm352, %v6791
      %6836 = vst.msk [vmem:[#allocation2 + $0xb8] sm:$0xff] %vm352, %v6792
      %6837 = vst.msk [vmem:[#allocation2 + $0xc0] sm:$0xff] %vm352, %v6793
      %6838 = vst.msk [vmem:[#allocation2 + $0xc8] sm:$0xff] %vm352, %v6794
      %6839 = vst.msk [vmem:[#allocation2 + $0xd0] sm:$0xff] %vm352, %v6795
      %6840 = vst.msk [vmem:[#allocation2 + $0xd8] sm:$0xff] %vm352, %v6796
      %6841 = vst.msk [vmem:[#allocation2 + $0xe0] sm:$0xff] %vm352, %v6797
      %6842 = vst.msk [vmem:[#allocation2 + $0xe8] sm:$0xff] %vm352, %v6798
      %6843 = vst.msk [vmem:[#allocation2 + $0xf0] sm:$0xff] %vm352, %v6799
      %6844 = vst.msk [vmem:[#allocation2 + $0xf8] sm:$0xff] %vm352, %v6800
      %6845 = vst.msk [vmem:[#allocation2 + $0x100] sm:$0xff] %vm352, %v6801
      %6846 = vst.msk [vmem:[#allocation2 + $0x108] sm:$0xff] %vm352, %v6802
      %6847 = vst.msk [vmem:[#allocation2 + $0x110] sm:$0xff] %vm352, %v6803
      %6848 = vst.msk [vmem:[#allocation2 + $0x118] sm:$0xff] %vm352, %v6804
      %6849 = vst.msk [vmem:[#allocation2 + $0x120] sm:$0xff] %vm352, %v6805
      %6850 = vst.msk [vmem:[#allocation2 + $0x128] sm:$0xff] %vm352, %v6806
      %6851 = vst.msk [vmem:[#allocation2 + $0x130] sm:$0xff] %vm352, %v6807
      %6852 = vst.msk [vmem:[#allocation2 + $0x138] sm:$0xff] %vm352, %v6808
      %6853 = vst.msk [vmem:[#allocation2 + $0x140] sm:$0xff] %vm352, %v6809
      %6854 = vst.msk [vmem:[#allocation2 + $0x148] sm:$0xff] %vm352, %v6810
      %6855 = vst.msk [vmem:[#allocation2 + $0x150] sm:$0xff] %vm352, %v6811
      %6856 = vst.msk [vmem:[#allocation2 + $0x158] sm:$0xff] %vm352, %v6812
      %s6857 = sadd.s32 %s302, 66
      %s6858 = scalar_lea.vmem %s291, %s6857
      %v6859 = vld [vmem:[%s6858] sm:$0xff]
      %v6860 = vld [vmem:[%s6858 + $0x8] sm:$0xff]
      %v6861 = vld [vmem:[%s6858 + $0x10] sm:$0xff]
      %v6862 = vld [vmem:[%s6858 + $0x18] sm:$0xff]
      %v6863 = vld [vmem:[%s6858 + $0x20] sm:$0xff]
      %v6864 = vld [vmem:[%s6858 + $0x28] sm:$0xff]
      %v6865 = vld [vmem:[%s6858 + $0x30] sm:$0xff]
      %v6866 = vld [vmem:[%s6858 + $0x38] sm:$0xff]
      %v6867 = vld [vmem:[%s6858 + $0x40] sm:$0xff]
      %v6868 = vld [vmem:[%s6858 + $0x48] sm:$0xff]
      %v6869 = vld [vmem:[%s6858 + $0x50] sm:$0xff]
      %v6870 = vld [vmem:[%s6858 + $0x58] sm:$0xff]
      %v6871 = vld [vmem:[%s6858 + $0x60] sm:$0xff]
      %v6872 = vld [vmem:[%s6858 + $0x68] sm:$0xff]
      %v6873 = vld [vmem:[%s6858 + $0x70] sm:$0xff]
      %v6874 = vld [vmem:[%s6858 + $0x78] sm:$0xff]
      %v6875 = vld [vmem:[%s6858 + $0x80] sm:$0xff]
      %v6876 = vld [vmem:[%s6858 + $0x88] sm:$0xff]
      %v6877 = vld [vmem:[%s6858 + $0x90] sm:$0xff]
      %v6878 = vld [vmem:[%s6858 + $0x98] sm:$0xff]
      %v6879 = vld [vmem:[%s6858 + $0xa0] sm:$0xff]
      %v6880 = vld [vmem:[%s6858 + $0xa8] sm:$0xff]
      %v6881 = vld [vmem:[%s6858 + $0xb0] sm:$0xff]
      %v6882 = vld [vmem:[%s6858 + $0xb8] sm:$0xff]
      %v6883 = vld [vmem:[%s6858 + $0xc0] sm:$0xff]
      %v6884 = vld [vmem:[%s6858 + $0xc8] sm:$0xff]
      %v6885 = vld [vmem:[%s6858 + $0xd0] sm:$0xff]
      %v6886 = vld [vmem:[%s6858 + $0xd8] sm:$0xff]
      %v6887 = vld [vmem:[%s6858 + $0xe0] sm:$0xff]
      %v6888 = vld [vmem:[%s6858 + $0xe8] sm:$0xff]
      %v6889 = vld [vmem:[%s6858 + $0xf0] sm:$0xff]
      %v6890 = vld [vmem:[%s6858 + $0xf8] sm:$0xff]
      %v6891 = vld [vmem:[%s6858 + $0x100] sm:$0xff]
      %v6892 = vld [vmem:[%s6858 + $0x108] sm:$0xff]
      %v6893 = vld [vmem:[%s6858 + $0x110] sm:$0xff]
      %v6894 = vld [vmem:[%s6858 + $0x118] sm:$0xff]
      %v6895 = vld [vmem:[%s6858 + $0x120] sm:$0xff]
      %v6896 = vld [vmem:[%s6858 + $0x128] sm:$0xff]
      %v6897 = vld [vmem:[%s6858 + $0x130] sm:$0xff]
      %v6898 = vld [vmem:[%s6858 + $0x138] sm:$0xff]
      %v6899 = vld [vmem:[%s6858 + $0x140] sm:$0xff]
      %v6900 = vld [vmem:[%s6858 + $0x148] sm:$0xff]
      %v6901 = vld [vmem:[%s6858 + $0x150] sm:$0xff]
      %v6902 = vld [vmem:[%s6858 + $0x158] sm:$0xff]
      %6947 = vrot.lane.b32.xlu0 %v6859, 4
      %v6948 = vpop.permute.xlu0 %6947
      %6949 = vrot.lane.b32.xlu0 %v6860, 4
      %v6950 = vpop.permute.xlu0 %6949
      %6951 = vrot.lane.b32.xlu0 %v6861, 4
      %v6952 = vpop.permute.xlu0 %6951
      %6953 = vrot.lane.b32.xlu0 %v6862, 4
      %v6954 = vpop.permute.xlu0 %6953
      %6955 = vrot.lane.b32.xlu0 %v6863, 4
      %v6956 = vpop.permute.xlu0 %6955
      %6957 = vrot.lane.b32.xlu0 %v6864, 4
      %v6958 = vpop.permute.xlu0 %6957
      %6959 = vrot.lane.b32.xlu0 %v6865, 4
      %v6960 = vpop.permute.xlu0 %6959
      %6961 = vrot.lane.b32.xlu0 %v6866, 4
      %v6962 = vpop.permute.xlu0 %6961
      %6963 = vrot.lane.b32.xlu0 %v6867, 4
      %v6964 = vpop.permute.xlu0 %6963
      %6965 = vrot.lane.b32.xlu0 %v6868, 4
      %v6966 = vpop.permute.xlu0 %6965
      %6967 = vrot.lane.b32.xlu0 %v6869, 4
      %v6968 = vpop.permute.xlu0 %6967
      %6969 = vrot.lane.b32.xlu0 %v6870, 4
      %v6970 = vpop.permute.xlu0 %6969
      %6971 = vrot.lane.b32.xlu0 %v6871, 4
      %v6972 = vpop.permute.xlu0 %6971
      %6973 = vrot.lane.b32.xlu0 %v6872, 4
      %v6974 = vpop.permute.xlu0 %6973
      %6975 = vrot.lane.b32.xlu0 %v6873, 4
      %v6976 = vpop.permute.xlu0 %6975
      %6977 = vrot.lane.b32.xlu0 %v6874, 4
      %v6978 = vpop.permute.xlu0 %6977
      %6979 = vrot.lane.b32.xlu0 %v6875, 4
      %v6980 = vpop.permute.xlu0 %6979
      %6981 = vrot.lane.b32.xlu0 %v6876, 4
      %v6982 = vpop.permute.xlu0 %6981
      %6983 = vrot.lane.b32.xlu0 %v6877, 4
      %v6984 = vpop.permute.xlu0 %6983
      %6985 = vrot.lane.b32.xlu0 %v6878, 4
      %v6986 = vpop.permute.xlu0 %6985
      %6987 = vrot.lane.b32.xlu0 %v6879, 4
      %v6988 = vpop.permute.xlu0 %6987
      %6989 = vrot.lane.b32.xlu0 %v6880, 4
      %v6990 = vpop.permute.xlu0 %6989
      %6991 = vrot.lane.b32.xlu0 %v6881, 4
      %v6992 = vpop.permute.xlu0 %6991
      %6993 = vrot.lane.b32.xlu0 %v6882, 4
      %v6994 = vpop.permute.xlu0 %6993
      %6995 = vrot.lane.b32.xlu0 %v6883, 4
      %v6996 = vpop.permute.xlu0 %6995
      %6997 = vrot.lane.b32.xlu0 %v6884, 4
      %v6998 = vpop.permute.xlu0 %6997
      %6999 = vrot.lane.b32.xlu0 %v6885, 4
      %v7000 = vpop.permute.xlu0 %6999
      %7001 = vrot.lane.b32.xlu0 %v6886, 4
      %v7002 = vpop.permute.xlu0 %7001
      %7003 = vrot.lane.b32.xlu0 %v6887, 4
      %v7004 = vpop.permute.xlu0 %7003
      %7005 = vrot.lane.b32.xlu0 %v6888, 4
      %v7006 = vpop.permute.xlu0 %7005
      %7007 = vrot.lane.b32.xlu0 %v6889, 4
      %v7008 = vpop.permute.xlu0 %7007
      %7009 = vrot.lane.b32.xlu0 %v6890, 4
      %v7010 = vpop.permute.xlu0 %7009
      %7011 = vrot.lane.b32.xlu0 %v6891, 4
      %v7012 = vpop.permute.xlu0 %7011
      %7013 = vrot.lane.b32.xlu0 %v6892, 4
      %v7014 = vpop.permute.xlu0 %7013
      %7015 = vrot.lane.b32.xlu0 %v6893, 4
      %v7016 = vpop.permute.xlu0 %7015
      %7017 = vrot.lane.b32.xlu0 %v6894, 4
      %v7018 = vpop.permute.xlu0 %7017
      %7019 = vrot.lane.b32.xlu0 %v6895, 4
      %v7020 = vpop.permute.xlu0 %7019
      %7021 = vrot.lane.b32.xlu0 %v6896, 4
      %v7022 = vpop.permute.xlu0 %7021
      %7023 = vrot.lane.b32.xlu0 %v6897, 4
      %v7024 = vpop.permute.xlu0 %7023
      %7025 = vrot.lane.b32.xlu0 %v6898, 4
      %v7026 = vpop.permute.xlu0 %7025
      %7027 = vrot.lane.b32.xlu0 %v6899, 4
      %v7028 = vpop.permute.xlu0 %7027
      %7029 = vrot.lane.b32.xlu0 %v6900, 4
      %v7030 = vpop.permute.xlu0 %7029
      %7031 = vrot.lane.b32.xlu0 %v6901, 4
      %v7032 = vpop.permute.xlu0 %7031
      %7033 = vrot.lane.b32.xlu0 %v6902, 4
      %v7034 = vpop.permute.xlu0 %7033
      %7079 = vst.msk [vmem:[#allocation2] sm:$0xff] %vm1173, %v6948
      %7080 = vst.msk [vmem:[#allocation2 + $0x8] sm:$0xff] %vm1173, %v6950
      %7081 = vst.msk [vmem:[#allocation2 + $0x10] sm:$0xff] %vm1173, %v6952
      %7082 = vst.msk [vmem:[#allocation2 + $0x18] sm:$0xff] %vm1173, %v6954
      %7083 = vst.msk [vmem:[#allocation2 + $0x20] sm:$0xff] %vm1173, %v6956
      %7084 = vst.msk [vmem:[#allocation2 + $0x28] sm:$0xff] %vm1173, %v6958
      %7085 = vst.msk [vmem:[#allocation2 + $0x30] sm:$0xff] %vm1173, %v6960
      %7086 = vst.msk [vmem:[#allocation2 + $0x38] sm:$0xff] %vm1173, %v6962
      %7087 = vst.msk [vmem:[#allocation2 + $0x40] sm:$0xff] %vm1173, %v6964
      %7088 = vst.msk [vmem:[#allocation2 + $0x48] sm:$0xff] %vm1173, %v6966
      %7089 = vst.msk [vmem:[#allocation2 + $0x50] sm:$0xff] %vm1173, %v6968
      %7090 = vst.msk [vmem:[#allocation2 + $0x58] sm:$0xff] %vm1173, %v6970
      %7091 = vst.msk [vmem:[#allocation2 + $0x60] sm:$0xff] %vm1173, %v6972
      %7092 = vst.msk [vmem:[#allocation2 + $0x68] sm:$0xff] %vm1173, %v6974
      %7093 = vst.msk [vmem:[#allocation2 + $0x70] sm:$0xff] %vm1173, %v6976
      %7094 = vst.msk [vmem:[#allocation2 + $0x78] sm:$0xff] %vm1173, %v6978
      %7095 = vst.msk [vmem:[#allocation2 + $0x80] sm:$0xff] %vm1173, %v6980
      %7096 = vst.msk [vmem:[#allocation2 + $0x88] sm:$0xff] %vm1173, %v6982
      %7097 = vst.msk [vmem:[#allocation2 + $0x90] sm:$0xff] %vm1173, %v6984
      %7098 = vst.msk [vmem:[#allocation2 + $0x98] sm:$0xff] %vm1173, %v6986
      %7099 = vst.msk [vmem:[#allocation2 + $0xa0] sm:$0xff] %vm1173, %v6988
      %7100 = vst.msk [vmem:[#allocation2 + $0xa8] sm:$0xff] %vm1173, %v6990
      %7101 = vst.msk [vmem:[#allocation2 + $0xb0] sm:$0xff] %vm1173, %v6992
      %7102 = vst.msk [vmem:[#allocation2 + $0xb8] sm:$0xff] %vm1173, %v6994
      %7103 = vst.msk [vmem:[#allocation2 + $0xc0] sm:$0xff] %vm1173, %v6996
      %7104 = vst.msk [vmem:[#allocation2 + $0xc8] sm:$0xff] %vm1173, %v6998
      %7105 = vst.msk [vmem:[#allocation2 + $0xd0] sm:$0xff] %vm1173, %v7000
      %7106 = vst.msk [vmem:[#allocation2 + $0xd8] sm:$0xff] %vm1173, %v7002
      %7107 = vst.msk [vmem:[#allocation2 + $0xe0] sm:$0xff] %vm1173, %v7004
      %7108 = vst.msk [vmem:[#allocation2 + $0xe8] sm:$0xff] %vm1173, %v7006
      %7109 = vst.msk [vmem:[#allocation2 + $0xf0] sm:$0xff] %vm1173, %v7008
      %7110 = vst.msk [vmem:[#allocation2 + $0xf8] sm:$0xff] %vm1173, %v7010
      %7111 = vst.msk [vmem:[#allocation2 + $0x100] sm:$0xff] %vm1173, %v7012
      %7112 = vst.msk [vmem:[#allocation2 + $0x108] sm:$0xff] %vm1173, %v7014
      %7113 = vst.msk [vmem:[#allocation2 + $0x110] sm:$0xff] %vm1173, %v7016
      %7114 = vst.msk [vmem:[#allocation2 + $0x118] sm:$0xff] %vm1173, %v7018
      %7115 = vst.msk [vmem:[#allocation2 + $0x120] sm:$0xff] %vm1173, %v7020
      %7116 = vst.msk [vmem:[#allocation2 + $0x128] sm:$0xff] %vm1173, %v7022
      %7117 = vst.msk [vmem:[#allocation2 + $0x130] sm:$0xff] %vm1173, %v7024
      %7118 = vst.msk [vmem:[#allocation2 + $0x138] sm:$0xff] %vm1173, %v7026
      %7119 = vst.msk [vmem:[#allocation2 + $0x140] sm:$0xff] %vm1173, %v7028
      %7120 = vst.msk [vmem:[#allocation2 + $0x148] sm:$0xff] %vm1173, %v7030
      %7121 = vst.msk [vmem:[#allocation2 + $0x150] sm:$0xff] %vm1173, %v7032
      %7122 = vst.msk [vmem:[#allocation2 + $0x158] sm:$0xff] %vm1173, %v7034
      %s7123 = sadd.s32 %s302, 69
      %s7124 = scalar_lea.vmem %s291, %s7123
      %v7125 = vld [vmem:[%s7124] sm:$0xff]
      %v7126 = vld [vmem:[%s7124 + $0x8] sm:$0xff]
      %v7127 = vld [vmem:[%s7124 + $0x10] sm:$0xff]
      %v7128 = vld [vmem:[%s7124 + $0x18] sm:$0xff]
      %v7129 = vld [vmem:[%s7124 + $0x20] sm:$0xff]
      %v7130 = vld [vmem:[%s7124 + $0x28] sm:$0xff]
      %v7131 = vld [vmem:[%s7124 + $0x30] sm:$0xff]
      %v7132 = vld [vmem:[%s7124 + $0x38] sm:$0xff]
      %v7133 = vld [vmem:[%s7124 + $0x40] sm:$0xff]
      %v7134 = vld [vmem:[%s7124 + $0x48] sm:$0xff]
      %v7135 = vld [vmem:[%s7124 + $0x50] sm:$0xff]
      %v7136 = vld [vmem:[%s7124 + $0x58] sm:$0xff]
      %v7137 = vld [vmem:[%s7124 + $0x60] sm:$0xff]
      %v7138 = vld [vmem:[%s7124 + $0x68] sm:$0xff]
      %v7139 = vld [vmem:[%s7124 + $0x70] sm:$0xff]
      %v7140 = vld [vmem:[%s7124 + $0x78] sm:$0xff]
      %v7141 = vld [vmem:[%s7124 + $0x80] sm:$0xff]
      %v7142 = vld [vmem:[%s7124 + $0x88] sm:$0xff]
      %v7143 = vld [vmem:[%s7124 + $0x90] sm:$0xff]
      %v7144 = vld [vmem:[%s7124 + $0x98] sm:$0xff]
      %v7145 = vld [vmem:[%s7124 + $0xa0] sm:$0xff]
      %v7146 = vld [vmem:[%s7124 + $0xa8] sm:$0xff]
      %v7147 = vld [vmem:[%s7124 + $0xb0] sm:$0xff]
      %v7148 = vld [vmem:[%s7124 + $0xb8] sm:$0xff]
      %v7149 = vld [vmem:[%s7124 + $0xc0] sm:$0xff]
      %v7150 = vld [vmem:[%s7124 + $0xc8] sm:$0xff]
      %v7151 = vld [vmem:[%s7124 + $0xd0] sm:$0xff]
      %v7152 = vld [vmem:[%s7124 + $0xd8] sm:$0xff]
      %v7153 = vld [vmem:[%s7124 + $0xe0] sm:$0xff]
      %v7154 = vld [vmem:[%s7124 + $0xe8] sm:$0xff]
      %v7155 = vld [vmem:[%s7124 + $0xf0] sm:$0xff]
      %v7156 = vld [vmem:[%s7124 + $0xf8] sm:$0xff]
      %v7157 = vld [vmem:[%s7124 + $0x100] sm:$0xff]
      %v7158 = vld [vmem:[%s7124 + $0x108] sm:$0xff]
      %v7159 = vld [vmem:[%s7124 + $0x110] sm:$0xff]
      %v7160 = vld [vmem:[%s7124 + $0x118] sm:$0xff]
      %v7161 = vld [vmem:[%s7124 + $0x120] sm:$0xff]
      %v7162 = vld [vmem:[%s7124 + $0x128] sm:$0xff]
      %v7163 = vld [vmem:[%s7124 + $0x130] sm:$0xff]
      %v7164 = vld [vmem:[%s7124 + $0x138] sm:$0xff]
      %v7165 = vld [vmem:[%s7124 + $0x140] sm:$0xff]
      %v7166 = vld [vmem:[%s7124 + $0x148] sm:$0xff]
      %v7167 = vld [vmem:[%s7124 + $0x150] sm:$0xff]
      %v7168 = vld [vmem:[%s7124 + $0x158] sm:$0xff]
      %7213 = vrot.lane.b32.xlu0 %v7125, 8
      %v7214 = vpop.permute.xlu0 %7213
      %7215 = vrot.lane.b32.xlu0 %v7126, 8
      %v7216 = vpop.permute.xlu0 %7215
      %7217 = vrot.lane.b32.xlu0 %v7127, 8
      %v7218 = vpop.permute.xlu0 %7217
      %7219 = vrot.lane.b32.xlu0 %v7128, 8
      %v7220 = vpop.permute.xlu0 %7219
      %7221 = vrot.lane.b32.xlu0 %v7129, 8
      %v7222 = vpop.permute.xlu0 %7221
      %7223 = vrot.lane.b32.xlu0 %v7130, 8
      %v7224 = vpop.permute.xlu0 %7223
      %7225 = vrot.lane.b32.xlu0 %v7131, 8
      %v7226 = vpop.permute.xlu0 %7225
      %7227 = vrot.lane.b32.xlu0 %v7132, 8
      %v7228 = vpop.permute.xlu0 %7227
      %7229 = vrot.lane.b32.xlu0 %v7133, 8
      %v7230 = vpop.permute.xlu0 %7229
      %7231 = vrot.lane.b32.xlu0 %v7134, 8
      %v7232 = vpop.permute.xlu0 %7231
      %7233 = vrot.lane.b32.xlu0 %v7135, 8
      %v7234 = vpop.permute.xlu0 %7233
      %7235 = vrot.lane.b32.xlu0 %v7136, 8
      %v7236 = vpop.permute.xlu0 %7235
      %7237 = vrot.lane.b32.xlu0 %v7137, 8
      %v7238 = vpop.permute.xlu0 %7237
      %7239 = vrot.lane.b32.xlu0 %v7138, 8
      %v7240 = vpop.permute.xlu0 %7239
      %7241 = vrot.lane.b32.xlu0 %v7139, 8
      %v7242 = vpop.permute.xlu0 %7241
      %7243 = vrot.lane.b32.xlu0 %v7140, 8
      %v7244 = vpop.permute.xlu0 %7243
      %7245 = vrot.lane.b32.xlu0 %v7141, 8
      %v7246 = vpop.permute.xlu0 %7245
      %7247 = vrot.lane.b32.xlu0 %v7142, 8
      %v7248 = vpop.permute.xlu0 %7247
      %7249 = vrot.lane.b32.xlu0 %v7143, 8
      %v7250 = vpop.permute.xlu0 %7249
      %7251 = vrot.lane.b32.xlu0 %v7144, 8
      %v7252 = vpop.permute.xlu0 %7251
      %7253 = vrot.lane.b32.xlu0 %v7145, 8
      %v7254 = vpop.permute.xlu0 %7253
      %7255 = vrot.lane.b32.xlu0 %v7146, 8
      %v7256 = vpop.permute.xlu0 %7255
      %7257 = vrot.lane.b32.xlu0 %v7147, 8
      %v7258 = vpop.permute.xlu0 %7257
      %7259 = vrot.lane.b32.xlu0 %v7148, 8
      %v7260 = vpop.permute.xlu0 %7259
      %7261 = vrot.lane.b32.xlu0 %v7149, 8
      %v7262 = vpop.permute.xlu0 %7261
      %7263 = vrot.lane.b32.xlu0 %v7150, 8
      %v7264 = vpop.permute.xlu0 %7263
      %7265 = vrot.lane.b32.xlu0 %v7151, 8
      %v7266 = vpop.permute.xlu0 %7265
      %7267 = vrot.lane.b32.xlu0 %v7152, 8
      %v7268 = vpop.permute.xlu0 %7267
      %7269 = vrot.lane.b32.xlu0 %v7153, 8
      %v7270 = vpop.permute.xlu0 %7269
      %7271 = vrot.lane.b32.xlu0 %v7154, 8
      %v7272 = vpop.permute.xlu0 %7271
      %7273 = vrot.lane.b32.xlu0 %v7155, 8
      %v7274 = vpop.permute.xlu0 %7273
      %7275 = vrot.lane.b32.xlu0 %v7156, 8
      %v7276 = vpop.permute.xlu0 %7275
      %7277 = vrot.lane.b32.xlu0 %v7157, 8
      %v7278 = vpop.permute.xlu0 %7277
      %7279 = vrot.lane.b32.xlu0 %v7158, 8
      %v7280 = vpop.permute.xlu0 %7279
      %7281 = vrot.lane.b32.xlu0 %v7159, 8
      %v7282 = vpop.permute.xlu0 %7281
      %7283 = vrot.lane.b32.xlu0 %v7160, 8
      %v7284 = vpop.permute.xlu0 %7283
      %7285 = vrot.lane.b32.xlu0 %v7161, 8
      %v7286 = vpop.permute.xlu0 %7285
      %7287 = vrot.lane.b32.xlu0 %v7162, 8
      %v7288 = vpop.permute.xlu0 %7287
      %7289 = vrot.lane.b32.xlu0 %v7163, 8
      %v7290 = vpop.permute.xlu0 %7289
      %7291 = vrot.lane.b32.xlu0 %v7164, 8
      %v7292 = vpop.permute.xlu0 %7291
      %7293 = vrot.lane.b32.xlu0 %v7165, 8
      %v7294 = vpop.permute.xlu0 %7293
      %7295 = vrot.lane.b32.xlu0 %v7166, 8
      %v7296 = vpop.permute.xlu0 %7295
      %7297 = vrot.lane.b32.xlu0 %v7167, 8
      %v7298 = vpop.permute.xlu0 %7297
      %7299 = vrot.lane.b32.xlu0 %v7168, 8
      %v7300 = vpop.permute.xlu0 %7299
      %7345 = vst.msk [vmem:[#allocation2] sm:$0xff] %vm1440, %v7214
      %7346 = vst.msk [vmem:[#allocation2 + $0x8] sm:$0xff] %vm1440, %v7216
      %7347 = vst.msk [vmem:[#allocation2 + $0x10] sm:$0xff] %vm1440, %v7218
      %7348 = vst.msk [vmem:[#allocation2 + $0x18] sm:$0xff] %vm1440, %v7220
      %7349 = vst.msk [vmem:[#allocation2 + $0x20] sm:$0xff] %vm1440, %v7222
      %7350 = vst.msk [vmem:[#allocation2 + $0x28] sm:$0xff] %vm1440, %v7224
      %7351 = vst.msk [vmem:[#allocation2 + $0x30] sm:$0xff] %vm1440, %v7226
      %7352 = vst.msk [vmem:[#allocation2 + $0x38] sm:$0xff] %vm1440, %v7228
      %7353 = vst.msk [vmem:[#allocation2 + $0x40] sm:$0xff] %vm1440, %v7230
      %7354 = vst.msk [vmem:[#allocation2 + $0x48] sm:$0xff] %vm1440, %v7232
      %7355 = vst.msk [vmem:[#allocation2 + $0x50] sm:$0xff] %vm1440, %v7234
      %7356 = vst.msk [vmem:[#allocation2 + $0x58] sm:$0xff] %vm1440, %v7236
      %7357 = vst.msk [vmem:[#allocation2 + $0x60] sm:$0xff] %vm1440, %v7238
      %7358 = vst.msk [vmem:[#allocation2 + $0x68] sm:$0xff] %vm1440, %v7240
      %7359 = vst.msk [vmem:[#allocation2 + $0x70] sm:$0xff] %vm1440, %v7242
      %7360 = vst.msk [vmem:[#allocation2 + $0x78] sm:$0xff] %vm1440, %v7244
      %7361 = vst.msk [vmem:[#allocation2 + $0x80] sm:$0xff] %vm1440, %v7246
      %7362 = vst.msk [vmem:[#allocation2 + $0x88] sm:$0xff] %vm1440, %v7248
      %7363 = vst.msk [vmem:[#allocation2 + $0x90] sm:$0xff] %vm1440, %v7250
      %7364 = vst.msk [vmem:[#allocation2 + $0x98] sm:$0xff] %vm1440, %v7252
      %7365 = vst.msk [vmem:[#allocation2 + $0xa0] sm:$0xff] %vm1440, %v7254
      %7366 = vst.msk [vmem:[#allocation2 + $0xa8] sm:$0xff] %vm1440, %v7256
      %7367 = vst.msk [vmem:[#allocation2 + $0xb0] sm:$0xff] %vm1440, %v7258
      %7368 = vst.msk [vmem:[#allocation2 + $0xb8] sm:$0xff] %vm1440, %v7260
      %7369 = vst.msk [vmem:[#allocation2 + $0xc0] sm:$0xff] %vm1440, %v7262
      %7370 = vst.msk [vmem:[#allocation2 + $0xc8] sm:$0xff] %vm1440, %v7264
      %7371 = vst.msk [vmem:[#allocation2 + $0xd0] sm:$0xff] %vm1440, %v7266
      %7372 = vst.msk [vmem:[#allocation2 + $0xd8] sm:$0xff] %vm1440, %v7268
      %7373 = vst.msk [vmem:[#allocation2 + $0xe0] sm:$0xff] %vm1440, %v7270
      %7374 = vst.msk [vmem:[#allocation2 + $0xe8] sm:$0xff] %vm1440, %v7272
      %7375 = vst.msk [vmem:[#allocation2 + $0xf0] sm:$0xff] %vm1440, %v7274
      %7376 = vst.msk [vmem:[#allocation2 + $0xf8] sm:$0xff] %vm1440, %v7276
      %7377 = vst.msk [vmem:[#allocation2 + $0x100] sm:$0xff] %vm1440, %v7278
      %7378 = vst.msk [vmem:[#allocation2 + $0x108] sm:$0xff] %vm1440, %v7280
      %7379 = vst.msk [vmem:[#allocation2 + $0x110] sm:$0xff] %vm1440, %v7282
      %7380 = vst.msk [vmem:[#allocation2 + $0x118] sm:$0xff] %vm1440, %v7284
      %7381 = vst.msk [vmem:[#allocation2 + $0x120] sm:$0xff] %vm1440, %v7286
      %7382 = vst.msk [vmem:[#allocation2 + $0x128] sm:$0xff] %vm1440, %v7288
      %7383 = vst.msk [vmem:[#allocation2 + $0x130] sm:$0xff] %vm1440, %v7290
      %7384 = vst.msk [vmem:[#allocation2 + $0x138] sm:$0xff] %vm1440, %v7292
      %7385 = vst.msk [vmem:[#allocation2 + $0x140] sm:$0xff] %vm1440, %v7294
      %7386 = vst.msk [vmem:[#allocation2 + $0x148] sm:$0xff] %vm1440, %v7296
      %7387 = vst.msk [vmem:[#allocation2 + $0x150] sm:$0xff] %vm1440, %v7298
      %7388 = vst.msk [vmem:[#allocation2 + $0x158] sm:$0xff] %vm1440, %v7300
      %s7389 = sadd.s32 %s302, 129
      %s7390 = scalar_lea.vmem %s291, %s7389
      %v7391 = vld [vmem:[%s7390] sm:$0xff]
      %v7392 = vld [vmem:[%s7390 + $0x8] sm:$0xff]
      %v7393 = vld [vmem:[%s7390 + $0x10] sm:$0xff]
      %v7394 = vld [vmem:[%s7390 + $0x18] sm:$0xff]
      %v7395 = vld [vmem:[%s7390 + $0x20] sm:$0xff]
      %v7396 = vld [vmem:[%s7390 + $0x28] sm:$0xff]
      %v7397 = vld [vmem:[%s7390 + $0x30] sm:$0xff]
      %v7398 = vld [vmem:[%s7390 + $0x38] sm:$0xff]
      %v7399 = vld [vmem:[%s7390 + $0x40] sm:$0xff]
      %v7400 = vld [vmem:[%s7390 + $0x48] sm:$0xff]
      %v7401 = vld [vmem:[%s7390 + $0x50] sm:$0xff]
      %v7402 = vld [vmem:[%s7390 + $0x58] sm:$0xff]
      %v7403 = vld [vmem:[%s7390 + $0x60] sm:$0xff]
      %v7404 = vld [vmem:[%s7390 + $0x68] sm:$0xff]
      %v7405 = vld [vmem:[%s7390 + $0x70] sm:$0xff]
      %v7406 = vld [vmem:[%s7390 + $0x78] sm:$0xff]
      %v7407 = vld [vmem:[%s7390 + $0x80] sm:$0xff]
      %v7408 = vld [vmem:[%s7390 + $0x88] sm:$0xff]
      %v7409 = vld [vmem:[%s7390 + $0x90] sm:$0xff]
      %v7410 = vld [vmem:[%s7390 + $0x98] sm:$0xff]
      %v7411 = vld [vmem:[%s7390 + $0xa0] sm:$0xff]
      %v7412 = vld [vmem:[%s7390 + $0xa8] sm:$0xff]
      %v7413 = vld [vmem:[%s7390 + $0xb0] sm:$0xff]
      %v7414 = vld [vmem:[%s7390 + $0xb8] sm:$0xff]
      %v7415 = vld [vmem:[%s7390 + $0xc0] sm:$0xff]
      %v7416 = vld [vmem:[%s7390 + $0xc8] sm:$0xff]
      %v7417 = vld [vmem:[%s7390 + $0xd0] sm:$0xff]
      %v7418 = vld [vmem:[%s7390 + $0xd8] sm:$0xff]
      %v7419 = vld [vmem:[%s7390 + $0xe0] sm:$0xff]
      %v7420 = vld [vmem:[%s7390 + $0xe8] sm:$0xff]
      %v7421 = vld [vmem:[%s7390 + $0xf0] sm:$0xff]
      %v7422 = vld [vmem:[%s7390 + $0xf8] sm:$0xff]
      %v7423 = vld [vmem:[%s7390 + $0x100] sm:$0xff]
      %v7424 = vld [vmem:[%s7390 + $0x108] sm:$0xff]
      %v7425 = vld [vmem:[%s7390 + $0x110] sm:$0xff]
      %v7426 = vld [vmem:[%s7390 + $0x118] sm:$0xff]
      %v7427 = vld [vmem:[%s7390 + $0x120] sm:$0xff]
      %v7428 = vld [vmem:[%s7390 + $0x128] sm:$0xff]
      %v7429 = vld [vmem:[%s7390 + $0x130] sm:$0xff]
      %v7430 = vld [vmem:[%s7390 + $0x138] sm:$0xff]
      %v7431 = vld [vmem:[%s7390 + $0x140] sm:$0xff]
      %v7432 = vld [vmem:[%s7390 + $0x148] sm:$0xff]
      %v7433 = vld [vmem:[%s7390 + $0x150] sm:$0xff]
      %v7434 = vld [vmem:[%s7390 + $0x158] sm:$0xff]
      %7479 = vrot.lane.b32.xlu0 %v7391, 12
      %v7480 = vpop.permute.xlu0 %7479
      %7481 = vrot.lane.b32.xlu0 %v7392, 12
      %v7482 = vpop.permute.xlu0 %7481
      %7483 = vrot.lane.b32.xlu0 %v7393, 12
      %v7484 = vpop.permute.xlu0 %7483
      %7485 = vrot.lane.b32.xlu0 %v7394, 12
      %v7486 = vpop.permute.xlu0 %7485
      %7487 = vrot.lane.b32.xlu0 %v7395, 12
      %v7488 = vpop.permute.xlu0 %7487
      %7489 = vrot.lane.b32.xlu0 %v7396, 12
      %v7490 = vpop.permute.xlu0 %7489
      %7491 = vrot.lane.b32.xlu0 %v7397, 12
      %v7492 = vpop.permute.xlu0 %7491
      %7493 = vrot.lane.b32.xlu0 %v7398, 12
      %v7494 = vpop.permute.xlu0 %7493
      %7495 = vrot.lane.b32.xlu0 %v7399, 12
      %v7496 = vpop.permute.xlu0 %7495
      %7497 = vrot.lane.b32.xlu0 %v7400, 12
      %v7498 = vpop.permute.xlu0 %7497
      %7499 = vrot.lane.b32.xlu0 %v7401, 12
      %v7500 = vpop.permute.xlu0 %7499
      %7501 = vrot.lane.b32.xlu0 %v7402, 12
      %v7502 = vpop.permute.xlu0 %7501
      %7503 = vrot.lane.b32.xlu0 %v7403, 12
      %v7504 = vpop.permute.xlu0 %7503
      %7505 = vrot.lane.b32.xlu0 %v7404, 12
      %v7506 = vpop.permute.xlu0 %7505
      %7507 = vrot.lane.b32.xlu0 %v7405, 12
      %v7508 = vpop.permute.xlu0 %7507
      %7509 = vrot.lane.b32.xlu0 %v7406, 12
      %v7510 = vpop.permute.xlu0 %7509
      %7511 = vrot.lane.b32.xlu0 %v7407, 12
      %v7512 = vpop.permute.xlu0 %7511
      %7513 = vrot.lane.b32.xlu0 %v7408, 12
      %v7514 = vpop.permute.xlu0 %7513
      %7515 = vrot.lane.b32.xlu0 %v7409, 12
      %v7516 = vpop.permute.xlu0 %7515
      %7517 = vrot.lane.b32.xlu0 %v7410, 12
      %v7518 = vpop.permute.xlu0 %7517
      %7519 = vrot.lane.b32.xlu0 %v7411, 12
      %v7520 = vpop.permute.xlu0 %7519
      %7521 = vrot.lane.b32.xlu0 %v7412, 12
      %v7522 = vpop.permute.xlu0 %7521
      %7523 = vrot.lane.b32.xlu0 %v7413, 12
      %v7524 = vpop.permute.xlu0 %7523
      %7525 = vrot.lane.b32.xlu0 %v7414, 12
      %v7526 = vpop.permute.xlu0 %7525
      %7527 = vrot.lane.b32.xlu0 %v7415, 12
      %v7528 = vpop.permute.xlu0 %7527
      %7529 = vrot.lane.b32.xlu0 %v7416, 12
      %v7530 = vpop.permute.xlu0 %7529
      %7531 = vrot.lane.b32.xlu0 %v7417, 12
      %v7532 = vpop.permute.xlu0 %7531
      %7533 = vrot.lane.b32.xlu0 %v7418, 12
      %v7534 = vpop.permute.xlu0 %7533
      %7535 = vrot.lane.b32.xlu0 %v7419, 12
      %v7536 = vpop.permute.xlu0 %7535
      %7537 = vrot.lane.b32.xlu0 %v7420, 12
      %v7538 = vpop.permute.xlu0 %7537
      %7539 = vrot.lane.b32.xlu0 %v7421, 12
      %v7540 = vpop.permute.xlu0 %7539
      %7541 = vrot.lane.b32.xlu0 %v7422, 12
      %v7542 = vpop.permute.xlu0 %7541
      %7543 = vrot.lane.b32.xlu0 %v7423, 12
      %v7544 = vpop.permute.xlu0 %7543
      %7545 = vrot.lane.b32.xlu0 %v7424, 12
      %v7546 = vpop.permute.xlu0 %7545
      %7547 = vrot.lane.b32.xlu0 %v7425, 12
      %v7548 = vpop.permute.xlu0 %7547
      %7549 = vrot.lane.b32.xlu0 %v7426, 12
      %v7550 = vpop.permute.xlu0 %7549
      %7551 = vrot.lane.b32.xlu0 %v7427, 12
      %v7552 = vpop.permute.xlu0 %7551
      %7553 = vrot.lane.b32.xlu0 %v7428, 12
      %v7554 = vpop.permute.xlu0 %7553
      %7555 = vrot.lane.b32.xlu0 %v7429, 12
      %v7556 = vpop.permute.xlu0 %7555
      %7557 = vrot.lane.b32.xlu0 %v7430, 12
      %v7558 = vpop.permute.xlu0 %7557
      %7559 = vrot.lane.b32.xlu0 %v7431, 12
      %v7560 = vpop.permute.xlu0 %7559
      %7561 = vrot.lane.b32.xlu0 %v7432, 12
      %v7562 = vpop.permute.xlu0 %7561
      %7563 = vrot.lane.b32.xlu0 %v7433, 12
      %v7564 = vpop.permute.xlu0 %7563
      %7565 = vrot.lane.b32.xlu0 %v7434, 12
      %v7566 = vpop.permute.xlu0 %7565
      %7611 = vst.msk [vmem:[#allocation2] sm:$0xff] %vm1707, %v7480
      %7612 = vst.msk [vmem:[#allocation2 + $0x8] sm:$0xff] %vm1707, %v7482
      %7613 = vst.msk [vmem:[#allocation2 + $0x10] sm:$0xff] %vm1707, %v7484
      %7614 = vst.msk [vmem:[#allocation2 + $0x18] sm:$0xff] %vm1707, %v7486
      %7615 = vst.msk [vmem:[#allocation2 + $0x20] sm:$0xff] %vm1707, %v7488
      %7616 = vst.msk [vmem:[#allocation2 + $0x28] sm:$0xff] %vm1707, %v7490
      %7617 = vst.msk [vmem:[#allocation2 + $0x30] sm:$0xff] %vm1707, %v7492
      %7618 = vst.msk [vmem:[#allocation2 + $0x38] sm:$0xff] %vm1707, %v7494
      %7619 = vst.msk [vmem:[#allocation2 + $0x40] sm:$0xff] %vm1707, %v7496
      %7620 = vst.msk [vmem:[#allocation2 + $0x48] sm:$0xff] %vm1707, %v7498
      %7621 = vst.msk [vmem:[#allocation2 + $0x50] sm:$0xff] %vm1707, %v7500
      %7622 = vst.msk [vmem:[#allocation2 + $0x58] sm:$0xff] %vm1707, %v7502
      %7623 = vst.msk [vmem:[#allocation2 + $0x60] sm:$0xff] %vm1707, %v7504
      %7624 = vst.msk [vmem:[#allocation2 + $0x68] sm:$0xff] %vm1707, %v7506
      %7625 = vst.msk [vmem:[#allocation2 + $0x70] sm:$0xff] %vm1707, %v7508
      %7626 = vst.msk [vmem:[#allocation2 + $0x78] sm:$0xff] %vm1707, %v7510
      %7627 = vst.msk [vmem:[#allocation2 + $0x80] sm:$0xff] %vm1707, %v7512
      %7628 = vst.msk [vmem:[#allocation2 + $0x88] sm:$0xff] %vm1707, %v7514
      %7629 = vst.msk [vmem:[#allocation2 + $0x90] sm:$0xff] %vm1707, %v7516
      %7630 = vst.msk [vmem:[#allocation2 + $0x98] sm:$0xff] %vm1707, %v7518
      %7631 = vst.msk [vmem:[#allocation2 + $0xa0] sm:$0xff] %vm1707, %v7520
      %7632 = vst.msk [vmem:[#allocation2 + $0xa8] sm:$0xff] %vm1707, %v7522
      %7633 = vst.msk [vmem:[#allocation2 + $0xb0] sm:$0xff] %vm1707, %v7524
      %7634 = vst.msk [vmem:[#allocation2 + $0xb8] sm:$0xff] %vm1707, %v7526
      %7635 = vst.msk [vmem:[#allocation2 + $0xc0] sm:$0xff] %vm1707, %v7528
      %7636 = vst.msk [vmem:[#allocation2 + $0xc8] sm:$0xff] %vm1707, %v7530
      %7637 = vst.msk [vmem:[#allocation2 + $0xd0] sm:$0xff] %vm1707, %v7532
      %7638 = vst.msk [vmem:[#allocation2 + $0xd8] sm:$0xff] %vm1707, %v7534
      %7639 = vst.msk [vmem:[#allocation2 + $0xe0] sm:$0xff] %vm1707, %v7536
      %7640 = vst.msk [vmem:[#allocation2 + $0xe8] sm:$0xff] %vm1707, %v7538
      %7641 = vst.msk [vmem:[#allocation2 + $0xf0] sm:$0xff] %vm1707, %v7540
      %7642 = vst.msk [vmem:[#allocation2 + $0xf8] sm:$0xff] %vm1707, %v7542
      %7643 = vst.msk [vmem:[#allocation2 + $0x100] sm:$0xff] %vm1707, %v7544
      %7644 = vst.msk [vmem:[#allocation2 + $0x108] sm:$0xff] %vm1707, %v7546
      %7645 = vst.msk [vmem:[#allocation2 + $0x110] sm:$0xff] %vm1707, %v7548
      %7646 = vst.msk [vmem:[#allocation2 + $0x118] sm:$0xff] %vm1707, %v7550
      %7647 = vst.msk [vmem:[#allocation2 + $0x120] sm:$0xff] %vm1707, %v7552
      %7648 = vst.msk [vmem:[#allocation2 + $0x128] sm:$0xff] %vm1707, %v7554
      %7649 = vst.msk [vmem:[#allocation2 + $0x130] sm:$0xff] %vm1707, %v7556
      %7650 = vst.msk [vmem:[#allocation2 + $0x138] sm:$0xff] %vm1707, %v7558
      %7651 = vst.msk [vmem:[#allocation2 + $0x140] sm:$0xff] %vm1707, %v7560
      %7652 = vst.msk [vmem:[#allocation2 + $0x148] sm:$0xff] %vm1707, %v7562
      %7653 = vst.msk [vmem:[#allocation2 + $0x150] sm:$0xff] %vm1707, %v7564
      %7654 = vst.msk [vmem:[#allocation2 + $0x158] sm:$0xff] %vm1707, %v7566
      %v7655 = vld [vmem:[%s306] sm:$0xff]
      %v7656 = vld [vmem:[%s306 + $0x8] sm:$0xff]
      %v7657 = vld [vmem:[%s306 + $0x10] sm:$0xff]
      %v7658 = vld [vmem:[%s306 + $0x18] sm:$0xff]
      %v7659 = vld [vmem:[%s306 + $0x20] sm:$0xff]
      %v7660 = vld [vmem:[%s306 + $0x28] sm:$0xff]
      %v7661 = vld [vmem:[%s306 + $0x30] sm:$0xff]
      %v7662 = vld [vmem:[%s306 + $0x38] sm:$0xff]
      %v7663 = vld [vmem:[%s306 + $0x40] sm:$0xff]
      %v7664 = vld [vmem:[%s306 + $0x48] sm:$0xff]
      %v7665 = vld [vmem:[%s306 + $0x50] sm:$0xff]
      %v7666 = vld [vmem:[%s306 + $0x58] sm:$0xff]
      %v7667 = vld [vmem:[%s306 + $0x60] sm:$0xff]
      %v7668 = vld [vmem:[%s306 + $0x68] sm:$0xff]
      %v7669 = vld [vmem:[%s306 + $0x70] sm:$0xff]
      %v7670 = vld [vmem:[%s306 + $0x78] sm:$0xff]
      %v7671 = vld [vmem:[%s306 + $0x80] sm:$0xff]
      %v7672 = vld [vmem:[%s306 + $0x88] sm:$0xff]
      %v7673 = vld [vmem:[%s306 + $0x90] sm:$0xff]
      %v7674 = vld [vmem:[%s306 + $0x98] sm:$0xff]
      %v7675 = vld [vmem:[%s306 + $0xa0] sm:$0xff]
      %v7676 = vld [vmem:[%s306 + $0xa8] sm:$0xff]
      %v7677 = vld [vmem:[%s306 + $0xb0] sm:$0xff]
      %v7678 = vld [vmem:[%s306 + $0xb8] sm:$0xff]
      %v7679 = vld [vmem:[%s306 + $0xc0] sm:$0xff]
      %v7680 = vld [vmem:[%s306 + $0xc8] sm:$0xff]
      %v7681 = vld [vmem:[%s306 + $0xd0] sm:$0xff]
      %v7682 = vld [vmem:[%s306 + $0xd8] sm:$0xff]
      %v7683 = vld [vmem:[%s306 + $0xe0] sm:$0xff]
      %v7684 = vld [vmem:[%s306 + $0xe8] sm:$0xff]
      %v7685 = vld [vmem:[%s306 + $0xf0] sm:$0xff]
      %v7686 = vld [vmem:[%s306 + $0xf8] sm:$0xff]
      %v7687 = vld [vmem:[%s306 + $0x100] sm:$0xff]
      %v7688 = vld [vmem:[%s306 + $0x108] sm:$0xff]
      %v7689 = vld [vmem:[%s306 + $0x110] sm:$0xff]
      %v7690 = vld [vmem:[%s306 + $0x118] sm:$0xff]
      %v7691 = vld [vmem:[%s306 + $0x120] sm:$0xff]
      %v7692 = vld [vmem:[%s306 + $0x128] sm:$0xff]
      %v7693 = vld [vmem:[%s306 + $0x130] sm:$0xff]
      %v7694 = vld [vmem:[%s306 + $0x138] sm:$0xff]
      %v7695 = vld [vmem:[%s306 + $0x140] sm:$0xff]
      %v7696 = vld [vmem:[%s306 + $0x148] sm:$0xff]
      %v7697 = vld [vmem:[%s306 + $0x150] sm:$0xff]
      %v7698 = vld [vmem:[%s306 + $0x158] sm:$0xff]
      %7743 = vrot.lane.b32.xlu0 %v7655, 16
      %v7744 = vpop.permute.xlu0 %7743
      %7745 = vrot.lane.b32.xlu0 %v7656, 16
      %v7746 = vpop.permute.xlu0 %7745
      %7747 = vrot.lane.b32.xlu0 %v7657, 16
      %v7748 = vpop.permute.xlu0 %7747
      %7749 = vrot.lane.b32.xlu0 %v7658, 16
      %v7750 = vpop.permute.xlu0 %7749
      %7751 = vrot.lane.b32.xlu0 %v7659, 16
      %v7752 = vpop.permute.xlu0 %7751
      %7753 = vrot.lane.b32.xlu0 %v7660, 16
      %v7754 = vpop.permute.xlu0 %7753
      %7755 = vrot.lane.b32.xlu0 %v7661, 16
      %v7756 = vpop.permute.xlu0 %7755
      %7757 = vrot.lane.b32.xlu0 %v7662, 16
      %v7758 = vpop.permute.xlu0 %7757
      %7759 = vrot.lane.b32.xlu0 %v7663, 16
      %v7760 = vpop.permute.xlu0 %7759
      %7761 = vrot.lane.b32.xlu0 %v7664, 16
      %v7762 = vpop.permute.xlu0 %7761
      %7763 = vrot.lane.b32.xlu0 %v7665, 16
      %v7764 = vpop.permute.xlu0 %7763
      %7765 = vrot.lane.b32.xlu0 %v7666, 16
      %v7766 = vpop.permute.xlu0 %7765
      %7767 = vrot.lane.b32.xlu0 %v7667, 16
      %v7768 = vpop.permute.xlu0 %7767
      %7769 = vrot.lane.b32.xlu0 %v7668, 16
      %v7770 = vpop.permute.xlu0 %7769
      %7771 = vrot.lane.b32.xlu0 %v7669, 16
      %v7772 = vpop.permute.xlu0 %7771
      %7773 = vrot.lane.b32.xlu0 %v7670, 16
      %v7774 = vpop.permute.xlu0 %7773
      %7775 = vrot.lane.b32.xlu0 %v7671, 16
      %v7776 = vpop.permute.xlu0 %7775
      %7777 = vrot.lane.b32.xlu0 %v7672, 16
      %v7778 = vpop.permute.xlu0 %7777
      %7779 = vrot.lane.b32.xlu0 %v7673, 16
      %v7780 = vpop.permute.xlu0 %7779
      %7781 = vrot.lane.b32.xlu0 %v7674, 16
      %v7782 = vpop.permute.xlu0 %7781
      %7783 = vrot.lane.b32.xlu0 %v7675, 16
      %v7784 = vpop.permute.xlu0 %7783
      %7785 = vrot.lane.b32.xlu0 %v7676, 16
      %v7786 = vpop.permute.xlu0 %7785
      %7787 = vrot.lane.b32.xlu0 %v7677, 16
      %v7788 = vpop.permute.xlu0 %7787
      %7789 = vrot.lane.b32.xlu0 %v7678, 16
      %v7790 = vpop.permute.xlu0 %7789
      %7791 = vrot.lane.b32.xlu0 %v7679, 16
      %v7792 = vpop.permute.xlu0 %7791
      %7793 = vrot.lane.b32.xlu0 %v7680, 16
      %v7794 = vpop.permute.xlu0 %7793
      %7795 = vrot.lane.b32.xlu0 %v7681, 16
      %v7796 = vpop.permute.xlu0 %7795
      %7797 = vrot.lane.b32.xlu0 %v7682, 16
      %v7798 = vpop.permute.xlu0 %7797
      %7799 = vrot.lane.b32.xlu0 %v7683, 16
      %v7800 = vpop.permute.xlu0 %7799
      %7801 = vrot.lane.b32.xlu0 %v7684, 16
      %v7802 = vpop.permute.xlu0 %7801
      %7803 = vrot.lane.b32.xlu0 %v7685, 16
      %v7804 = vpop.permute.xlu0 %7803
      %7805 = vrot.lane.b32.xlu0 %v7686, 16
      %v7806 = vpop.permute.xlu0 %7805
      %7807 = vrot.lane.b32.xlu0 %v7687, 16
      %v7808 = vpop.permute.xlu0 %7807
      %7809 = vrot.lane.b32.xlu0 %v7688, 16
      %v7810 = vpop.permute.xlu0 %7809
      %7811 = vrot.lane.b32.xlu0 %v7689, 16
      %v7812 = vpop.permute.xlu0 %7811
      %7813 = vrot.lane.b32.xlu0 %v7690, 16
      %v7814 = vpop.permute.xlu0 %7813
      %7815 = vrot.lane.b32.xlu0 %v7691, 16
      %v7816 = vpop.permute.xlu0 %7815
      %7817 = vrot.lane.b32.xlu0 %v7692, 16
      %v7818 = vpop.permute.xlu0 %7817
      %7819 = vrot.lane.b32.xlu0 %v7693, 16
      %v7820 = vpop.permute.xlu0 %7819
      %7821 = vrot.lane.b32.xlu0 %v7694, 16
      %v7822 = vpop.permute.xlu0 %7821
      %7823 = vrot.lane.b32.xlu0 %v7695, 16
      %v7824 = vpop.permute.xlu0 %7823
      %7825 = vrot.lane.b32.xlu0 %v7696, 16
      %v7826 = vpop.permute.xlu0 %7825
      %7827 = vrot.lane.b32.xlu0 %v7697, 16
      %v7828 = vpop.permute.xlu0 %7827
      %7829 = vrot.lane.b32.xlu0 %v7698, 16
      %v7830 = vpop.permute.xlu0 %7829
      %7875 = vst.msk [vmem:[#allocation2] sm:$0xff] %vm1972, %v7744
      %7876 = vst.msk [vmem:[#allocation2 + $0x8] sm:$0xff] %vm1972, %v7746
      %7877 = vst.msk [vmem:[#allocation2 + $0x10] sm:$0xff] %vm1972, %v7748
      %7878 = vst.msk [vmem:[#allocation2 + $0x18] sm:$0xff] %vm1972, %v7750
      %7879 = vst.msk [vmem:[#allocation2 + $0x20] sm:$0xff] %vm1972, %v7752
      %7880 = vst.msk [vmem:[#allocation2 + $0x28] sm:$0xff] %vm1972, %v7754
      %7881 = vst.msk [vmem:[#allocation2 + $0x30] sm:$0xff] %vm1972, %v7756
      %7882 = vst.msk [vmem:[#allocation2 + $0x38] sm:$0xff] %vm1972, %v7758
      %7883 = vst.msk [vmem:[#allocation2 + $0x40] sm:$0xff] %vm1972, %v7760
      %7884 = vst.msk [vmem:[#allocation2 + $0x48] sm:$0xff] %vm1972, %v7762
      %7885 = vst.msk [vmem:[#allocation2 + $0x50] sm:$0xff] %vm1972, %v7764
      %7886 = vst.msk [vmem:[#allocation2 + $0x58] sm:$0xff] %vm1972, %v7766
      %7887 = vst.msk [vmem:[#allocation2 + $0x60] sm:$0xff] %vm1972, %v7768
      %7888 = vst.msk [vmem:[#allocation2 + $0x68] sm:$0xff] %vm1972, %v7770
      %7889 = vst.msk [vmem:[#allocation2 + $0x70] sm:$0xff] %vm1972, %v7772
      %7890 = vst.msk [vmem:[#allocation2 + $0x78] sm:$0xff] %vm1972, %v7774
      %7891 = vst.msk [vmem:[#allocation2 + $0x80] sm:$0xff] %vm1972, %v7776
      %7892 = vst.msk [vmem:[#allocation2 + $0x88] sm:$0xff] %vm1972, %v7778
      %7893 = vst.msk [vmem:[#allocation2 + $0x90] sm:$0xff] %vm1972, %v7780
      %7894 = vst.msk [vmem:[#allocation2 + $0x98] sm:$0xff] %vm1972, %v7782
      %7895 = vst.msk [vmem:[#allocation2 + $0xa0] sm:$0xff] %vm1972, %v7784
      %7896 = vst.msk [vmem:[#allocation2 + $0xa8] sm:$0xff] %vm1972, %v7786
      %7897 = vst.msk [vmem:[#allocation2 + $0xb0] sm:$0xff] %vm1972, %v7788
      %7898 = vst.msk [vmem:[#allocation2 + $0xb8] sm:$0xff] %vm1972, %v7790
      %7899 = vst.msk [vmem:[#allocation2 + $0xc0] sm:$0xff] %vm1972, %v7792
      %7900 = vst.msk [vmem:[#allocation2 + $0xc8] sm:$0xff] %vm1972, %v7794
      %7901 = vst.msk [vmem:[#allocation2 + $0xd0] sm:$0xff] %vm1972, %v7796
      %7902 = vst.msk [vmem:[#allocation2 + $0xd8] sm:$0xff] %vm1972, %v7798
      %7903 = vst.msk [vmem:[#allocation2 + $0xe0] sm:$0xff] %vm1972, %v7800
      %7904 = vst.msk [vmem:[#allocation2 + $0xe8] sm:$0xff] %vm1972, %v7802
      %7905 = vst.msk [vmem:[#allocation2 + $0xf0] sm:$0xff] %vm1972, %v7804
      %7906 = vst.msk [vmem:[#allocation2 + $0xf8] sm:$0xff] %vm1972, %v7806
      %7907 = vst.msk [vmem:[#allocation2 + $0x100] sm:$0xff] %vm1972, %v7808
      %7908 = vst.msk [vmem:[#allocation2 + $0x108] sm:$0xff] %vm1972, %v7810
      %7909 = vst.msk [vmem:[#allocation2 + $0x110] sm:$0xff] %vm1972, %v7812
      %7910 = vst.msk [vmem:[#allocation2 + $0x118] sm:$0xff] %vm1972, %v7814
      %7911 = vst.msk [vmem:[#allocation2 + $0x120] sm:$0xff] %vm1972, %v7816
      %7912 = vst.msk [vmem:[#allocation2 + $0x128] sm:$0xff] %vm1972, %v7818
      %7913 = vst.msk [vmem:[#allocation2 + $0x130] sm:$0xff] %vm1972, %v7820
      %7914 = vst.msk [vmem:[#allocation2 + $0x138] sm:$0xff] %vm1972, %v7822
      %7915 = vst.msk [vmem:[#allocation2 + $0x140] sm:$0xff] %vm1972, %v7824
      %7916 = vst.msk [vmem:[#allocation2 + $0x148] sm:$0xff] %vm1972, %v7826
      %7917 = vst.msk [vmem:[#allocation2 + $0x150] sm:$0xff] %vm1972, %v7828
      %7918 = vst.msk [vmem:[#allocation2 + $0x158] sm:$0xff] %vm1972, %v7830
      %s7919 = sadd.s32 %s302, 135
      %s7920 = scalar_lea.vmem %s291, %s7919
      %v7921 = vld [vmem:[%s7920] sm:$0xff]
      %v7922 = vld [vmem:[%s7920 + $0x8] sm:$0xff]
      %v7923 = vld [vmem:[%s7920 + $0x10] sm:$0xff]
      %v7924 = vld [vmem:[%s7920 + $0x18] sm:$0xff]
      %v7925 = vld [vmem:[%s7920 + $0x20] sm:$0xff]
      %v7926 = vld [vmem:[%s7920 + $0x28] sm:$0xff]
      %v7927 = vld [vmem:[%s7920 + $0x30] sm:$0xff]
      %v7928 = vld [vmem:[%s7920 + $0x38] sm:$0xff]
      %v7929 = vld [vmem:[%s7920 + $0x40] sm:$0xff]
      %v7930 = vld [vmem:[%s7920 + $0x48] sm:$0xff]
      %v7931 = vld [vmem:[%s7920 + $0x50] sm:$0xff]
      %v7932 = vld [vmem:[%s7920 + $0x58] sm:$0xff]
      %v7933 = vld [vmem:[%s7920 + $0x60] sm:$0xff]
      %v7934 = vld [vmem:[%s7920 + $0x68] sm:$0xff]
      %v7935 = vld [vmem:[%s7920 + $0x70] sm:$0xff]
      %v7936 = vld [vmem:[%s7920 + $0x78] sm:$0xff]
      %v7937 = vld [vmem:[%s7920 + $0x80] sm:$0xff]
      %v7938 = vld [vmem:[%s7920 + $0x88] sm:$0xff]
      %v7939 = vld [vmem:[%s7920 + $0x90] sm:$0xff]
      %v7940 = vld [vmem:[%s7920 + $0x98] sm:$0xff]
      %v7941 = vld [vmem:[%s7920 + $0xa0] sm:$0xff]
      %v7942 = vld [vmem:[%s7920 + $0xa8] sm:$0xff]
      %v7943 = vld [vmem:[%s7920 + $0xb0] sm:$0xff]
      %v7944 = vld [vmem:[%s7920 + $0xb8] sm:$0xff]
      %v7945 = vld [vmem:[%s7920 + $0xc0] sm:$0xff]
      %v7946 = vld [vmem:[%s7920 + $0xc8] sm:$0xff]
      %v7947 = vld [vmem:[%s7920 + $0xd0] sm:$0xff]
      %v7948 = vld [vmem:[%s7920 + $0xd8] sm:$0xff]
      %v7949 = vld [vmem:[%s7920 + $0xe0] sm:$0xff]
      %v7950 = vld [vmem:[%s7920 + $0xe8] sm:$0xff]
      %v7951 = vld [vmem:[%s7920 + $0xf0] sm:$0xff]
      %v7952 = vld [vmem:[%s7920 + $0xf8] sm:$0xff]
      %v7953 = vld [vmem:[%s7920 + $0x100] sm:$0xff]
      %v7954 = vld [vmem:[%s7920 + $0x108] sm:$0xff]
      %v7955 = vld [vmem:[%s7920 + $0x110] sm:$0xff]
      %v7956 = vld [vmem:[%s7920 + $0x118] sm:$0xff]
      %v7957 = vld [vmem:[%s7920 + $0x120] sm:$0xff]
      %v7958 = vld [vmem:[%s7920 + $0x128] sm:$0xff]
      %v7959 = vld [vmem:[%s7920 + $0x130] sm:$0xff]
      %v7960 = vld [vmem:[%s7920 + $0x138] sm:$0xff]
      %v7961 = vld [vmem:[%s7920 + $0x140] sm:$0xff]
      %v7962 = vld [vmem:[%s7920 + $0x148] sm:$0xff]
      %v7963 = vld [vmem:[%s7920 + $0x150] sm:$0xff]
      %v7964 = vld [vmem:[%s7920 + $0x158] sm:$0xff]
      %8009 = vrot.lane.b32.xlu0 %v7921, 20
      %v8010 = vpop.permute.xlu0 %8009
      %8011 = vrot.lane.b32.xlu0 %v7922, 20
      %v8012 = vpop.permute.xlu0 %8011
      %8013 = vrot.lane.b32.xlu0 %v7923, 20
      %v8014 = vpop.permute.xlu0 %8013
      %8015 = vrot.lane.b32.xlu0 %v7924, 20
      %v8016 = vpop.permute.xlu0 %8015
      %8017 = vrot.lane.b32.xlu0 %v7925, 20
      %v8018 = vpop.permute.xlu0 %8017
      %8019 = vrot.lane.b32.xlu0 %v7926, 20
      %v8020 = vpop.permute.xlu0 %8019
      %8021 = vrot.lane.b32.xlu0 %v7927, 20
      %v8022 = vpop.permute.xlu0 %8021
      %8023 = vrot.lane.b32.xlu0 %v7928, 20
      %v8024 = vpop.permute.xlu0 %8023
      %8025 = vrot.lane.b32.xlu0 %v7929, 20
      %v8026 = vpop.permute.xlu0 %8025
      %8027 = vrot.lane.b32.xlu0 %v7930, 20
      %v8028 = vpop.permute.xlu0 %8027
      %8029 = vrot.lane.b32.xlu0 %v7931, 20
      %v8030 = vpop.permute.xlu0 %8029
      %8031 = vrot.lane.b32.xlu0 %v7932, 20
      %v8032 = vpop.permute.xlu0 %8031
      %8033 = vrot.lane.b32.xlu0 %v7933, 20
      %v8034 = vpop.permute.xlu0 %8033
      %8035 = vrot.lane.b32.xlu0 %v7934, 20
      %v8036 = vpop.permute.xlu0 %8035
      %8037 = vrot.lane.b32.xlu0 %v7935, 20
      %v8038 = vpop.permute.xlu0 %8037
      %8039 = vrot.lane.b32.xlu0 %v7936, 20
      %v8040 = vpop.permute.xlu0 %8039
      %8041 = vrot.lane.b32.xlu0 %v7937, 20
      %v8042 = vpop.permute.xlu0 %8041
      %8043 = vrot.lane.b32.xlu0 %v7938, 20
      %v8044 = vpop.permute.xlu0 %8043
      %8045 = vrot.lane.b32.xlu0 %v7939, 20
      %v8046 = vpop.permute.xlu0 %8045
      %8047 = vrot.lane.b32.xlu0 %v7940, 20
      %v8048 = vpop.permute.xlu0 %8047
      %8049 = vrot.lane.b32.xlu0 %v7941, 20
      %v8050 = vpop.permute.xlu0 %8049
      %8051 = vrot.lane.b32.xlu0 %v7942, 20
      %v8052 = vpop.permute.xlu0 %8051
      %8053 = vrot.lane.b32.xlu0 %v7943, 20
      %v8054 = vpop.permute.xlu0 %8053
      %8055 = vrot.lane.b32.xlu0 %v7944, 20
      %v8056 = vpop.permute.xlu0 %8055
      %8057 = vrot.lane.b32.xlu0 %v7945, 20
      %v8058 = vpop.permute.xlu0 %8057
      %8059 = vrot.lane.b32.xlu0 %v7946, 20
      %v8060 = vpop.permute.xlu0 %8059
      %8061 = vrot.lane.b32.xlu0 %v7947, 20
      %v8062 = vpop.permute.xlu0 %8061
      %8063 = vrot.lane.b32.xlu0 %v7948, 20
      %v8064 = vpop.permute.xlu0 %8063
      %8065 = vrot.lane.b32.xlu0 %v7949, 20
      %v8066 = vpop.permute.xlu0 %8065
      %8067 = vrot.lane.b32.xlu0 %v7950, 20
      %v8068 = vpop.permute.xlu0 %8067
      %8069 = vrot.lane.b32.xlu0 %v7951, 20
      %v8070 = vpop.permute.xlu0 %8069
      %8071 = vrot.lane.b32.xlu0 %v7952, 20
      %v8072 = vpop.permute.xlu0 %8071
      %8073 = vrot.lane.b32.xlu0 %v7953, 20
      %v8074 = vpop.permute.xlu0 %8073
      %8075 = vrot.lane.b32.xlu0 %v7954, 20
      %v8076 = vpop.permute.xlu0 %8075
      %8077 = vrot.lane.b32.xlu0 %v7955, 20
      %v8078 = vpop.permute.xlu0 %8077
      %8079 = vrot.lane.b32.xlu0 %v7956, 20
      %v8080 = vpop.permute.xlu0 %8079
      %8081 = vrot.lane.b32.xlu0 %v7957, 20
      %v8082 = vpop.permute.xlu0 %8081
      %8083 = vrot.lane.b32.xlu0 %v7958, 20
      %v8084 = vpop.permute.xlu0 %8083
      %8085 = vrot.lane.b32.xlu0 %v7959, 20
      %v8086 = vpop.permute.xlu0 %8085
      %8087 = vrot.lane.b32.xlu0 %v7960, 20
      %v8088 = vpop.permute.xlu0 %8087
      %8089 = vrot.lane.b32.xlu0 %v7961, 20
      %v8090 = vpop.permute.xlu0 %8089
      %8091 = vrot.lane.b32.xlu0 %v7962, 20
      %v8092 = vpop.permute.xlu0 %8091
      %8093 = vrot.lane.b32.xlu0 %v7963, 20
      %v8094 = vpop.permute.xlu0 %8093
      %8095 = vrot.lane.b32.xlu0 %v7964, 20
      %v8096 = vpop.permute.xlu0 %8095
      %8141 = vst.msk [vmem:[#allocation2] sm:$0xff] %vm2239, %v8010
      %8142 = vst.msk [vmem:[#allocation2 + $0x8] sm:$0xff] %vm2239, %v8012
      %8143 = vst.msk [vmem:[#allocation2 + $0x10] sm:$0xff] %vm2239, %v8014
      %8144 = vst.msk [vmem:[#allocation2 + $0x18] sm:$0xff] %vm2239, %v8016
      %8145 = vst.msk [vmem:[#allocation2 + $0x20] sm:$0xff] %vm2239, %v8018
      %8146 = vst.msk [vmem:[#allocation2 + $0x28] sm:$0xff] %vm2239, %v8020
      %8147 = vst.msk [vmem:[#allocation2 + $0x30] sm:$0xff] %vm2239, %v8022
      %8148 = vst.msk [vmem:[#allocation2 + $0x38] sm:$0xff] %vm2239, %v8024
      %8149 = vst.msk [vmem:[#allocation2 + $0x40] sm:$0xff] %vm2239, %v8026
      %8150 = vst.msk [vmem:[#allocation2 + $0x48] sm:$0xff] %vm2239, %v8028
      %8151 = vst.msk [vmem:[#allocation2 + $0x50] sm:$0xff] %vm2239, %v8030
      %8152 = vst.msk [vmem:[#allocation2 + $0x58] sm:$0xff] %vm2239, %v8032
      %8153 = vst.msk [vmem:[#allocation2 + $0x60] sm:$0xff] %vm2239, %v8034
      %8154 = vst.msk [vmem:[#allocation2 + $0x68] sm:$0xff] %vm2239, %v8036
      %8155 = vst.msk [vmem:[#allocation2 + $0x70] sm:$0xff] %vm2239, %v8038
      %8156 = vst.msk [vmem:[#allocation2 + $0x78] sm:$0xff] %vm2239, %v8040
      %8157 = vst.msk [vmem:[#allocation2 + $0x80] sm:$0xff] %vm2239, %v8042
      %8158 = vst.msk [vmem:[#allocation2 + $0x88] sm:$0xff] %vm2239, %v8044
      %8159 = vst.msk [vmem:[#allocation2 + $0x90] sm:$0xff] %vm2239, %v8046
      %8160 = vst.msk [vmem:[#allocation2 + $0x98] sm:$0xff] %vm2239, %v8048
      %8161 = vst.msk [vmem:[#allocation2 + $0xa0] sm:$0xff] %vm2239, %v8050
      %8162 = vst.msk [vmem:[#allocation2 + $0xa8] sm:$0xff] %vm2239, %v8052
      %8163 = vst.msk [vmem:[#allocation2 + $0xb0] sm:$0xff] %vm2239, %v8054
      %8164 = vst.msk [vmem:[#allocation2 + $0xb8] sm:$0xff] %vm2239, %v8056
      %8165 = vst.msk [vmem:[#allocation2 + $0xc0] sm:$0xff] %vm2239, %v8058
      %8166 = vst.msk [vmem:[#allocation2 + $0xc8] sm:$0xff] %vm2239, %v8060
      %8167 = vst.msk [vmem:[#allocation2 + $0xd0] sm:$0xff] %vm2239, %v8062
      %8168 = vst.msk [vmem:[#allocation2 + $0xd8] sm:$0xff] %vm2239, %v8064
      %8169 = vst.msk [vmem:[#allocation2 + $0xe0] sm:$0xff] %vm2239, %v8066
      %8170 = vst.msk [vmem:[#allocation2 + $0xe8] sm:$0xff] %vm2239, %v8068
      %8171 = vst.msk [vmem:[#allocation2 + $0xf0] sm:$0xff] %vm2239, %v8070
      %8172 = vst.msk [vmem:[#allocation2 + $0xf8] sm:$0xff] %vm2239, %v8072
      %8173 = vst.msk [vmem:[#allocation2 + $0x100] sm:$0xff] %vm2239, %v8074
      %8174 = vst.msk [vmem:[#allocation2 + $0x108] sm:$0xff] %vm2239, %v8076
      %8175 = vst.msk [vmem:[#allocation2 + $0x110] sm:$0xff] %vm2239, %v8078
      %8176 = vst.msk [vmem:[#allocation2 + $0x118] sm:$0xff] %vm2239, %v8080
      %8177 = vst.msk [vmem:[#allocation2 + $0x120] sm:$0xff] %vm2239, %v8082
      %8178 = vst.msk [vmem:[#allocation2 + $0x128] sm:$0xff] %vm2239, %v8084
      %8179 = vst.msk [vmem:[#allocation2 + $0x130] sm:$0xff] %vm2239, %v8086
      %8180 = vst.msk [vmem:[#allocation2 + $0x138] sm:$0xff] %vm2239, %v8088
      %8181 = vst.msk [vmem:[#allocation2 + $0x140] sm:$0xff] %vm2239, %v8090
      %8182 = vst.msk [vmem:[#allocation2 + $0x148] sm:$0xff] %vm2239, %v8092
      %8183 = vst.msk [vmem:[#allocation2 + $0x150] sm:$0xff] %vm2239, %v8094
      %8184 = vst.msk [vmem:[#allocation2 + $0x158] sm:$0xff] %vm2239, %v8096
      %s8185 = sadd.s32 %s302, 195
      %s8186 = scalar_lea.vmem %s291, %s8185
      %v8187 = vld [vmem:[%s8186] sm:$0xff]
      %v8188 = vld [vmem:[%s8186 + $0x8] sm:$0xff]
      %v8189 = vld [vmem:[%s8186 + $0x10] sm:$0xff]
      %v8190 = vld [vmem:[%s8186 + $0x18] sm:$0xff]
      %v8191 = vld [vmem:[%s8186 + $0x20] sm:$0xff]
      %v8192 = vld [vmem:[%s8186 + $0x28] sm:$0xff]
      %v8193 = vld [vmem:[%s8186 + $0x30] sm:$0xff]
      %v8194 = vld [vmem:[%s8186 + $0x38] sm:$0xff]
      %v8195 = vld [vmem:[%s8186 + $0x40] sm:$0xff]
      %v8196 = vld [vmem:[%s8186 + $0x48] sm:$0xff]
      %v8197 = vld [vmem:[%s8186 + $0x50] sm:$0xff]
      %v8198 = vld [vmem:[%s8186 + $0x58] sm:$0xff]
      %v8199 = vld [vmem:[%s8186 + $0x60] sm:$0xff]
      %v8200 = vld [vmem:[%s8186 + $0x68] sm:$0xff]
      %v8201 = vld [vmem:[%s8186 + $0x70] sm:$0xff]
      %v8202 = vld [vmem:[%s8186 + $0x78] sm:$0xff]
      %v8203 = vld [vmem:[%s8186 + $0x80] sm:$0xff]
      %v8204 = vld [vmem:[%s8186 + $0x88] sm:$0xff]
      %v8205 = vld [vmem:[%s8186 + $0x90] sm:$0xff]
      %v8206 = vld [vmem:[%s8186 + $0x98] sm:$0xff]
      %v8207 = vld [vmem:[%s8186 + $0xa0] sm:$0xff]
      %v8208 = vld [vmem:[%s8186 + $0xa8] sm:$0xff]
      %v8209 = vld [vmem:[%s8186 + $0xb0] sm:$0xff]
      %v8210 = vld [vmem:[%s8186 + $0xb8] sm:$0xff]
      %v8211 = vld [vmem:[%s8186 + $0xc0] sm:$0xff]
      %v8212 = vld [vmem:[%s8186 + $0xc8] sm:$0xff]
      %v8213 = vld [vmem:[%s8186 + $0xd0] sm:$0xff]
      %v8214 = vld [vmem:[%s8186 + $0xd8] sm:$0xff]
      %v8215 = vld [vmem:[%s8186 + $0xe0] sm:$0xff]
      %v8216 = vld [vmem:[%s8186 + $0xe8] sm:$0xff]
      %v8217 = vld [vmem:[%s8186 + $0xf0] sm:$0xff]
      %v8218 = vld [vmem:[%s8186 + $0xf8] sm:$0xff]
      %v8219 = vld [vmem:[%s8186 + $0x100] sm:$0xff]
      %v8220 = vld [vmem:[%s8186 + $0x108] sm:$0xff]
      %v8221 = vld [vmem:[%s8186 + $0x110] sm:$0xff]
      %v8222 = vld [vmem:[%s8186 + $0x118] sm:$0xff]
      %v8223 = vld [vmem:[%s8186 + $0x120] sm:$0xff]
      %v8224 = vld [vmem:[%s8186 + $0x128] sm:$0xff]
      %v8225 = vld [vmem:[%s8186 + $0x130] sm:$0xff]
      %v8226 = vld [vmem:[%s8186 + $0x138] sm:$0xff]
      %v8227 = vld [vmem:[%s8186 + $0x140] sm:$0xff]
      %v8228 = vld [vmem:[%s8186 + $0x148] sm:$0xff]
      %v8229 = vld [vmem:[%s8186 + $0x150] sm:$0xff]
      %v8230 = vld [vmem:[%s8186 + $0x158] sm:$0xff]
      %8275 = vrot.lane.b32.xlu0 %v8187, 24
      %v8276 = vpop.permute.xlu0 %8275
      %8277 = vrot.lane.b32.xlu0 %v8188, 24
      %v8278 = vpop.permute.xlu0 %8277
      %8279 = vrot.lane.b32.xlu0 %v8189, 24
      %v8280 = vpop.permute.xlu0 %8279
      %8281 = vrot.lane.b32.xlu0 %v8190, 24
      %v8282 = vpop.permute.xlu0 %8281
      %8283 = vrot.lane.b32.xlu0 %v8191, 24
      %v8284 = vpop.permute.xlu0 %8283
      %8285 = vrot.lane.b32.xlu0 %v8192, 24
      %v8286 = vpop.permute.xlu0 %8285
      %8287 = vrot.lane.b32.xlu0 %v8193, 24
      %v8288 = vpop.permute.xlu0 %8287
      %8289 = vrot.lane.b32.xlu0 %v8194, 24
      %v8290 = vpop.permute.xlu0 %8289
      %8291 = vrot.lane.b32.xlu0 %v8195, 24
      %v8292 = vpop.permute.xlu0 %8291
      %8293 = vrot.lane.b32.xlu0 %v8196, 24
      %v8294 = vpop.permute.xlu0 %8293
      %8295 = vrot.lane.b32.xlu0 %v8197, 24
      %v8296 = vpop.permute.xlu0 %8295
      %8297 = vrot.lane.b32.xlu0 %v8198, 24
      %v8298 = vpop.permute.xlu0 %8297
      %8299 = vrot.lane.b32.xlu0 %v8199, 24
      %v8300 = vpop.permute.xlu0 %8299
      %8301 = vrot.lane.b32.xlu0 %v8200, 24
      %v8302 = vpop.permute.xlu0 %8301
      %8303 = vrot.lane.b32.xlu0 %v8201, 24
      %v8304 = vpop.permute.xlu0 %8303
      %8305 = vrot.lane.b32.xlu0 %v8202, 24
      %v8306 = vpop.permute.xlu0 %8305
      %8307 = vrot.lane.b32.xlu0 %v8203, 24
      %v8308 = vpop.permute.xlu0 %8307
      %8309 = vrot.lane.b32.xlu0 %v8204, 24
      %v8310 = vpop.permute.xlu0 %8309
      %8311 = vrot.lane.b32.xlu0 %v8205, 24
      %v8312 = vpop.permute.xlu0 %8311
      %8313 = vrot.lane.b32.xlu0 %v8206, 24
      %v8314 = vpop.permute.xlu0 %8313
      %8315 = vrot.lane.b32.xlu0 %v8207, 24
      %v8316 = vpop.permute.xlu0 %8315
      %8317 = vrot.lane.b32.xlu0 %v8208, 24
      %v8318 = vpop.permute.xlu0 %8317
      %8319 = vrot.lane.b32.xlu0 %v8209, 24
      %v8320 = vpop.permute.xlu0 %8319
      %8321 = vrot.lane.b32.xlu0 %v8210, 24
      %v8322 = vpop.permute.xlu0 %8321
      %8323 = vrot.lane.b32.xlu0 %v8211, 24
      %v8324 = vpop.permute.xlu0 %8323
      %8325 = vrot.lane.b32.xlu0 %v8212, 24
      %v8326 = vpop.permute.xlu0 %8325
      %8327 = vrot.lane.b32.xlu0 %v8213, 24
      %v8328 = vpop.permute.xlu0 %8327
      %8329 = vrot.lane.b32.xlu0 %v8214, 24
      %v8330 = vpop.permute.xlu0 %8329
      %8331 = vrot.lane.b32.xlu0 %v8215, 24
      %v8332 = vpop.permute.xlu0 %8331
      %8333 = vrot.lane.b32.xlu0 %v8216, 24
      %v8334 = vpop.permute.xlu0 %8333
      %8335 = vrot.lane.b32.xlu0 %v8217, 24
      %v8336 = vpop.permute.xlu0 %8335
      %8337 = vrot.lane.b32.xlu0 %v8218, 24
      %v8338 = vpop.permute.xlu0 %8337
      %8339 = vrot.lane.b32.xlu0 %v8219, 24
      %v8340 = vpop.permute.xlu0 %8339
      %8341 = vrot.lane.b32.xlu0 %v8220, 24
      %v8342 = vpop.permute.xlu0 %8341
      %8343 = vrot.lane.b32.xlu0 %v8221, 24
      %v8344 = vpop.permute.xlu0 %8343
      %8345 = vrot.lane.b32.xlu0 %v8222, 24
      %v8346 = vpop.permute.xlu0 %8345
      %8347 = vrot.lane.b32.xlu0 %v8223, 24
      %v8348 = vpop.permute.xlu0 %8347
      %8349 = vrot.lane.b32.xlu0 %v8224, 24
      %v8350 = vpop.permute.xlu0 %8349
      %8351 = vrot.lane.b32.xlu0 %v8225, 24
      %v8352 = vpop.permute.xlu0 %8351
      %8353 = vrot.lane.b32.xlu0 %v8226, 24
      %v8354 = vpop.permute.xlu0 %8353
      %8355 = vrot.lane.b32.xlu0 %v8227, 24
      %v8356 = vpop.permute.xlu0 %8355
      %8357 = vrot.lane.b32.xlu0 %v8228, 24
      %v8358 = vpop.permute.xlu0 %8357
      %8359 = vrot.lane.b32.xlu0 %v8229, 24
      %v8360 = vpop.permute.xlu0 %8359
      %8361 = vrot.lane.b32.xlu0 %v8230, 24
      %v8362 = vpop.permute.xlu0 %8361
      %8407 = vst.msk [vmem:[#allocation2] sm:$0xff] %vm2506, %v8276
      %8408 = vst.msk [vmem:[#allocation2 + $0x8] sm:$0xff] %vm2506, %v8278
      %8409 = vst.msk [vmem:[#allocation2 + $0x10] sm:$0xff] %vm2506, %v8280
      %8410 = vst.msk [vmem:[#allocation2 + $0x18] sm:$0xff] %vm2506, %v8282
      %8411 = vst.msk [vmem:[#allocation2 + $0x20] sm:$0xff] %vm2506, %v8284
      %8412 = vst.msk [vmem:[#allocation2 + $0x28] sm:$0xff] %vm2506, %v8286
      %8413 = vst.msk [vmem:[#allocation2 + $0x30] sm:$0xff] %vm2506, %v8288
      %8414 = vst.msk [vmem:[#allocation2 + $0x38] sm:$0xff] %vm2506, %v8290
      %8415 = vst.msk [vmem:[#allocation2 + $0x40] sm:$0xff] %vm2506, %v8292
      %8416 = vst.msk [vmem:[#allocation2 + $0x48] sm:$0xff] %vm2506, %v8294
      %8417 = vst.msk [vmem:[#allocation2 + $0x50] sm:$0xff] %vm2506, %v8296
      %8418 = vst.msk [vmem:[#allocation2 + $0x58] sm:$0xff] %vm2506, %v8298
      %8419 = vst.msk [vmem:[#allocation2 + $0x60] sm:$0xff] %vm2506, %v8300
      %8420 = vst.msk [vmem:[#allocation2 + $0x68] sm:$0xff] %vm2506, %v8302
      %8421 = vst.msk [vmem:[#allocation2 + $0x70] sm:$0xff] %vm2506, %v8304
      %8422 = vst.msk [vmem:[#allocation2 + $0x78] sm:$0xff] %vm2506, %v8306
      %8423 = vst.msk [vmem:[#allocation2 + $0x80] sm:$0xff] %vm2506, %v8308
      %8424 = vst.msk [vmem:[#allocation2 + $0x88] sm:$0xff] %vm2506, %v8310
      %8425 = vst.msk [vmem:[#allocation2 + $0x90] sm:$0xff] %vm2506, %v8312
      %8426 = vst.msk [vmem:[#allocation2 + $0x98] sm:$0xff] %vm2506, %v8314
      %8427 = vst.msk [vmem:[#allocation2 + $0xa0] sm:$0xff] %vm2506, %v8316
      %8428 = vst.msk [vmem:[#allocation2 + $0xa8] sm:$0xff] %vm2506, %v8318
      %8429 = vst.msk [vmem:[#allocation2 + $0xb0] sm:$0xff] %vm2506, %v8320
      %8430 = vst.msk [vmem:[#allocation2 + $0xb8] sm:$0xff] %vm2506, %v8322
      %8431 = vst.msk [vmem:[#allocation2 + $0xc0] sm:$0xff] %vm2506, %v8324
      %8432 = vst.msk [vmem:[#allocation2 + $0xc8] sm:$0xff] %vm2506, %v8326
      %8433 = vst.msk [vmem:[#allocation2 + $0xd0] sm:$0xff] %vm2506, %v8328
      %8434 = vst.msk [vmem:[#allocation2 + $0xd8] sm:$0xff] %vm2506, %v8330
      %8435 = vst.msk [vmem:[#allocation2 + $0xe0] sm:$0xff] %vm2506, %v8332
      %8436 = vst.msk [vmem:[#allocation2 + $0xe8] sm:$0xff] %vm2506, %v8334
      %8437 = vst.msk [vmem:[#allocation2 + $0xf0] sm:$0xff] %vm2506, %v8336
      %8438 = vst.msk [vmem:[#allocation2 + $0xf8] sm:$0xff] %vm2506, %v8338
      %8439 = vst.msk [vmem:[#allocation2 + $0x100] sm:$0xff] %vm2506, %v8340
      %8440 = vst.msk [vmem:[#allocation2 + $0x108] sm:$0xff] %vm2506, %v8342
      %8441 = vst.msk [vmem:[#allocation2 + $0x110] sm:$0xff] %vm2506, %v8344
      %8442 = vst.msk [vmem:[#allocation2 + $0x118] sm:$0xff] %vm2506, %v8346
      %8443 = vst.msk [vmem:[#allocation2 + $0x120] sm:$0xff] %vm2506, %v8348
      %8444 = vst.msk [vmem:[#allocation2 + $0x128] sm:$0xff] %vm2506, %v8350
      %8445 = vst.msk [vmem:[#allocation2 + $0x130] sm:$0xff] %vm2506, %v8352
      %8446 = vst.msk [vmem:[#allocation2 + $0x138] sm:$0xff] %vm2506, %v8354
      %8447 = vst.msk [vmem:[#allocation2 + $0x140] sm:$0xff] %vm2506, %v8356
      %8448 = vst.msk [vmem:[#allocation2 + $0x148] sm:$0xff] %vm2506, %v8358
      %8449 = vst.msk [vmem:[#allocation2 + $0x150] sm:$0xff] %vm2506, %v8360
      %8450 = vst.msk [vmem:[#allocation2 + $0x158] sm:$0xff] %vm2506, %v8362
      %s8451 = sadd.s32 %s302, 198
      %s8452 = scalar_lea.vmem %s291, %s8451
      %v8453 = vld [vmem:[%s8452] sm:$0xff]
      %v8454 = vld [vmem:[%s8452 + $0x8] sm:$0xff]
      %v8455 = vld [vmem:[%s8452 + $0x10] sm:$0xff]
      %v8456 = vld [vmem:[%s8452 + $0x18] sm:$0xff]
      %v8457 = vld [vmem:[%s8452 + $0x20] sm:$0xff]
      %v8458 = vld [vmem:[%s8452 + $0x28] sm:$0xff]
      %v8459 = vld [vmem:[%s8452 + $0x30] sm:$0xff]
      %v8460 = vld [vmem:[%s8452 + $0x38] sm:$0xff]
      %v8461 = vld [vmem:[%s8452 + $0x40] sm:$0xff]
      %v8462 = vld [vmem:[%s8452 + $0x48] sm:$0xff]
      %v8463 = vld [vmem:[%s8452 + $0x50] sm:$0xff]
      %v8464 = vld [vmem:[%s8452 + $0x58] sm:$0xff]
      %v8465 = vld [vmem:[%s8452 + $0x60] sm:$0xff]
      %v8466 = vld [vmem:[%s8452 + $0x68] sm:$0xff]
      %v8467 = vld [vmem:[%s8452 + $0x70] sm:$0xff]
      %v8468 = vld [vmem:[%s8452 + $0x78] sm:$0xff]
      %v8469 = vld [vmem:[%s8452 + $0x80] sm:$0xff]
      %v8470 = vld [vmem:[%s8452 + $0x88] sm:$0xff]
      %v8471 = vld [vmem:[%s8452 + $0x90] sm:$0xff]
      %v8472 = vld [vmem:[%s8452 + $0x98] sm:$0xff]
      %v8473 = vld [vmem:[%s8452 + $0xa0] sm:$0xff]
      %v8474 = vld [vmem:[%s8452 + $0xa8] sm:$0xff]
      %v8475 = vld [vmem:[%s8452 + $0xb0] sm:$0xff]
      %v8476 = vld [vmem:[%s8452 + $0xb8] sm:$0xff]
      %v8477 = vld [vmem:[%s8452 + $0xc0] sm:$0xff]
      %v8478 = vld [vmem:[%s8452 + $0xc8] sm:$0xff]
      %v8479 = vld [vmem:[%s8452 + $0xd0] sm:$0xff]
      %v8480 = vld [vmem:[%s8452 + $0xd8] sm:$0xff]
      %v8481 = vld [vmem:[%s8452 + $0xe0] sm:$0xff]
      %v8482 = vld [vmem:[%s8452 + $0xe8] sm:$0xff]
      %v8483 = vld [vmem:[%s8452 + $0xf0] sm:$0xff]
      %v8484 = vld [vmem:[%s8452 + $0xf8] sm:$0xff]
      %v8485 = vld [vmem:[%s8452 + $0x100] sm:$0xff]
      %v8486 = vld [vmem:[%s8452 + $0x108] sm:$0xff]
      %v8487 = vld [vmem:[%s8452 + $0x110] sm:$0xff]
      %v8488 = vld [vmem:[%s8452 + $0x118] sm:$0xff]
      %v8489 = vld [vmem:[%s8452 + $0x120] sm:$0xff]
      %v8490 = vld [vmem:[%s8452 + $0x128] sm:$0xff]
      %v8491 = vld [vmem:[%s8452 + $0x130] sm:$0xff]
      %v8492 = vld [vmem:[%s8452 + $0x138] sm:$0xff]
      %v8493 = vld [vmem:[%s8452 + $0x140] sm:$0xff]
      %v8494 = vld [vmem:[%s8452 + $0x148] sm:$0xff]
      %v8495 = vld [vmem:[%s8452 + $0x150] sm:$0xff]
      %v8496 = vld [vmem:[%s8452 + $0x158] sm:$0xff]
      %8541 = vrot.lane.b32.xlu0 %v8453, 28
      %v8542 = vpop.permute.xlu0 %8541
      %8543 = vrot.lane.b32.xlu0 %v8454, 28
      %v8544 = vpop.permute.xlu0 %8543
      %8545 = vrot.lane.b32.xlu0 %v8455, 28
      %v8546 = vpop.permute.xlu0 %8545
      %8547 = vrot.lane.b32.xlu0 %v8456, 28
      %v8548 = vpop.permute.xlu0 %8547
      %8549 = vrot.lane.b32.xlu0 %v8457, 28
      %v8550 = vpop.permute.xlu0 %8549
      %8551 = vrot.lane.b32.xlu0 %v8458, 28
      %v8552 = vpop.permute.xlu0 %8551
      %8553 = vrot.lane.b32.xlu0 %v8459, 28
      %v8554 = vpop.permute.xlu0 %8553
      %8555 = vrot.lane.b32.xlu0 %v8460, 28
      %v8556 = vpop.permute.xlu0 %8555
      %8557 = vrot.lane.b32.xlu0 %v8461, 28
      %v8558 = vpop.permute.xlu0 %8557
      %8559 = vrot.lane.b32.xlu0 %v8462, 28
      %v8560 = vpop.permute.xlu0 %8559
      %8561 = vrot.lane.b32.xlu0 %v8463, 28
      %v8562 = vpop.permute.xlu0 %8561
      %8563 = vrot.lane.b32.xlu0 %v8464, 28
      %v8564 = vpop.permute.xlu0 %8563
      %8565 = vrot.lane.b32.xlu0 %v8465, 28
      %v8566 = vpop.permute.xlu0 %8565
      %8567 = vrot.lane.b32.xlu0 %v8466, 28
      %v8568 = vpop.permute.xlu0 %8567
      %8569 = vrot.lane.b32.xlu0 %v8467, 28
      %v8570 = vpop.permute.xlu0 %8569
      %8571 = vrot.lane.b32.xlu0 %v8468, 28
      %v8572 = vpop.permute.xlu0 %8571
      %8573 = vrot.lane.b32.xlu0 %v8469, 28
      %v8574 = vpop.permute.xlu0 %8573
      %8575 = vrot.lane.b32.xlu0 %v8470, 28
      %v8576 = vpop.permute.xlu0 %8575
      %8577 = vrot.lane.b32.xlu0 %v8471, 28
      %v8578 = vpop.permute.xlu0 %8577
      %8579 = vrot.lane.b32.xlu0 %v8472, 28
      %v8580 = vpop.permute.xlu0 %8579
      %8581 = vrot.lane.b32.xlu0 %v8473, 28
      %v8582 = vpop.permute.xlu0 %8581
      %8583 = vrot.lane.b32.xlu0 %v8474, 28
      %v8584 = vpop.permute.xlu0 %8583
      %8585 = vrot.lane.b32.xlu0 %v8475, 28
      %v8586 = vpop.permute.xlu0 %8585
      %8587 = vrot.lane.b32.xlu0 %v8476, 28
      %v8588 = vpop.permute.xlu0 %8587
      %8589 = vrot.lane.b32.xlu0 %v8477, 28
      %v8590 = vpop.permute.xlu0 %8589
      %8591 = vrot.lane.b32.xlu0 %v8478, 28
      %v8592 = vpop.permute.xlu0 %8591
      %8593 = vrot.lane.b32.xlu0 %v8479, 28
      %v8594 = vpop.permute.xlu0 %8593
      %8595 = vrot.lane.b32.xlu0 %v8480, 28
      %v8596 = vpop.permute.xlu0 %8595
      %8597 = vrot.lane.b32.xlu0 %v8481, 28
      %v8598 = vpop.permute.xlu0 %8597
      %8599 = vrot.lane.b32.xlu0 %v8482, 28
      %v8600 = vpop.permute.xlu0 %8599
      %8601 = vrot.lane.b32.xlu0 %v8483, 28
      %v8602 = vpop.permute.xlu0 %8601
      %8603 = vrot.lane.b32.xlu0 %v8484, 28
      %v8604 = vpop.permute.xlu0 %8603
      %8605 = vrot.lane.b32.xlu0 %v8485, 28
      %v8606 = vpop.permute.xlu0 %8605
      %8607 = vrot.lane.b32.xlu0 %v8486, 28
      %v8608 = vpop.permute.xlu0 %8607
      %8609 = vrot.lane.b32.xlu0 %v8487, 28
      %v8610 = vpop.permute.xlu0 %8609
      %8611 = vrot.lane.b32.xlu0 %v8488, 28
      %v8612 = vpop.permute.xlu0 %8611
      %8613 = vrot.lane.b32.xlu0 %v8489, 28
      %v8614 = vpop.permute.xlu0 %8613
      %8615 = vrot.lane.b32.xlu0 %v8490, 28
      %v8616 = vpop.permute.xlu0 %8615
      %8617 = vrot.lane.b32.xlu0 %v8491, 28
      %v8618 = vpop.permute.xlu0 %8617
      %8619 = vrot.lane.b32.xlu0 %v8492, 28
      %v8620 = vpop.permute.xlu0 %8619
      %8621 = vrot.lane.b32.xlu0 %v8493, 28
      %v8622 = vpop.permute.xlu0 %8621
      %8623 = vrot.lane.b32.xlu0 %v8494, 28
      %v8624 = vpop.permute.xlu0 %8623
      %8625 = vrot.lane.b32.xlu0 %v8495, 28
      %v8626 = vpop.permute.xlu0 %8625
      %8627 = vrot.lane.b32.xlu0 %v8496, 28
      %v8628 = vpop.permute.xlu0 %8627
      %8673 = vst.msk [vmem:[#allocation2] sm:$0xff] %vm2773, %v8542
      %8674 = vst.msk [vmem:[#allocation2 + $0x8] sm:$0xff] %vm2773, %v8544
      %8675 = vst.msk [vmem:[#allocation2 + $0x10] sm:$0xff] %vm2773, %v8546
      %8676 = vst.msk [vmem:[#allocation2 + $0x18] sm:$0xff] %vm2773, %v8548
      %8677 = vst.msk [vmem:[#allocation2 + $0x20] sm:$0xff] %vm2773, %v8550
      %8678 = vst.msk [vmem:[#allocation2 + $0x28] sm:$0xff] %vm2773, %v8552
      %8679 = vst.msk [vmem:[#allocation2 + $0x30] sm:$0xff] %vm2773, %v8554
      %8680 = vst.msk [vmem:[#allocation2 + $0x38] sm:$0xff] %vm2773, %v8556
      %8681 = vst.msk [vmem:[#allocation2 + $0x40] sm:$0xff] %vm2773, %v8558
      %8682 = vst.msk [vmem:[#allocation2 + $0x48] sm:$0xff] %vm2773, %v8560
      %8683 = vst.msk [vmem:[#allocation2 + $0x50] sm:$0xff] %vm2773, %v8562
      %8684 = vst.msk [vmem:[#allocation2 + $0x58] sm:$0xff] %vm2773, %v8564
      %8685 = vst.msk [vmem:[#allocation2 + $0x60] sm:$0xff] %vm2773, %v8566
      %8686 = vst.msk [vmem:[#allocation2 + $0x68] sm:$0xff] %vm2773, %v8568
      %8687 = vst.msk [vmem:[#allocation2 + $0x70] sm:$0xff] %vm2773, %v8570
      %8688 = vst.msk [vmem:[#allocation2 + $0x78] sm:$0xff] %vm2773, %v8572
      %8689 = vst.msk [vmem:[#allocation2 + $0x80] sm:$0xff] %vm2773, %v8574
      %8690 = vst.msk [vmem:[#allocation2 + $0x88] sm:$0xff] %vm2773, %v8576
      %8691 = vst.msk [vmem:[#allocation2 + $0x90] sm:$0xff] %vm2773, %v8578
      %8692 = vst.msk [vmem:[#allocation2 + $0x98] sm:$0xff] %vm2773, %v8580
      %8693 = vst.msk [vmem:[#allocation2 + $0xa0] sm:$0xff] %vm2773, %v8582
      %8694 = vst.msk [vmem:[#allocation2 + $0xa8] sm:$0xff] %vm2773, %v8584
      %8695 = vst.msk [vmem:[#allocation2 + $0xb0] sm:$0xff] %vm2773, %v8586
      %8696 = vst.msk [vmem:[#allocation2 + $0xb8] sm:$0xff] %vm2773, %v8588
      %8697 = vst.msk [vmem:[#allocation2 + $0xc0] sm:$0xff] %vm2773, %v8590
      %8698 = vst.msk [vmem:[#allocation2 + $0xc8] sm:$0xff] %vm2773, %v8592
      %8699 = vst.msk [vmem:[#allocation2 + $0xd0] sm:$0xff] %vm2773, %v8594
      %8700 = vst.msk [vmem:[#allocation2 + $0xd8] sm:$0xff] %vm2773, %v8596
      %8701 = vst.msk [vmem:[#allocation2 + $0xe0] sm:$0xff] %vm2773, %v8598
      %8702 = vst.msk [vmem:[#allocation2 + $0xe8] sm:$0xff] %vm2773, %v8600
      %8703 = vst.msk [vmem:[#allocation2 + $0xf0] sm:$0xff] %vm2773, %v8602
      %8704 = vst.msk [vmem:[#allocation2 + $0xf8] sm:$0xff] %vm2773, %v8604
      %8705 = vst.msk [vmem:[#allocation2 + $0x100] sm:$0xff] %vm2773, %v8606
      %8706 = vst.msk [vmem:[#allocation2 + $0x108] sm:$0xff] %vm2773, %v8608
      %8707 = vst.msk [vmem:[#allocation2 + $0x110] sm:$0xff] %vm2773, %v8610
      %8708 = vst.msk [vmem:[#allocation2 + $0x118] sm:$0xff] %vm2773, %v8612
      %8709 = vst.msk [vmem:[#allocation2 + $0x120] sm:$0xff] %vm2773, %v8614
      %8710 = vst.msk [vmem:[#allocation2 + $0x128] sm:$0xff] %vm2773, %v8616
      %8711 = vst.msk [vmem:[#allocation2 + $0x130] sm:$0xff] %vm2773, %v8618
      %8712 = vst.msk [vmem:[#allocation2 + $0x138] sm:$0xff] %vm2773, %v8620
      %8713 = vst.msk [vmem:[#allocation2 + $0x140] sm:$0xff] %vm2773, %v8622
      %8714 = vst.msk [vmem:[#allocation2 + $0x148] sm:$0xff] %vm2773, %v8624
      %8715 = vst.msk [vmem:[#allocation2 + $0x150] sm:$0xff] %vm2773, %v8626
      %8716 = vst.msk [vmem:[#allocation2 + $0x158] sm:$0xff] %vm2773, %v8628
      %s8717 = sadd.s32 %s302, 201
      %s8718 = scalar_lea.vmem %s291, %s8717
      %v8719 = vld [vmem:[%s8718] sm:$0xff]
      %v8720 = vld [vmem:[%s8718 + $0x8] sm:$0xff]
      %v8721 = vld [vmem:[%s8718 + $0x10] sm:$0xff]
      %v8722 = vld [vmem:[%s8718 + $0x18] sm:$0xff]
      %v8723 = vld [vmem:[%s8718 + $0x20] sm:$0xff]
      %v8724 = vld [vmem:[%s8718 + $0x28] sm:$0xff]
      %v8725 = vld [vmem:[%s8718 + $0x30] sm:$0xff]
      %v8726 = vld [vmem:[%s8718 + $0x38] sm:$0xff]
      %v8727 = vld [vmem:[%s8718 + $0x40] sm:$0xff]
      %v8728 = vld [vmem:[%s8718 + $0x48] sm:$0xff]
      %v8729 = vld [vmem:[%s8718 + $0x50] sm:$0xff]
      %v8730 = vld [vmem:[%s8718 + $0x58] sm:$0xff]
      %v8731 = vld [vmem:[%s8718 + $0x60] sm:$0xff]
      %v8732 = vld [vmem:[%s8718 + $0x68] sm:$0xff]
      %v8733 = vld [vmem:[%s8718 + $0x70] sm:$0xff]
      %v8734 = vld [vmem:[%s8718 + $0x78] sm:$0xff]
      %v8735 = vld [vmem:[%s8718 + $0x80] sm:$0xff]
      %v8736 = vld [vmem:[%s8718 + $0x88] sm:$0xff]
      %v8737 = vld [vmem:[%s8718 + $0x90] sm:$0xff]
      %v8738 = vld [vmem:[%s8718 + $0x98] sm:$0xff]
      %v8739 = vld [vmem:[%s8718 + $0xa0] sm:$0xff]
      %v8740 = vld [vmem:[%s8718 + $0xa8] sm:$0xff]
      %v8741 = vld [vmem:[%s8718 + $0xb0] sm:$0xff]
      %v8742 = vld [vmem:[%s8718 + $0xb8] sm:$0xff]
      %v8743 = vld [vmem:[%s8718 + $0xc0] sm:$0xff]
      %v8744 = vld [vmem:[%s8718 + $0xc8] sm:$0xff]
      %v8745 = vld [vmem:[%s8718 + $0xd0] sm:$0xff]
      %v8746 = vld [vmem:[%s8718 + $0xd8] sm:$0xff]
      %v8747 = vld [vmem:[%s8718 + $0xe0] sm:$0xff]
      %v8748 = vld [vmem:[%s8718 + $0xe8] sm:$0xff]
      %v8749 = vld [vmem:[%s8718 + $0xf0] sm:$0xff]
      %v8750 = vld [vmem:[%s8718 + $0xf8] sm:$0xff]
      %v8751 = vld [vmem:[%s8718 + $0x100] sm:$0xff]
      %v8752 = vld [vmem:[%s8718 + $0x108] sm:$0xff]
      %v8753 = vld [vmem:[%s8718 + $0x110] sm:$0xff]
      %v8754 = vld [vmem:[%s8718 + $0x118] sm:$0xff]
      %v8755 = vld [vmem:[%s8718 + $0x120] sm:$0xff]
      %v8756 = vld [vmem:[%s8718 + $0x128] sm:$0xff]
      %v8757 = vld [vmem:[%s8718 + $0x130] sm:$0xff]
      %v8758 = vld [vmem:[%s8718 + $0x138] sm:$0xff]
      %v8759 = vld [vmem:[%s8718 + $0x140] sm:$0xff]
      %v8760 = vld [vmem:[%s8718 + $0x148] sm:$0xff]
      %v8761 = vld [vmem:[%s8718 + $0x150] sm:$0xff]
      %v8762 = vld [vmem:[%s8718 + $0x158] sm:$0xff]
      %8807 = vrot.lane.b32.xlu0 %v8719, 32
      %v8808 = vpop.permute.xlu0 %8807
      %8809 = vrot.lane.b32.xlu0 %v8720, 32
      %v8810 = vpop.permute.xlu0 %8809
      %8811 = vrot.lane.b32.xlu0 %v8721, 32
      %v8812 = vpop.permute.xlu0 %8811
      %8813 = vrot.lane.b32.xlu0 %v8722, 32
      %v8814 = vpop.permute.xlu0 %8813
      %8815 = vrot.lane.b32.xlu0 %v8723, 32
      %v8816 = vpop.permute.xlu0 %8815
      %8817 = vrot.lane.b32.xlu0 %v8724, 32
      %v8818 = vpop.permute.xlu0 %8817
      %8819 = vrot.lane.b32.xlu0 %v8725, 32
      %v8820 = vpop.permute.xlu0 %8819
      %8821 = vrot.lane.b32.xlu0 %v8726, 32
      %v8822 = vpop.permute.xlu0 %8821
      %8823 = vrot.lane.b32.xlu0 %v8727, 32
      %v8824 = vpop.permute.xlu0 %8823
      %8825 = vrot.lane.b32.xlu0 %v8728, 32
      %v8826 = vpop.permute.xlu0 %8825
      %8827 = vrot.lane.b32.xlu0 %v8729, 32
      %v8828 = vpop.permute.xlu0 %8827
      %8829 = vrot.lane.b32.xlu0 %v8730, 32
      %v8830 = vpop.permute.xlu0 %8829
      %8831 = vrot.lane.b32.xlu0 %v8731, 32
      %v8832 = vpop.permute.xlu0 %8831
      %8833 = vrot.lane.b32.xlu0 %v8732, 32
      %v8834 = vpop.permute.xlu0 %8833
      %8835 = vrot.lane.b32.xlu0 %v8733, 32
      %v8836 = vpop.permute.xlu0 %8835
      %8837 = vrot.lane.b32.xlu0 %v8734, 32
      %v8838 = vpop.permute.xlu0 %8837
      %8839 = vrot.lane.b32.xlu0 %v8735, 32
      %v8840 = vpop.permute.xlu0 %8839
      %8841 = vrot.lane.b32.xlu0 %v8736, 32
      %v8842 = vpop.permute.xlu0 %8841
      %8843 = vrot.lane.b32.xlu0 %v8737, 32
      %v8844 = vpop.permute.xlu0 %8843
      %8845 = vrot.lane.b32.xlu0 %v8738, 32
      %v8846 = vpop.permute.xlu0 %8845
      %8847 = vrot.lane.b32.xlu0 %v8739, 32
      %v8848 = vpop.permute.xlu0 %8847
      %8849 = vrot.lane.b32.xlu0 %v8740, 32
      %v8850 = vpop.permute.xlu0 %8849
      %8851 = vrot.lane.b32.xlu0 %v8741, 32
      %v8852 = vpop.permute.xlu0 %8851
      %8853 = vrot.lane.b32.xlu0 %v8742, 32
      %v8854 = vpop.permute.xlu0 %8853
      %8855 = vrot.lane.b32.xlu0 %v8743, 32
      %v8856 = vpop.permute.xlu0 %8855
      %8857 = vrot.lane.b32.xlu0 %v8744, 32
      %v8858 = vpop.permute.xlu0 %8857
      %8859 = vrot.lane.b32.xlu0 %v8745, 32
      %v8860 = vpop.permute.xlu0 %8859
      %8861 = vrot.lane.b32.xlu0 %v8746, 32
      %v8862 = vpop.permute.xlu0 %8861
      %8863 = vrot.lane.b32.xlu0 %v8747, 32
      %v8864 = vpop.permute.xlu0 %8863
      %8865 = vrot.lane.b32.xlu0 %v8748, 32
      %v8866 = vpop.permute.xlu0 %8865
      %8867 = vrot.lane.b32.xlu0 %v8749, 32
      %v8868 = vpop.permute.xlu0 %8867
      %8869 = vrot.lane.b32.xlu0 %v8750, 32
      %v8870 = vpop.permute.xlu0 %8869
      %8871 = vrot.lane.b32.xlu0 %v8751, 32
      %v8872 = vpop.permute.xlu0 %8871
      %8873 = vrot.lane.b32.xlu0 %v8752, 32
      %v8874 = vpop.permute.xlu0 %8873
      %8875 = vrot.lane.b32.xlu0 %v8753, 32
      %v8876 = vpop.permute.xlu0 %8875
      %8877 = vrot.lane.b32.xlu0 %v8754, 32
      %v8878 = vpop.permute.xlu0 %8877
      %8879 = vrot.lane.b32.xlu0 %v8755, 32
      %v8880 = vpop.permute.xlu0 %8879
      %8881 = vrot.lane.b32.xlu0 %v8756, 32
      %v8882 = vpop.permute.xlu0 %8881
      %8883 = vrot.lane.b32.xlu0 %v8757, 32
      %v8884 = vpop.permute.xlu0 %8883
      %8885 = vrot.lane.b32.xlu0 %v8758, 32
      %v8886 = vpop.permute.xlu0 %8885
      %8887 = vrot.lane.b32.xlu0 %v8759, 32
      %v8888 = vpop.permute.xlu0 %8887
      %8889 = vrot.lane.b32.xlu0 %v8760, 32
      %v8890 = vpop.permute.xlu0 %8889
      %8891 = vrot.lane.b32.xlu0 %v8761, 32
      %v8892 = vpop.permute.xlu0 %8891
      %8893 = vrot.lane.b32.xlu0 %v8762, 32
      %v8894 = vpop.permute.xlu0 %8893
      %8939 = vst.msk [vmem:[#allocation2] sm:$0xff] %vm3040, %v8808
      %8940 = vst.msk [vmem:[#allocation2 + $0x8] sm:$0xff] %vm3040, %v8810
      %8941 = vst.msk [vmem:[#allocation2 + $0x10] sm:$0xff] %vm3040, %v8812
      %8942 = vst.msk [vmem:[#allocation2 + $0x18] sm:$0xff] %vm3040, %v8814
      %8943 = vst.msk [vmem:[#allocation2 + $0x20] sm:$0xff] %vm3040, %v8816
      %8944 = vst.msk [vmem:[#allocation2 + $0x28] sm:$0xff] %vm3040, %v8818
      %8945 = vst.msk [vmem:[#allocation2 + $0x30] sm:$0xff] %vm3040, %v8820
      %8946 = vst.msk [vmem:[#allocation2 + $0x38] sm:$0xff] %vm3040, %v8822
      %8947 = vst.msk [vmem:[#allocation2 + $0x40] sm:$0xff] %vm3040, %v8824
      %8948 = vst.msk [vmem:[#allocation2 + $0x48] sm:$0xff] %vm3040, %v8826
      %8949 = vst.msk [vmem:[#allocation2 + $0x50] sm:$0xff] %vm3040, %v8828
      %8950 = vst.msk [vmem:[#allocation2 + $0x58] sm:$0xff] %vm3040, %v8830
      %8951 = vst.msk [vmem:[#allocation2 + $0x60] sm:$0xff] %vm3040, %v8832
      %8952 = vst.msk [vmem:[#allocation2 + $0x68] sm:$0xff] %vm3040, %v8834
      %8953 = vst.msk [vmem:[#allocation2 + $0x70] sm:$0xff] %vm3040, %v8836
      %8954 = vst.msk [vmem:[#allocation2 + $0x78] sm:$0xff] %vm3040, %v8838
      %8955 = vst.msk [vmem:[#allocation2 + $0x80] sm:$0xff] %vm3040, %v8840
      %8956 = vst.msk [vmem:[#allocation2 + $0x88] sm:$0xff] %vm3040, %v8842
      %8957 = vst.msk [vmem:[#allocation2 + $0x90] sm:$0xff] %vm3040, %v8844
      %8958 = vst.msk [vmem:[#allocation2 + $0x98] sm:$0xff] %vm3040, %v8846
      %8959 = vst.msk [vmem:[#allocation2 + $0xa0] sm:$0xff] %vm3040, %v8848
      %8960 = vst.msk [vmem:[#allocation2 + $0xa8] sm:$0xff] %vm3040, %v8850
      %8961 = vst.msk [vmem:[#allocation2 + $0xb0] sm:$0xff] %vm3040, %v8852
      %8962 = vst.msk [vmem:[#allocation2 + $0xb8] sm:$0xff] %vm3040, %v8854
      %8963 = vst.msk [vmem:[#allocation2 + $0xc0] sm:$0xff] %vm3040, %v8856
      %8964 = vst.msk [vmem:[#allocation2 + $0xc8] sm:$0xff] %vm3040, %v8858
      %8965 = vst.msk [vmem:[#allocation2 + $0xd0] sm:$0xff] %vm3040, %v8860
      %8966 = vst.msk [vmem:[#allocation2 + $0xd8] sm:$0xff] %vm3040, %v8862
      %8967 = vst.msk [vmem:[#allocation2 + $0xe0] sm:$0xff] %vm3040, %v8864
      %8968 = vst.msk [vmem:[#allocation2 + $0xe8] sm:$0xff] %vm3040, %v8866
      %8969 = vst.msk [vmem:[#allocation2 + $0xf0] sm:$0xff] %vm3040, %v8868
      %8970 = vst.msk [vmem:[#allocation2 + $0xf8] sm:$0xff] %vm3040, %v8870
      %8971 = vst.msk [vmem:[#allocation2 + $0x100] sm:$0xff] %vm3040, %v8872
      %8972 = vst.msk [vmem:[#allocation2 + $0x108] sm:$0xff] %vm3040, %v8874
      %8973 = vst.msk [vmem:[#allocation2 + $0x110] sm:$0xff] %vm3040, %v8876
      %8974 = vst.msk [vmem:[#allocation2 + $0x118] sm:$0xff] %vm3040, %v8878
      %8975 = vst.msk [vmem:[#allocation2 + $0x120] sm:$0xff] %vm3040, %v8880
      %8976 = vst.msk [vmem:[#allocation2 + $0x128] sm:$0xff] %vm3040, %v8882
      %8977 = vst.msk [vmem:[#allocation2 + $0x130] sm:$0xff] %vm3040, %v8884
      %8978 = vst.msk [vmem:[#allocation2 + $0x138] sm:$0xff] %vm3040, %v8886
      %8979 = vst.msk [vmem:[#allocation2 + $0x140] sm:$0xff] %vm3040, %v8888
      %8980 = vst.msk [vmem:[#allocation2 + $0x148] sm:$0xff] %vm3040, %v8890
      %8981 = vst.msk [vmem:[#allocation2 + $0x150] sm:$0xff] %vm3040, %v8892
      %8982 = vst.msk [vmem:[#allocation2 + $0x158] sm:$0xff] %vm3040, %v8894
      %v8983 = vld [vmem:[#allocation2] sm:$0xff]
      %v8984 = vld [vmem:[#allocation2 + $0x8] sm:$0xff]
      %v8985 = vld [vmem:[#allocation2 + $0x10] sm:$0xff]
      %v8986 = vld [vmem:[#allocation2 + $0x18] sm:$0xff]
      %v8987 = vld [vmem:[#allocation2 + $0x20] sm:$0xff]
      %v8988 = vld [vmem:[#allocation2 + $0x28] sm:$0xff]
      %v8989 = vld [vmem:[#allocation2 + $0x30] sm:$0xff]
      %v8990 = vld [vmem:[#allocation2 + $0x38] sm:$0xff]
      %v8991 = vld [vmem:[#allocation2 + $0x40] sm:$0xff]
      %v8992 = vld [vmem:[#allocation2 + $0x48] sm:$0xff]
      %v8993 = vld [vmem:[#allocation2 + $0x50] sm:$0xff]
      %v8994 = vld [vmem:[#allocation2 + $0x58] sm:$0xff]
      %v8995 = vld [vmem:[#allocation2 + $0x60] sm:$0xff]
      %v8996 = vld [vmem:[#allocation2 + $0x68] sm:$0xff]
      %v8997 = vld [vmem:[#allocation2 + $0x70] sm:$0xff]
      %v8998 = vld [vmem:[#allocation2 + $0x78] sm:$0xff]
      %v8999 = vld [vmem:[#allocation2 + $0x80] sm:$0xff]
      %v9000 = vld [vmem:[#allocation2 + $0x88] sm:$0xff]
      %v9001 = vld [vmem:[#allocation2 + $0x90] sm:$0xff]
      %v9002 = vld [vmem:[#allocation2 + $0x98] sm:$0xff]
      %v9003 = vld [vmem:[#allocation2 + $0xa0] sm:$0xff]
      %v9004 = vld [vmem:[#allocation2 + $0xa8] sm:$0xff]
      %v9005 = vld [vmem:[#allocation2 + $0xb0] sm:$0xff]
      %v9006 = vld [vmem:[#allocation2 + $0xb8] sm:$0xff]
      %v9007 = vld [vmem:[#allocation2 + $0xc0] sm:$0xff]
      %v9008 = vld [vmem:[#allocation2 + $0xc8] sm:$0xff]
      %v9009 = vld [vmem:[#allocation2 + $0xd0] sm:$0xff]
      %v9010 = vld [vmem:[#allocation2 + $0xd8] sm:$0xff]
      %v9011 = vld [vmem:[#allocation2 + $0xe0] sm:$0xff]
      %v9012 = vld [vmem:[#allocation2 + $0xe8] sm:$0xff]
      %v9013 = vld [vmem:[#allocation2 + $0xf0] sm:$0xff]
      %v9014 = vld [vmem:[#allocation2 + $0xf8] sm:$0xff]
      %v9015 = vld [vmem:[#allocation2 + $0x100] sm:$0xff]
      %v9016 = vld [vmem:[#allocation2 + $0x108] sm:$0xff]
      %v9017 = vld [vmem:[#allocation2 + $0x110] sm:$0xff]
      %v9018 = vld [vmem:[#allocation2 + $0x118] sm:$0xff]
      %v9019 = vld [vmem:[#allocation2 + $0x120] sm:$0xff]
      %v9020 = vld [vmem:[#allocation2 + $0x128] sm:$0xff]
      %v9021 = vld [vmem:[#allocation2 + $0x130] sm:$0xff]
      %v9022 = vld [vmem:[#allocation2 + $0x138] sm:$0xff]
      %v9023 = vld [vmem:[#allocation2 + $0x140] sm:$0xff]
      %v9024 = vld [vmem:[#allocation2 + $0x148] sm:$0xff]
      %v9025 = vld [vmem:[#allocation2 + $0x150] sm:$0xff]
      %v9026 = vld [vmem:[#allocation2 + $0x158] sm:$0xff]
      %s9027 = scalar_lea.vmem %s3, 80
      %v9028 = vld [vmem:[%s9027] sm:$0xff]
      %v9029 = vld [vmem:[%s9027 + $0x8] sm:$0xff]
      %v9030 = vld [vmem:[%s9027 + $0x10] sm:$0xff]
      %v9031 = vld [vmem:[%s9027 + $0x18] sm:$0xff]
      %v9032 = vld [vmem:[%s9027 + $0x20] sm:$0xf]
      %v9034 = vsel %vm3134, %v8983, 0
      %v9037 = vsel %vm3134, %v8984, 0
      %v9040 = vsel %vm3134, %v8985, 0
      %v9043 = vsel %vm3134, %v8986, 0
      %v9046 = vsel %vm3134, %v8987, 0
      %v9049 = vsel %vm3134, %v8988, 0
      %v9052 = vsel %vm3134, %v8989, 0
      %v9055 = vsel %vm3134, %v8990, 0
      %v9058 = vsel %vm3134, %v8991, 0
      %v9061 = vsel %vm3134, %v8992, 0
      %v9064 = vsel %vm3134, %v8993, 0
      %v9067 = vsel %vm3134, %v8994, 0
      %v9070 = vsel %vm3134, %v8995, 0
      %v9073 = vsel %vm3134, %v8996, 0
      %v9076 = vsel %vm3134, %v8997, 0
      %v9079 = vsel %vm3134, %v8998, 0
      %v9082 = vsel %vm3134, %v8999, 0
      %v9085 = vsel %vm3134, %v9000, 0
      %v9088 = vsel %vm3134, %v9001, 0
      %v9091 = vsel %vm3134, %v9002, 0
      %v9094 = vsel %vm3134, %v9003, 0
      %v9097 = vsel %vm3134, %v9004, 0
      %v9100 = vsel %vm3134, %v9005, 0
      %v9103 = vsel %vm3134, %v9006, 0
      %v9106 = vsel %vm3134, %v9007, 0
      %v9109 = vsel %vm3134, %v9008, 0
      %v9112 = vsel %vm3134, %v9009, 0
      %v9115 = vsel %vm3134, %v9010, 0
      %v9118 = vsel %vm3134, %v9011, 0
      %v9121 = vsel %vm3134, %v9012, 0
      %v9124 = vsel %vm3134, %v9013, 0
      %v9127 = vsel %vm3134, %v9014, 0
      %v9130 = vsel %vm3134, %v9015, 0
      %v9133 = vsel %vm3134, %v9016, 0
      %v9136 = vsel %vm3134, %v9017, 0
      %v9139 = vsel %vm3134, %v9018, 0
      %v9142 = vsel %vm3134, %v9019, 0
      %v9145 = vsel %vm3134, %v9020, 0
      %v9148 = vsel %vm3134, %v9021, 0
      %v9151 = vsel %vm3134, %v9022, 0
      %v9154 = vsel %vm3134, %v9023, 0
      %v9157 = vsel %vm3134, %v9024, 0
      %v9160 = vsel %vm3134, %v9025, 0
      %v9163 = vsel %vm3134, %v9026, 0
      %v9166 = vsel %vm485, %v9032, 0
      %9168 = vmatpush.msra.mxu0 0.0
      %9169 = vmatpush.msra.mxu0 0.0
      %9170 = vmatpush.msra.mxu0 0.0
      %9171 = vmatpush.msra.mxu0 0.0
      %9172 = vmatpush.msra.mxu0 0.0
      %9173 = vmatpush.msra.mxu0 0.0
      %9174 = vmatpush.msra.mxu0 0.0
      %9175 = vmatpush.msra.mxu0 0.0
      %9176 = vmatpush.msra.mxu0 0.0
      %9177 = vmatpush.msra.mxu0 0.0
      %9178 = vmatpush.msra.mxu0 0.0
      %9179 = vmatpush.msra.mxu0 %v9166
      %9180 = vmatpush.msra.mxu0 %v9031
      %9181 = vmatpush.msra.mxu0 %v9030
      %9182 = vmatpush.msra.mxu0 %v9029
      %9183 = vmatpush.msra.mxu0 %v9028
      %9184 = vmatmul.f32.gmra.mxu0 %v9034
      %v9185 = vpop.f32.mrf.mxu0
      %v9186 = vadd.f32 0.0, %v9185
      %9187 = vmatmul.f32.gmra.mxu0 %v9037
      %v9188 = vpop.f32.mrf.mxu0
      %v9189 = vadd.f32 0.0, %v9188
      %9190 = vmatmul.f32.gmra.mxu0 %v9040
      %v9191 = vpop.f32.mrf.mxu0
      %v9192 = vadd.f32 0.0, %v9191
      %9193 = vmatmul.f32.gmra.mxu0 %v9043
      %v9194 = vpop.f32.mrf.mxu0
      %v9195 = vadd.f32 0.0, %v9194
      %9196 = vmatmul.f32.gmra.mxu0 %v9046
      %v9197 = vpop.f32.mrf.mxu0
      %v9198 = vadd.f32 0.0, %v9197
      %9199 = vmatmul.f32.gmra.mxu0 %v9049
      %v9200 = vpop.f32.mrf.mxu0
      %v9201 = vadd.f32 0.0, %v9200
      %9202 = vmatmul.f32.gmra.mxu0 %v9052
      %v9203 = vpop.f32.mrf.mxu0
      %v9204 = vadd.f32 0.0, %v9203
      %9205 = vmatmul.f32.gmra.mxu0 %v9055
      %v9206 = vpop.f32.mrf.mxu0
      %v9207 = vadd.f32 0.0, %v9206
      %9208 = vmatmul.f32.gmra.mxu0 %v9058
      %v9209 = vpop.f32.mrf.mxu0
      %v9210 = vadd.f32 0.0, %v9209
      %9211 = vmatmul.f32.gmra.mxu0 %v9061
      %v9212 = vpop.f32.mrf.mxu0
      %v9213 = vadd.f32 0.0, %v9212
      %9214 = vmatmul.f32.gmra.mxu0 %v9064
      %v9215 = vpop.f32.mrf.mxu0
      %v9216 = vadd.f32 0.0, %v9215
      %9217 = vmatmul.f32.gmra.mxu0 %v9067
      %v9218 = vpop.f32.mrf.mxu0
      %v9219 = vadd.f32 0.0, %v9218
      %9220 = vmatmul.f32.gmra.mxu0 %v9070
      %v9221 = vpop.f32.mrf.mxu0
      %v9222 = vadd.f32 0.0, %v9221
      %9223 = vmatmul.f32.gmra.mxu0 %v9073
      %v9224 = vpop.f32.mrf.mxu0
      %v9225 = vadd.f32 0.0, %v9224
      %9226 = vmatmul.f32.gmra.mxu0 %v9076
      %v9227 = vpop.f32.mrf.mxu0
      %v9228 = vadd.f32 0.0, %v9227
      %9229 = vmatmul.f32.gmra.mxu0 %v9079
      %v9230 = vpop.f32.mrf.mxu0
      %v9231 = vadd.f32 0.0, %v9230
      %9232 = vmatmul.f32.gmra.mxu0 %v9082
      %v9233 = vpop.f32.mrf.mxu0
      %v9234 = vadd.f32 0.0, %v9233
      %9235 = vmatmul.f32.gmra.mxu0 %v9085
      %v9236 = vpop.f32.mrf.mxu0
      %v9237 = vadd.f32 0.0, %v9236
      %9238 = vmatmul.f32.gmra.mxu0 %v9088
      %v9239 = vpop.f32.mrf.mxu0
      %v9240 = vadd.f32 0.0, %v9239
      %9241 = vmatmul.f32.gmra.mxu0 %v9091
      %v9242 = vpop.f32.mrf.mxu0
      %v9243 = vadd.f32 0.0, %v9242
      %9244 = vmatmul.f32.gmra.mxu0 %v9094
      %v9245 = vpop.f32.mrf.mxu0
      %v9246 = vadd.f32 0.0, %v9245
      %9247 = vmatmul.f32.gmra.mxu0 %v9097
      %v9248 = vpop.f32.mrf.mxu0
      %v9249 = vadd.f32 0.0, %v9248
      %9250 = vmatmul.f32.gmra.mxu0 %v9100
      %v9251 = vpop.f32.mrf.mxu0
      %v9252 = vadd.f32 0.0, %v9251
      %9253 = vmatmul.f32.gmra.mxu0 %v9103
      %v9254 = vpop.f32.mrf.mxu0
      %v9255 = vadd.f32 0.0, %v9254
      %9256 = vmatmul.f32.gmra.mxu0 %v9106
      %v9257 = vpop.f32.mrf.mxu0
      %v9258 = vadd.f32 0.0, %v9257
      %9259 = vmatmul.f32.gmra.mxu0 %v9109
      %v9260 = vpop.f32.mrf.mxu0
      %v9261 = vadd.f32 0.0, %v9260
      %9262 = vmatmul.f32.gmra.mxu0 %v9112
      %v9263 = vpop.f32.mrf.mxu0
      %v9264 = vadd.f32 0.0, %v9263
      %9265 = vmatmul.f32.gmra.mxu0 %v9115
      %v9266 = vpop.f32.mrf.mxu0
      %v9267 = vadd.f32 0.0, %v9266
      %9268 = vmatmul.f32.gmra.mxu0 %v9118
      %v9269 = vpop.f32.mrf.mxu0
      %v9270 = vadd.f32 0.0, %v9269
      %9271 = vmatmul.f32.gmra.mxu0 %v9121
      %v9272 = vpop.f32.mrf.mxu0
      %v9273 = vadd.f32 0.0, %v9272
      %9274 = vmatmul.f32.gmra.mxu0 %v9124
      %v9275 = vpop.f32.mrf.mxu0
      %v9276 = vadd.f32 0.0, %v9275
      %9277 = vmatmul.f32.gmra.mxu0 %v9127
      %v9278 = vpop.f32.mrf.mxu0
      %v9279 = vadd.f32 0.0, %v9278
      %9280 = vmatmul.f32.gmra.mxu0 %v9130
      %v9281 = vpop.f32.mrf.mxu0
      %v9282 = vadd.f32 0.0, %v9281
      %9283 = vmatmul.f32.gmra.mxu0 %v9133
      %v9284 = vpop.f32.mrf.mxu0
      %v9285 = vadd.f32 0.0, %v9284
      %9286 = vmatmul.f32.gmra.mxu0 %v9136
      %v9287 = vpop.f32.mrf.mxu0
      %v9288 = vadd.f32 0.0, %v9287
      %9289 = vmatmul.f32.gmra.mxu0 %v9139
      %v9290 = vpop.f32.mrf.mxu0
      %v9291 = vadd.f32 0.0, %v9290
      %9292 = vmatmul.f32.gmra.mxu0 %v9142
      %v9293 = vpop.f32.mrf.mxu0
      %v9294 = vadd.f32 0.0, %v9293
      %9295 = vmatmul.f32.gmra.mxu0 %v9145
      %v9296 = vpop.f32.mrf.mxu0
      %v9297 = vadd.f32 0.0, %v9296
      %9298 = vmatmul.f32.gmra.mxu0 %v9148
      %v9299 = vpop.f32.mrf.mxu0
      %v9300 = vadd.f32 0.0, %v9299
      %9301 = vmatmul.f32.gmra.mxu0 %v9151
      %v9302 = vpop.f32.mrf.mxu0
      %v9303 = vadd.f32 0.0, %v9302
      %9304 = vmatmul.f32.gmra.mxu0 %v9154
      %v9305 = vpop.f32.mrf.mxu0
      %v9306 = vadd.f32 0.0, %v9305
      %9307 = vmatmul.f32.gmra.mxu0 %v9157
      %v9308 = vpop.f32.mrf.mxu0
      %v9309 = vadd.f32 0.0, %v9308
      %9310 = vmatmul.f32.gmra.mxu0 %v9160
      %v9311 = vpop.f32.mrf.mxu0
      %v9312 = vadd.f32 0.0, %v9311
      %9313 = vmatmul.f32.gmra.mxu0 %v9163
      %v9314 = vpop.f32.mrf.mxu0
      %v9315 = vadd.f32 0.0, %v9314
      %9316 = vdwg.mxu0
      %v9317 = vperm.slane %v304, 3
      %v9318 = vmul.f32 %v9186, %v9317
      %v9319 = vmul.f32 %v9189, %v9317
      %v9320 = vmul.f32 %v9192, %v9317
      %v9321 = vmul.f32 %v9195, %v9317
      %v9322 = vmul.f32 %v9198, %v9317
      %v9323 = vmul.f32 %v9201, %v9317
      %v9324 = vmul.f32 %v9204, %v9317
      %v9325 = vmul.f32 %v9207, %v9317
      %v9326 = vmul.f32 %v9210, %v9317
      %v9327 = vmul.f32 %v9213, %v9317
      %v9328 = vmul.f32 %v9216, %v9317
      %v9329 = vmul.f32 %v9219, %v9317
      %v9330 = vmul.f32 %v9222, %v9317
      %v9331 = vmul.f32 %v9225, %v9317
      %v9332 = vmul.f32 %v9228, %v9317
      %v9333 = vmul.f32 %v9231, %v9317
      %v9334 = vmul.f32 %v9234, %v9317
      %v9335 = vmul.f32 %v9237, %v9317
      %v9336 = vmul.f32 %v9240, %v9317
      %v9337 = vmul.f32 %v9243, %v9317
      %v9338 = vmul.f32 %v9246, %v9317
      %v9339 = vmul.f32 %v9249, %v9317
      %v9340 = vmul.f32 %v9252, %v9317
      %v9341 = vmul.f32 %v9255, %v9317
      %v9342 = vmul.f32 %v9258, %v9317
      %v9343 = vmul.f32 %v9261, %v9317
      %v9344 = vmul.f32 %v9264, %v9317
      %v9345 = vmul.f32 %v9267, %v9317
      %v9346 = vmul.f32 %v9270, %v9317
      %v9347 = vmul.f32 %v9273, %v9317
      %v9348 = vmul.f32 %v9276, %v9317
      %v9349 = vmul.f32 %v9279, %v9317
      %v9350 = vmul.f32 %v9282, %v9317
      %v9351 = vmul.f32 %v9285, %v9317
      %v9352 = vmul.f32 %v9288, %v9317
      %v9353 = vmul.f32 %v9291, %v9317
      %v9354 = vmul.f32 %v9294, %v9317
      %v9355 = vmul.f32 %v9297, %v9317
      %v9356 = vmul.f32 %v9300, %v9317
      %v9357 = vmul.f32 %v9303, %v9317
      %v9358 = vmul.f32 %v9306, %v9317
      %v9359 = vmul.f32 %v9309, %v9317
      %v9360 = vmul.f32 %v9312, %v9317
      %v9361 = vmul.f32 %v9315, %v9317
      %v9362 = vperm.slane %v305, 3
      %v9363 = vadd.f32 %v9318, %v9362
      %v9364 = vadd.f32 %v9319, %v9362
      %v9365 = vadd.f32 %v9320, %v9362
      %v9366 = vadd.f32 %v9321, %v9362
      %v9367 = vadd.f32 %v9322, %v9362
      %v9368 = vadd.f32 %v9323, %v9362
      %v9369 = vadd.f32 %v9324, %v9362
      %v9370 = vadd.f32 %v9325, %v9362
      %v9371 = vadd.f32 %v9326, %v9362
      %v9372 = vadd.f32 %v9327, %v9362
      %v9373 = vadd.f32 %v9328, %v9362
      %v9374 = vadd.f32 %v9329, %v9362
      %v9375 = vadd.f32 %v9330, %v9362
      %v9376 = vadd.f32 %v9331, %v9362
      %v9377 = vadd.f32 %v9332, %v9362
      %v9378 = vadd.f32 %v9333, %v9362
      %v9379 = vadd.f32 %v9334, %v9362
      %v9380 = vadd.f32 %v9335, %v9362
      %v9381 = vadd.f32 %v9336, %v9362
      %v9382 = vadd.f32 %v9337, %v9362
      %v9383 = vadd.f32 %v9338, %v9362
      %v9384 = vadd.f32 %v9339, %v9362
      %v9385 = vadd.f32 %v9340, %v9362
      %v9386 = vadd.f32 %v9341, %v9362
      %v9387 = vadd.f32 %v9342, %v9362
      %v9388 = vadd.f32 %v9343, %v9362
      %v9389 = vadd.f32 %v9344, %v9362
      %v9390 = vadd.f32 %v9345, %v9362
      %v9391 = vadd.f32 %v9346, %v9362
      %v9392 = vadd.f32 %v9347, %v9362
      %v9393 = vadd.f32 %v9348, %v9362
      %v9394 = vadd.f32 %v9349, %v9362
      %v9395 = vadd.f32 %v9350, %v9362
      %v9396 = vadd.f32 %v9351, %v9362
      %v9397 = vadd.f32 %v9352, %v9362
      %v9398 = vadd.f32 %v9353, %v9362
      %v9399 = vadd.f32 %v9354, %v9362
      %v9400 = vadd.f32 %v9355, %v9362
      %v9401 = vadd.f32 %v9356, %v9362
      %v9402 = vadd.f32 %v9357, %v9362
      %v9403 = vadd.f32 %v9358, %v9362
      %v9404 = vadd.f32 %v9359, %v9362
      %v9405 = vadd.f32 %v9360, %v9362
      %v9406 = vadd.f32 %v9361, %v9362
      %v9407 = vmax.f32 %v9363, 0.0
      %v9408 = vmax.f32 %v9364, 0.0
      %v9409 = vmax.f32 %v9365, 0.0
      %v9410 = vmax.f32 %v9366, 0.0
      %v9411 = vmax.f32 %v9367, 0.0
      %v9412 = vmax.f32 %v9368, 0.0
      %v9413 = vmax.f32 %v9369, 0.0
      %v9414 = vmax.f32 %v9370, 0.0
      %v9415 = vmax.f32 %v9371, 0.0
      %v9416 = vmax.f32 %v9372, 0.0
      %v9417 = vmax.f32 %v9373, 0.0
      %v9418 = vmax.f32 %v9374, 0.0
      %v9419 = vmax.f32 %v9375, 0.0
      %v9420 = vmax.f32 %v9376, 0.0
      %v9421 = vmax.f32 %v9377, 0.0
      %v9422 = vmax.f32 %v9378, 0.0
      %v9423 = vmax.f32 %v9379, 0.0
      %v9424 = vmax.f32 %v9380, 0.0
      %v9425 = vmax.f32 %v9381, 0.0
      %v9426 = vmax.f32 %v9382, 0.0
      %v9427 = vmax.f32 %v9383, 0.0
      %v9428 = vmax.f32 %v9384, 0.0
      %v9429 = vmax.f32 %v9385, 0.0
      %v9430 = vmax.f32 %v9386, 0.0
      %v9431 = vmax.f32 %v9387, 0.0
      %v9432 = vmax.f32 %v9388, 0.0
      %v9433 = vmax.f32 %v9389, 0.0
      %v9434 = vmax.f32 %v9390, 0.0
      %v9435 = vmax.f32 %v9391, 0.0
      %v9436 = vmax.f32 %v9392, 0.0
      %v9437 = vmax.f32 %v9393, 0.0
      %v9438 = vmax.f32 %v9394, 0.0
      %v9439 = vmax.f32 %v9395, 0.0
      %v9440 = vmax.f32 %v9396, 0.0
      %v9441 = vmax.f32 %v9397, 0.0
      %v9442 = vmax.f32 %v9398, 0.0
      %v9443 = vmax.f32 %v9399, 0.0
      %v9444 = vmax.f32 %v9400, 0.0
      %v9445 = vmax.f32 %v9401, 0.0
      %v9446 = vmax.f32 %v9402, 0.0
      %v9447 = vmax.f32 %v9403, 0.0
      %v9448 = vmax.f32 %v9404, 0.0
      %v9449 = vmax.f32 %v9405, 0.0
      %v9450 = vmax.f32 %v9406, 0.0
      %v9451 = vround.ne.pseudo %v9407
      %v9452 = vround.ne.pseudo %v9408
      %v9453 = vround.ne.pseudo %v9409
      %v9454 = vround.ne.pseudo %v9410
      %v9455 = vround.ne.pseudo %v9411
      %v9456 = vround.ne.pseudo %v9412
      %v9457 = vround.ne.pseudo %v9413
      %v9458 = vround.ne.pseudo %v9414
      %v9459 = vround.ne.pseudo %v9415
      %v9460 = vround.ne.pseudo %v9416
      %v9461 = vround.ne.pseudo %v9417
      %v9462 = vround.ne.pseudo %v9418
      %v9463 = vround.ne.pseudo %v9419
      %v9464 = vround.ne.pseudo %v9420
      %v9465 = vround.ne.pseudo %v9421
      %v9466 = vround.ne.pseudo %v9422
      %v9467 = vround.ne.pseudo %v9423
      %v9468 = vround.ne.pseudo %v9424
      %v9469 = vround.ne.pseudo %v9425
      %v9470 = vround.ne.pseudo %v9426
      %v9471 = vround.ne.pseudo %v9427
      %v9472 = vround.ne.pseudo %v9428
      %v9473 = vround.ne.pseudo %v9429
      %v9474 = vround.ne.pseudo %v9430
      %v9475 = vround.ne.pseudo %v9431
      %v9476 = vround.ne.pseudo %v9432
      %v9477 = vround.ne.pseudo %v9433
      %v9478 = vround.ne.pseudo %v9434
      %v9479 = vround.ne.pseudo %v9435
      %v9480 = vround.ne.pseudo %v9436
      %v9481 = vround.ne.pseudo %v9437
      %v9482 = vround.ne.pseudo %v9438
      %v9483 = vround.ne.pseudo %v9439
      %v9484 = vround.ne.pseudo %v9440
      %v9485 = vround.ne.pseudo %v9441
      %v9486 = vround.ne.pseudo %v9442
      %v9487 = vround.ne.pseudo %v9443
      %v9488 = vround.ne.pseudo %v9444
      %v9489 = vround.ne.pseudo %v9445
      %v9490 = vround.ne.pseudo %v9446
      %v9491 = vround.ne.pseudo %v9447
      %v9492 = vround.ne.pseudo %v9448
      %v9493 = vround.ne.pseudo %v9449
      %v9494 = vround.ne.pseudo %v9450
      %9539 = vrot.lane.b32.xlu0 %v9451, 24
      %v9540 = vpop.permute.xlu0 %9539
      %9541 = vrot.lane.b32.xlu0 %v9452, 24
      %v9542 = vpop.permute.xlu0 %9541
      %9543 = vrot.lane.b32.xlu0 %v9453, 24
      %v9544 = vpop.permute.xlu0 %9543
      %9545 = vrot.lane.b32.xlu0 %v9454, 24
      %v9546 = vpop.permute.xlu0 %9545
      %9547 = vrot.lane.b32.xlu0 %v9455, 24
      %v9548 = vpop.permute.xlu0 %9547
      %9549 = vrot.lane.b32.xlu0 %v9456, 24
      %v9550 = vpop.permute.xlu0 %9549
      %9551 = vrot.lane.b32.xlu0 %v9457, 24
      %v9552 = vpop.permute.xlu0 %9551
      %9553 = vrot.lane.b32.xlu0 %v9458, 24
      %v9554 = vpop.permute.xlu0 %9553
      %9555 = vrot.lane.b32.xlu0 %v9459, 24
      %v9556 = vpop.permute.xlu0 %9555
      %9557 = vrot.lane.b32.xlu0 %v9460, 24
      %v9558 = vpop.permute.xlu0 %9557
      %9559 = vrot.lane.b32.xlu0 %v9461, 24
      %v9560 = vpop.permute.xlu0 %9559
      %9561 = vrot.lane.b32.xlu0 %v9462, 24
      %v9562 = vpop.permute.xlu0 %9561
      %9563 = vrot.lane.b32.xlu0 %v9463, 24
      %v9564 = vpop.permute.xlu0 %9563
      %9565 = vrot.lane.b32.xlu0 %v9464, 24
      %v9566 = vpop.permute.xlu0 %9565
      %9567 = vrot.lane.b32.xlu0 %v9465, 24
      %v9568 = vpop.permute.xlu0 %9567
      %9569 = vrot.lane.b32.xlu0 %v9466, 24
      %v9570 = vpop.permute.xlu0 %9569
      %9571 = vrot.lane.b32.xlu0 %v9467, 24
      %v9572 = vpop.permute.xlu0 %9571
      %9573 = vrot.lane.b32.xlu0 %v9468, 24
      %v9574 = vpop.permute.xlu0 %9573
      %9575 = vrot.lane.b32.xlu0 %v9469, 24
      %v9576 = vpop.permute.xlu0 %9575
      %9577 = vrot.lane.b32.xlu0 %v9470, 24
      %v9578 = vpop.permute.xlu0 %9577
      %9579 = vrot.lane.b32.xlu0 %v9471, 24
      %v9580 = vpop.permute.xlu0 %9579
      %9581 = vrot.lane.b32.xlu0 %v9472, 24
      %v9582 = vpop.permute.xlu0 %9581
      %9583 = vrot.lane.b32.xlu0 %v9473, 24
      %v9584 = vpop.permute.xlu0 %9583
      %9585 = vrot.lane.b32.xlu0 %v9474, 24
      %v9586 = vpop.permute.xlu0 %9585
      %9587 = vrot.lane.b32.xlu0 %v9475, 24
      %v9588 = vpop.permute.xlu0 %9587
      %9589 = vrot.lane.b32.xlu0 %v9476, 24
      %v9590 = vpop.permute.xlu0 %9589
      %9591 = vrot.lane.b32.xlu0 %v9477, 24
      %v9592 = vpop.permute.xlu0 %9591
      %9593 = vrot.lane.b32.xlu0 %v9478, 24
      %v9594 = vpop.permute.xlu0 %9593
      %9595 = vrot.lane.b32.xlu0 %v9479, 24
      %v9596 = vpop.permute.xlu0 %9595
      %9597 = vrot.lane.b32.xlu0 %v9480, 24
      %v9598 = vpop.permute.xlu0 %9597
      %9599 = vrot.lane.b32.xlu0 %v9481, 24
      %v9600 = vpop.permute.xlu0 %9599
      %9601 = vrot.lane.b32.xlu0 %v9482, 24
      %v9602 = vpop.permute.xlu0 %9601
      %9603 = vrot.lane.b32.xlu0 %v9483, 24
      %v9604 = vpop.permute.xlu0 %9603
      %9605 = vrot.lane.b32.xlu0 %v9484, 24
      %v9606 = vpop.permute.xlu0 %9605
      %9607 = vrot.lane.b32.xlu0 %v9485, 24
      %v9608 = vpop.permute.xlu0 %9607
      %9609 = vrot.lane.b32.xlu0 %v9486, 24
      %v9610 = vpop.permute.xlu0 %9609
      %9611 = vrot.lane.b32.xlu0 %v9487, 24
      %v9612 = vpop.permute.xlu0 %9611
      %9613 = vrot.lane.b32.xlu0 %v9488, 24
      %v9614 = vpop.permute.xlu0 %9613
      %9615 = vrot.lane.b32.xlu0 %v9489, 24
      %v9616 = vpop.permute.xlu0 %9615
      %9617 = vrot.lane.b32.xlu0 %v9490, 24
      %v9618 = vpop.permute.xlu0 %9617
      %9619 = vrot.lane.b32.xlu0 %v9491, 24
      %v9620 = vpop.permute.xlu0 %9619
      %9621 = vrot.lane.b32.xlu0 %v9492, 24
      %v9622 = vpop.permute.xlu0 %9621
      %9623 = vrot.lane.b32.xlu0 %v9493, 24
      %v9624 = vpop.permute.xlu0 %9623
      %9625 = vrot.lane.b32.xlu0 %v9494, 24
      %v9626 = vpop.permute.xlu0 %9625
      %vm9671 = vcmask 261312
      %9672 = vst.msk [vmem:[#allocation3] sm:$0xff] %vm9671, %v9540
      %9673 = vst.msk [vmem:[#allocation3 + $0x8] sm:$0xff] %vm9671, %v9542
      %9674 = vst.msk [vmem:[#allocation3 + $0x10] sm:$0xff] %vm9671, %v9544
      %9675 = vst.msk [vmem:[#allocation3 + $0x18] sm:$0xff] %vm9671, %v9546
      %9676 = vst.msk [vmem:[#allocation3 + $0x20] sm:$0xff] %vm9671, %v9548
      %9677 = vst.msk [vmem:[#allocation3 + $0x28] sm:$0xff] %vm9671, %v9550
      %9678 = vst.msk [vmem:[#allocation3 + $0x30] sm:$0xff] %vm9671, %v9552
      %9679 = vst.msk [vmem:[#allocation3 + $0x38] sm:$0xff] %vm9671, %v9554
      %9680 = vst.msk [vmem:[#allocation3 + $0x40] sm:$0xff] %vm9671, %v9556
      %9681 = vst.msk [vmem:[#allocation3 + $0x48] sm:$0xff] %vm9671, %v9558
      %9682 = vst.msk [vmem:[#allocation3 + $0x50] sm:$0xff] %vm9671, %v9560
      %9683 = vst.msk [vmem:[#allocation3 + $0x58] sm:$0xff] %vm9671, %v9562
      %9684 = vst.msk [vmem:[#allocation3 + $0x60] sm:$0xff] %vm9671, %v9564
      %9685 = vst.msk [vmem:[#allocation3 + $0x68] sm:$0xff] %vm9671, %v9566
      %9686 = vst.msk [vmem:[#allocation3 + $0x70] sm:$0xff] %vm9671, %v9568
      %9687 = vst.msk [vmem:[#allocation3 + $0x78] sm:$0xff] %vm9671, %v9570
      %9688 = vst.msk [vmem:[#allocation3 + $0x80] sm:$0xff] %vm9671, %v9572
      %9689 = vst.msk [vmem:[#allocation3 + $0x88] sm:$0xff] %vm9671, %v9574
      %9690 = vst.msk [vmem:[#allocation3 + $0x90] sm:$0xff] %vm9671, %v9576
      %9691 = vst.msk [vmem:[#allocation3 + $0x98] sm:$0xff] %vm9671, %v9578
      %9692 = vst.msk [vmem:[#allocation3 + $0xa0] sm:$0xff] %vm9671, %v9580
      %9693 = vst.msk [vmem:[#allocation3 + $0xa8] sm:$0xff] %vm9671, %v9582
      %9694 = vst.msk [vmem:[#allocation3 + $0xb0] sm:$0xff] %vm9671, %v9584
      %9695 = vst.msk [vmem:[#allocation3 + $0xb8] sm:$0xff] %vm9671, %v9586
      %9696 = vst.msk [vmem:[#allocation3 + $0xc0] sm:$0xff] %vm9671, %v9588
      %9697 = vst.msk [vmem:[#allocation3 + $0xc8] sm:$0xff] %vm9671, %v9590
      %9698 = vst.msk [vmem:[#allocation3 + $0xd0] sm:$0xff] %vm9671, %v9592
      %9699 = vst.msk [vmem:[#allocation3 + $0xd8] sm:$0xff] %vm9671, %v9594
      %9700 = vst.msk [vmem:[#allocation3 + $0xe0] sm:$0xff] %vm9671, %v9596
      %9701 = vst.msk [vmem:[#allocation3 + $0xe8] sm:$0xff] %vm9671, %v9598
      %9702 = vst.msk [vmem:[#allocation3 + $0xf0] sm:$0xff] %vm9671, %v9600
      %9703 = vst.msk [vmem:[#allocation3 + $0xf8] sm:$0xff] %vm9671, %v9602
      %9704 = vst.msk [vmem:[#allocation3 + $0x100] sm:$0xff] %vm9671, %v9604
      %9705 = vst.msk [vmem:[#allocation3 + $0x108] sm:$0xff] %vm9671, %v9606
      %9706 = vst.msk [vmem:[#allocation3 + $0x110] sm:$0xff] %vm9671, %v9608
      %9707 = vst.msk [vmem:[#allocation3 + $0x118] sm:$0xff] %vm9671, %v9610
      %9708 = vst.msk [vmem:[#allocation3 + $0x120] sm:$0xff] %vm9671, %v9612
      %9709 = vst.msk [vmem:[#allocation3 + $0x128] sm:$0xff] %vm9671, %v9614
      %9710 = vst.msk [vmem:[#allocation3 + $0x130] sm:$0xff] %vm9671, %v9616
      %9711 = vst.msk [vmem:[#allocation3 + $0x138] sm:$0xff] %vm9671, %v9618
      %9712 = vst.msk [vmem:[#allocation3 + $0x140] sm:$0xff] %vm9671, %v9620
      %9713 = vst.msk [vmem:[#allocation3 + $0x148] sm:$0xff] %vm9671, %v9622
      %9714 = vst.msk [vmem:[#allocation3 + $0x150] sm:$0xff] %vm9671, %v9624
      %9715 = vst.msk [vmem:[#allocation3 + $0x158] sm:$0xff] %vm9671, %v9626
      %v9716 = vld [vmem:[#allocation3] sm:$0xff]
      %v9717 = vld [vmem:[#allocation3 + $0x8] sm:$0xff]
      %v9718 = vld [vmem:[#allocation3 + $0x10] sm:$0xff]
      %v9719 = vld [vmem:[#allocation3 + $0x18] sm:$0xff]
      %v9720 = vld [vmem:[#allocation3 + $0x20] sm:$0xff]
      %v9721 = vld [vmem:[#allocation3 + $0x28] sm:$0xff]
      %v9722 = vld [vmem:[#allocation3 + $0x30] sm:$0xff]
      %v9723 = vld [vmem:[#allocation3 + $0x38] sm:$0xff]
      %v9724 = vld [vmem:[#allocation3 + $0x40] sm:$0xff]
      %v9725 = vld [vmem:[#allocation3 + $0x48] sm:$0xff]
      %v9726 = vld [vmem:[#allocation3 + $0x50] sm:$0xff]
      %v9727 = vld [vmem:[#allocation3 + $0x58] sm:$0xff]
      %v9728 = vld [vmem:[#allocation3 + $0x60] sm:$0xff]
      %v9729 = vld [vmem:[#allocation3 + $0x68] sm:$0xff]
      %v9730 = vld [vmem:[#allocation3 + $0x70] sm:$0xff]
      %v9731 = vld [vmem:[#allocation3 + $0x78] sm:$0xff]
      %v9732 = vld [vmem:[#allocation3 + $0x80] sm:$0xff]
      %v9733 = vld [vmem:[#allocation3 + $0x88] sm:$0xff]
      %v9734 = vld [vmem:[#allocation3 + $0x90] sm:$0xff]
      %v9735 = vld [vmem:[#allocation3 + $0x98] sm:$0xff]
      %v9736 = vld [vmem:[#allocation3 + $0xa0] sm:$0xff]
      %v9737 = vld [vmem:[#allocation3 + $0xa8] sm:$0xff]
      %v9738 = vld [vmem:[#allocation3 + $0xb0] sm:$0xff]
      %v9739 = vld [vmem:[#allocation3 + $0xb8] sm:$0xff]
      %v9740 = vld [vmem:[#allocation3 + $0xc0] sm:$0xff]
      %v9741 = vld [vmem:[#allocation3 + $0xc8] sm:$0xff]
      %v9742 = vld [vmem:[#allocation3 + $0xd0] sm:$0xff]
      %v9743 = vld [vmem:[#allocation3 + $0xd8] sm:$0xff]
      %v9744 = vld [vmem:[#allocation3 + $0xe0] sm:$0xff]
      %v9745 = vld [vmem:[#allocation3 + $0xe8] sm:$0xff]
      %v9746 = vld [vmem:[#allocation3 + $0xf0] sm:$0xff]
      %v9747 = vld [vmem:[#allocation3 + $0xf8] sm:$0xff]
      %v9748 = vld [vmem:[#allocation3 + $0x100] sm:$0xff]
      %v9749 = vld [vmem:[#allocation3 + $0x108] sm:$0xff]
      %v9750 = vld [vmem:[#allocation3 + $0x110] sm:$0xff]
      %v9751 = vld [vmem:[#allocation3 + $0x118] sm:$0xff]
      %v9752 = vld [vmem:[#allocation3 + $0x120] sm:$0xff]
      %v9753 = vld [vmem:[#allocation3 + $0x128] sm:$0xff]
      %v9754 = vld [vmem:[#allocation3 + $0x130] sm:$0xff]
      %v9755 = vld [vmem:[#allocation3 + $0x138] sm:$0xff]
      %v9756 = vld [vmem:[#allocation3 + $0x140] sm:$0xff]
      %v9757 = vld [vmem:[#allocation3 + $0x148] sm:$0xff]
      %v9758 = vld [vmem:[#allocation3 + $0x150] sm:$0xff]
      %v9759 = vld [vmem:[#allocation3 + $0x158] sm:$0xff]
      %v9760 = vld [vmem:[%s4] sm:$0xff]
      %v9761 = vld [vmem:[%s4 + $0x8] sm:$0xff]
      %v9762 = vld [vmem:[%s4 + $0x10] sm:$0xff]
      %v9763 = vld [vmem:[%s4 + $0x18] sm:$0xff]
      %s9764 = scalar_lea.vmem %s1, %s22
      %v9765 = vld [vmem:[%s9764] sm:$0x1]
      %v9766 = vperm.slane %v9765, 0
      %vm9767 = vcmask 261120
      %v9769 = vsel %vm9767, %v9716, 0
      %v9772 = vsel %vm9767, %v9717, 0
      %v9775 = vsel %vm9767, %v9718, 0
      %v9778 = vsel %vm9767, %v9719, 0
      %v9781 = vsel %vm9767, %v9720, 0
      %v9784 = vsel %vm9767, %v9721, 0
      %v9787 = vsel %vm9767, %v9722, 0
      %v9790 = vsel %vm9767, %v9723, 0
      %v9793 = vsel %vm9767, %v9724, 0
      %v9796 = vsel %vm9767, %v9725, 0
      %v9799 = vsel %vm9767, %v9726, 0
      %v9802 = vsel %vm9767, %v9727, 0
      %v9805 = vsel %vm9767, %v9728, 0
      %v9808 = vsel %vm9767, %v9729, 0
      %v9811 = vsel %vm9767, %v9730, 0
      %v9814 = vsel %vm9767, %v9731, 0
      %v9817 = vsel %vm9767, %v9732, 0
      %v9820 = vsel %vm9767, %v9733, 0
      %v9823 = vsel %vm9767, %v9734, 0
      %v9826 = vsel %vm9767, %v9735, 0
      %v9829 = vsel %vm9767, %v9736, 0
      %v9832 = vsel %vm9767, %v9737, 0
      %v9835 = vsel %vm9767, %v9738, 0
      %v9838 = vsel %vm9767, %v9739, 0
      %v9841 = vsel %vm9767, %v9740, 0
      %v9844 = vsel %vm9767, %v9741, 0
      %v9847 = vsel %vm9767, %v9742, 0
      %v9850 = vsel %vm9767, %v9743, 0
      %v9853 = vsel %vm9767, %v9744, 0
      %v9856 = vsel %vm9767, %v9745, 0
      %v9859 = vsel %vm9767, %v9746, 0
      %v9862 = vsel %vm9767, %v9747, 0
      %v9865 = vsel %vm9767, %v9748, 0
      %v9868 = vsel %vm9767, %v9749, 0
      %v9871 = vsel %vm9767, %v9750, 0
      %v9874 = vsel %vm9767, %v9751, 0
      %v9877 = vsel %vm9767, %v9752, 0
      %v9880 = vsel %vm9767, %v9753, 0
      %v9883 = vsel %vm9767, %v9754, 0
      %v9886 = vsel %vm9767, %v9755, 0
      %v9889 = vsel %vm9767, %v9756, 0
      %v9892 = vsel %vm9767, %v9757, 0
      %v9895 = vsel %vm9767, %v9758, 0
      %v9898 = vsel %vm9767, %v9759, 0
      %9900 = vmatpush.msra.mxu0 0.0
      %9901 = vmatpush.msra.mxu0 0.0
      %9902 = vmatpush.msra.mxu0 0.0
      %9903 = vmatpush.msra.mxu0 0.0
      %9904 = vmatpush.msra.mxu0 0.0
      %9905 = vmatpush.msra.mxu0 0.0
      %9906 = vmatpush.msra.mxu0 0.0
      %9907 = vmatpush.msra.mxu0 0.0
      %9908 = vmatpush.msra.mxu0 0.0
      %9909 = vmatpush.msra.mxu0 0.0
      %9910 = vmatpush.msra.mxu0 0.0
      %9911 = vmatpush.msra.mxu0 0.0
      %9912 = vmatpush.msra.mxu0 %v9763
      %9913 = vmatpush.msra.mxu0 %v9762
      %9914 = vmatpush.msra.mxu0 %v9761
      %9915 = vmatpush.msra.mxu0 %v9760
      %9916 = vmatmul.f32.gmra.mxu0 %v9769
      %v9917 = vpop.f32.mrf.mxu0
      %v9918 = vadd.f32 %v9766, %v9917
      %9919 = vmatmul.f32.gmra.mxu0 %v9772
      %v9920 = vpop.f32.mrf.mxu0
      %v9921 = vadd.f32 %v9766, %v9920
      %9922 = vmatmul.f32.gmra.mxu0 %v9775
      %v9923 = vpop.f32.mrf.mxu0
      %v9924 = vadd.f32 %v9766, %v9923
      %9925 = vmatmul.f32.gmra.mxu0 %v9778
      %v9926 = vpop.f32.mrf.mxu0
      %v9927 = vadd.f32 %v9766, %v9926
      %9928 = vmatmul.f32.gmra.mxu0 %v9781
      %v9929 = vpop.f32.mrf.mxu0
      %v9930 = vadd.f32 %v9766, %v9929
      %9931 = vmatmul.f32.gmra.mxu0 %v9784
      %v9932 = vpop.f32.mrf.mxu0
      %v9933 = vadd.f32 %v9766, %v9932
      %9934 = vmatmul.f32.gmra.mxu0 %v9787
      %v9935 = vpop.f32.mrf.mxu0
      %v9936 = vadd.f32 %v9766, %v9935
      %9937 = vmatmul.f32.gmra.mxu0 %v9790
      %v9938 = vpop.f32.mrf.mxu0
      %v9939 = vadd.f32 %v9766, %v9938
      %9940 = vmatmul.f32.gmra.mxu0 %v9793
      %v9941 = vpop.f32.mrf.mxu0
      %v9942 = vadd.f32 %v9766, %v9941
      %9943 = vmatmul.f32.gmra.mxu0 %v9796
      %v9944 = vpop.f32.mrf.mxu0
      %v9945 = vadd.f32 %v9766, %v9944
      %9946 = vmatmul.f32.gmra.mxu0 %v9799
      %v9947 = vpop.f32.mrf.mxu0
      %v9948 = vadd.f32 %v9766, %v9947
      %9949 = vmatmul.f32.gmra.mxu0 %v9802
      %v9950 = vpop.f32.mrf.mxu0
      %v9951 = vadd.f32 %v9766, %v9950
      %9952 = vmatmul.f32.gmra.mxu0 %v9805
      %v9953 = vpop.f32.mrf.mxu0
      %v9954 = vadd.f32 %v9766, %v9953
      %9955 = vmatmul.f32.gmra.mxu0 %v9808
      %v9956 = vpop.f32.mrf.mxu0
      %v9957 = vadd.f32 %v9766, %v9956
      %9958 = vmatmul.f32.gmra.mxu0 %v9811
      %v9959 = vpop.f32.mrf.mxu0
      %v9960 = vadd.f32 %v9766, %v9959
      %9961 = vmatmul.f32.gmra.mxu0 %v9814
      %v9962 = vpop.f32.mrf.mxu0
      %v9963 = vadd.f32 %v9766, %v9962
      %9964 = vmatmul.f32.gmra.mxu0 %v9817
      %v9965 = vpop.f32.mrf.mxu0
      %v9966 = vadd.f32 %v9766, %v9965
      %9967 = vmatmul.f32.gmra.mxu0 %v9820
      %v9968 = vpop.f32.mrf.mxu0
      %v9969 = vadd.f32 %v9766, %v9968
      %9970 = vmatmul.f32.gmra.mxu0 %v9823
      %v9971 = vpop.f32.mrf.mxu0
      %v9972 = vadd.f32 %v9766, %v9971
      %9973 = vmatmul.f32.gmra.mxu0 %v9826
      %v9974 = vpop.f32.mrf.mxu0
      %v9975 = vadd.f32 %v9766, %v9974
      %9976 = vmatmul.f32.gmra.mxu0 %v9829
      %v9977 = vpop.f32.mrf.mxu0
      %v9978 = vadd.f32 %v9766, %v9977
      %9979 = vmatmul.f32.gmra.mxu0 %v9832
      %v9980 = vpop.f32.mrf.mxu0
      %v9981 = vadd.f32 %v9766, %v9980
      %9982 = vmatmul.f32.gmra.mxu0 %v9835
      %v9983 = vpop.f32.mrf.mxu0
      %v9984 = vadd.f32 %v9766, %v9983
      %9985 = vmatmul.f32.gmra.mxu0 %v9838
      %v9986 = vpop.f32.mrf.mxu0
      %v9987 = vadd.f32 %v9766, %v9986
      %9988 = vmatmul.f32.gmra.mxu0 %v9841
      %v9989 = vpop.f32.mrf.mxu0
      %v9990 = vadd.f32 %v9766, %v9989
      %9991 = vmatmul.f32.gmra.mxu0 %v9844
      %v9992 = vpop.f32.mrf.mxu0
      %v9993 = vadd.f32 %v9766, %v9992
      %9994 = vmatmul.f32.gmra.mxu0 %v9847
      %v9995 = vpop.f32.mrf.mxu0
      %v9996 = vadd.f32 %v9766, %v9995
      %9997 = vmatmul.f32.gmra.mxu0 %v9850
      %v9998 = vpop.f32.mrf.mxu0
      %v9999 = vadd.f32 %v9766, %v9998
      %10000 = vmatmul.f32.gmra.mxu0 %v9853
      %v10001 = vpop.f32.mrf.mxu0
      %v10002 = vadd.f32 %v9766, %v10001
      %10003 = vmatmul.f32.gmra.mxu0 %v9856
      %v10004 = vpop.f32.mrf.mxu0
      %v10005 = vadd.f32 %v9766, %v10004
      %10006 = vmatmul.f32.gmra.mxu0 %v9859
      %v10007 = vpop.f32.mrf.mxu0
      %v10008 = vadd.f32 %v9766, %v10007
      %10009 = vmatmul.f32.gmra.mxu0 %v9862
      %v10010 = vpop.f32.mrf.mxu0
      %v10011 = vadd.f32 %v9766, %v10010
      %10012 = vmatmul.f32.gmra.mxu0 %v9865
      %v10013 = vpop.f32.mrf.mxu0
      %v10014 = vadd.f32 %v9766, %v10013
      %10015 = vmatmul.f32.gmra.mxu0 %v9868
      %v10016 = vpop.f32.mrf.mxu0
      %v10017 = vadd.f32 %v9766, %v10016
      %10018 = vmatmul.f32.gmra.mxu0 %v9871
      %v10019 = vpop.f32.mrf.mxu0
      %v10020 = vadd.f32 %v9766, %v10019
      %10021 = vmatmul.f32.gmra.mxu0 %v9874
      %v10022 = vpop.f32.mrf.mxu0
      %v10023 = vadd.f32 %v9766, %v10022
      %10024 = vmatmul.f32.gmra.mxu0 %v9877
      %v10025 = vpop.f32.mrf.mxu0
      %v10026 = vadd.f32 %v9766, %v10025
      %10027 = vmatmul.f32.gmra.mxu0 %v9880
      %v10028 = vpop.f32.mrf.mxu0
      %v10029 = vadd.f32 %v9766, %v10028
      %10030 = vmatmul.f32.gmra.mxu0 %v9883
      %v10031 = vpop.f32.mrf.mxu0
      %v10032 = vadd.f32 %v9766, %v10031
      %10033 = vmatmul.f32.gmra.mxu0 %v9886
      %v10034 = vpop.f32.mrf.mxu0
      %v10035 = vadd.f32 %v9766, %v10034
      %10036 = vmatmul.f32.gmra.mxu0 %v9889
      %v10037 = vpop.f32.mrf.mxu0
      %v10038 = vadd.f32 %v9766, %v10037
      %10039 = vmatmul.f32.gmra.mxu0 %v9892
      %v10040 = vpop.f32.mrf.mxu0
      %v10041 = vadd.f32 %v9766, %v10040
      %10042 = vmatmul.f32.gmra.mxu0 %v9895
      %v10043 = vpop.f32.mrf.mxu0
      %v10044 = vadd.f32 %v9766, %v10043
      %10045 = vmatmul.f32.gmra.mxu0 %v9898
      %v10046 = vpop.f32.mrf.mxu0
      %v10047 = vadd.f32 %v9766, %v10046
      %10048 = vdwg.mxu0
      %v10049 = vperm.slane %v304, 4
      %v10050 = vmul.f32 %v9918, %v10049
      %v10051 = vmul.f32 %v9921, %v10049
      %v10052 = vmul.f32 %v9924, %v10049
      %v10053 = vmul.f32 %v9927, %v10049
      %v10054 = vmul.f32 %v9930, %v10049
      %v10055 = vmul.f32 %v9933, %v10049
      %v10056 = vmul.f32 %v9936, %v10049
      %v10057 = vmul.f32 %v9939, %v10049
      %v10058 = vmul.f32 %v9942, %v10049
      %v10059 = vmul.f32 %v9945, %v10049
      %v10060 = vmul.f32 %v9948, %v10049
      %v10061 = vmul.f32 %v9951, %v10049
      %v10062 = vmul.f32 %v9954, %v10049
      %v10063 = vmul.f32 %v9957, %v10049
      %v10064 = vmul.f32 %v9960, %v10049
      %v10065 = vmul.f32 %v9963, %v10049
      %v10066 = vmul.f32 %v9966, %v10049
      %v10067 = vmul.f32 %v9969, %v10049
      %v10068 = vmul.f32 %v9972, %v10049
      %v10069 = vmul.f32 %v9975, %v10049
      %v10070 = vmul.f32 %v9978, %v10049
      %v10071 = vmul.f32 %v9981, %v10049
      %v10072 = vmul.f32 %v9984, %v10049
      %v10073 = vmul.f32 %v9987, %v10049
      %v10074 = vmul.f32 %v9990, %v10049
      %v10075 = vmul.f32 %v9993, %v10049
      %v10076 = vmul.f32 %v9996, %v10049
      %v10077 = vmul.f32 %v9999, %v10049
      %v10078 = vmul.f32 %v10002, %v10049
      %v10079 = vmul.f32 %v10005, %v10049
      %v10080 = vmul.f32 %v10008, %v10049
      %v10081 = vmul.f32 %v10011, %v10049
      %v10082 = vmul.f32 %v10014, %v10049
      %v10083 = vmul.f32 %v10017, %v10049
      %v10084 = vmul.f32 %v10020, %v10049
      %v10085 = vmul.f32 %v10023, %v10049
      %v10086 = vmul.f32 %v10026, %v10049
      %v10087 = vmul.f32 %v10029, %v10049
      %v10088 = vmul.f32 %v10032, %v10049
      %v10089 = vmul.f32 %v10035, %v10049
      %v10090 = vmul.f32 %v10038, %v10049
      %v10091 = vmul.f32 %v10041, %v10049
      %v10092 = vmul.f32 %v10044, %v10049
      %v10093 = vmul.f32 %v10047, %v10049
      %v10094 = vperm.slane %v305, 4
      %v10095 = vadd.f32 %v10050, %v10094
      %v10096 = vadd.f32 %v10051, %v10094
      %v10097 = vadd.f32 %v10052, %v10094
      %v10098 = vadd.f32 %v10053, %v10094
      %v10099 = vadd.f32 %v10054, %v10094
      %v10100 = vadd.f32 %v10055, %v10094
      %v10101 = vadd.f32 %v10056, %v10094
      %v10102 = vadd.f32 %v10057, %v10094
      %v10103 = vadd.f32 %v10058, %v10094
      %v10104 = vadd.f32 %v10059, %v10094
      %v10105 = vadd.f32 %v10060, %v10094
      %v10106 = vadd.f32 %v10061, %v10094
      %v10107 = vadd.f32 %v10062, %v10094
      %v10108 = vadd.f32 %v10063, %v10094
      %v10109 = vadd.f32 %v10064, %v10094
      %v10110 = vadd.f32 %v10065, %v10094
      %v10111 = vadd.f32 %v10066, %v10094
      %v10112 = vadd.f32 %v10067, %v10094
      %v10113 = vadd.f32 %v10068, %v10094
      %v10114 = vadd.f32 %v10069, %v10094
      %v10115 = vadd.f32 %v10070, %v10094
      %v10116 = vadd.f32 %v10071, %v10094
      %v10117 = vadd.f32 %v10072, %v10094
      %v10118 = vadd.f32 %v10073, %v10094
      %v10119 = vadd.f32 %v10074, %v10094
      %v10120 = vadd.f32 %v10075, %v10094
      %v10121 = vadd.f32 %v10076, %v10094
      %v10122 = vadd.f32 %v10077, %v10094
      %v10123 = vadd.f32 %v10078, %v10094
      %v10124 = vadd.f32 %v10079, %v10094
      %v10125 = vadd.f32 %v10080, %v10094
      %v10126 = vadd.f32 %v10081, %v10094
      %v10127 = vadd.f32 %v10082, %v10094
      %v10128 = vadd.f32 %v10083, %v10094
      %v10129 = vadd.f32 %v10084, %v10094
      %v10130 = vadd.f32 %v10085, %v10094
      %v10131 = vadd.f32 %v10086, %v10094
      %v10132 = vadd.f32 %v10087, %v10094
      %v10133 = vadd.f32 %v10088, %v10094
      %v10134 = vadd.f32 %v10089, %v10094
      %v10135 = vadd.f32 %v10090, %v10094
      %v10136 = vadd.f32 %v10091, %v10094
      %v10137 = vadd.f32 %v10092, %v10094
      %v10138 = vadd.f32 %v10093, %v10094
      %v10139 = vmax.f32 %v10095, 0.0
      %v10140 = vmax.f32 %v10096, 0.0
      %v10141 = vmax.f32 %v10097, 0.0
      %v10142 = vmax.f32 %v10098, 0.0
      %v10143 = vmax.f32 %v10099, 0.0
      %v10144 = vmax.f32 %v10100, 0.0
      %v10145 = vmax.f32 %v10101, 0.0
      %v10146 = vmax.f32 %v10102, 0.0
      %v10147 = vmax.f32 %v10103, 0.0
      %v10148 = vmax.f32 %v10104, 0.0
      %v10149 = vmax.f32 %v10105, 0.0
      %v10150 = vmax.f32 %v10106, 0.0
      %v10151 = vmax.f32 %v10107, 0.0
      %v10152 = vmax.f32 %v10108, 0.0
      %v10153 = vmax.f32 %v10109, 0.0
      %v10154 = vmax.f32 %v10110, 0.0
      %v10155 = vmax.f32 %v10111, 0.0
      %v10156 = vmax.f32 %v10112, 0.0
      %v10157 = vmax.f32 %v10113, 0.0
      %v10158 = vmax.f32 %v10114, 0.0
      %v10159 = vmax.f32 %v10115, 0.0
      %v10160 = vmax.f32 %v10116, 0.0
      %v10161 = vmax.f32 %v10117, 0.0
      %v10162 = vmax.f32 %v10118, 0.0
      %v10163 = vmax.f32 %v10119, 0.0
      %v10164 = vmax.f32 %v10120, 0.0
      %v10165 = vmax.f32 %v10121, 0.0
      %v10166 = vmax.f32 %v10122, 0.0
      %v10167 = vmax.f32 %v10123, 0.0
      %v10168 = vmax.f32 %v10124, 0.0
      %v10169 = vmax.f32 %v10125, 0.0
      %v10170 = vmax.f32 %v10126, 0.0
      %v10171 = vmax.f32 %v10127, 0.0
      %v10172 = vmax.f32 %v10128, 0.0
      %v10173 = vmax.f32 %v10129, 0.0
      %v10174 = vmax.f32 %v10130, 0.0
      %v10175 = vmax.f32 %v10131, 0.0
      %v10176 = vmax.f32 %v10132, 0.0
      %v10177 = vmax.f32 %v10133, 0.0
      %v10178 = vmax.f32 %v10134, 0.0
      %v10179 = vmax.f32 %v10135, 0.0
      %v10180 = vmax.f32 %v10136, 0.0
      %v10181 = vmax.f32 %v10137, 0.0
      %v10182 = vmax.f32 %v10138, 0.0
      %v10183 = vround.ne.pseudo %v10139
      %v10184 = vround.ne.pseudo %v10140
      %v10185 = vround.ne.pseudo %v10141
      %v10186 = vround.ne.pseudo %v10142
      %v10187 = vround.ne.pseudo %v10143
      %v10188 = vround.ne.pseudo %v10144
      %v10189 = vround.ne.pseudo %v10145
      %v10190 = vround.ne.pseudo %v10146
      %v10191 = vround.ne.pseudo %v10147
      %v10192 = vround.ne.pseudo %v10148
      %v10193 = vround.ne.pseudo %v10149
      %v10194 = vround.ne.pseudo %v10150
      %v10195 = vround.ne.pseudo %v10151
      %v10196 = vround.ne.pseudo %v10152
      %v10197 = vround.ne.pseudo %v10153
      %v10198 = vround.ne.pseudo %v10154
      %v10199 = vround.ne.pseudo %v10155
      %v10200 = vround.ne.pseudo %v10156
      %v10201 = vround.ne.pseudo %v10157
      %v10202 = vround.ne.pseudo %v10158
      %v10203 = vround.ne.pseudo %v10159
      %v10204 = vround.ne.pseudo %v10160
      %v10205 = vround.ne.pseudo %v10161
      %v10206 = vround.ne.pseudo %v10162
      %v10207 = vround.ne.pseudo %v10163
      %v10208 = vround.ne.pseudo %v10164
      %v10209 = vround.ne.pseudo %v10165
      %v10210 = vround.ne.pseudo %v10166
      %v10211 = vround.ne.pseudo %v10167
      %v10212 = vround.ne.pseudo %v10168
      %v10213 = vround.ne.pseudo %v10169
      %v10214 = vround.ne.pseudo %v10170
      %v10215 = vround.ne.pseudo %v10171
      %v10216 = vround.ne.pseudo %v10172
      %v10217 = vround.ne.pseudo %v10173
      %v10218 = vround.ne.pseudo %v10174
      %v10219 = vround.ne.pseudo %v10175
      %v10220 = vround.ne.pseudo %v10176
      %v10221 = vround.ne.pseudo %v10177
      %v10222 = vround.ne.pseudo %v10178
      %v10223 = vround.ne.pseudo %v10179
      %v10224 = vround.ne.pseudo %v10180
      %v10225 = vround.ne.pseudo %v10181
      %v10226 = vround.ne.pseudo %v10182
      %10227 = vst.msk [vmem:[%s300] sm:$0xff] %vm816, %v10183
      %10228 = vst.msk [vmem:[%s300 + $0x8] sm:$0xff] %vm816, %v10184
      %10229 = vst.msk [vmem:[%s300 + $0x10] sm:$0xff] %vm816, %v10185
      %10230 = vst.msk [vmem:[%s300 + $0x18] sm:$0xff] %vm816, %v10186
      %10231 = vst.msk [vmem:[%s300 + $0x20] sm:$0xff] %vm816, %v10187
      %10232 = vst.msk [vmem:[%s300 + $0x28] sm:$0xff] %vm816, %v10188
      %10233 = vst.msk [vmem:[%s300 + $0x30] sm:$0xff] %vm816, %v10189
      %10234 = vst.msk [vmem:[%s300 + $0x38] sm:$0xff] %vm816, %v10190
      %10235 = vst.msk [vmem:[%s300 + $0x40] sm:$0xff] %vm816, %v10191
      %10236 = vst.msk [vmem:[%s300 + $0x48] sm:$0xff] %vm816, %v10192
      %10237 = vst.msk [vmem:[%s300 + $0x50] sm:$0xff] %vm816, %v10193
      %10238 = vst.msk [vmem:[%s300 + $0x58] sm:$0xff] %vm816, %v10194
      %10239 = vst.msk [vmem:[%s300 + $0x60] sm:$0xff] %vm816, %v10195
      %10240 = vst.msk [vmem:[%s300 + $0x68] sm:$0xff] %vm816, %v10196
      %10241 = vst.msk [vmem:[%s300 + $0x70] sm:$0xff] %vm816, %v10197
      %10242 = vst.msk [vmem:[%s300 + $0x78] sm:$0xff] %vm816, %v10198
      %10243 = vst.msk [vmem:[%s300 + $0x80] sm:$0xff] %vm816, %v10199
      %10244 = vst.msk [vmem:[%s300 + $0x88] sm:$0xff] %vm816, %v10200
      %10245 = vst.msk [vmem:[%s300 + $0x90] sm:$0xff] %vm816, %v10201
      %10246 = vst.msk [vmem:[%s300 + $0x98] sm:$0xff] %vm816, %v10202
      %10247 = vst.msk [vmem:[%s300 + $0xa0] sm:$0xff] %vm816, %v10203
      %10248 = vst.msk [vmem:[%s300 + $0xa8] sm:$0xff] %vm816, %v10204
      %10249 = vst.msk [vmem:[%s300 + $0xb0] sm:$0xff] %vm816, %v10205
      %10250 = vst.msk [vmem:[%s300 + $0xb8] sm:$0xff] %vm816, %v10206
      %10251 = vst.msk [vmem:[%s300 + $0xc0] sm:$0xff] %vm816, %v10207
      %10252 = vst.msk [vmem:[%s300 + $0xc8] sm:$0xff] %vm816, %v10208
      %10253 = vst.msk [vmem:[%s300 + $0xd0] sm:$0xff] %vm816, %v10209
      %10254 = vst.msk [vmem:[%s300 + $0xd8] sm:$0xff] %vm816, %v10210
      %10255 = vst.msk [vmem:[%s300 + $0xe0] sm:$0xff] %vm816, %v10211
      %10256 = vst.msk [vmem:[%s300 + $0xe8] sm:$0xff] %vm816, %v10212
      %10257 = vst.msk [vmem:[%s300 + $0xf0] sm:$0xff] %vm816, %v10213
      %10258 = vst.msk [vmem:[%s300 + $0xf8] sm:$0xff] %vm816, %v10214
      %10259 = vst.msk [vmem:[%s300 + $0x100] sm:$0xff] %vm816, %v10215
      %10260 = vst.msk [vmem:[%s300 + $0x108] sm:$0xff] %vm816, %v10216
      %10261 = vst.msk [vmem:[%s300 + $0x110] sm:$0xff] %vm816, %v10217
      %10262 = vst.msk [vmem:[%s300 + $0x118] sm:$0xff] %vm816, %v10218
      %10263 = vst.msk [vmem:[%s300 + $0x120] sm:$0xff] %vm816, %v10219
      %10264 = vst.msk [vmem:[%s300 + $0x128] sm:$0xff] %vm816, %v10220
      %10265 = vst.msk [vmem:[%s300 + $0x130] sm:$0xff] %vm816, %v10221
      %10266 = vst.msk [vmem:[%s300 + $0x138] sm:$0xff] %vm816, %v10222
      %10267 = vst.msk [vmem:[%s300 + $0x140] sm:$0xff] %vm816, %v10223
      %10268 = vst.msk [vmem:[%s300 + $0x148] sm:$0xff] %vm816, %v10224
      %10269 = vst.msk [vmem:[%s300 + $0x150] sm:$0xff] %vm816, %v10225
      %10270 = vst.msk [vmem:[%s300 + $0x158] sm:$0xff] %vm816, %v10226
      %s10271 = smul.u32 44, %s23
      %p10272 = scmp.lt.s32.totalorder %s22, 1
      %s10273 = scalar_select %p10272, %s22, 1
      %p10274 = scmp.lt.s32.totalorder %s10271, 43
      %s10275 = scalar_select %p10274, %s10271, 43
      %s10276 = smul.addr %s10273, 44
      %s10277 = sadd.s32 %s10275, %s10276
      %s10278 = smul.addr %s10277, 8
      %s10279 = scalar_lea.vmem %s7, %s10278
      // Predicated region
      $region49: #{tpu_custom_call.1} parent=47 // pred_check
        %p10280 = pneg %p202
      $region50: #{tpu_custom_call.1} parent=47 // pred_check_branch
        %10282 = sbr.rel (%p10280) target = $region52
      $region51: #{tpu_custom_call.1} parent=47 // pred_region
        %s10283 = smul.u32 44, %s23
      $region52: #{tpu_custom_call.1} parent=47 // pred_fallthru
        _
    $region48: #{tpu_custom_call.1} parent=5 // pred_fallthru
      _
    %p10284 = scmp.le.s32.totalorder 2, %s13
    // Predicated region
    $region53: #{tpu_custom_call.1} parent=5 // pred_check
      %p10285 = pneg %p10284
    $region54: #{tpu_custom_call.1} parent=5 // pred_check_branch
      %10287 = sbr.rel (%p10285) target = $region56
    $region55: #{tpu_custom_call.1} parent=5 // pred_region
      %s10288 = ssub.s32 %s13, 2
      // Predicated region
      $region57: #{tpu_custom_call.1} parent=55 // pred_check
        %p10289 = pneg %p208
      $region58: #{tpu_custom_call.1} parent=55 // pred_check_branch
        %10291 = sbr.rel (%p10289) target = $region60
      $region59: #{tpu_custom_call.1} parent=55 // pred_region
        %s10292 = smul.u32 44, %s25
        %p10293 = scmp.lt.s32.totalorder %s24, 1
        %s10294 = scalar_select %p10293, %s24, 1
        %p10295 = scmp.lt.s32.totalorder %s10292, 43
        %s10296 = scalar_select %p10295, %s10292, 43
        %s10297 = smul.addr %s10294, 44
        %s10298 = sadd.s32 %s10296, %s10297
        %s10299 = smul.addr %s10298, 8
        %s10300 = scalar_lea.vmem %s7, %s10299
      $region60: #{tpu_custom_call.1} parent=55 // pred_fallthru
        _
    $region56: #{tpu_custom_call.1} parent=5 // pred_fallthru
      _
  $region6: #{tpu_custom_call.1} parent=0 // loop_footer
    %s17 = sadd.s32 1, %s13
  $region7: #{tpu_custom_call.1} parent=0 // loop_footer_branch
    %12 = sbr.rel target = $region3
  $region8: #{tpu_custom_call.1} parent=0 // loop_exit
    _

</llo_original>
